<compile_context>
chip_gen: v5e
topology: v5e:2x2
jax: 0.10.0
libtpu: 0.0.40
codegen_flags: <defaults>
</compile_context>

<pallas_src>
import jax
import jax.numpy as jnp
from jax.experimental import pallas as pl
from jax.experimental.pallas import tpu as pltpu


def _round_up(x, m):
    return (x + m - 1) // m * m


# ----------------------------------------------------------------------------
# Kernel 1: conv1 (quadrant matmuls) + 2x2 max-pool + ReLU, transposed output
# ----------------------------------------------------------------------------
def _conv1_pool_relu_kernel(p_ref, w_ref, b_ref, o_ref):
    # p_ref: (4, Kp, TM) bf16 pooling-quadrant im2col patches (transposed)
    # w_ref: (Cout, Kp) bf16 transposed conv weights, b_ref: (Cout, 1) f32
    m = jnp.dot(w_ref[...], p_ref[0], preferred_element_type=jnp.float32)
    for q in range(1, 4):
        m = jnp.maximum(
            m, jnp.dot(w_ref[...], p_ref[q], preferred_element_type=jnp.float32))
    # (quadrant max before bias add == bias add before pool; bias is constant)
    o_ref[...] = jnp.maximum(m + b_ref[...], 0.0).astype(o_ref.dtype)


def conv1_pool_relu(pt1, w1t, b1, *, tm=1024):
    """pt1: (4, Kp, Mp) bf16, w1t: (N, Kp) bf16, b1: (N, 1) f32 -> (N, Mp) bf16."""
    _, kp, mp = pt1.shape
    n = w1t.shape[0]
    assert mp % tm == 0
    return pl.pallas_call(
        _conv1_pool_relu_kernel,
        out_shape=jax.ShapeDtypeStruct((n, mp), jnp.bfloat16),
        grid=(mp // tm,),
        in_specs=[
            pl.BlockSpec((4, kp, tm), lambda i: (0, 0, i)),
            pl.BlockSpec((n, kp), lambda i: (0, 0)),
            pl.BlockSpec((n, 1), lambda i: (0, 0)),
        ],
        out_specs=pl.BlockSpec((n, tm), lambda i: (0, i)),
        compiler_params=pltpu.CompilerParams(
            dimension_semantics=("parallel",)),
    )(pt1, w1t, b1)


# ----------------------------------------------------------------------------
# Kernel 2: conv2 + 2x2 max-pool + ReLU + fc1 + ReLU + fc2 (fully fused)
# ----------------------------------------------------------------------------
def _conv2_fc_kernel(p_ref, w2_ref, b2_ref, w1p_ref, bf1_ref, wf2_ref, bf2_ref,
                     o_ref, acc_ref):
    # p_ref : (4 positions, 4 quadrants, 1, K2p, Bt) bf16
    # w2_ref: (20, K2p) bf16, b2_ref: (20, 1) f32
    # w1p_ref: (16, 50, 20) bf16 resident, bf1_ref: (50, 1) f32
    # wf2_ref: (10, 50) bf16, bf2_ref: (10, 1) f32
    # o_ref : (1, 10, Bt) f32, acc_ref: (50, Bt) f32 scratch
    kg = pl.program_id(1)
    kpos = p_ref.shape[0]

    @pl.when(kg == 0)
    def _():
        acc_ref[...] = jnp.zeros_like(acc_ref)

    # 4 pooled spatial positions per grid step (unrolled).
    for kk in range(kpos):
        m = jnp.dot(w2_ref[...], p_ref[kk, 0, 0],
                    preferred_element_type=jnp.float32)
        for q in range(1, 4):
            m = jnp.maximum(
                m, jnp.dot(w2_ref[...], p_ref[kk, q, 0],
                           preferred_element_type=jnp.float32))
        h2_k = jnp.maximum(m + b2_ref[...], 0.0).astype(jnp.bfloat16)  # (20,Bt)
        w1p_k = w1p_ref[kg * kpos + kk]        # (50, 20) bf16, dynamic index
        acc_ref[...] += jnp.dot(w1p_k, h2_k,
                                preferred_element_type=jnp.float32)

    # Epilogue at the last position group: fc1 bias + ReLU, then fc2.
    @pl.when(kg == pl.num_programs(1) - 1)
    def _():
        f1 = jnp.maximum(acc_ref[...] + bf1_ref[...], 0.0).astype(jnp.bfloat16)
        out = jnp.dot(wf2_ref[...], f1,
                      preferred_element_type=jnp.float32) + bf2_ref[...]
        o_ref[0] = out.astype(o_ref.dtype)


def conv2_pool_fc(pt2, w2t, b2, w1p, bf1, wf2t, bf2):
    """pt2: (16, 4, nbt, K2p, Bt) bf16 -> logits (nbt, 10, Bt) f32."""
    nk, nq, nbt, k2p, bt = pt2.shape
    kpos = 4                         # pooled spatial positions per grid step
    assert nk % kpos == 0
    nkg = nk // kpos
    n2 = w2t.shape[0]                # 20
    nf1 = w1p.shape[1]               # 50
    nout = wf2t.shape[0]             # 10
    return pl.pallas_call(
        _conv2_fc_kernel,
        out_shape=jax.ShapeDtypeStruct((nbt, nout, bt), jnp.float32),
        grid=(nbt, nkg),
        in_specs=[
            pl.BlockSpec((kpos, nq, 1, k2p, bt), lambda b, k: (k, 0, b, 0, 0)),
            pl.BlockSpec((n2, k2p), lambda b, k: (0, 0)),
            pl.BlockSpec((n2, 1), lambda b, k: (0, 0)),
            pl.BlockSpec((nk, nf1, n2), lambda b, k: (0, 0, 0)),   # resident
            pl.BlockSpec((nf1, 1), lambda b, k: (0, 0)),
            pl.BlockSpec((nout, nf1), lambda b, k: (0, 0)),
            pl.BlockSpec((nout, 1), lambda b, k: (0, 0)),
        ],
        out_specs=pl.BlockSpec((1, nout, bt), lambda b, k: (b, 0, 0)),
        scratch_shapes=[pltpu.VMEM((nf1, bt), jnp.float32)],
        compiler_params=pltpu.CompilerParams(
            dimension_semantics=("parallel", "arbitrary")),
    )(pt2, w2t, b2, w1p, bf1, wf2t, bf2)


# ----------------------------------------------------------------------------
# XLA glue: quadrant im2col (pure data rearrangement, done once in the wrapper)
# ----------------------------------------------------------------------------
def _conv1_patches(x_img, mp1):
    """x_img (B,28,28) bf16 -> (4, 32, Mp1); columns ordered (b, i, j)."""
    B = x_img.shape[0]
    cols = [x_img[:, kh:kh + 24, kw:kw + 24]
            for kh in range(5) for kw in range(5)]
    pat = jnp.stack(cols, axis=0)                        # (25, B, 24, 24)
    quads = []
    for di in range(2):
        for dj in range(2):
            q = pat[:, :, di::2, dj::2]                  # (25, B, 12, 12)
            quads.append(q.reshape(25, B * 144))
    pt1 = jnp.stack(quads, axis=0)                       # (4, 25, B*144)
    return jnp.pad(pt1, ((0, 0), (0, 7), (0, mp1 - B * 144)))


def _conv2_patches(h1, nbt, bt):
    """h1 (B,12,12,10) bf16 -> (16, 4, nbt, 256, bt); rows (kh,kw,ci)."""
    B = h1.shape[0]
    bp = nbt * bt
    h1p = jnp.pad(h1, ((0, bp - B), (0, 0), (0, 0), (0, 0)))
    cols = [h1p[:, kh:kh + 8, kw:kw + 8, :]
            for kh in range(5) for kw in range(5)]
    pat = jnp.stack(cols, axis=0)                        # (25, Bp, 8, 8, 10)
    quads = []
    for di in range(2):
        for dj in range(2):
            q = pat[:, :, di::2, dj::2, :]               # (25, Bp, 4, 4, 10)
            q = q.transpose(2, 3, 0, 4, 1)               # (4, 4, 25, 10, Bp)
            quads.append(q.reshape(16, 250, bp))         # k=(i,j), r=(kh,kw,ci)
    pt2 = jnp.stack(quads, axis=1)                       # (16, 4, 250, Bp)
    pt2 = jnp.pad(pt2, ((0, 0), (0, 0), (0, 6), (0, 0)))  # K 250 -> 256
    pt2 = pt2.reshape(16, 4, 256, nbt, bt).transpose(0, 1, 3, 2, 4)
    return pt2                                           # (16, 4, nbt, 256, bt)


# ----------------------------------------------------------------------------
# Parameters (deterministic init; HWIO conv weights, (in,out) fc weights)
# ----------------------------------------------------------------------------
def init_params(seed=0):
    key = jax.random.PRNGKey(seed)
    ks = jax.random.split(key, 8)

    def _init(k, shape, fan_in):
        return jax.random.normal(k, shape, jnp.float32) / jnp.sqrt(fan_in)

    return {
        "w1": _init(ks[0], (5, 5, 1, 10), 5 * 5 * 1),    # conv1  (HWIO)
        "b1": jnp.zeros((10,), jnp.float32),
        "w2": _init(ks[1], (5, 5, 10, 20), 5 * 5 * 10),  # conv2  (HWIO)
        "b2": jnp.zeros((20,), jnp.float32),
        "wf1": _init(ks[2], (320, 50), 320),             # fc1    (in, out)
        "bf1": jnp.zeros((50,), jnp.float32),
        "wf2": _init(ks[3], (50, 10), 50),               # fc2    (in, out)
        "bf2": jnp.zeros((10,), jnp.float32),
    }


# ----------------------------------------------------------------------------
# Forward pass (mirrors Net.forward)
# ----------------------------------------------------------------------------
@jax.jit
def net_forward(x_nchw, params):
    B = x_nchw.shape[0]
    x = x_nchw.astype(jnp.bfloat16).reshape(B, 28, 28)   # C == 1, bf16 operands

    # conv1 + pool + relu  (kernel 1)
    TM = 1024
    m1 = B * 144
    mp1 = _round_up(m1, TM)
    pt1 = _conv1_patches(x, mp1)                                     # (4,32,Mp1) bf16
    w1t = jnp.pad(params["w1"].reshape(25, 10).T,
                  ((0, 0), (0, 7))).astype(jnp.bfloat16)             # (10,32)
    h1t = conv1_pool_relu(pt1, w1t, params["b1"].reshape(10, 1), tm=TM)  # (10,Mp1) bf16
    h1 = h1t[:, :m1].reshape(10, B, 12, 12).transpose(1, 2, 3, 0)    # (B,12,12,10) bf16

    # conv2 + pool + relu + fc1 + relu + fc2  (kernel 2)
    bp = _round_up(B, 128)
    bt = 64 if bp == 128 else 128        # always >= 2 batch tiles (v7x 2-TC)
    nbt = bp // bt
    pt2 = _conv2_patches(h1, nbt, bt)                                # (16,4,nbt,256,bt)
    w2t = jnp.pad(params["w2"].reshape(250, 20).T,
                  ((0, 0), (0, 6))).astype(jnp.bfloat16)             # (20,256)
    # fc1 weight regrouped per pooled spatial position k = i*4+j:
    # w1p[k, f, c] = wf1[c*16 + k, f]
    w1p = params["wf1"].reshape(20, 16, 50).transpose(1, 2, 0)       # (16,50,20)
    logits_t = conv2_pool_fc(
        pt2, w2t, params["b2"].reshape(20, 1),
        w1p.astype(jnp.bfloat16), params["bf1"].reshape(50, 1),
        params["wf2"].T.astype(jnp.bfloat16),
        params["bf2"].reshape(10, 1))                                # (nbt,10,bt) f32

    logits = logits_t.transpose(0, 2, 1).reshape(bp, 10)
    return logits[:B]                                                # (B,10)


# ----------------------------------------------------------------------------
# Pure-JAX reference.  bf16_inputs=True applies the same bf16 quantization of
# matmul operands as the kernels (f32 accumulation), for a tight comparison.
# ----------------------------------------------------------------------------
def net_forward_reference(x_nchw, params, *, bf16_inputs=False):
    if bf16_inputs:
        q = lambda t: t.astype(jnp.bfloat16).astype(jnp.float32)
    else:
        q = lambda t: t
    hi = jax.lax.Precision.HIGHEST
    x = q(jnp.transpose(x_nchw, (0, 2, 3, 1)).astype(jnp.float32))
    B = x.shape[0]

    def im2col(t, k):
        Bb, H, W, C = t.shape
        ho, wo = H - k + 1, W - k + 1
        cols = [t[:, kh:kh + ho, kw:kw + wo, :]
                for kh in range(k) for kw in range(k)]
        return jnp.stack(cols, axis=3).reshape(Bb * ho * wo, k * k * C)

    def pool_relu(t):
        m = jnp.maximum(jnp.maximum(t[:, 0::2, 0::2, :], t[:, 0::2, 1::2, :]),
                        jnp.maximum(t[:, 1::2, 0::2, :], t[:, 1::2, 1::2, :]))
        return jnp.maximum(m, 0.0)

    c1 = (jnp.dot(im2col(x, 5), q(params["w1"].reshape(25, 10)), precision=hi)
          + params["b1"]).reshape(B, 24, 24, 10)
    h1 = q(pool_relu(c1))
    c2 = (jnp.dot(im2col(h1, 5), q(params["w2"].reshape(250, 20)), precision=hi)
          + params["b2"]).reshape(B, 8, 8, 20)
    h2 = pool_relu(c2)
    flat = q(jnp.transpose(h2, (0, 3, 1, 2)).reshape(B, 320))
    f1 = q(jnp.maximum(jnp.dot(flat, q(params["wf1"]), precision=hi)
                       + params["bf1"], 0.0))
    return jnp.dot(f1, q(params["wf2"]), precision=hi) + params["bf2"]


# ----------------------------------------------------------------------------
if __name__ == "__main__":
    params = init_params(seed=0)
    ref_fn = jax.jit(net_forward_reference, static_argnames="bf16_inputs")

    # B=2: small-shape smoke test; B=130: multi-batch-tile / batch-padding path.
    for B in (2, 130):
        x = jax.random.normal(jax.random.PRNGKey(0), (B, 1, 28, 28), jnp.float32)
        logits = net_forward(x, params)
        jax.block_until_ready(logits)

        assert logits.shape == (B, 10), logits.shape
        assert bool(jnp.all(jnp.isfinite(logits)))

        # Tight check vs reference with identical bf16 operand quantization.
        ref_q = ref_fn(x, params, bf16_inputs=True)
        assert bool(jnp.allclose(logits, ref_q, atol=5e-3, rtol=5e-3)), \
            (B, float(jnp.max(jnp.abs(logits - ref_q))))

        # Sanity check vs full-f32 reference (budget for bf16 quantization).
        ref = ref_fn(x, params, bf16_inputs=False)
        assert bool(jnp.allclose(logits, ref, atol=5e-2, rtol=5e-2)), \
            (B, float(jnp.max(jnp.abs(logits - ref))))

    print("KERNEL_OK")
</pallas_src>

<mosaic_0001>
module attributes {stable_mosaic.version = 11 : i64} {
  func.func @_conv1_pool_relu_kernel(%arg0: i32, %arg1: memref<4x32x1024xbf16, #tpu.memory_space<vmem>>, %arg2: memref<10x32xbf16, #tpu.memory_space<vmem>>, %arg3: memref<10x1xf32, #tpu.memory_space<vmem>>, %arg4: memref<10x1024xbf16, #tpu.memory_space<vmem>>) attributes {dimension_semantics = [#tpu.dimension_semantics<parallel>], iteration_bounds = array<i64: 1>, scalar_prefetch = 0 : i64, scratch_operands = 0 : i64, tpu.core_type = #tpu.core_type<tc>, window_params = [{transform_indices = @transform_0, window_bounds = array<i64: 4, 32, 1024>}, {pipeline_mode = #tpu.pipeline_mode<synchronous>, transform_indices = @transform_1, window_bounds = array<i64: 10, 32>}, {pipeline_mode = #tpu.pipeline_mode<synchronous>, transform_indices = @transform_2, window_bounds = array<i64: 10, 1>}, {transform_indices = @transform_3, window_bounds = array<i64: 10, 1024>}]} {
    %c0 = arith.constant 0 : index
    %c0_0 = arith.constant 0 : index
    %0 = vector.load %arg2[%c0, %c0_0] : memref<10x32xbf16, #tpu.memory_space<vmem>>, vector<10x32xbf16>
    %c0_1 = arith.constant 0 : index
    %c0_2 = arith.constant 0 : index
    %c0_3 = arith.constant 0 : index
    %1 = vector.load %arg1[%c0_1, %c0_2, %c0_3] : memref<4x32x1024xbf16, #tpu.memory_space<vmem>>, vector<1x32x1024xbf16>
    %2 = vector.shape_cast %1 : vector<1x32x1024xbf16> to vector<32x1024xbf16>
    %cst = arith.constant dense<0.000000e+00> : vector<10x1024xf32>
    %3 = tpu.matmul %0, %2, %cst {dimension_numbers = #tpu.dot_dimension_numbers<[1], [0], [0], [1], [0, 0, 1, 1], [], []>} : vector<10x32xbf16>, vector<32x1024xbf16>, vector<10x1024xf32> -> vector<10x1024xf32>
    %c0_4 = arith.constant 0 : index
    %c0_5 = arith.constant 0 : index
    %4 = vector.load %arg2[%c0_4, %c0_5] : memref<10x32xbf16, #tpu.memory_space<vmem>>, vector<10x32xbf16>
    %c1 = arith.constant 1 : index
    %c0_6 = arith.constant 0 : index
    %c0_7 = arith.constant 0 : index
    %5 = vector.load %arg1[%c1, %c0_6, %c0_7] : memref<4x32x1024xbf16, #tpu.memory_space<vmem>>, vector<1x32x1024xbf16>
    %6 = vector.shape_cast %5 : vector<1x32x1024xbf16> to vector<32x1024xbf16>
    %cst_8 = arith.constant dense<0.000000e+00> : vector<10x1024xf32>
    %7 = tpu.matmul %4, %6, %cst_8 {dimension_numbers = #tpu.dot_dimension_numbers<[1], [0], [0], [1], [0, 0, 1, 1], [], []>} : vector<10x32xbf16>, vector<32x1024xbf16>, vector<10x1024xf32> -> vector<10x1024xf32>
    %8 = arith.maximumf %3, %7 : vector<10x1024xf32>
    %c0_9 = arith.constant 0 : index
    %c0_10 = arith.constant 0 : index
    %9 = vector.load %arg2[%c0_9, %c0_10] : memref<10x32xbf16, #tpu.memory_space<vmem>>, vector<10x32xbf16>
    %c2 = arith.constant 2 : index
    %c0_11 = arith.constant 0 : index
    %c0_12 = arith.constant 0 : index
    %10 = vector.load %arg1[%c2, %c0_11, %c0_12] : memref<4x32x1024xbf16, #tpu.memory_space<vmem>>, vector<1x32x1024xbf16>
    %11 = vector.shape_cast %10 : vector<1x32x1024xbf16> to vector<32x1024xbf16>
    %cst_13 = arith.constant dense<0.000000e+00> : vector<10x1024xf32>
    %12 = tpu.matmul %9, %11, %cst_13 {dimension_numbers = #tpu.dot_dimension_numbers<[1], [0], [0], [1], [0, 0, 1, 1], [], []>} : vector<10x32xbf16>, vector<32x1024xbf16>, vector<10x1024xf32> -> vector<10x1024xf32>
    %13 = arith.maximumf %8, %12 : vector<10x1024xf32>
    %c0_14 = arith.constant 0 : index
    %c0_15 = arith.constant 0 : index
    %14 = vector.load %arg2[%c0_14, %c0_15] : memref<10x32xbf16, #tpu.memory_space<vmem>>, vector<10x32xbf16>
    %c3 = arith.constant 3 : index
    %c0_16 = arith.constant 0 : index
    %c0_17 = arith.constant 0 : index
    %15 = vector.load %arg1[%c3, %c0_16, %c0_17] : memref<4x32x1024xbf16, #tpu.memory_space<vmem>>, vector<1x32x1024xbf16>
    %16 = vector.shape_cast %15 : vector<1x32x1024xbf16> to vector<32x1024xbf16>
    %cst_18 = arith.constant dense<0.000000e+00> : vector<10x1024xf32>
    %17 = tpu.matmul %14, %16, %cst_18 {dimension_numbers = #tpu.dot_dimension_numbers<[1], [0], [0], [1], [0, 0, 1, 1], [], []>} : vector<10x32xbf16>, vector<32x1024xbf16>, vector<10x1024xf32> -> vector<10x1024xf32>
    %18 = arith.maximumf %13, %17 : vector<10x1024xf32>
    %c0_19 = arith.constant 0 : index
    %c0_20 = arith.constant 0 : index
    %19 = vector.load %arg3[%c0_19, %c0_20] : memref<10x1xf32, #tpu.memory_space<vmem>>, vector<10x1xf32>
    %20 = vector.broadcast %19 : vector<10x1xf32> to vector<10x1024xf32>
    %21 = arith.addf %18, %20 : vector<10x1024xf32>
    %cst_21 = arith.constant 0.000000e+00 : f32
    %22 = vector.broadcast %cst_21 : f32 to vector<10x1024xf32>
    %23 = arith.maximumf %21, %22 : vector<10x1024xf32>
    %24 = arith.truncf %23 : vector<10x1024xf32> to vector<10x1024xbf16>
    %c0_22 = arith.constant 0 : index
    %c0_23 = arith.constant 0 : index
    %25 = vector.load %arg4[%c0_22, %c0_23] : memref<10x1024xbf16, #tpu.memory_space<vmem>>, vector<10x1024xbf16>
    tpu.vector_store %arg4[%c0_22, %c0_23], %24 {strides = array<i32>} : memref<10x1024xbf16, #tpu.memory_space<vmem>>, vector<10x1024xbf16>,
    return
  }
  func.func @transform_0(%arg0: i32) -> (i32, i32, i32) {
    %c0_i32 = arith.constant 0 : i32
    %c0_i32_0 = arith.constant 0 : i32
    %c0_i32_1 = arith.constant 0 : i32
    return %c0_i32, %c0_i32_0, %arg0 : i32, i32, i32
  }
  func.func @transform_1(%arg0: i32) -> (i32, i32) {
    %c0_i32 = arith.constant 0 : i32
    %c0_i32_0 = arith.constant 0 : i32
    %c0_i32_1 = arith.constant 0 : i32
    return %c0_i32, %c0_i32_0 : i32, i32
  }
  func.func @transform_2(%arg0: i32) -> (i32, i32) {
    %c0_i32 = arith.constant 0 : i32
    %c0_i32_0 = arith.constant 0 : i32
    %c0_i32_1 = arith.constant 0 : i32
    return %c0_i32, %c0_i32_0 : i32, i32
  }
  func.func @transform_3(%arg0: i32) -> (i32, i32) {
    %c0_i32 = arith.constant 0 : i32
    %c0_i32_0 = arith.constant 0 : i32
    return %c0_i32, %arg0 : i32, i32
  }
}

module attributes {stable_mosaic.version = 11 : i64} {
  func.func @_conv2_fc_kernel(%arg0: i32, %arg1: i32, %arg2: memref<4x4x1x256x64xbf16, #tpu.memory_space<vmem>>, %arg3: memref<20x256xbf16, #tpu.memory_space<vmem>>, %arg4: memref<20x1xf32, #tpu.memory_space<vmem>>, %arg5: memref<16x50x20xbf16, #tpu.memory_space<vmem>>, %arg6: memref<50x1xf32, #tpu.memory_space<vmem>>, %arg7: memref<10x50xbf16, #tpu.memory_space<vmem>>, %arg8: memref<10x1xf32, #tpu.memory_space<vmem>>, %arg9: memref<1x10x64xf32, #tpu.memory_space<vmem>>, %arg10: memref<50x64xf32, #tpu.memory_space<vmem>>) attributes {dimension_semantics = [#tpu.dimension_semantics<parallel>, #tpu.dimension_semantics<arbitrary>], iteration_bounds = array<i64: 2, 4>, scalar_prefetch = 0 : i64, scratch_operands = 1 : i64, tpu.core_type = #tpu.core_type<tc>, window_params = [{transform_indices = @transform_0, window_bounds = array<i64: 4, 4, 1, 256, 64>}, {pipeline_mode = #tpu.pipeline_mode<synchronous>, transform_indices = @transform_1, window_bounds = array<i64: 20, 256>}, {pipeline_mode = #tpu.pipeline_mode<synchronous>, transform_indices = @transform_2, window_bounds = array<i64: 20, 1>}, {pipeline_mode = #tpu.pipeline_mode<synchronous>, transform_indices = @transform_3, window_bounds = array<i64: 16, 50, 20>}, {pipeline_mode = #tpu.pipeline_mode<synchronous>, transform_indices = @transform_4, window_bounds = array<i64: 50, 1>}, {pipeline_mode = #tpu.pipeline_mode<synchronous>, transform_indices = @transform_5, window_bounds = array<i64: 10, 50>}, {pipeline_mode = #tpu.pipeline_mode<synchronous>, transform_indices = @transform_6, window_bounds = array<i64: 10, 1>}, {transform_indices = @transform_7, window_bounds = array<i64: 1, 10, 64>}]} {
    %c0_i32 = arith.constant 0 : i32
    %0 = arith.cmpi eq, %arg1, %c0_i32 : i32
    %1 = arith.extui %0 : i1 to i32
    %c0_i32_0 = arith.constant 0 : i32
    %2 = arith.cmpi ne, %1, %c0_i32_0 : i32
    scf.if %2 {
      %cst_170 = arith.constant 0.000000e+00 : f32
      %142 = vector.broadcast %cst_170 : f32 to vector<50x64xf32>
      %c0_171 = arith.constant 0 : index
      %c0_172 = arith.constant 0 : index
      %143 = vector.load %arg10[%c0_171, %c0_172] : memref<50x64xf32, #tpu.memory_space<vmem>>, vector<50x64xf32>
      tpu.vector_store %arg10[%c0_171, %c0_172], %142 {strides = array<i32>} : memref<50x64xf32, #tpu.memory_space<vmem>>, vector<50x64xf32>,
    } else {
    }
    %c0 = arith.constant 0 : index
    %c0_1 = arith.constant 0 : index
    %3 = vector.load %arg3[%c0, %c0_1] : memref<20x256xbf16, #tpu.memory_space<vmem>>, vector<20x256xbf16>
    %c0_2 = arith.constant 0 : index
    %c0_3 = arith.constant 0 : index
    %c0_4 = arith.constant 0 : index
    %c0_5 = arith.constant 0 : index
    %c0_6 = arith.constant 0 : index
    %4 = vector.load %arg2[%c0_2, %c0_3, %c0_4, %c0_5, %c0_6] : memref<4x4x1x256x64xbf16, #tpu.memory_space<vmem>>, vector<1x1x1x256x64xbf16>
    %5 = vector.shape_cast %4 : vector<1x1x1x256x64xbf16> to vector<256x64xbf16>
    %cst = arith.constant dense<0.000000e+00> : vector<20x64xf32>
    %6 = tpu.matmul %3, %5, %cst {dimension_numbers = #tpu.dot_dimension_numbers<[1], [0], [0], [1], [0, 0, 1, 1], [], []>} : vector<20x256xbf16>, vector<256x64xbf16>, vector<20x64xf32> -> vector<20x64xf32>
    %c0_7 = arith.constant 0 : index
    %c0_8 = arith.constant 0 : index
    %7 = vector.load %arg3[%c0_7, %c0_8] : memref<20x256xbf16, #tpu.memory_space<vmem>>, vector<20x256xbf16>
    %c0_9 = arith.constant 0 : index
    %c1 = arith.constant 1 : index
    %c0_10 = arith.constant 0 : index
    %c0_11 = arith.constant 0 : index
    %c0_12 = arith.constant 0 : index
    %8 = vector.load %arg2[%c0_9, %c1, %c0_10, %c0_11, %c0_12] : memref<4x4x1x256x64xbf16, #tpu.memory_space<vmem>>, vector<1x1x1x256x64xbf16>
    %9 = vector.shape_cast %8 : vector<1x1x1x256x64xbf16> to vector<256x64xbf16>
    %cst_13 = arith.constant dense<0.000000e+00> : vector<20x64xf32>
    %10 = tpu.matmul %7, %9, %cst_13 {dimension_numbers = #tpu.dot_dimension_numbers<[1], [0], [0], [1], [0, 0, 1, 1], [], []>} : vector<20x256xbf16>, vector<256x64xbf16>, vector<20x64xf32> -> vector<20x64xf32>
    %11 = arith.maximumf %6, %10 : vector<20x64xf32>
    %c0_14 = arith.constant 0 : index
    %c0_15 = arith.constant 0 : index
    %12 = vector.load %arg3[%c0_14, %c0_15] : memref<20x256xbf16, #tpu.memory_space<vmem>>, vector<20x256xbf16>
    %c0_16 = arith.constant 0 : index
    %c2 = arith.constant 2 : index
    %c0_17 = arith.constant 0 : index
    %c0_18 = arith.constant 0 : index
    %c0_19 = arith.constant 0 : index
    %13 = vector.load %arg2[%c0_16, %c2, %c0_17, %c0_18, %c0_19] : memref<4x4x1x256x64xbf16, #tpu.memory_space<vmem>>, vector<1x1x1x256x64xbf16>
    %14 = vector.shape_cast %13 : vector<1x1x1x256x64xbf16> to vector<256x64xbf16>
    %cst_20 = arith.constant dense<0.000000e+00> : vector<20x64xf32>
    %15 = tpu.matmul %12, %14, %cst_20 {dimension_numbers = #tpu.dot_dimension_numbers<[1], [0], [0], [1], [0, 0, 1, 1], [], []>} : vector<20x256xbf16>, vector<256x64xbf16>, vector<20x64xf32> -> vector<20x64xf32>
    %16 = arith.maximumf %11, %15 : vector<20x64xf32>
    %c0_21 = arith.constant 0 : index
    %c0_22 = arith.constant 0 : index
    %17 = vector.load %arg3[%c0_21, %c0_22] : memref<20x256xbf16, #tpu.memory_space<vmem>>, vector<20x256xbf16>
    %c0_23 = arith.constant 0 : index
    %c3 = arith.constant 3 : index
    %c0_24 = arith.constant 0 : index
    %c0_25 = arith.constant 0 : index
    %c0_26 = arith.constant 0 : index
    %18 = vector.load %arg2[%c0_23, %c3, %c0_24, %c0_25, %c0_26] : memref<4x4x1x256x64xbf16, #tpu.memory_space<vmem>>, vector<1x1x1x256x64xbf16>
    %19 = vector.shape_cast %18 : vector<1x1x1x256x64xbf16> to vector<256x64xbf16>
    %cst_27 = arith.constant dense<0.000000e+00> : vector<20x64xf32>
    %20 = tpu.matmul %17, %19, %cst_27 {dimension_numbers = #tpu.dot_dimension_numbers<[1], [0], [0], [1], [0, 0, 1, 1], [], []>} : vector<20x256xbf16>, vector<256x64xbf16>, vector<20x64xf32> -> vector<20x64xf32>
    %21 = arith.maximumf %16, %20 : vector<20x64xf32>
    %c0_28 = arith.constant 0 : index
    %c0_29 = arith.constant 0 : index
    %22 = vector.load %arg4[%c0_28, %c0_29] : memref<20x1xf32, #tpu.memory_space<vmem>>, vector<20x1xf32>
    %23 = vector.broadcast %22 : vector<20x1xf32> to vector<20x64xf32>
    %24 = arith.addf %21, %23 : vector<20x64xf32>
    %cst_30 = arith.constant 0.000000e+00 : f32
    %25 = vector.broadcast %cst_30 : f32 to vector<20x64xf32>
    %26 = arith.maximumf %24, %25 : vector<20x64xf32>
    %27 = arith.truncf %26 : vector<20x64xf32> to vector<20x64xbf16>
    %c4_i32 = arith.constant 4 : i32
    %28 = arith.muli %arg1, %c4_i32 : i32
    %c0_i32_31 = arith.constant 0 : i32
    %29 = arith.addi %28, %c0_i32_31 : i32
    %30 = arith.index_cast %29 : i32 to index
    %c0_32 = arith.constant 0 : index
    %c0_33 = arith.constant 0 : index
    %31 = vector.load %arg5[%30, %c0_32, %c0_33] : memref<16x50x20xbf16, #tpu.memory_space<vmem>>, vector<1x50x20xbf16>
    %32 = vector.shape_cast %31 : vector<1x50x20xbf16> to vector<50x20xbf16>
    %c0_34 = arith.constant 0 : index
    %c0_35 = arith.constant 0 : index
    %33 = vector.load %arg10[%c0_34, %c0_35] : memref<50x64xf32, #tpu.memory_space<vmem>>, vector<50x64xf32>
    %cst_36 = arith.constant dense<0.000000e+00> : vector<50x64xf32>
    %34 = tpu.matmul %32, %27, %cst_36 {dimension_numbers = #tpu.dot_dimension_numbers<[1], [0], [0], [1], [0, 0, 1, 1], [], []>} : vector<50x20xbf16>, vector<20x64xbf16>, vector<50x64xf32> -> vector<50x64xf32>
    %35 = arith.addf %33, %34 : vector<50x64xf32>
    %c0_37 = arith.constant 0 : index
    %c0_38 = arith.constant 0 : index
    %36 = vector.load %arg10[%c0_37, %c0_38] : memref<50x64xf32, #tpu.memory_space<vmem>>, vector<50x64xf32>
    tpu.vector_store %arg10[%c0_37, %c0_38], %35 {strides = array<i32>} : memref<50x64xf32, #tpu.memory_space<vmem>>, vector<50x64xf32>,
    %c0_39 = arith.constant 0 : index
    %c0_40 = arith.constant 0 : index
    %37 = vector.load %arg3[%c0_39, %c0_40] : memref<20x256xbf16, #tpu.memory_space<vmem>>, vector<20x256xbf16>
    %c1_41 = arith.constant 1 : index
    %c0_42 = arith.constant 0 : index
    %c0_43 = arith.constant 0 : index
    %c0_44 = arith.constant 0 : index
    %c0_45 = arith.constant 0 : index
    %38 = vector.load %arg2[%c1_41, %c0_42, %c0_43, %c0_44, %c0_45] : memref<4x4x1x256x64xbf16, #tpu.memory_space<vmem>>, vector<1x1x1x256x64xbf16>
    %39 = vector.shape_cast %38 : vector<1x1x1x256x64xbf16> to vector<256x64xbf16>
    %cst_46 = arith.constant dense<0.000000e+00> : vector<20x64xf32>
    %40 = tpu.matmul %37, %39, %cst_46 {dimension_numbers = #tpu.dot_dimension_numbers<[1], [0], [0], [1], [0, 0, 1, 1], [], []>} : vector<20x256xbf16>, vector<256x64xbf16>, vector<20x64xf32> -> vector<20x64xf32>
    %c0_47 = arith.constant 0 : index
    %c0_48 = arith.constant 0 : index
    %41 = vector.load %arg3[%c0_47, %c0_48] : memref<20x256xbf16, #tpu.memory_space<vmem>>, vector<20x256xbf16>
    %c1_49 = arith.constant 1 : index
    %c1_50 = arith.constant 1 : index
    %c0_51 = arith.constant 0 : index
    %c0_52 = arith.constant 0 : index
    %c0_53 = arith.constant 0 : index
    %42 = vector.load %arg2[%c1_49, %c1_50, %c0_51, %c0_52, %c0_53] : memref<4x4x1x256x64xbf16, #tpu.memory_space<vmem>>, vector<1x1x1x256x64xbf16>
    %43 = vector.shape_cast %42 : vector<1x1x1x256x64xbf16> to vector<256x64xbf16>
    %cst_54 = arith.constant dense<0.000000e+00> : vector<20x64xf32>
    %44 = tpu.matmul %41, %43, %cst_54 {dimension_numbers = #tpu.dot_dimension_numbers<[1], [0], [0], [1], [0, 0, 1, 1], [], []>} : vector<20x256xbf16>, vector<256x64xbf16>, vector<20x64xf32> -> vector<20x64xf32>
    %45 = arith.maximumf %40, %44 : vector<20x64xf32>
    %c0_55 = arith.constant 0 : index
    %c0_56 = arith.constant 0 : index
    %46 = vector.load %arg3[%c0_55, %c0_56] : memref<20x256xbf16, #tpu.memory_space<vmem>>, vector<20x256xbf16>
    %c1_57 = arith.constant 1 : index
    %c2_58 = arith.constant 2 : index
    %c0_59 = arith.constant 0 : index
    %c0_60 = arith.constant 0 : index
    %c0_61 = arith.constant 0 : index
    %47 = vector.load %arg2[%c1_57, %c2_58, %c0_59, %c0_60, %c0_61] : memref<4x4x1x256x64xbf16, #tpu.memory_space<vmem>>, vector<1x1x1x256x64xbf16>
    %48 = vector.shape_cast %47 : vector<1x1x1x256x64xbf16> to vector<256x64xbf16>
    %cst_62 = arith.constant dense<0.000000e+00> : vector<20x64xf32>
    %49 = tpu.matmul %46, %48, %cst_62 {dimension_numbers = #tpu.dot_dimension_numbers<[1], [0], [0], [1], [0, 0, 1, 1], [], []>} : vector<20x256xbf16>, vector<256x64xbf16>, vector<20x64xf32> -> vector<20x64xf32>
    %50 = arith.maximumf %45, %49 : vector<20x64xf32>
    %c0_63 = arith.constant 0 : index
    %c0_64 = arith.constant 0 : index
    %51 = vector.load %arg3[%c0_63, %c0_64] : memref<20x256xbf16, #tpu.memory_space<vmem>>, vector<20x256xbf16>
    %c1_65 = arith.constant 1 : index
    %c3_66 = arith.constant 3 : index
    %c0_67 = arith.constant 0 : index
    %c0_68 = arith.constant 0 : index
    %c0_69 = arith.constant 0 : index
    %52 = vector.load %arg2[%c1_65, %c3_66, %c0_67, %c0_68, %c0_69] : memref<4x4x1x256x64xbf16, #tpu.memory_space<vmem>>, vector<1x1x1x256x64xbf16>
    %53 = vector.shape_cast %52 : vector<1x1x1x256x64xbf16> to vector<256x64xbf16>
    %cst_70 = arith.constant dense<0.000000e+00> : vector<20x64xf32>
    %54 = tpu.matmul %51, %53, %cst_70 {dimension_numbers = #tpu.dot_dimension_numbers<[1], [0], [0], [1], [0, 0, 1, 1], [], []>} : vector<20x256xbf16>, vector<256x64xbf16>, vector<20x64xf32> -> vector<20x64xf32>
    %55 = arith.maximumf %50, %54 : vector<20x64xf32>
    %c0_71 = arith.constant 0 : index
    %c0_72 = arith.constant 0 : index
    %56 = vector.load %arg4[%c0_71, %c0_72] : memref<20x1xf32, #tpu.memory_space<vmem>>, vector<20x1xf32>
    %57 = vector.broadcast %56 : vector<20x1xf32> to vector<20x64xf32>
    %58 = arith.addf %55, %57 : vector<20x64xf32>
    %cst_73 = arith.constant 0.000000e+00 : f32
    %59 = vector.broadcast %cst_73 : f32 to vector<20x64xf32>
    %60 = arith.maximumf %58, %59 : vector<20x64xf32>
    %61 = arith.truncf %60 : vector<20x64xf32> to vector<20x64xbf16>
    %c4_i32_74 = arith.constant 4 : i32
    %62 = arith.muli %arg1, %c4_i32_74 : i32
    %c1_i32 = arith.constant 1 : i32
    %63 = arith.addi %62, %c1_i32 : i32
    %64 = arith.index_cast %63 : i32 to index
    %c0_75 = arith.constant 0 : index
    %c0_76 = arith.constant 0 : index
    %65 = vector.load %arg5[%64, %c0_75, %c0_76] : memref<16x50x20xbf16, #tpu.memory_space<vmem>>, vector<1x50x20xbf16>
    %66 = vector.shape_cast %65 : vector<1x50x20xbf16> to vector<50x20xbf16>
    %c0_77 = arith.constant 0 : index
    %c0_78 = arith.constant 0 : index
    %67 = vector.load %arg10[%c0_77, %c0_78] : memref<50x64xf32, #tpu.memory_space<vmem>>, vector<50x64xf32>
    %cst_79 = arith.constant dense<0.000000e+00> : vector<50x64xf32>
    %68 = tpu.matmul %66, %61, %cst_79 {dimension_numbers = #tpu.dot_dimension_numbers<[1], [0], [0], [1], [0, 0, 1, 1], [], []>} : vector<50x20xbf16>, vector<20x64xbf16>, vector<50x64xf32> -> vector<50x64xf32>
    %69 = arith.addf %67, %68 : vector<50x64xf32>
    %c0_80 = arith.constant 0 : index
    %c0_81 = arith.constant 0 : index
    %70 = vector.load %arg10[%c0_80, %c0_81] : memref<50x64xf32, #tpu.memory_space<vmem>>, vector<50x64xf32>
    tpu.vector_store %arg10[%c0_80, %c0_81], %69 {strides = array<i32>} : memref<50x64xf32, #tpu.memory_space<vmem>>, vector<50x64xf32>,
    %c0_82 = arith.constant 0 : index
    %c0_83 = arith.constant 0 : index
    %71 = vector.load %arg3[%c0_82, %c0_83] : memref<20x256xbf16, #tpu.memory_space<vmem>>, vector<20x256xbf16>
    %c2_84 = arith.constant 2 : index
    %c0_85 = arith.constant 0 : index
    %c0_86 = arith.constant 0 : index
    %c0_87 = arith.constant 0 : index
    %c0_88 = arith.constant 0 : index
    %72 = vector.load %arg2[%c2_84, %c0_85, %c0_86, %c0_87, %c0_88] : memref<4x4x1x256x64xbf16, #tpu.memory_space<vmem>>, vector<1x1x1x256x64xbf16>
    %73 = vector.shape_cast %72 : vector<1x1x1x256x64xbf16> to vector<256x64xbf16>
    %cst_89 = arith.constant dense<0.000000e+00> : vector<20x64xf32>
    %74 = tpu.matmul %71, %73, %cst_89 {dimension_numbers = #tpu.dot_dimension_numbers<[1], [0], [0], [1], [0, 0, 1, 1], [], []>} : vector<20x256xbf16>, vector<256x64xbf16>, vector<20x64xf32> -> vector<20x64xf32>
    %c0_90 = arith.constant 0 : index
    %c0_91 = arith.constant 0 : index
    %75 = vector.load %arg3[%c0_90, %c0_91] : memref<20x256xbf16, #tpu.memory_space<vmem>>, vector<20x256xbf16>
    %c2_92 = arith.constant 2 : index
    %c1_93 = arith.constant 1 : index
    %c0_94 = arith.constant 0 : index
    %c0_95 = arith.constant 0 : index
    %c0_96 = arith.constant 0 : index
    %76 = vector.load %arg2[%c2_92, %c1_93, %c0_94, %c0_95, %c0_96] : memref<4x4x1x256x64xbf16, #tpu.memory_space<vmem>>, vector<1x1x1x256x64xbf16>
    %77 = vector.shape_cast %76 : vector<1x1x1x256x64xbf16> to vector<256x64xbf16>
    %cst_97 = arith.constant dense<0.000000e+00> : vector<20x64xf32>
    %78 = tpu.matmul %75, %77, %cst_97 {dimension_numbers = #tpu.dot_dimension_numbers<[1], [0], [0], [1], [0, 0, 1, 1], [], []>} : vector<20x256xbf16>, vector<256x64xbf16>, vector<20x64xf32> -> vector<20x64xf32>
    %79 = arith.maximumf %74, %78 : vector<20x64xf32>
    %c0_98 = arith.constant 0 : index
    %c0_99 = arith.constant 0 : index
    %80 = vector.load %arg3[%c0_98, %c0_99] : memref<20x256xbf16, #tpu.memory_space<vmem>>, vector<20x256xbf16>
    %c2_100 = arith.constant 2 : index
    %c2_101 = arith.constant 2 : index
    %c0_102 = arith.constant 0 : index
    %c0_103 = arith.constant 0 : index
    %c0_104 = arith.constant 0 : index
    %81 = vector.load %arg2[%c2_100, %c2_101, %c0_102, %c0_103, %c0_104] : memref<4x4x1x256x64xbf16, #tpu.memory_space<vmem>>, vector<1x1x1x256x64xbf16>
    %82 = vector.shape_cast %81 : vector<1x1x1x256x64xbf16> to vector<256x64xbf16>
    %cst_105 = arith.constant dense<0.000000e+00> : vector<20x64xf32>
    %83 = tpu.matmul %80, %82, %cst_105 {dimension_numbers = #tpu.dot_dimension_numbers<[1], [0], [0], [1], [0, 0, 1, 1], [], []>} : vector<20x256xbf16>, vector<256x64xbf16>, vector<20x64xf32> -> vector<20x64xf32>
    %84 = arith.maximumf %79, %83 : vector<20x64xf32>
    %c0_106 = arith.constant 0 : index
    %c0_107 = arith.constant 0 : index
    %85 = vector.load %arg3[%c0_106, %c0_107] : memref<20x256xbf16, #tpu.memory_space<vmem>>, vector<20x256xbf16>
    %c2_108 = arith.constant 2 : index
    %c3_109 = arith.constant 3 : index
    %c0_110 = arith.constant 0 : index
    %c0_111 = arith.constant 0 : index
    %c0_112 = arith.constant 0 : index
    %86 = vector.load %arg2[%c2_108, %c3_109, %c0_110, %c0_111, %c0_112] : memref<4x4x1x256x64xbf16, #tpu.memory_space<vmem>>, vector<1x1x1x256x64xbf16>
    %87 = vector.shape_cast %86 : vector<1x1x1x256x64xbf16> to vector<256x64xbf16>
    %cst_113 = arith.constant dense<0.000000e+00> : vector<20x64xf32>
    %88 = tpu.matmul %85, %87, %cst_113 {dimension_numbers = #tpu.dot_dimension_numbers<[1], [0], [0], [1], [0, 0, 1, 1], [], []>} : vector<20x256xbf16>, vector<256x64xbf16>, vector<20x64xf32> -> vector<20x64xf32>
    %89 = arith.maximumf %84, %88 : vector<20x64xf32>
    %c0_114 = arith.constant 0 : index
    %c0_115 = arith.constant 0 : index
    %90 = vector.load %arg4[%c0_114, %c0_115] : memref<20x1xf32, #tpu.memory_space<vmem>>, vector<20x1xf32>
    %91 = vector.broadcast %90 : vector<20x1xf32> to vector<20x64xf32>
    %92 = arith.addf %89, %91 : vector<20x64xf32>
    %cst_116 = arith.constant 0.000000e+00 : f32
    %93 = vector.broadcast %cst_116 : f32 to vector<20x64xf32>
    %94 = arith.maximumf %92, %93 : vector<20x64xf32>
    %95 = arith.truncf %94 : vector<20x64xf32> to vector<20x64xbf16>
    %c4_i32_117 = arith.constant 4 : i32
    %96 = arith.muli %arg1, %c4_i32_117 : i32
    %c2_i32 = arith.constant 2 : i32
    %97 = arith.addi %96, %c2_i32 : i32
    %98 = arith.index_cast %97 : i32 to index
    %c0_118 = arith.constant 0 : index
    %c0_119 = arith.constant 0 : index
    %99 = vector.load %arg5[%98, %c0_118, %c0_119] : memref<16x50x20xbf16, #tpu.memory_space<vmem>>, vector<1x50x20xbf16>
    %100 = vector.shape_cast %99 : vector<1x50x20xbf16> to vector<50x20xbf16>
    %c0_120 = arith.constant 0 : index
    %c0_121 = arith.constant 0 : index
    %101 = vector.load %arg10[%c0_120, %c0_121] : memref<50x64xf32, #tpu.memory_space<vmem>>, vector<50x64xf32>
    %cst_122 = arith.constant dense<0.000000e+00> : vector<50x64xf32>
    %102 = tpu.matmul %100, %95, %cst_122 {dimension_numbers = #tpu.dot_dimension_numbers<[1], [0], [0], [1], [0, 0, 1, 1], [], []>} : vector<50x20xbf16>, vector<20x64xbf16>, vector<50x64xf32> -> vector<50x64xf32>
    %103 = arith.addf %101, %102 : vector<50x64xf32>
    %c0_123 = arith.constant 0 : index
    %c0_124 = arith.constant 0 : index
    %104 = vector.load %arg10[%c0_123, %c0_124] : memref<50x64xf32, #tpu.memory_space<vmem>>, vector<50x64xf32>
    tpu.vector_store %arg10[%c0_123, %c0_124], %103 {strides = array<i32>} : memref<50x64xf32, #tpu.memory_space<vmem>>, vector<50x64xf32>,
    %c0_125 = arith.constant 0 : index
    %c0_126 = arith.constant 0 : index
    %105 = vector.load %arg3[%c0_125, %c0_126] : memref<20x256xbf16, #tpu.memory_space<vmem>>, vector<20x256xbf16>
    %c3_127 = arith.constant 3 : index
    %c0_128 = arith.constant 0 : index
    %c0_129 = arith.constant 0 : index
    %c0_130 = arith.constant 0 : index
    %c0_131 = arith.constant 0 : index
    %106 = vector.load %arg2[%c3_127, %c0_128, %c0_129, %c0_130, %c0_131] : memref<4x4x1x256x64xbf16, #tpu.memory_space<vmem>>, vector<1x1x1x256x64xbf16>
    %107 = vector.shape_cast %106 : vector<1x1x1x256x64xbf16> to vector<256x64xbf16>
    %cst_132 = arith.constant dense<0.000000e+00> : vector<20x64xf32>
    %108 = tpu.matmul %105, %107, %cst_132 {dimension_numbers = #tpu.dot_dimension_numbers<[1], [0], [0], [1], [0, 0, 1, 1], [], []>} : vector<20x256xbf16>, vector<256x64xbf16>, vector<20x64xf32> -> vector<20x64xf32>
    %c0_133 = arith.constant 0 : index
    %c0_134 = arith.constant 0 : index
    %109 = vector.load %arg3[%c0_133, %c0_134] : memref<20x256xbf16, #tpu.memory_space<vmem>>, vector<20x256xbf16>
    %c3_135 = arith.constant 3 : index
    %c1_136 = arith.constant 1 : index
    %c0_137 = arith.constant 0 : index
    %c0_138 = arith.constant 0 : index
    %c0_139 = arith.constant 0 : index
    %110 = vector.load %arg2[%c3_135, %c1_136, %c0_137, %c0_138, %c0_139] : memref<4x4x1x256x64xbf16, #tpu.memory_space<vmem>>, vector<1x1x1x256x64xbf16>
    %111 = vector.shape_cast %110 : vector<1x1x1x256x64xbf16> to vector<256x64xbf16>
    %cst_140 = arith.constant dense<0.000000e+00> : vector<20x64xf32>
    %112 = tpu.matmul %109, %111, %cst_140 {dimension_numbers = #tpu.dot_dimension_numbers<[1], [0], [0], [1], [0, 0, 1, 1], [], []>} : vector<20x256xbf16>, vector<256x64xbf16>, vector<20x64xf32> -> vector<20x64xf32>
    %113 = arith.maximumf %108, %112 : vector<20x64xf32>
    %c0_141 = arith.constant 0 : index
    %c0_142 = arith.constant 0 : index
    %114 = vector.load %arg3[%c0_141, %c0_142] : memref<20x256xbf16, #tpu.memory_space<vmem>>, vector<20x256xbf16>
    %c3_143 = arith.constant 3 : index
    %c2_144 = arith.constant 2 : index
    %c0_145 = arith.constant 0 : index
    %c0_146 = arith.constant 0 : index
    %c0_147 = arith.constant 0 : index
    %115 = vector.load %arg2[%c3_143, %c2_144, %c0_145, %c0_146, %c0_147] : memref<4x4x1x256x64xbf16, #tpu.memory_space<vmem>>, vector<1x1x1x256x64xbf16>
    %116 = vector.shape_cast %115 : vector<1x1x1x256x64xbf16> to vector<256x64xbf16>
    %cst_148 = arith.constant dense<0.000000e+00> : vector<20x64xf32>
    %117 = tpu.matmul %114, %116, %cst_148 {dimension_numbers = #tpu.dot_dimension_numbers<[1], [0], [0], [1], [0, 0, 1, 1], [], []>} : vector<20x256xbf16>, vector<256x64xbf16>, vector<20x64xf32> -> vector<20x64xf32>
    %118 = arith.maximumf %113, %117 : vector<20x64xf32>
    %c0_149 = arith.constant 0 : index
    %c0_150 = arith.constant 0 : index
    %119 = vector.load %arg3[%c0_149, %c0_150] : memref<20x256xbf16, #tpu.memory_space<vmem>>, vector<20x256xbf16>
    %c3_151 = arith.constant 3 : index
    %c3_152 = arith.constant 3 : index
    %c0_153 = arith.constant 0 : index
    %c0_154 = arith.constant 0 : index
    %c0_155 = arith.constant 0 : index
    %120 = vector.load %arg2[%c3_151, %c3_152, %c0_153, %c0_154, %c0_155] : memref<4x4x1x256x64xbf16, #tpu.memory_space<vmem>>, vector<1x1x1x256x64xbf16>
    %121 = vector.shape_cast %120 : vector<1x1x1x256x64xbf16> to vector<256x64xbf16>
    %cst_156 = arith.constant dense<0.000000e+00> : vector<20x64xf32>
    %122 = tpu.matmul %119, %121, %cst_156 {dimension_numbers = #tpu.dot_dimension_numbers<[1], [0], [0], [1], [0, 0, 1, 1], [], []>} : vector<20x256xbf16>, vector<256x64xbf16>, vector<20x64xf32> -> vector<20x64xf32>
    %123 = arith.maximumf %118, %122 : vector<20x64xf32>
    %c0_157 = arith.constant 0 : index
    %c0_158 = arith.constant 0 : index
    %124 = vector.load %arg4[%c0_157, %c0_158] : memref<20x1xf32, #tpu.memory_space<vmem>>, vector<20x1xf32>
    %125 = vector.broadcast %124 : vector<20x1xf32> to vector<20x64xf32>
    %126 = arith.addf %123, %125 : vector<20x64xf32>
    %cst_159 = arith.constant 0.000000e+00 : f32
    %127 = vector.broadcast %cst_159 : f32 to vector<20x64xf32>
    %128 = arith.maximumf %126, %127 : vector<20x64xf32>
    %129 = arith.truncf %128 : vector<20x64xf32> to vector<20x64xbf16>
    %c4_i32_160 = arith.constant 4 : i32
    %130 = arith.muli %arg1, %c4_i32_160 : i32
    %c3_i32 = arith.constant 3 : i32
    %131 = arith.addi %130, %c3_i32 : i32
    %132 = arith.index_cast %131 : i32 to index
    %c0_161 = arith.constant 0 : index
    %c0_162 = arith.constant 0 : index
    %133 = vector.load %arg5[%132, %c0_161, %c0_162] : memref<16x50x20xbf16, #tpu.memory_space<vmem>>, vector<1x50x20xbf16>
    %134 = vector.shape_cast %133 : vector<1x50x20xbf16> to vector<50x20xbf16>
    %c0_163 = arith.constant 0 : index
    %c0_164 = arith.constant 0 : index
    %135 = vector.load %arg10[%c0_163, %c0_164] : memref<50x64xf32, #tpu.memory_space<vmem>>, vector<50x64xf32>
    %cst_165 = arith.constant dense<0.000000e+00> : vector<50x64xf32>
    %136 = tpu.matmul %134, %129, %cst_165 {dimension_numbers = #tpu.dot_dimension_numbers<[1], [0], [0], [1], [0, 0, 1, 1], [], []>} : vector<50x20xbf16>, vector<20x64xbf16>, vector<50x64xf32> -> vector<50x64xf32>
    %137 = arith.addf %135, %136 : vector<50x64xf32>
    %c0_166 = arith.constant 0 : index
    %c0_167 = arith.constant 0 : index
    %138 = vector.load %arg10[%c0_166, %c0_167] : memref<50x64xf32, #tpu.memory_space<vmem>>, vector<50x64xf32>
    tpu.vector_store %arg10[%c0_166, %c0_167], %137 {strides = array<i32>} : memref<50x64xf32, #tpu.memory_space<vmem>>, vector<50x64xf32>,
    %c3_i32_168 = arith.constant 3 : i32
    %139 = arith.cmpi eq, %arg1, %c3_i32_168 : i32
    %140 = arith.extui %139 : i1 to i32
    %c0_i32_169 = arith.constant 0 : i32
    %141 = arith.cmpi ne, %140, %c0_i32_169 : i32
    scf.if %141 {
      %c0_170 = arith.constant 0 : index
      %c0_171 = arith.constant 0 : index
      %142 = vector.load %arg10[%c0_170, %c0_171] : memref<50x64xf32, #tpu.memory_space<vmem>>, vector<50x64xf32>
      %c0_172 = arith.constant 0 : index
      %c0_173 = arith.constant 0 : index
      %143 = vector.load %arg6[%c0_172, %c0_173] : memref<50x1xf32, #tpu.memory_space<vmem>>, vector<50x1xf32>
      %144 = vector.broadcast %143 : vector<50x1xf32> to vector<50x64xf32>
      %145 = arith.addf %142, %144 : vector<50x64xf32>
      %cst_174 = arith.constant 0.000000e+00 : f32
      %146 = vector.broadcast %cst_174 : f32 to vector<50x64xf32>
      %147 = arith.maximumf %145, %146 : vector<50x64xf32>
      %148 = arith.truncf %147 : vector<50x64xf32> to vector<50x64xbf16>
      %c0_175 = arith.constant 0 : index
      %c0_176 = arith.constant 0 : index
      %149 = vector.load %arg7[%c0_175, %c0_176] : memref<10x50xbf16, #tpu.memory_space<vmem>>, vector<10x50xbf16>
      %cst_177 = arith.constant dense<0.000000e+00> : vector<10x64xf32>
      %150 = tpu.matmul %149, %148, %cst_177 {dimension_numbers = #tpu.dot_dimension_numbers<[1], [0], [0], [1], [0, 0, 1, 1], [], []>} : vector<10x50xbf16>, vector<50x64xbf16>, vector<10x64xf32> -> vector<10x64xf32>
      %c0_178 = arith.constant 0 : index
      %c0_179 = arith.constant 0 : index
      %151 = vector.load %arg8[%c0_178, %c0_179] : memref<10x1xf32, #tpu.memory_space<vmem>>, vector<10x1xf32>
      %152 = vector.broadcast %151 : vector<10x1xf32> to vector<10x64xf32>
      %153 = arith.addf %150, %152 : vector<10x64xf32>
      %c0_180 = arith.constant 0 : index
      %c0_181 = arith.constant 0 : index
      %c0_182 = arith.constant 0 : index
      %154 = vector.load %arg9[%c0_180, %c0_181, %c0_182] : memref<1x10x64xf32, #tpu.memory_space<vmem>>, vector<1x10x64xf32>
      %155 = vector.shape_cast %154 : vector<1x10x64xf32> to vector<10x64xf32>
      %156 = vector.shape_cast %153 : vector<10x64xf32> to vector<1x10x64xf32>
      tpu.vector_store %arg9[%c0_180, %c0_181, %c0_182], %156 {strides = array<i32>} : memref<1x10x64xf32, #tpu.memory_space<vmem>>, vector<1x10x64xf32>,
    } else {
    }
    return
  }
  func.func @transform_0(%arg0: i32, %arg1: i32) -> (i32, i32, i32, i32, i32) {
    %c0_i32 = arith.constant 0 : i32
    %c0_i32_0 = arith.constant 0 : i32
    %c0_i32_1 = arith.constant 0 : i32
    %c0_i32_2 = arith.constant 0 : i32
    return %arg1, %c0_i32, %arg0, %c0_i32_0, %c0_i32_1 : i32, i32, i32, i32, i32
  }
  func.func @transform_1(%arg0: i32, %arg1: i32) -> (i32, i32) {
    %c0_i32 = arith.constant 0 : i32
    %c0_i32_0 = arith.constant 0 : i32
    %c0_i32_1 = arith.constant 0 : i32
    return %c0_i32, %c0_i32_0 : i32, i32
  }
  func.func @transform_2(%arg0: i32, %arg1: i32) -> (i32, i32) {
    %c0_i32 = arith.constant 0 : i32
    %c0_i32_0 = arith.constant 0 : i32
    %c0_i32_1 = arith.constant 0 : i32
    return %c0_i32, %c0_i32_0 : i32, i32
  }
  func.func @transform_3(%arg0: i32, %arg1: i32) -> (i32, i32, i32) {
    %c0_i32 = arith.constant 0 : i32
    %c0_i32_0 = arith.constant 0 : i32
    %c0_i32_1 = arith.constant 0 : i32
    %c0_i32_2 = arith.constant 0 : i32
    return %c0_i32, %c0_i32_0, %c0_i32_1 : i32, i32, i32
  }
  func.func @transform_4(%arg0: i32, %arg1: i32) -> (i32, i32) {
    %c0_i32 = arith.constant 0 : i32
    %c0_i32_0 = arith.constant 0 : i32
    %c0_i32_1 = arith.constant 0 : i32
    return %c0_i32, %c0_i32_0 : i32, i32
  }
  func.func @transform_5(%arg0: i32, %arg1: i32) -> (i32, i32) {
    %c0_i32 = arith.constant 0 : i32
    %c0_i32_0 = arith.constant 0 : i32
    %c0_i32_1 = arith.constant 0 : i32
    return %c0_i32, %c0_i32_0 : i32, i32
  }
  func.func @transform_6(%arg0: i32, %arg1: i32) -> (i32, i32) {
    %c0_i32 = arith.constant 0 : i32
    %c0_i32_0 = arith.constant 0 : i32
    %c0_i32_1 = arith.constant 0 : i32
    return %c0_i32, %c0_i32_0 : i32, i32
  }
  func.func @transform_7(%arg0: i32, %arg1: i32) -> (i32, i32, i32) {
    %c0_i32 = arith.constant 0 : i32
    %c0_i32_0 = arith.constant 0 : i32
    %c0_i32_1 = arith.constant 0 : i32
    return %arg0, %c0_i32, %c0_i32_0 : i32, i32, i32
  }
}

</mosaic_0001>

<llo_original>
// kernel: net_forward.2
$region0: #{net_forward.2}
  #allocation0 [shape = 'u32[]', space=smem, size = 0x4, offset = 0x4, fixed_abs, tag = 'smem constant byte address 0x4 - core index']
  #allocation1 [shape = 'u32[72,128]{1,0:T(1,128)}', space=vmem, size = 0x9000, scoped, tag = 'internal scratch']
  %s0 = inlined_call_operand.vmem [shape: bf16[4,32,1024], index: 0, kind: input, shape index: {}]
  %s1 = inlined_call_operand.vmem [shape: bf16[10,32], index: 1, kind: input, shape index: {}]
  %s2 = inlined_call_operand.vmem [shape: f32[10,1], index: 2, kind: input, shape index: {}]
  %s3 = inlined_call_operand.vmem [shape: bf16[10,1024], index: 3, kind: output, shape index: {}]
  %s4 = sld [smem:[#allocation0]]
  $region22: #{net_forward.2} parent=0
    _
  %s6 = ssub.s32 1, %s4
  %s7 = scalar_select 0, %s6, %s4
  // Predicated region
  $region2: #{net_forward.2} parent=0 // pred_check
    _
  $region3: #{net_forward.2} parent=0 // pred_check_branch
    %9 = sbr.rel (0) target = $region5
  $region4: #{net_forward.2} parent=0 // pred_region
    _
  $region5: #{net_forward.2} parent=0 // pred_fallthru
    _
  // Predicated region
  $region6: #{net_forward.2} parent=0 // pred_check
    _
  $region7: #{net_forward.2} parent=0 // pred_check_branch
    %11 = sbr.rel (0) target = $region9
  $region8: #{net_forward.2} parent=0 // pred_region
    _
  $region9: #{net_forward.2} parent=0 // pred_fallthru
    _
  // Predicated region
  $region10: #{net_forward.2} parent=0 // pred_check
    _
  $region11: #{net_forward.2} parent=0 // pred_check_branch
    %13 = sbr.rel (0) target = $region13
  $region12: #{net_forward.2} parent=0 // pred_region
    _
  $region13: #{net_forward.2} parent=0 // pred_fallthru
    _
  %v15 = vld [vmem:[%s1] sm:$0xf]
  %v16 = vld [vmem:[%s1 + $0x4] sm:$0x1]
  %v17 = vld [vmem:[%s0] sm:$0xff]
  %v18 = vld [vmem:[%s0 + $0x8] sm:$0xff]
  %v19 = vld [vmem:[%s0 + $0x10] sm:$0xff]
  %v20 = vld [vmem:[%s0 + $0x18] sm:$0xff]
  %v21 = vld [vmem:[%s0 + $0x20] sm:$0xff]
  %v22 = vld [vmem:[%s0 + $0x28] sm:$0xff]
  %v23 = vld [vmem:[%s0 + $0x30] sm:$0xff]
  %v24 = vld [vmem:[%s0 + $0x38] sm:$0xff]
  %v25 = vld [vmem:[%s0 + $0x40] sm:$0xff]
  %v26 = vld [vmem:[%s0 + $0x48] sm:$0xff]
  %v27 = vld [vmem:[%s0 + $0x50] sm:$0xff]
  %v28 = vld [vmem:[%s0 + $0x58] sm:$0xff]
  %v29 = vld [vmem:[%s0 + $0x60] sm:$0xff]
  %v30 = vld [vmem:[%s0 + $0x68] sm:$0xff]
  %v31 = vld [vmem:[%s0 + $0x70] sm:$0xff]
  %v32 = vld [vmem:[%s0 + $0x78] sm:$0xff]
  %v35 = vunpack.c.l.b16 %v15
  %v36 = vunpack.c.l.b16 %v16
  %v37 = vpack.c.b16 %v36, %v35
  %v54 = vunpack.c.l.b16 %v17
  %v55 = vunpack.c.h.b16 %v17
  %v56 = vunpack.c.l.b16 %v18
  %v57 = vunpack.c.h.b16 %v18
  %v58 = vunpack.c.l.b16 %v19
  %v59 = vunpack.c.h.b16 %v19
  %v60 = vunpack.c.l.b16 %v20
  %v61 = vunpack.c.h.b16 %v20
  %v62 = vunpack.c.l.b16 %v21
  %v63 = vunpack.c.h.b16 %v21
  %v64 = vunpack.c.l.b16 %v22
  %v65 = vunpack.c.h.b16 %v22
  %v66 = vunpack.c.l.b16 %v23
  %v67 = vunpack.c.h.b16 %v23
  %v68 = vunpack.c.l.b16 %v24
  %v69 = vunpack.c.h.b16 %v24
  %v70 = vunpack.c.l.b16 %v25
  %v71 = vunpack.c.h.b16 %v25
  %v72 = vunpack.c.l.b16 %v26
  %v73 = vunpack.c.h.b16 %v26
  %v74 = vunpack.c.l.b16 %v27
  %v75 = vunpack.c.h.b16 %v27
  %v76 = vunpack.c.l.b16 %v28
  %v77 = vunpack.c.h.b16 %v28
  %v78 = vunpack.c.l.b16 %v29
  %v79 = vunpack.c.h.b16 %v29
  %v80 = vunpack.c.l.b16 %v30
  %v81 = vunpack.c.h.b16 %v30
  %v82 = vunpack.c.l.b16 %v31
  %v83 = vunpack.c.h.b16 %v31
  %v84 = vunpack.c.l.b16 %v32
  %v85 = vunpack.c.h.b16 %v32
  %v86 = vpack.c.b16 %v62, %v54
  %v87 = vpack.c.b16 %v63, %v55
  %v88 = vpack.c.b16 %v64, %v56
  %v89 = vpack.c.b16 %v65, %v57
  %v90 = vpack.c.b16 %v66, %v58
  %v91 = vpack.c.b16 %v67, %v59
  %v92 = vpack.c.b16 %v68, %v60
  %v93 = vpack.c.b16 %v69, %v61
  %v94 = vpack.c.b16 %v78, %v70
  %v95 = vpack.c.b16 %v79, %v71
  %v96 = vpack.c.b16 %v80, %v72
  %v97 = vpack.c.b16 %v81, %v73
  %v98 = vpack.c.b16 %v82, %v74
  %v99 = vpack.c.b16 %v83, %v75
  %v100 = vpack.c.b16 %v84, %v76
  %v101 = vpack.c.b16 %v85, %v77
  %vm118 = vcmask 261120
  %v120 = vsel %vm118, %v37, 0
  %122 = vmatpush.bf16.msra.mxu0 0
  %123 = vmatpush.bf16.msra.mxu0 0
  %124 = vmatpush.bf16.msra.mxu0 0
  %125 = vmatpush.bf16.msra.mxu0 0
  %126 = vmatpush.bf16.msra.mxu0 0
  %127 = vmatpush.bf16.msra.mxu0 0
  %128 = vmatpush.bf16.msra.mxu0 %v94
  %129 = vmatpush.bf16.msra.mxu0 %v86
  %130 = vmatmul.bf16.gmra.mxu0 %v120
  %v131 = vpop.f32.mrf.mxu0
  %v132 = vadd.f32 0.0, %v131
  %v133 = vpop.f32.mrf.mxu0
  %v134 = vadd.f32 0.0, %v133
  %135 = vdwg.mxu0
  %136 = vmatpush.bf16.msra.mxu0 0
  %137 = vmatpush.bf16.msra.mxu0 0
  %138 = vmatpush.bf16.msra.mxu0 0
  %139 = vmatpush.bf16.msra.mxu0 0
  %140 = vmatpush.bf16.msra.mxu0 0
  %141 = vmatpush.bf16.msra.mxu0 0
  %142 = vmatpush.bf16.msra.mxu0 %v95
  %143 = vmatpush.bf16.msra.mxu0 %v87
  %144 = vmatmul.bf16.gmra.mxu0 %v120
  %v145 = vpop.f32.mrf.mxu0
  %v146 = vadd.f32 0.0, %v145
  %v147 = vpop.f32.mrf.mxu0
  %v148 = vadd.f32 0.0, %v147
  %149 = vdwg.mxu0
  %150 = vmatpush.bf16.msra.mxu0 0
  %151 = vmatpush.bf16.msra.mxu0 0
  %152 = vmatpush.bf16.msra.mxu0 0
  %153 = vmatpush.bf16.msra.mxu0 0
  %154 = vmatpush.bf16.msra.mxu0 0
  %155 = vmatpush.bf16.msra.mxu0 0
  %156 = vmatpush.bf16.msra.mxu0 %v96
  %157 = vmatpush.bf16.msra.mxu0 %v88
  %158 = vmatmul.bf16.gmra.mxu0 %v120
  %v159 = vpop.f32.mrf.mxu0
  %v160 = vadd.f32 0.0, %v159
  %v161 = vpop.f32.mrf.mxu0
  %v162 = vadd.f32 0.0, %v161
  %163 = vdwg.mxu0
  %164 = vmatpush.bf16.msra.mxu0 0
  %165 = vmatpush.bf16.msra.mxu0 0
  %166 = vmatpush.bf16.msra.mxu0 0
  %167 = vmatpush.bf16.msra.mxu0 0
  %168 = vmatpush.bf16.msra.mxu0 0
  %169 = vmatpush.bf16.msra.mxu0 0
  %170 = vmatpush.bf16.msra.mxu0 %v97
  %171 = vmatpush.bf16.msra.mxu0 %v89
  %172 = vmatmul.bf16.gmra.mxu0 %v120
  %v173 = vpop.f32.mrf.mxu0
  %v174 = vadd.f32 0.0, %v173
  %v175 = vpop.f32.mrf.mxu0
  %v176 = vadd.f32 0.0, %v175
  %177 = vdwg.mxu0
  %178 = vmatpush.bf16.msra.mxu0 0
  %179 = vmatpush.bf16.msra.mxu0 0
  %180 = vmatpush.bf16.msra.mxu0 0
  %181 = vmatpush.bf16.msra.mxu0 0
  %182 = vmatpush.bf16.msra.mxu0 0
  %183 = vmatpush.bf16.msra.mxu0 0
  %184 = vmatpush.bf16.msra.mxu0 %v98
  %185 = vmatpush.bf16.msra.mxu0 %v90
  %186 = vmatmul.bf16.gmra.mxu0 %v120
  %v187 = vpop.f32.mrf.mxu0
  %v188 = vadd.f32 0.0, %v187
  %v189 = vpop.f32.mrf.mxu0
  %v190 = vadd.f32 0.0, %v189
  %191 = vdwg.mxu0
  %192 = vmatpush.bf16.msra.mxu0 0
  %193 = vmatpush.bf16.msra.mxu0 0
  %194 = vmatpush.bf16.msra.mxu0 0
  %195 = vmatpush.bf16.msra.mxu0 0
  %196 = vmatpush.bf16.msra.mxu0 0
  %197 = vmatpush.bf16.msra.mxu0 0
  %198 = vmatpush.bf16.msra.mxu0 %v99
  %199 = vmatpush.bf16.msra.mxu0 %v91
  %200 = vmatmul.bf16.gmra.mxu0 %v120
  %v201 = vpop.f32.mrf.mxu0
  %v202 = vadd.f32 0.0, %v201
  %v203 = vpop.f32.mrf.mxu0
  %v204 = vadd.f32 0.0, %v203
  %205 = vdwg.mxu0
  %206 = vmatpush.bf16.msra.mxu0 0
  %207 = vmatpush.bf16.msra.mxu0 0
  %208 = vmatpush.bf16.msra.mxu0 0
  %209 = vmatpush.bf16.msra.mxu0 0
  %210 = vmatpush.bf16.msra.mxu0 0
  %211 = vmatpush.bf16.msra.mxu0 0
  %212 = vmatpush.bf16.msra.mxu0 %v100
  %213 = vmatpush.bf16.msra.mxu0 %v92
  %214 = vmatmul.bf16.gmra.mxu0 %v120
  %v215 = vpop.f32.mrf.mxu0
  %v216 = vadd.f32 0.0, %v215
  %v217 = vpop.f32.mrf.mxu0
  %v218 = vadd.f32 0.0, %v217
  %219 = vdwg.mxu0
  %220 = vmatpush.bf16.msra.mxu0 0
  %221 = vmatpush.bf16.msra.mxu0 0
  %222 = vmatpush.bf16.msra.mxu0 0
  %223 = vmatpush.bf16.msra.mxu0 0
  %224 = vmatpush.bf16.msra.mxu0 0
  %225 = vmatpush.bf16.msra.mxu0 0
  %226 = vmatpush.bf16.msra.mxu0 %v101
  %227 = vmatpush.bf16.msra.mxu0 %v93
  %228 = vmatmul.bf16.gmra.mxu0 %v120
  %v229 = vpop.f32.mrf.mxu0
  %v230 = vadd.f32 0.0, %v229
  %v231 = vpop.f32.mrf.mxu0
  %v232 = vadd.f32 0.0, %v231
  %233 = vdwg.mxu0
  %s234 = scalar_lea.vmem %s0, 128
  %v235 = vld [vmem:[%s234] sm:$0xff]
  %v236 = vld [vmem:[%s234 + $0x8] sm:$0xff]
  %v237 = vld [vmem:[%s234 + $0x10] sm:$0xff]
  %v238 = vld [vmem:[%s234 + $0x18] sm:$0xff]
  %v239 = vld [vmem:[%s234 + $0x20] sm:$0xff]
  %v240 = vld [vmem:[%s234 + $0x28] sm:$0xff]
  %v241 = vld [vmem:[%s234 + $0x30] sm:$0xff]
  %v242 = vld [vmem:[%s234 + $0x38] sm:$0xff]
  %v243 = vld [vmem:[%s234 + $0x40] sm:$0xff]
  %v244 = vld [vmem:[%s234 + $0x48] sm:$0xff]
  %v245 = vld [vmem:[%s234 + $0x50] sm:$0xff]
  %v246 = vld [vmem:[%s234 + $0x58] sm:$0xff]
  %v247 = vld [vmem:[%s234 + $0x60] sm:$0xff]
  %v248 = vld [vmem:[%s234 + $0x68] sm:$0xff]
  %v249 = vld [vmem:[%s234 + $0x70] sm:$0xff]
  %v250 = vld [vmem:[%s234 + $0x78] sm:$0xff]
  %v267 = vunpack.c.l.b16 %v235
  %v268 = vunpack.c.h.b16 %v235
  %v269 = vunpack.c.l.b16 %v236
  %v270 = vunpack.c.h.b16 %v236
  %v271 = vunpack.c.l.b16 %v237
  %v272 = vunpack.c.h.b16 %v237
  %v273 = vunpack.c.l.b16 %v238
  %v274 = vunpack.c.h.b16 %v238
  %v275 = vunpack.c.l.b16 %v239
  %v276 = vunpack.c.h.b16 %v239
  %v277 = vunpack.c.l.b16 %v240
  %v278 = vunpack.c.h.b16 %v240
  %v279 = vunpack.c.l.b16 %v241
  %v280 = vunpack.c.h.b16 %v241
  %v281 = vunpack.c.l.b16 %v242
  %v282 = vunpack.c.h.b16 %v242
  %v283 = vunpack.c.l.b16 %v243
  %v284 = vunpack.c.h.b16 %v243
  %v285 = vunpack.c.l.b16 %v244
  %v286 = vunpack.c.h.b16 %v244
  %v287 = vunpack.c.l.b16 %v245
  %v288 = vunpack.c.h.b16 %v245
  %v289 = vunpack.c.l.b16 %v246
  %v290 = vunpack.c.h.b16 %v246
  %v291 = vunpack.c.l.b16 %v247
  %v292 = vunpack.c.h.b16 %v247
  %v293 = vunpack.c.l.b16 %v248
  %v294 = vunpack.c.h.b16 %v248
  %v295 = vunpack.c.l.b16 %v249
  %v296 = vunpack.c.h.b16 %v249
  %v297 = vunpack.c.l.b16 %v250
  %v298 = vunpack.c.h.b16 %v250
  %v299 = vpack.c.b16 %v275, %v267
  %v300 = vpack.c.b16 %v276, %v268
  %v301 = vpack.c.b16 %v277, %v269
  %v302 = vpack.c.b16 %v278, %v270
  %v303 = vpack.c.b16 %v279, %v271
  %v304 = vpack.c.b16 %v280, %v272
  %v305 = vpack.c.b16 %v281, %v273
  %v306 = vpack.c.b16 %v282, %v274
  %v307 = vpack.c.b16 %v291, %v283
  %v308 = vpack.c.b16 %v292, %v284
  %v309 = vpack.c.b16 %v293, %v285
  %v310 = vpack.c.b16 %v294, %v286
  %v311 = vpack.c.b16 %v295, %v287
  %v312 = vpack.c.b16 %v296, %v288
  %v313 = vpack.c.b16 %v297, %v289
  %v314 = vpack.c.b16 %v298, %v290
  %331 = vmatpush.bf16.msra.mxu0 0
  %332 = vmatpush.bf16.msra.mxu0 0
  %333 = vmatpush.bf16.msra.mxu0 0
  %334 = vmatpush.bf16.msra.mxu0 0
  %335 = vmatpush.bf16.msra.mxu0 0
  %336 = vmatpush.bf16.msra.mxu0 0
  %337 = vmatpush.bf16.msra.mxu0 %v307
  %338 = vmatpush.bf16.msra.mxu0 %v299
  %339 = vmatmul.bf16.gmra.mxu0 %v120
  %v340 = vpop.f32.mrf.mxu0
  %v341 = vadd.f32 0.0, %v340
  %v342 = vpop.f32.mrf.mxu0
  %v343 = vadd.f32 0.0, %v342
  %344 = vdwg.mxu0
  %345 = vmatpush.bf16.msra.mxu0 0
  %346 = vmatpush.bf16.msra.mxu0 0
  %347 = vmatpush.bf16.msra.mxu0 0
  %348 = vmatpush.bf16.msra.mxu0 0
  %349 = vmatpush.bf16.msra.mxu0 0
  %350 = vmatpush.bf16.msra.mxu0 0
  %351 = vmatpush.bf16.msra.mxu0 %v308
  %352 = vmatpush.bf16.msra.mxu0 %v300
  %353 = vmatmul.bf16.gmra.mxu0 %v120
  %v354 = vpop.f32.mrf.mxu0
  %v355 = vadd.f32 0.0, %v354
  %v356 = vpop.f32.mrf.mxu0
  %v357 = vadd.f32 0.0, %v356
  %358 = vdwg.mxu0
  %359 = vmatpush.bf16.msra.mxu0 0
  %360 = vmatpush.bf16.msra.mxu0 0
  %361 = vmatpush.bf16.msra.mxu0 0
  %362 = vmatpush.bf16.msra.mxu0 0
  %363 = vmatpush.bf16.msra.mxu0 0
  %364 = vmatpush.bf16.msra.mxu0 0
  %365 = vmatpush.bf16.msra.mxu0 %v309
  %366 = vmatpush.bf16.msra.mxu0 %v301
  %367 = vmatmul.bf16.gmra.mxu0 %v120
  %v368 = vpop.f32.mrf.mxu0
  %v369 = vadd.f32 0.0, %v368
  %v370 = vpop.f32.mrf.mxu0
  %v371 = vadd.f32 0.0, %v370
  %372 = vdwg.mxu0
  %373 = vmatpush.bf16.msra.mxu0 0
  %374 = vmatpush.bf16.msra.mxu0 0
  %375 = vmatpush.bf16.msra.mxu0 0
  %376 = vmatpush.bf16.msra.mxu0 0
  %377 = vmatpush.bf16.msra.mxu0 0
  %378 = vmatpush.bf16.msra.mxu0 0
  %379 = vmatpush.bf16.msra.mxu0 %v310
  %380 = vmatpush.bf16.msra.mxu0 %v302
  %381 = vmatmul.bf16.gmra.mxu0 %v120
  %v382 = vpop.f32.mrf.mxu0
  %v383 = vadd.f32 0.0, %v382
  %v384 = vpop.f32.mrf.mxu0
  %v385 = vadd.f32 0.0, %v384
  %386 = vdwg.mxu0
  %387 = vmatpush.bf16.msra.mxu0 0
  %388 = vmatpush.bf16.msra.mxu0 0
  %389 = vmatpush.bf16.msra.mxu0 0
  %390 = vmatpush.bf16.msra.mxu0 0
  %391 = vmatpush.bf16.msra.mxu0 0
  %392 = vmatpush.bf16.msra.mxu0 0
  %393 = vmatpush.bf16.msra.mxu0 %v311
  %394 = vmatpush.bf16.msra.mxu0 %v303
  %395 = vmatmul.bf16.gmra.mxu0 %v120
  %v396 = vpop.f32.mrf.mxu0
  %v397 = vadd.f32 0.0, %v396
  %v398 = vpop.f32.mrf.mxu0
  %v399 = vadd.f32 0.0, %v398
  %400 = vdwg.mxu0
  %401 = vmatpush.bf16.msra.mxu0 0
  %402 = vmatpush.bf16.msra.mxu0 0
  %403 = vmatpush.bf16.msra.mxu0 0
  %404 = vmatpush.bf16.msra.mxu0 0
  %405 = vmatpush.bf16.msra.mxu0 0
  %406 = vmatpush.bf16.msra.mxu0 0
  %407 = vmatpush.bf16.msra.mxu0 %v312
  %408 = vmatpush.bf16.msra.mxu0 %v304
  %409 = vmatmul.bf16.gmra.mxu0 %v120
  %v410 = vpop.f32.mrf.mxu0
  %v411 = vadd.f32 0.0, %v410
  %v412 = vpop.f32.mrf.mxu0
  %v413 = vadd.f32 0.0, %v412
  %414 = vdwg.mxu0
  %415 = vmatpush.bf16.msra.mxu0 0
  %416 = vmatpush.bf16.msra.mxu0 0
  %417 = vmatpush.bf16.msra.mxu0 0
  %418 = vmatpush.bf16.msra.mxu0 0
  %419 = vmatpush.bf16.msra.mxu0 0
  %420 = vmatpush.bf16.msra.mxu0 0
  %421 = vmatpush.bf16.msra.mxu0 %v313
  %422 = vmatpush.bf16.msra.mxu0 %v305
  %423 = vmatmul.bf16.gmra.mxu0 %v120
  %v424 = vpop.f32.mrf.mxu0
  %v425 = vadd.f32 0.0, %v424
  %v426 = vpop.f32.mrf.mxu0
  %v427 = vadd.f32 0.0, %v426
  %428 = vdwg.mxu0
  %429 = vmatpush.bf16.msra.mxu0 0
  %430 = vmatpush.bf16.msra.mxu0 0
  %431 = vmatpush.bf16.msra.mxu0 0
  %432 = vmatpush.bf16.msra.mxu0 0
  %433 = vmatpush.bf16.msra.mxu0 0
  %434 = vmatpush.bf16.msra.mxu0 0
  %435 = vmatpush.bf16.msra.mxu0 %v314
  %436 = vmatpush.bf16.msra.mxu0 %v306
  %437 = vmatmul.bf16.gmra.mxu0 %v120
  %v438 = vpop.f32.mrf.mxu0
  %v439 = vadd.f32 0.0, %v438
  %v440 = vpop.f32.mrf.mxu0
  %v441 = vadd.f32 0.0, %v440
  %442 = vdwg.mxu0
  %v443 = vmax.f32 %v132, %v341
  %v444 = vmax.f32 %v146, %v355
  %v445 = vmax.f32 %v160, %v369
  %v446 = vmax.f32 %v174, %v383
  %v447 = vmax.f32 %v188, %v397
  %v448 = vmax.f32 %v202, %v411
  %v449 = vmax.f32 %v216, %v425
  %v450 = vmax.f32 %v230, %v439
  %v451 = vmax.f32 %v134, %v343
  %v452 = vmax.f32 %v148, %v357
  %v453 = vmax.f32 %v162, %v371
  %v454 = vmax.f32 %v176, %v385
  %v455 = vmax.f32 %v190, %v399
  %v456 = vmax.f32 %v204, %v413
  %v457 = vmax.f32 %v218, %v427
  %v458 = vmax.f32 %v232, %v441
  %s459 = scalar_lea.vmem %s0, 256
  %v460 = vld [vmem:[%s459] sm:$0xff]
  %v461 = vld [vmem:[%s459 + $0x8] sm:$0xff]
  %v462 = vld [vmem:[%s459 + $0x10] sm:$0xff]
  %v463 = vld [vmem:[%s459 + $0x18] sm:$0xff]
  %v464 = vld [vmem:[%s459 + $0x20] sm:$0xff]
  %v465 = vld [vmem:[%s459 + $0x28] sm:$0xff]
  %v466 = vld [vmem:[%s459 + $0x30] sm:$0xff]
  %v467 = vld [vmem:[%s459 + $0x38] sm:$0xff]
  %v468 = vld [vmem:[%s459 + $0x40] sm:$0xff]
  %v469 = vld [vmem:[%s459 + $0x48] sm:$0xff]
  %v470 = vld [vmem:[%s459 + $0x50] sm:$0xff]
  %v471 = vld [vmem:[%s459 + $0x58] sm:$0xff]
  %v472 = vld [vmem:[%s459 + $0x60] sm:$0xff]
  %v473 = vld [vmem:[%s459 + $0x68] sm:$0xff]
  %v474 = vld [vmem:[%s459 + $0x70] sm:$0xff]
  %v475 = vld [vmem:[%s459 + $0x78] sm:$0xff]
  %v492 = vunpack.c.l.b16 %v460
  %v493 = vunpack.c.h.b16 %v460
  %v494 = vunpack.c.l.b16 %v461
  %v495 = vunpack.c.h.b16 %v461
  %v496 = vunpack.c.l.b16 %v462
  %v497 = vunpack.c.h.b16 %v462
  %v498 = vunpack.c.l.b16 %v463
  %v499 = vunpack.c.h.b16 %v463
  %v500 = vunpack.c.l.b16 %v464
  %v501 = vunpack.c.h.b16 %v464
  %v502 = vunpack.c.l.b16 %v465
  %v503 = vunpack.c.h.b16 %v465
  %v504 = vunpack.c.l.b16 %v466
  %v505 = vunpack.c.h.b16 %v466
  %v506 = vunpack.c.l.b16 %v467
  %v507 = vunpack.c.h.b16 %v467
  %v508 = vunpack.c.l.b16 %v468
  %v509 = vunpack.c.h.b16 %v468
  %v510 = vunpack.c.l.b16 %v469
  %v511 = vunpack.c.h.b16 %v469
  %v512 = vunpack.c.l.b16 %v470
  %v513 = vunpack.c.h.b16 %v470
  %v514 = vunpack.c.l.b16 %v471
  %v515 = vunpack.c.h.b16 %v471
  %v516 = vunpack.c.l.b16 %v472
  %v517 = vunpack.c.h.b16 %v472
  %v518 = vunpack.c.l.b16 %v473
  %v519 = vunpack.c.h.b16 %v473
  %v520 = vunpack.c.l.b16 %v474
  %v521 = vunpack.c.h.b16 %v474
  %v522 = vunpack.c.l.b16 %v475
  %v523 = vunpack.c.h.b16 %v475
  %v524 = vpack.c.b16 %v500, %v492
  %v525 = vpack.c.b16 %v501, %v493
  %v526 = vpack.c.b16 %v502, %v494
  %v527 = vpack.c.b16 %v503, %v495
  %v528 = vpack.c.b16 %v504, %v496
  %v529 = vpack.c.b16 %v505, %v497
  %v530 = vpack.c.b16 %v506, %v498
  %v531 = vpack.c.b16 %v507, %v499
  %v532 = vpack.c.b16 %v516, %v508
  %v533 = vpack.c.b16 %v517, %v509
  %v534 = vpack.c.b16 %v518, %v510
  %v535 = vpack.c.b16 %v519, %v511
  %v536 = vpack.c.b16 %v520, %v512
  %v537 = vpack.c.b16 %v521, %v513
  %v538 = vpack.c.b16 %v522, %v514
  %v539 = vpack.c.b16 %v523, %v515
  %556 = vmatpush.bf16.msra.mxu0 0
  %557 = vmatpush.bf16.msra.mxu0 0
  %558 = vmatpush.bf16.msra.mxu0 0
  %559 = vmatpush.bf16.msra.mxu0 0
  %560 = vmatpush.bf16.msra.mxu0 0
  %561 = vmatpush.bf16.msra.mxu0 0
  %562 = vmatpush.bf16.msra.mxu0 %v532
  %563 = vmatpush.bf16.msra.mxu0 %v524
  %564 = vmatmul.bf16.gmra.mxu0 %v120
  %v565 = vpop.f32.mrf.mxu0
  %v566 = vadd.f32 0.0, %v565
  %v567 = vpop.f32.mrf.mxu0
  %v568 = vadd.f32 0.0, %v567
  %569 = vdwg.mxu0
  %570 = vmatpush.bf16.msra.mxu0 0
  %571 = vmatpush.bf16.msra.mxu0 0
  %572 = vmatpush.bf16.msra.mxu0 0
  %573 = vmatpush.bf16.msra.mxu0 0
  %574 = vmatpush.bf16.msra.mxu0 0
  %575 = vmatpush.bf16.msra.mxu0 0
  %576 = vmatpush.bf16.msra.mxu0 %v533
  %577 = vmatpush.bf16.msra.mxu0 %v525
  %578 = vmatmul.bf16.gmra.mxu0 %v120
  %v579 = vpop.f32.mrf.mxu0
  %v580 = vadd.f32 0.0, %v579
  %v581 = vpop.f32.mrf.mxu0
  %v582 = vadd.f32 0.0, %v581
  %583 = vdwg.mxu0
  %584 = vmatpush.bf16.msra.mxu0 0
  %585 = vmatpush.bf16.msra.mxu0 0
  %586 = vmatpush.bf16.msra.mxu0 0
  %587 = vmatpush.bf16.msra.mxu0 0
  %588 = vmatpush.bf16.msra.mxu0 0
  %589 = vmatpush.bf16.msra.mxu0 0
  %590 = vmatpush.bf16.msra.mxu0 %v534
  %591 = vmatpush.bf16.msra.mxu0 %v526
  %592 = vmatmul.bf16.gmra.mxu0 %v120
  %v593 = vpop.f32.mrf.mxu0
  %v594 = vadd.f32 0.0, %v593
  %v595 = vpop.f32.mrf.mxu0
  %v596 = vadd.f32 0.0, %v595
  %597 = vdwg.mxu0
  %598 = vmatpush.bf16.msra.mxu0 0
  %599 = vmatpush.bf16.msra.mxu0 0
  %600 = vmatpush.bf16.msra.mxu0 0
  %601 = vmatpush.bf16.msra.mxu0 0
  %602 = vmatpush.bf16.msra.mxu0 0
  %603 = vmatpush.bf16.msra.mxu0 0
  %604 = vmatpush.bf16.msra.mxu0 %v535
  %605 = vmatpush.bf16.msra.mxu0 %v527
  %606 = vmatmul.bf16.gmra.mxu0 %v120
  %v607 = vpop.f32.mrf.mxu0
  %v608 = vadd.f32 0.0, %v607
  %v609 = vpop.f32.mrf.mxu0
  %v610 = vadd.f32 0.0, %v609
  %611 = vdwg.mxu0
  %612 = vmatpush.bf16.msra.mxu0 0
  %613 = vmatpush.bf16.msra.mxu0 0
  %614 = vmatpush.bf16.msra.mxu0 0
  %615 = vmatpush.bf16.msra.mxu0 0
  %616 = vmatpush.bf16.msra.mxu0 0
  %617 = vmatpush.bf16.msra.mxu0 0
  %618 = vmatpush.bf16.msra.mxu0 %v536
  %619 = vmatpush.bf16.msra.mxu0 %v528
  %620 = vmatmul.bf16.gmra.mxu0 %v120
  %v621 = vpop.f32.mrf.mxu0
  %v622 = vadd.f32 0.0, %v621
  %v623 = vpop.f32.mrf.mxu0
  %v624 = vadd.f32 0.0, %v623
  %625 = vdwg.mxu0
  %626 = vmatpush.bf16.msra.mxu0 0
  %627 = vmatpush.bf16.msra.mxu0 0
  %628 = vmatpush.bf16.msra.mxu0 0
  %629 = vmatpush.bf16.msra.mxu0 0
  %630 = vmatpush.bf16.msra.mxu0 0
  %631 = vmatpush.bf16.msra.mxu0 0
  %632 = vmatpush.bf16.msra.mxu0 %v537
  %633 = vmatpush.bf16.msra.mxu0 %v529
  %634 = vmatmul.bf16.gmra.mxu0 %v120
  %v635 = vpop.f32.mrf.mxu0
  %v636 = vadd.f32 0.0, %v635
  %v637 = vpop.f32.mrf.mxu0
  %v638 = vadd.f32 0.0, %v637
  %639 = vdwg.mxu0
  %640 = vmatpush.bf16.msra.mxu0 0
  %641 = vmatpush.bf16.msra.mxu0 0
  %642 = vmatpush.bf16.msra.mxu0 0
  %643 = vmatpush.bf16.msra.mxu0 0
  %644 = vmatpush.bf16.msra.mxu0 0
  %645 = vmatpush.bf16.msra.mxu0 0
  %646 = vmatpush.bf16.msra.mxu0 %v538
  %647 = vmatpush.bf16.msra.mxu0 %v530
  %648 = vmatmul.bf16.gmra.mxu0 %v120
  %v649 = vpop.f32.mrf.mxu0
  %v650 = vadd.f32 0.0, %v649
  %v651 = vpop.f32.mrf.mxu0
  %v652 = vadd.f32 0.0, %v651
  %653 = vdwg.mxu0
  %654 = vmatpush.bf16.msra.mxu0 0
  %655 = vmatpush.bf16.msra.mxu0 0
  %656 = vmatpush.bf16.msra.mxu0 0
  %657 = vmatpush.bf16.msra.mxu0 0
  %658 = vmatpush.bf16.msra.mxu0 0
  %659 = vmatpush.bf16.msra.mxu0 0
  %660 = vmatpush.bf16.msra.mxu0 %v539
  %661 = vmatpush.bf16.msra.mxu0 %v531
  %662 = vmatmul.bf16.gmra.mxu0 %v120
  %v663 = vpop.f32.mrf.mxu0
  %v664 = vadd.f32 0.0, %v663
  %v665 = vpop.f32.mrf.mxu0
  %v666 = vadd.f32 0.0, %v665
  %667 = vdwg.mxu0
  %v668 = vmax.f32 %v443, %v566
  %v669 = vmax.f32 %v444, %v580
  %v670 = vmax.f32 %v445, %v594
  %v671 = vmax.f32 %v446, %v608
  %v672 = vmax.f32 %v447, %v622
  %v673 = vmax.f32 %v448, %v636
  %v674 = vmax.f32 %v449, %v650
  %v675 = vmax.f32 %v450, %v664
  %v676 = vmax.f32 %v451, %v568
  %v677 = vmax.f32 %v452, %v582
  %v678 = vmax.f32 %v453, %v596
  %v679 = vmax.f32 %v454, %v610
  %v680 = vmax.f32 %v455, %v624
  %v681 = vmax.f32 %v456, %v638
  %v682 = vmax.f32 %v457, %v652
  %v683 = vmax.f32 %v458, %v666
  %s684 = scalar_lea.vmem %s0, 384
  %v685 = vld [vmem:[%s684] sm:$0xff]
  %v686 = vld [vmem:[%s684 + $0x8] sm:$0xff]
  %v687 = vld [vmem:[%s684 + $0x10] sm:$0xff]
  %v688 = vld [vmem:[%s684 + $0x18] sm:$0xff]
  %v689 = vld [vmem:[%s684 + $0x20] sm:$0xff]
  %v690 = vld [vmem:[%s684 + $0x28] sm:$0xff]
  %v691 = vld [vmem:[%s684 + $0x30] sm:$0xff]
  %v692 = vld [vmem:[%s684 + $0x38] sm:$0xff]
  %v693 = vld [vmem:[%s684 + $0x40] sm:$0xff]
  %v694 = vld [vmem:[%s684 + $0x48] sm:$0xff]
  %v695 = vld [vmem:[%s684 + $0x50] sm:$0xff]
  %v696 = vld [vmem:[%s684 + $0x58] sm:$0xff]
  %v697 = vld [vmem:[%s684 + $0x60] sm:$0xff]
  %v698 = vld [vmem:[%s684 + $0x68] sm:$0xff]
  %v699 = vld [vmem:[%s684 + $0x70] sm:$0xff]
  %v700 = vld [vmem:[%s684 + $0x78] sm:$0xff]
  %v717 = vunpack.c.l.b16 %v685
  %v718 = vunpack.c.h.b16 %v685
  %v719 = vunpack.c.l.b16 %v686
  %v720 = vunpack.c.h.b16 %v686
  %v721 = vunpack.c.l.b16 %v687
  %v722 = vunpack.c.h.b16 %v687
  %v723 = vunpack.c.l.b16 %v688
  %v724 = vunpack.c.h.b16 %v688
  %v725 = vunpack.c.l.b16 %v689
  %v726 = vunpack.c.h.b16 %v689
  %v727 = vunpack.c.l.b16 %v690
  %v728 = vunpack.c.h.b16 %v690
  %v729 = vunpack.c.l.b16 %v691
  %v730 = vunpack.c.h.b16 %v691
  %v731 = vunpack.c.l.b16 %v692
  %v732 = vunpack.c.h.b16 %v692
  %v733 = vunpack.c.l.b16 %v693
  %v734 = vunpack.c.h.b16 %v693
  %v735 = vunpack.c.l.b16 %v694
  %v736 = vunpack.c.h.b16 %v694
  %v737 = vunpack.c.l.b16 %v695
  %v738 = vunpack.c.h.b16 %v695
  %v739 = vunpack.c.l.b16 %v696
  %v740 = vunpack.c.h.b16 %v696
  %v741 = vunpack.c.l.b16 %v697
  %v742 = vunpack.c.h.b16 %v697
  %v743 = vunpack.c.l.b16 %v698
  %v744 = vunpack.c.h.b16 %v698
  %v745 = vunpack.c.l.b16 %v699
  %v746 = vunpack.c.h.b16 %v699
  %v747 = vunpack.c.l.b16 %v700
  %v748 = vunpack.c.h.b16 %v700
  %v749 = vpack.c.b16 %v725, %v717
  %v750 = vpack.c.b16 %v726, %v718
  %v751 = vpack.c.b16 %v727, %v719
  %v752 = vpack.c.b16 %v728, %v720
  %v753 = vpack.c.b16 %v729, %v721
  %v754 = vpack.c.b16 %v730, %v722
  %v755 = vpack.c.b16 %v731, %v723
  %v756 = vpack.c.b16 %v732, %v724
  %v757 = vpack.c.b16 %v741, %v733
  %v758 = vpack.c.b16 %v742, %v734
  %v759 = vpack.c.b16 %v743, %v735
  %v760 = vpack.c.b16 %v744, %v736
  %v761 = vpack.c.b16 %v745, %v737
  %v762 = vpack.c.b16 %v746, %v738
  %v763 = vpack.c.b16 %v747, %v739
  %v764 = vpack.c.b16 %v748, %v740
  %781 = vmatpush.bf16.msra.mxu0 0
  %782 = vmatpush.bf16.msra.mxu0 0
  %783 = vmatpush.bf16.msra.mxu0 0
  %784 = vmatpush.bf16.msra.mxu0 0
  %785 = vmatpush.bf16.msra.mxu0 0
  %786 = vmatpush.bf16.msra.mxu0 0
  %787 = vmatpush.bf16.msra.mxu0 %v757
  %788 = vmatpush.bf16.msra.mxu0 %v749
  %789 = vmatmul.bf16.gmra.mxu0 %v120
  %v790 = vpop.f32.mrf.mxu0
  %v791 = vadd.f32 0.0, %v790
  %v792 = vpop.f32.mrf.mxu0
  %v793 = vadd.f32 0.0, %v792
  %794 = vdwg.mxu0
  %795 = vmatpush.bf16.msra.mxu0 0
  %796 = vmatpush.bf16.msra.mxu0 0
  %797 = vmatpush.bf16.msra.mxu0 0
  %798 = vmatpush.bf16.msra.mxu0 0
  %799 = vmatpush.bf16.msra.mxu0 0
  %800 = vmatpush.bf16.msra.mxu0 0
  %801 = vmatpush.bf16.msra.mxu0 %v758
  %802 = vmatpush.bf16.msra.mxu0 %v750
  %803 = vmatmul.bf16.gmra.mxu0 %v120
  %v804 = vpop.f32.mrf.mxu0
  %v805 = vadd.f32 0.0, %v804
  %v806 = vpop.f32.mrf.mxu0
  %v807 = vadd.f32 0.0, %v806
  %808 = vdwg.mxu0
  %809 = vmatpush.bf16.msra.mxu0 0
  %810 = vmatpush.bf16.msra.mxu0 0
  %811 = vmatpush.bf16.msra.mxu0 0
  %812 = vmatpush.bf16.msra.mxu0 0
  %813 = vmatpush.bf16.msra.mxu0 0
  %814 = vmatpush.bf16.msra.mxu0 0
  %815 = vmatpush.bf16.msra.mxu0 %v759
  %816 = vmatpush.bf16.msra.mxu0 %v751
  %817 = vmatmul.bf16.gmra.mxu0 %v120
  %v818 = vpop.f32.mrf.mxu0
  %v819 = vadd.f32 0.0, %v818
  %v820 = vpop.f32.mrf.mxu0
  %v821 = vadd.f32 0.0, %v820
  %822 = vdwg.mxu0
  %823 = vmatpush.bf16.msra.mxu0 0
  %824 = vmatpush.bf16.msra.mxu0 0
  %825 = vmatpush.bf16.msra.mxu0 0
  %826 = vmatpush.bf16.msra.mxu0 0
  %827 = vmatpush.bf16.msra.mxu0 0
  %828 = vmatpush.bf16.msra.mxu0 0
  %829 = vmatpush.bf16.msra.mxu0 %v760
  %830 = vmatpush.bf16.msra.mxu0 %v752
  %831 = vmatmul.bf16.gmra.mxu0 %v120
  %v832 = vpop.f32.mrf.mxu0
  %v833 = vadd.f32 0.0, %v832
  %v834 = vpop.f32.mrf.mxu0
  %v835 = vadd.f32 0.0, %v834
  %836 = vdwg.mxu0
  %837 = vmatpush.bf16.msra.mxu0 0
  %838 = vmatpush.bf16.msra.mxu0 0
  %839 = vmatpush.bf16.msra.mxu0 0
  %840 = vmatpush.bf16.msra.mxu0 0
  %841 = vmatpush.bf16.msra.mxu0 0
  %842 = vmatpush.bf16.msra.mxu0 0
  %843 = vmatpush.bf16.msra.mxu0 %v761
  %844 = vmatpush.bf16.msra.mxu0 %v753
  %845 = vmatmul.bf16.gmra.mxu0 %v120
  %v846 = vpop.f32.mrf.mxu0
  %v847 = vadd.f32 0.0, %v846
  %v848 = vpop.f32.mrf.mxu0
  %v849 = vadd.f32 0.0, %v848
  %850 = vdwg.mxu0
  %851 = vmatpush.bf16.msra.mxu0 0
  %852 = vmatpush.bf16.msra.mxu0 0
  %853 = vmatpush.bf16.msra.mxu0 0
  %854 = vmatpush.bf16.msra.mxu0 0
  %855 = vmatpush.bf16.msra.mxu0 0
  %856 = vmatpush.bf16.msra.mxu0 0
  %857 = vmatpush.bf16.msra.mxu0 %v762
  %858 = vmatpush.bf16.msra.mxu0 %v754
  %859 = vmatmul.bf16.gmra.mxu0 %v120
  %v860 = vpop.f32.mrf.mxu0
  %v861 = vadd.f32 0.0, %v860
  %v862 = vpop.f32.mrf.mxu0
  %v863 = vadd.f32 0.0, %v862
  %864 = vdwg.mxu0
  %865 = vmatpush.bf16.msra.mxu0 0
  %866 = vmatpush.bf16.msra.mxu0 0
  %867 = vmatpush.bf16.msra.mxu0 0
  %868 = vmatpush.bf16.msra.mxu0 0
  %869 = vmatpush.bf16.msra.mxu0 0
  %870 = vmatpush.bf16.msra.mxu0 0
  %871 = vmatpush.bf16.msra.mxu0 %v763
  %872 = vmatpush.bf16.msra.mxu0 %v755
  %873 = vmatmul.bf16.gmra.mxu0 %v120
  %v874 = vpop.f32.mrf.mxu0
  %v875 = vadd.f32 0.0, %v874
  %v876 = vpop.f32.mrf.mxu0
  %v877 = vadd.f32 0.0, %v876
  %878 = vdwg.mxu0
  %879 = vmatpush.bf16.msra.mxu0 0
  %880 = vmatpush.bf16.msra.mxu0 0
  %881 = vmatpush.bf16.msra.mxu0 0
  %882 = vmatpush.bf16.msra.mxu0 0
  %883 = vmatpush.bf16.msra.mxu0 0
  %884 = vmatpush.bf16.msra.mxu0 0
  %885 = vmatpush.bf16.msra.mxu0 %v764
  %886 = vmatpush.bf16.msra.mxu0 %v756
  %887 = vmatmul.bf16.gmra.mxu0 %v120
  %v888 = vpop.f32.mrf.mxu0
  %v889 = vadd.f32 0.0, %v888
  %v890 = vpop.f32.mrf.mxu0
  %v891 = vadd.f32 0.0, %v890
  %892 = vdwg.mxu0
  %v893 = vmax.f32 %v668, %v791
  %v894 = vmax.f32 %v669, %v805
  %v895 = vmax.f32 %v670, %v819
  %v896 = vmax.f32 %v671, %v833
  %v897 = vmax.f32 %v672, %v847
  %v898 = vmax.f32 %v673, %v861
  %v899 = vmax.f32 %v674, %v875
  %v900 = vmax.f32 %v675, %v889
  %v901 = vmax.f32 %v676, %v793
  %v902 = vmax.f32 %v677, %v807
  %v903 = vmax.f32 %v678, %v821
  %v904 = vmax.f32 %v679, %v835
  %v905 = vmax.f32 %v680, %v849
  %v906 = vmax.f32 %v681, %v863
  %v907 = vmax.f32 %v682, %v877
  %v908 = vmax.f32 %v683, %v891
  %v909 = vld [vmem:[%s2] sm:$0xff]
  %v910 = vld [vmem:[%s2 + $0x8] sm:$0x3]
  %912 = vset.pattern.permute.xlu0 0
  %913 = vperm.xlu0 %912, %v909
  %v914 = vpop.permute.xlu0 %913
  %917 = vset.pattern.permute.xlu0 0
  %918 = vperm.xlu0 %917, %v910
  %v919 = vpop.permute.xlu0 %918
  %v921 = vadd.f32 %v893, %v914
  %v922 = vadd.f32 %v894, %v914
  %v923 = vadd.f32 %v895, %v914
  %v924 = vadd.f32 %v896, %v914
  %v925 = vadd.f32 %v897, %v914
  %v926 = vadd.f32 %v898, %v914
  %v927 = vadd.f32 %v899, %v914
  %v928 = vadd.f32 %v900, %v914
  %v929 = vadd.f32 %v901, %v919
  %v930 = vadd.f32 %v902, %v919
  %v931 = vadd.f32 %v903, %v919
  %v932 = vadd.f32 %v904, %v919
  %v933 = vadd.f32 %v905, %v919
  %v934 = vadd.f32 %v906, %v919
  %v935 = vadd.f32 %v907, %v919
  %v936 = vadd.f32 %v908, %v919
  %v937 = vmax.f32 %v921, 0.0
  %v938 = vmax.f32 %v922, 0.0
  %v939 = vmax.f32 %v923, 0.0
  %v940 = vmax.f32 %v924, 0.0
  %v941 = vmax.f32 %v925, 0.0
  %v942 = vmax.f32 %v926, 0.0
  %v943 = vmax.f32 %v927, 0.0
  %v944 = vmax.f32 %v928, 0.0
  %v945 = vmax.f32 %v929, 0.0
  %v946 = vmax.f32 %v930, 0.0
  %v947 = vmax.f32 %v931, 0.0
  %v948 = vmax.f32 %v932, 0.0
  %v949 = vmax.f32 %v933, 0.0
  %v950 = vmax.f32 %v934, 0.0
  %v951 = vmax.f32 %v935, 0.0
  %v952 = vmax.f32 %v936, 0.0
  %v953 = vpack.c.bf16 %v938, %v937
  %v954 = vpack.c.bf16 %v940, %v939
  %v955 = vpack.c.bf16 %v942, %v941
  %v956 = vpack.c.bf16 %v944, %v943
  %v957 = vpack.c.bf16 %v946, %v945
  %v958 = vpack.c.bf16 %v948, %v947
  %v959 = vpack.c.bf16 %v950, %v949
  %v960 = vpack.c.bf16 %v952, %v951
  %961 = vst [vmem:[%s3] sm:$0xff] %v953
  %962 = vst [vmem:[%s3 + $0x8] sm:$0xff] %v954
  %963 = vst [vmem:[%s3 + $0x10] sm:$0xff] %v955
  %964 = vst [vmem:[%s3 + $0x18] sm:$0xff] %v956
  %965 = vst [vmem:[%s3 + $0x20] sm:$0x11] %v957
  %966 = vst [vmem:[%s3 + $0x28] sm:$0x11] %v958
  %967 = vst [vmem:[%s3 + $0x30] sm:$0x11] %v959
  %968 = vst [vmem:[%s3 + $0x38] sm:$0x11] %v960
  // Predicated region
  $region14: #{net_forward.2} parent=0 // pred_check
    _
  $region15: #{net_forward.2} parent=0 // pred_check_branch
    %970 = sbr.rel (0) target = $region17
  $region16: #{net_forward.2} parent=0 // pred_region
    _
  $region17: #{net_forward.2} parent=0 // pred_fallthru
    _
  // Predicated region
  $region18: #{net_forward.2} parent=0 // pred_check
    _
  $region19: #{net_forward.2} parent=0 // pred_check_branch
    %972 = sbr.rel (0) target = $region21
  $region20: #{net_forward.2} parent=0 // pred_region
    _
  $region21: #{net_forward.2} parent=0 // pred_fallthru
    _

// kernel: net_forward.3
$region0: #{net_forward.3}
  #allocation0 [shape = 'u32[]', space=smem, size = 0x4, offset = 0x4, fixed_abs, tag = 'smem constant byte address 0x4 - core index']
  #allocation1 [shape = 'u32[72,128]{1,0:T(1,128)}', space=vmem, size = 0x9000, scoped, tag = 'internal scratch']
  #allocation2 [shape = 'f32[50,64]{1,0:T(8,128)}', space=vmem, size = 0x7000, scoped, tag = 'scratch operand']
  %s0 = inlined_call_operand.vmem [shape: bf16[16,4,2,256,64], index: 0, kind: input, shape index: {}]
  %s1 = inlined_call_operand.vmem [shape: bf16[20,256], index: 1, kind: input, shape index: {}]
  %s2 = inlined_call_operand.vmem [shape: f32[20,1], index: 2, kind: input, shape index: {}]
  %s3 = inlined_call_operand.vmem [shape: bf16[16,50,20], index: 3, kind: input, shape index: {}]
  %s4 = inlined_call_operand.vmem [shape: f32[50,1], index: 4, kind: input, shape index: {}]
  %s5 = inlined_call_operand.vmem [shape: bf16[10,50], index: 5, kind: input, shape index: {}]
  %s6 = inlined_call_operand.vmem [shape: f32[10,1], index: 6, kind: input, shape index: {}]
  %s7 = inlined_call_operand.vmem [shape: f32[2,10,64], index: 7, kind: output, shape index: {}]
  %s8 = sld [smem:[#allocation0]]
  $region121: #{net_forward.3} parent=0
    _
  %s10 = ssub.s32 1, %s8
  %s11 = scalar_select 0, %s10, %s8
  $region1: #{net_forward.3} parent=0
    #allocation3 [shape = 'u8[2097152]{0}', space=vmem, size = 0x200000, scoped, tag = 'input window, operand 0']
    loop: start=0, step=1, limit=10
    $region2: #{net_forward.3} parent=1 // loop_pre_header
      _
    $region3: #{net_forward.3} parent=1 // loop_header
      %s13 = sphi 0, %s17
      %p14 = scmp.ge.s32.totalorder %s13, 10
      %s20 = sphi 0, %s32
      %s21 = sphi 0, %s28
      %s22 = sphi 0, %s20
      %s23 = sphi 0, %s21
      %s24 = sphi 0, %s22
      %s25 = sphi 0, %s23
      %s37 = sphi 0, %s39
      %s40 = sphi 0, %s37
      %s41 = sphi 0, %s40
      %s57 = sphi 0, %s41
      %s61 = sphi 0, %s61
      %s63 = sphi 0, %s61
      %s64 = sphi 0, %s63
      %s78 = sphi 0, %s64
      %s82 = sphi 0, %s82
      %s84 = sphi 0, %s82
      %s85 = sphi 0, %s84
      %s99 = sphi 0, %s85
      %s103 = sphi 0, %s103
      %s105 = sphi 0, %s103
      %s106 = sphi 0, %s105
      %s120 = sphi 0, %s106
      %s124 = sphi 0, %s124
      %s126 = sphi 0, %s124
      %s127 = sphi 0, %s126
      %s141 = sphi 0, %s127
      %s145 = sphi 0, %s145
      %s147 = sphi 0, %s145
      %s148 = sphi 0, %s147
      %s162 = sphi 0, %s148
      %s166 = sphi 0, %s166
      %s168 = sphi 0, %s166
      %s169 = sphi 0, %s168
      %s183 = sphi 0, %s169
      %s189 = sphi 0, %s191
      %s192 = sphi 0, %s189
      %s193 = sphi 0, %s192
      %s209 = sphi 0, %s193
    $region4: #{net_forward.3} parent=1 // loop_header_branch
      %16 = sbr.rel (%p14) target = $region8
    $region5: #{net_forward.3} parent=1 // loop_body
      %s18 = ssub.s32 %s13, 1
      %s19 = ssub.s32 %s13, 2
      %s26 = sadd.s32 1, %s21
      %p27 = scmp.ge.s32.totalorder %s26, 4
      %s28 = scalar_select %p27, 0, %s26
      %s29 = sadd.s32 1, %s20
      %s30 = scalar_select %p27, %s29, %s20
      %p31 = scmp.ge.s32.totalorder %s30, 2
      %s32 = scalar_select %p31, 0, %s30
      %s33 = ssub.s32 %s21, %s28
      %s34 = ssub.s32 %s20, %s32
      %s35 = sor.u32 %s33, %s34
      %p36 = scmp.eq.s32.totalorder %s35, 0
      %s38 = sadd.s32 %s37, 1
      %s39 = scalar_select %p36, %s37, %s38
      %p42 = pneg %p36
      %p43 = scmp.eq.s32.totalorder %s13, 7
      %p44 = por %p42, %p43
      %p45 = scmp.ne.s32.totalorder %s37, %s40
      %p46 = scmp.eq.s32.totalorder %s13, 0
      %p47 = por %p45, %p46
      %p48 = scmp.ne.s32.totalorder %s37, %s40
      %p49 = scmp.eq.s32.totalorder %s18, 7
      %p50 = por %p48, %p49
      %p51 = scmp.ne.s32.totalorder %s40, %s41
      %p52 = scmp.eq.s32.totalorder %s18, 0
      %p53 = por %p51, %p52
      %p54 = scmp.ne.s32.totalorder %s40, %s41
      %p55 = scmp.eq.s32.totalorder %s19, 7
      %p56 = por %p54, %p55
      %p58 = scmp.ne.s32.totalorder %s41, %s57
      %p59 = scmp.eq.s32.totalorder %s19, 0
      %p60 = por %p58, %p59
      %s62 = sadd.s32 %s61, 1
      %p65 = scmp.eq.s32.totalorder %s13, 7
      %p66 = scmp.ne.s32.totalorder %s61, %s63
      %p67 = scmp.eq.s32.totalorder %s13, 0
      %p68 = por %p66, %p67
      %p69 = scmp.ne.s32.totalorder %s61, %s63
      %p70 = scmp.eq.s32.totalorder %s18, 7
      %p71 = por %p69, %p70
      %p72 = scmp.ne.s32.totalorder %s63, %s64
      %p73 = scmp.eq.s32.totalorder %s18, 0
      %p74 = por %p72, %p73
      %p75 = scmp.ne.s32.totalorder %s63, %s64
      %p76 = scmp.eq.s32.totalorder %s19, 7
      %p77 = por %p75, %p76
      %p79 = scmp.ne.s32.totalorder %s64, %s78
      %p80 = scmp.eq.s32.totalorder %s19, 0
      %p81 = por %p79, %p80
      %s83 = sadd.s32 %s82, 1
      %p86 = scmp.eq.s32.totalorder %s13, 7
      %p87 = scmp.ne.s32.totalorder %s82, %s84
      %p88 = scmp.eq.s32.totalorder %s13, 0
      %p89 = por %p87, %p88
      %p90 = scmp.ne.s32.totalorder %s82, %s84
      %p91 = scmp.eq.s32.totalorder %s18, 7
      %p92 = por %p90, %p91
      %p93 = scmp.ne.s32.totalorder %s84, %s85
      %p94 = scmp.eq.s32.totalorder %s18, 0
      %p95 = por %p93, %p94
      %p96 = scmp.ne.s32.totalorder %s84, %s85
      %p97 = scmp.eq.s32.totalorder %s19, 7
      %p98 = por %p96, %p97
      %p100 = scmp.ne.s32.totalorder %s85, %s99
      %p101 = scmp.eq.s32.totalorder %s19, 0
      %p102 = por %p100, %p101
      %s104 = sadd.s32 %s103, 1
      %p107 = scmp.eq.s32.totalorder %s13, 7
      %p108 = scmp.ne.s32.totalorder %s103, %s105
      %p109 = scmp.eq.s32.totalorder %s13, 0
      %p110 = por %p108, %p109
      %p111 = scmp.ne.s32.totalorder %s103, %s105
      %p112 = scmp.eq.s32.totalorder %s18, 7
      %p113 = por %p111, %p112
      %p114 = scmp.ne.s32.totalorder %s105, %s106
      %p115 = scmp.eq.s32.totalorder %s18, 0
      %p116 = por %p114, %p115
      %p117 = scmp.ne.s32.totalorder %s105, %s106
      %p118 = scmp.eq.s32.totalorder %s19, 7
      %p119 = por %p117, %p118
      %p121 = scmp.ne.s32.totalorder %s106, %s120
      %p122 = scmp.eq.s32.totalorder %s19, 0
      %p123 = por %p121, %p122
      %s125 = sadd.s32 %s124, 1
      %p128 = scmp.eq.s32.totalorder %s13, 7
      %p129 = scmp.ne.s32.totalorder %s124, %s126
      %p130 = scmp.eq.s32.totalorder %s13, 0
      %p131 = por %p129, %p130
      %p132 = scmp.ne.s32.totalorder %s124, %s126
      %p133 = scmp.eq.s32.totalorder %s18, 7
      %p134 = por %p132, %p133
      %p135 = scmp.ne.s32.totalorder %s126, %s127
      %p136 = scmp.eq.s32.totalorder %s18, 0
      %p137 = por %p135, %p136
      %p138 = scmp.ne.s32.totalorder %s126, %s127
      %p139 = scmp.eq.s32.totalorder %s19, 7
      %p140 = por %p138, %p139
      %p142 = scmp.ne.s32.totalorder %s127, %s141
      %p143 = scmp.eq.s32.totalorder %s19, 0
      %p144 = por %p142, %p143
      %s146 = sadd.s32 %s145, 1
      %p149 = scmp.eq.s32.totalorder %s13, 7
      %p150 = scmp.ne.s32.totalorder %s145, %s147
      %p151 = scmp.eq.s32.totalorder %s13, 0
      %p152 = por %p150, %p151
      %p153 = scmp.ne.s32.totalorder %s145, %s147
      %p154 = scmp.eq.s32.totalorder %s18, 7
      %p155 = por %p153, %p154
      %p156 = scmp.ne.s32.totalorder %s147, %s148
      %p157 = scmp.eq.s32.totalorder %s18, 0
      %p158 = por %p156, %p157
      %p159 = scmp.ne.s32.totalorder %s147, %s148
      %p160 = scmp.eq.s32.totalorder %s19, 7
      %p161 = por %p159, %p160
      %p163 = scmp.ne.s32.totalorder %s148, %s162
      %p164 = scmp.eq.s32.totalorder %s19, 0
      %p165 = por %p163, %p164
      %s167 = sadd.s32 %s166, 1
      %p170 = scmp.eq.s32.totalorder %s13, 7
      %p171 = scmp.ne.s32.totalorder %s166, %s168
      %p172 = scmp.eq.s32.totalorder %s13, 0
      %p173 = por %p171, %p172
      %p174 = scmp.ne.s32.totalorder %s166, %s168
      %p175 = scmp.eq.s32.totalorder %s18, 7
      %p176 = por %p174, %p175
      %p177 = scmp.ne.s32.totalorder %s168, %s169
      %p178 = scmp.eq.s32.totalorder %s18, 0
      %p179 = por %p177, %p178
      %p180 = scmp.ne.s32.totalorder %s168, %s169
      %p181 = scmp.eq.s32.totalorder %s19, 7
      %p182 = por %p180, %p181
      %p184 = scmp.ne.s32.totalorder %s169, %s183
      %p185 = scmp.eq.s32.totalorder %s19, 0
      %p186 = por %p184, %p185
      %s187 = ssub.s32 %s20, %s32
      %p188 = scmp.eq.s32.totalorder %s187, 0
      %s190 = sadd.s32 %s189, 1
      %s191 = scalar_select %p188, %s189, %s190
      %p194 = pneg %p188
      %p195 = scmp.eq.s32.totalorder %s13, 7
      %p196 = por %p194, %p195
      %p197 = scmp.ne.s32.totalorder %s189, %s192
      %p198 = scmp.eq.s32.totalorder %s13, 0
      %p199 = por %p197, %p198
      %p200 = scmp.ne.s32.totalorder %s189, %s192
      %p201 = scmp.eq.s32.totalorder %s18, 7
      %p202 = por %p200, %p201
      %p203 = scmp.ne.s32.totalorder %s192, %s193
      %p204 = scmp.eq.s32.totalorder %s18, 0
      %p205 = por %p203, %p204
      %p206 = scmp.ne.s32.totalorder %s192, %s193
      %p207 = scmp.eq.s32.totalorder %s19, 7
      %p208 = por %p206, %p207
      %p210 = scmp.ne.s32.totalorder %s193, %s209
      %p211 = scmp.eq.s32.totalorder %s19, 0
      %p212 = por %p210, %p211
      %p213 = scmp.le.s32.totalorder 1, %s13
      %p214 = scmp.lt.s32.totalorder %s13, 9
      %p215 = pnand %p213, %p214
      %p216 = pneg %p215
      // Predicated region
      $region9: #{net_forward.3} parent=5 // pred_check
        _
      $region10: #{net_forward.3} parent=5 // pred_check_branch
        %218 = sbr.rel (%p215) target = $region12
      $region11: #{net_forward.3} parent=5 // pred_region
        %s219 = ssub.s32 %s13, 1
        // Predicated region
        $region13: #{net_forward.3} parent=11 // pred_check
          %p220 = pneg %p74
        $region14: #{net_forward.3} parent=11 // pred_check_branch
          %222 = sbr.rel (%p220) target = $region16
        $region15: #{net_forward.3} parent=11 // pred_region
          _
        $region16: #{net_forward.3} parent=11 // pred_fallthru
          _
        // Predicated region
        $region17: #{net_forward.3} parent=11 // pred_check
          %p223 = pneg %p95
        $region18: #{net_forward.3} parent=11 // pred_check_branch
          %225 = sbr.rel (%p223) target = $region20
        $region19: #{net_forward.3} parent=11 // pred_region
          _
        $region20: #{net_forward.3} parent=11 // pred_fallthru
          _
        // Predicated region
        $region21: #{net_forward.3} parent=11 // pred_check
          %p226 = pneg %p116
        $region22: #{net_forward.3} parent=11 // pred_check_branch
          %228 = sbr.rel (%p226) target = $region24
        $region23: #{net_forward.3} parent=11 // pred_region
          _
        $region24: #{net_forward.3} parent=11 // pred_fallthru
          _
        // Predicated region
        $region25: #{net_forward.3} parent=11 // pred_check
          %p229 = pneg %p137
        $region26: #{net_forward.3} parent=11 // pred_check_branch
          %231 = sbr.rel (%p229) target = $region28
        $region27: #{net_forward.3} parent=11 // pred_region
          _
        $region28: #{net_forward.3} parent=11 // pred_fallthru
          _
        // Predicated region
        $region29: #{net_forward.3} parent=11 // pred_check
          %p232 = pneg %p158
        $region30: #{net_forward.3} parent=11 // pred_check_branch
          %234 = sbr.rel (%p232) target = $region32
        $region31: #{net_forward.3} parent=11 // pred_region
          _
        $region32: #{net_forward.3} parent=11 // pred_fallthru
          _
        // Predicated region
        $region33: #{net_forward.3} parent=11 // pred_check
          %p235 = pneg %p179
        $region34: #{net_forward.3} parent=11 // pred_check_branch
          %237 = sbr.rel (%p235) target = $region36
        $region35: #{net_forward.3} parent=11 // pred_region
          _
        $region36: #{net_forward.3} parent=11 // pred_fallthru
          _
      $region12: #{net_forward.3} parent=5 // pred_fallthru
        _
      %p238 = scmp.lt.s32.totalorder %s13, 8
      // Predicated region
      $region37: #{net_forward.3} parent=5 // pred_check
        %p239 = pneg %p238
      $region38: #{net_forward.3} parent=5 // pred_check_branch
        %241 = sbr.rel (%p239) target = $region40
      $region39: #{net_forward.3} parent=5 // pred_region
        // Predicated region
        $region41: #{net_forward.3} parent=39 // pred_check
          %p242 = pneg %p47
        $region42: #{net_forward.3} parent=39 // pred_check_branch
          %244 = sbr.rel (%p242) target = $region44
        $region43: #{net_forward.3} parent=39 // pred_region
          %s245 = sand.u32 %s37, 1
          %s246 = sand.u32 %s37, 1
          %s247 = smul.addr %s246, 2048
          %s248 = scalar_lea.vmem [#allocation3], %s247
          %s249 = smul.u32 4, %s21
          %s250 = smul.addr %s20, 32
          %s251 = smul.addr %s249, 256
          %s252 = sadd.s32 %s250, %s251
          %s253 = smul.addr %s252, 4
          %s254 = scalar_lea.vmem %s0, %s253
          // Predicated region
          $region45: #{net_forward.3} parent=43 // pred_check
            _
          $region46: #{net_forward.3} parent=43 // pred_check_branch
            %256 = sbr.rel (0) target = $region48
          $region47: #{net_forward.3} parent=43 // pred_region
            // Predicated region
            $region49: #{net_forward.3} parent=47 // pred_check
              _
            $region50: #{net_forward.3} parent=47 // pred_check_branch
              %258 = sbr.rel target = $region52
            $region51: #{net_forward.3} parent=47 // pred_region
              // Predicated region
              $region64: #{net_forward.3} parent=51 // pred_check
                _
              $region65: #{net_forward.3} parent=51 // pred_check_branch
                %1296 = sbr.rel target = $region67
              $region66: #{net_forward.3} parent=51 // pred_region
                loop: start=0, step=1, limit=0
                $region68: #{net_forward.3} parent=66 // loop_pre_header
                  _
                $region69: #{net_forward.3} parent=66 // loop_header
                  %s1298 = sphi 0, %s1302
                  %p1299 = scmp.ge.s32.totalorder %s1298, 0
                  %s1303 = sphi 0, %s2332
                  %s1304 = sphi %s254, %s2335
                  %s1305 = sphi %s248, %s2336
                $region70: #{net_forward.3} parent=66 // loop_header_branch
                  %1301 = sbr.rel (%p1299) target = $region74
                $region71: #{net_forward.3} parent=66 // loop_body
                  %v1306 = vld [vmem:[%s1304] sm:$0xff]
                  %1307 = vst [vmem:[%s1305] sm:$0xff] %v1306
                  %v1308 = vld [vmem:[%s1304 + $0x4] sm:$0xff]
                  %1309 = vst [vmem:[%s1305 + $0x4] sm:$0xff] %v1308
                  %v1310 = vld [vmem:[%s1304 + $0x8] sm:$0xff]
                  %1311 = vst [vmem:[%s1305 + $0x8] sm:$0xff] %v1310
                  %v1312 = vld [vmem:[%s1304 + $0xc] sm:$0xff]
                  %1313 = vst [vmem:[%s1305 + $0xc] sm:$0xff] %v1312
                  %v1314 = vld [vmem:[%s1304 + $0x10] sm:$0xff]
                  %1315 = vst [vmem:[%s1305 + $0x10] sm:$0xff] %v1314
                  %v1316 = vld [vmem:[%s1304 + $0x14] sm:$0xff]
                  %1317 = vst [vmem:[%s1305 + $0x14] sm:$0xff] %v1316
                  %v1318 = vld [vmem:[%s1304 + $0x18] sm:$0xff]
                  %1319 = vst [vmem:[%s1305 + $0x18] sm:$0xff] %v1318
                  %v1320 = vld [vmem:[%s1304 + $0x1c] sm:$0xff]
                  %1321 = vst [vmem:[%s1305 + $0x1c] sm:$0xff] %v1320
                  %v1322 = vld [vmem:[%s1304 + $0x20] sm:$0xff]
                  %1323 = vst [vmem:[%s1305 + $0x20] sm:$0xff] %v1322
                  %v1324 = vld [vmem:[%s1304 + $0x24] sm:$0xff]
                  %1325 = vst [vmem:[%s1305 + $0x24] sm:$0xff] %v1324
                  %v1326 = vld [vmem:[%s1304 + $0x28] sm:$0xff]
                  %1327 = vst [vmem:[%s1305 + $0x28] sm:$0xff] %v1326
                  %v1328 = vld [vmem:[%s1304 + $0x2c] sm:$0xff]
                  %1329 = vst [vmem:[%s1305 + $0x2c] sm:$0xff] %v1328
                  %v1330 = vld [vmem:[%s1304 + $0x30] sm:$0xff]
                  %1331 = vst [vmem:[%s1305 + $0x30] sm:$0xff] %v1330
                  %v1332 = vld [vmem:[%s1304 + $0x34] sm:$0xff]
                  %1333 = vst [vmem:[%s1305 + $0x34] sm:$0xff] %v1332
                  %v1334 = vld [vmem:[%s1304 + $0x38] sm:$0xff]
                  %1335 = vst [vmem:[%s1305 + $0x38] sm:$0xff] %v1334
                  %v1336 = vld [vmem:[%s1304 + $0x3c] sm:$0xff]
                  %1337 = vst [vmem:[%s1305 + $0x3c] sm:$0xff] %v1336
                  %v1338 = vld [vmem:[%s1304 + $0x40] sm:$0xff]
                  %1339 = vst [vmem:[%s1305 + $0x40] sm:$0xff] %v1338
                  %v1340 = vld [vmem:[%s1304 + $0x44] sm:$0xff]
                  %1341 = vst [vmem:[%s1305 + $0x44] sm:$0xff] %v1340
                  %v1342 = vld [vmem:[%s1304 + $0x48] sm:$0xff]
                  %1343 = vst [vmem:[%s1305 + $0x48] sm:$0xff] %v1342
                  %v1344 = vld [vmem:[%s1304 + $0x4c] sm:$0xff]
                  %1345 = vst [vmem:[%s1305 + $0x4c] sm:$0xff] %v1344
                  %v1346 = vld [vmem:[%s1304 + $0x50] sm:$0xff]
                  %1347 = vst [vmem:[%s1305 + $0x50] sm:$0xff] %v1346
                  %v1348 = vld [vmem:[%s1304 + $0x54] sm:$0xff]
                  %1349 = vst [vmem:[%s1305 + $0x54] sm:$0xff] %v1348
                  %v1350 = vld [vmem:[%s1304 + $0x58] sm:$0xff]
                  %1351 = vst [vmem:[%s1305 + $0x58] sm:$0xff] %v1350
                  %v1352 = vld [vmem:[%s1304 + $0x5c] sm:$0xff]
                  %1353 = vst [vmem:[%s1305 + $0x5c] sm:$0xff] %v1352
                  %v1354 = vld [vmem:[%s1304 + $0x60] sm:$0xff]
                  %1355 = vst [vmem:[%s1305 + $0x60] sm:$0xff] %v1354
                  %v1356 = vld [vmem:[%s1304 + $0x64] sm:$0xff]
                  %1357 = vst [vmem:[%s1305 + $0x64] sm:$0xff] %v1356
                  %v1358 = vld [vmem:[%s1304 + $0x68] sm:$0xff]
                  %1359 = vst [vmem:[%s1305 + $0x68] sm:$0xff] %v1358
                  %v1360 = vld [vmem:[%s1304 + $0x6c] sm:$0xff]
                  %1361 = vst [vmem:[%s1305 + $0x6c] sm:$0xff] %v1360
                  %v1362 = vld [vmem:[%s1304 + $0x70] sm:$0xff]
                  %1363 = vst [vmem:[%s1305 + $0x70] sm:$0xff] %v1362
                  %v1364 = vld [vmem:[%s1304 + $0x74] sm:$0xff]
                  %1365 = vst [vmem:[%s1305 + $0x74] sm:$0xff] %v1364
                  %v1366 = vld [vmem:[%s1304 + $0x78] sm:$0xff]
                  %1367 = vst [vmem:[%s1305 + $0x78] sm:$0xff] %v1366
                  %v1368 = vld [vmem:[%s1304 + $0x7c] sm:$0xff]
                  %1369 = vst [vmem:[%s1305 + $0x7c] sm:$0xff] %v1368
                  %v1370 = vld [vmem:[%s1304 + $0x100] sm:$0xff]
                  %1371 = vst [vmem:[%s1305 + $0x80] sm:$0xff] %v1370
                  %v1372 = vld [vmem:[%s1304 + $0x104] sm:$0xff]
                  %1373 = vst [vmem:[%s1305 + $0x84] sm:$0xff] %v1372
                  %v1374 = vld [vmem:[%s1304 + $0x108] sm:$0xff]
                  %1375 = vst [vmem:[%s1305 + $0x88] sm:$0xff] %v1374
                  %v1376 = vld [vmem:[%s1304 + $0x10c] sm:$0xff]
                  %1377 = vst [vmem:[%s1305 + $0x8c] sm:$0xff] %v1376
                  %v1378 = vld [vmem:[%s1304 + $0x110] sm:$0xff]
                  %1379 = vst [vmem:[%s1305 + $0x90] sm:$0xff] %v1378
                  %v1380 = vld [vmem:[%s1304 + $0x114] sm:$0xff]
                  %1381 = vst [vmem:[%s1305 + $0x94] sm:$0xff] %v1380
                  %v1382 = vld [vmem:[%s1304 + $0x118] sm:$0xff]
                  %1383 = vst [vmem:[%s1305 + $0x98] sm:$0xff] %v1382
                  %v1384 = vld [vmem:[%s1304 + $0x11c] sm:$0xff]
                  %1385 = vst [vmem:[%s1305 + $0x9c] sm:$0xff] %v1384
                  %v1386 = vld [vmem:[%s1304 + $0x120] sm:$0xff]
                  %1387 = vst [vmem:[%s1305 + $0xa0] sm:$0xff] %v1386
                  %v1388 = vld [vmem:[%s1304 + $0x124] sm:$0xff]
                  %1389 = vst [vmem:[%s1305 + $0xa4] sm:$0xff] %v1388
                  %v1390 = vld [vmem:[%s1304 + $0x128] sm:$0xff]
                  %1391 = vst [vmem:[%s1305 + $0xa8] sm:$0xff] %v1390
                  %v1392 = vld [vmem:[%s1304 + $0x12c] sm:$0xff]
                  %1393 = vst [vmem:[%s1305 + $0xac] sm:$0xff] %v1392
                  %v1394 = vld [vmem:[%s1304 + $0x130] sm:$0xff]
                  %1395 = vst [vmem:[%s1305 + $0xb0] sm:$0xff] %v1394
                  %v1396 = vld [vmem:[%s1304 + $0x134] sm:$0xff]
                  %1397 = vst [vmem:[%s1305 + $0xb4] sm:$0xff] %v1396
                  %v1398 = vld [vmem:[%s1304 + $0x138] sm:$0xff]
                  %1399 = vst [vmem:[%s1305 + $0xb8] sm:$0xff] %v1398
                  %v1400 = vld [vmem:[%s1304 + $0x13c] sm:$0xff]
                  %1401 = vst [vmem:[%s1305 + $0xbc] sm:$0xff] %v1400
                  %v1402 = vld [vmem:[%s1304 + $0x140] sm:$0xff]
                  %1403 = vst [vmem:[%s1305 + $0xc0] sm:$0xff] %v1402
                  %v1404 = vld [vmem:[%s1304 + $0x144] sm:$0xff]
                  %1405 = vst [vmem:[%s1305 + $0xc4] sm:$0xff] %v1404
                  %v1406 = vld [vmem:[%s1304 + $0x148] sm:$0xff]
                  %1407 = vst [vmem:[%s1305 + $0xc8] sm:$0xff] %v1406
                  %v1408 = vld [vmem:[%s1304 + $0x14c] sm:$0xff]
                  %1409 = vst [vmem:[%s1305 + $0xcc] sm:$0xff] %v1408
                  %v1410 = vld [vmem:[%s1304 + $0x150] sm:$0xff]
                  %1411 = vst [vmem:[%s1305 + $0xd0] sm:$0xff] %v1410
                  %v1412 = vld [vmem:[%s1304 + $0x154] sm:$0xff]
                  %1413 = vst [vmem:[%s1305 + $0xd4] sm:$0xff] %v1412
                  %v1414 = vld [vmem:[%s1304 + $0x158] sm:$0xff]
                  %1415 = vst [vmem:[%s1305 + $0xd8] sm:$0xff] %v1414
                  %v1416 = vld [vmem:[%s1304 + $0x15c] sm:$0xff]
                  %1417 = vst [vmem:[%s1305 + $0xdc] sm:$0xff] %v1416
                  %v1418 = vld [vmem:[%s1304 + $0x160] sm:$0xff]
                  %1419 = vst [vmem:[%s1305 + $0xe0] sm:$0xff] %v1418
                  %v1420 = vld [vmem:[%s1304 + $0x164] sm:$0xff]
                  %1421 = vst [vmem:[%s1305 + $0xe4] sm:$0xff] %v1420
                  %v1422 = vld [vmem:[%s1304 + $0x168] sm:$0xff]
                  %1423 = vst [vmem:[%s1305 + $0xe8] sm:$0xff] %v1422
                  %v1424 = vld [vmem:[%s1304 + $0x16c] sm:$0xff]
                  %1425 = vst [vmem:[%s1305 + $0xec] sm:$0xff] %v1424
                  %v1426 = vld [vmem:[%s1304 + $0x170] sm:$0xff]
                  %1427 = vst [vmem:[%s1305 + $0xf0] sm:$0xff] %v1426
                  %v1428 = vld [vmem:[%s1304 + $0x174] sm:$0xff]
                  %1429 = vst [vmem:[%s1305 + $0xf4] sm:$0xff] %v1428
                  %v1430 = vld [vmem:[%s1304 + $0x178] sm:$0xff]
                  %1431 = vst [vmem:[%s1305 + $0xf8] sm:$0xff] %v1430
                  %v1432 = vld [vmem:[%s1304 + $0x17c] sm:$0xff]
                  %1433 = vst [vmem:[%s1305 + $0xfc] sm:$0xff] %v1432
                  %v1434 = vld [vmem:[%s1304 + $0x200] sm:$0xff]
                  %1435 = vst [vmem:[%s1305 + $0x100] sm:$0xff] %v1434
                  %v1436 = vld [vmem:[%s1304 + $0x204] sm:$0xff]
                  %1437 = vst [vmem:[%s1305 + $0x104] sm:$0xff] %v1436
                  %v1438 = vld [vmem:[%s1304 + $0x208] sm:$0xff]
                  %1439 = vst [vmem:[%s1305 + $0x108] sm:$0xff] %v1438
                  %v1440 = vld [vmem:[%s1304 + $0x20c] sm:$0xff]
                  %1441 = vst [vmem:[%s1305 + $0x10c] sm:$0xff] %v1440
                  %v1442 = vld [vmem:[%s1304 + $0x210] sm:$0xff]
                  %1443 = vst [vmem:[%s1305 + $0x110] sm:$0xff] %v1442
                  %v1444 = vld [vmem:[%s1304 + $0x214] sm:$0xff]
                  %1445 = vst [vmem:[%s1305 + $0x114] sm:$0xff] %v1444
                  %v1446 = vld [vmem:[%s1304 + $0x218] sm:$0xff]
                  %1447 = vst [vmem:[%s1305 + $0x118] sm:$0xff] %v1446
                  %v1448 = vld [vmem:[%s1304 + $0x21c] sm:$0xff]
                  %1449 = vst [vmem:[%s1305 + $0x11c] sm:$0xff] %v1448
                  %v1450 = vld [vmem:[%s1304 + $0x220] sm:$0xff]
                  %1451 = vst [vmem:[%s1305 + $0x120] sm:$0xff] %v1450
                  %v1452 = vld [vmem:[%s1304 + $0x224] sm:$0xff]
                  %1453 = vst [vmem:[%s1305 + $0x124] sm:$0xff] %v1452
                  %v1454 = vld [vmem:[%s1304 + $0x228] sm:$0xff]
                  %1455 = vst [vmem:[%s1305 + $0x128] sm:$0xff] %v1454
                  %v1456 = vld [vmem:[%s1304 + $0x22c] sm:$0xff]
                  %1457 = vst [vmem:[%s1305 + $0x12c] sm:$0xff] %v1456
                  %v1458 = vld [vmem:[%s1304 + $0x230] sm:$0xff]
                  %1459 = vst [vmem:[%s1305 + $0x130] sm:$0xff] %v1458
                  %v1460 = vld [vmem:[%s1304 + $0x234] sm:$0xff]
                  %1461 = vst [vmem:[%s1305 + $0x134] sm:$0xff] %v1460
                  %v1462 = vld [vmem:[%s1304 + $0x238] sm:$0xff]
                  %1463 = vst [vmem:[%s1305 + $0x138] sm:$0xff] %v1462
                  %v1464 = vld [vmem:[%s1304 + $0x23c] sm:$0xff]
                  %1465 = vst [vmem:[%s1305 + $0x13c] sm:$0xff] %v1464
                  %v1466 = vld [vmem:[%s1304 + $0x240] sm:$0xff]
                  %1467 = vst [vmem:[%s1305 + $0x140] sm:$0xff] %v1466
                  %v1468 = vld [vmem:[%s1304 + $0x244] sm:$0xff]
                  %1469 = vst [vmem:[%s1305 + $0x144] sm:$0xff] %v1468
                  %v1470 = vld [vmem:[%s1304 + $0x248] sm:$0xff]
                  %1471 = vst [vmem:[%s1305 + $0x148] sm:$0xff] %v1470
                  %v1472 = vld [vmem:[%s1304 + $0x24c] sm:$0xff]
                  %1473 = vst [vmem:[%s1305 + $0x14c] sm:$0xff] %v1472
                  %v1474 = vld [vmem:[%s1304 + $0x250] sm:$0xff]
                  %1475 = vst [vmem:[%s1305 + $0x150] sm:$0xff] %v1474
                  %v1476 = vld [vmem:[%s1304 + $0x254] sm:$0xff]
                  %1477 = vst [vmem:[%s1305 + $0x154] sm:$0xff] %v1476
                  %v1478 = vld [vmem:[%s1304 + $0x258] sm:$0xff]
                  %1479 = vst [vmem:[%s1305 + $0x158] sm:$0xff] %v1478
                  %v1480 = vld [vmem:[%s1304 + $0x25c] sm:$0xff]
                  %1481 = vst [vmem:[%s1305 + $0x15c] sm:$0xff] %v1480
                  %v1482 = vld [vmem:[%s1304 + $0x260] sm:$0xff]
                  %1483 = vst [vmem:[%s1305 + $0x160] sm:$0xff] %v1482
                  %v1484 = vld [vmem:[%s1304 + $0x264] sm:$0xff]
                  %1485 = vst [vmem:[%s1305 + $0x164] sm:$0xff] %v1484
                  %v1486 = vld [vmem:[%s1304 + $0x268] sm:$0xff]
                  %1487 = vst [vmem:[%s1305 + $0x168] sm:$0xff] %v1486
                  %v1488 = vld [vmem:[%s1304 + $0x26c] sm:$0xff]
                  %1489 = vst [vmem:[%s1305 + $0x16c] sm:$0xff] %v1488
                  %v1490 = vld [vmem:[%s1304 + $0x270] sm:$0xff]
                  %1491 = vst [vmem:[%s1305 + $0x170] sm:$0xff] %v1490
                  %v1492 = vld [vmem:[%s1304 + $0x274] sm:$0xff]
                  %1493 = vst [vmem:[%s1305 + $0x174] sm:$0xff] %v1492
                  %v1494 = vld [vmem:[%s1304 + $0x278] sm:$0xff]
                  %1495 = vst [vmem:[%s1305 + $0x178] sm:$0xff] %v1494
                  %v1496 = vld [vmem:[%s1304 + $0x27c] sm:$0xff]
                  %1497 = vst [vmem:[%s1305 + $0x17c] sm:$0xff] %v1496
                  %v1498 = vld [vmem:[%s1304 + $0x300] sm:$0xff]
                  %1499 = vst [vmem:[%s1305 + $0x180] sm:$0xff] %v1498
                  %v1500 = vld [vmem:[%s1304 + $0x304] sm:$0xff]
                  %1501 = vst [vmem:[%s1305 + $0x184] sm:$0xff] %v1500
                  %v1502 = vld [vmem:[%s1304 + $0x308] sm:$0xff]
                  %1503 = vst [vmem:[%s1305 + $0x188] sm:$0xff] %v1502
                  %v1504 = vld [vmem:[%s1304 + $0x30c] sm:$0xff]
                  %1505 = vst [vmem:[%s1305 + $0x18c] sm:$0xff] %v1504
                  %v1506 = vld [vmem:[%s1304 + $0x310] sm:$0xff]
                  %1507 = vst [vmem:[%s1305 + $0x190] sm:$0xff] %v1506
                  %v1508 = vld [vmem:[%s1304 + $0x314] sm:$0xff]
                  %1509 = vst [vmem:[%s1305 + $0x194] sm:$0xff] %v1508
                  %v1510 = vld [vmem:[%s1304 + $0x318] sm:$0xff]
                  %1511 = vst [vmem:[%s1305 + $0x198] sm:$0xff] %v1510
                  %v1512 = vld [vmem:[%s1304 + $0x31c] sm:$0xff]
                  %1513 = vst [vmem:[%s1305 + $0x19c] sm:$0xff] %v1512
                  %v1514 = vld [vmem:[%s1304 + $0x320] sm:$0xff]
                  %1515 = vst [vmem:[%s1305 + $0x1a0] sm:$0xff] %v1514
                  %v1516 = vld [vmem:[%s1304 + $0x324] sm:$0xff]
                  %1517 = vst [vmem:[%s1305 + $0x1a4] sm:$0xff] %v1516
                  %v1518 = vld [vmem:[%s1304 + $0x328] sm:$0xff]
                  %1519 = vst [vmem:[%s1305 + $0x1a8] sm:$0xff] %v1518
                  %v1520 = vld [vmem:[%s1304 + $0x32c] sm:$0xff]
                  %1521 = vst [vmem:[%s1305 + $0x1ac] sm:$0xff] %v1520
                  %v1522 = vld [vmem:[%s1304 + $0x330] sm:$0xff]
                  %1523 = vst [vmem:[%s1305 + $0x1b0] sm:$0xff] %v1522
                  %v1524 = vld [vmem:[%s1304 + $0x334] sm:$0xff]
                  %1525 = vst [vmem:[%s1305 + $0x1b4] sm:$0xff] %v1524
                  %v1526 = vld [vmem:[%s1304 + $0x338] sm:$0xff]
                  %1527 = vst [vmem:[%s1305 + $0x1b8] sm:$0xff] %v1526
                  %v1528 = vld [vmem:[%s1304 + $0x33c] sm:$0xff]
                  %1529 = vst [vmem:[%s1305 + $0x1bc] sm:$0xff] %v1528
                  %v1530 = vld [vmem:[%s1304 + $0x340] sm:$0xff]
                  %1531 = vst [vmem:[%s1305 + $0x1c0] sm:$0xff] %v1530
                  %v1532 = vld [vmem:[%s1304 + $0x344] sm:$0xff]
                  %1533 = vst [vmem:[%s1305 + $0x1c4] sm:$0xff] %v1532
                  %v1534 = vld [vmem:[%s1304 + $0x348] sm:$0xff]
                  %1535 = vst [vmem:[%s1305 + $0x1c8] sm:$0xff] %v1534
                  %v1536 = vld [vmem:[%s1304 + $0x34c] sm:$0xff]
                  %1537 = vst [vmem:[%s1305 + $0x1cc] sm:$0xff] %v1536
                  %v1538 = vld [vmem:[%s1304 + $0x350] sm:$0xff]
                  %1539 = vst [vmem:[%s1305 + $0x1d0] sm:$0xff] %v1538
                  %v1540 = vld [vmem:[%s1304 + $0x354] sm:$0xff]
                  %1541 = vst [vmem:[%s1305 + $0x1d4] sm:$0xff] %v1540
                  %v1542 = vld [vmem:[%s1304 + $0x358] sm:$0xff]
                  %1543 = vst [vmem:[%s1305 + $0x1d8] sm:$0xff] %v1542
                  %v1544 = vld [vmem:[%s1304 + $0x35c] sm:$0xff]
                  %1545 = vst [vmem:[%s1305 + $0x1dc] sm:$0xff] %v1544
                  %v1546 = vld [vmem:[%s1304 + $0x360] sm:$0xff]
                  %1547 = vst [vmem:[%s1305 + $0x1e0] sm:$0xff] %v1546
                  %v1548 = vld [vmem:[%s1304 + $0x364] sm:$0xff]
                  %1549 = vst [vmem:[%s1305 + $0x1e4] sm:$0xff] %v1548
                  %v1550 = vld [vmem:[%s1304 + $0x368] sm:$0xff]
                  %1551 = vst [vmem:[%s1305 + $0x1e8] sm:$0xff] %v1550
                  %v1552 = vld [vmem:[%s1304 + $0x36c] sm:$0xff]
                  %1553 = vst [vmem:[%s1305 + $0x1ec] sm:$0xff] %v1552
                  %v1554 = vld [vmem:[%s1304 + $0x370] sm:$0xff]
                  %1555 = vst [vmem:[%s1305 + $0x1f0] sm:$0xff] %v1554
                  %v1556 = vld [vmem:[%s1304 + $0x374] sm:$0xff]
                  %1557 = vst [vmem:[%s1305 + $0x1f4] sm:$0xff] %v1556
                  %v1558 = vld [vmem:[%s1304 + $0x378] sm:$0xff]
                  %1559 = vst [vmem:[%s1305 + $0x1f8] sm:$0xff] %v1558
                  %v1560 = vld [vmem:[%s1304 + $0x37c] sm:$0xff]
                  %1561 = vst [vmem:[%s1305 + $0x1fc] sm:$0xff] %v1560
                  %v1562 = vld [vmem:[%s1304 + $0x400] sm:$0xff]
                  %1563 = vst [vmem:[%s1305 + $0x200] sm:$0xff] %v1562
                  %v1564 = vld [vmem:[%s1304 + $0x404] sm:$0xff]
                  %1565 = vst [vmem:[%s1305 + $0x204] sm:$0xff] %v1564
                  %v1566 = vld [vmem:[%s1304 + $0x408] sm:$0xff]
                  %1567 = vst [vmem:[%s1305 + $0x208] sm:$0xff] %v1566
                  %v1568 = vld [vmem:[%s1304 + $0x40c] sm:$0xff]
                  %1569 = vst [vmem:[%s1305 + $0x20c] sm:$0xff] %v1568
                  %v1570 = vld [vmem:[%s1304 + $0x410] sm:$0xff]
                  %1571 = vst [vmem:[%s1305 + $0x210] sm:$0xff] %v1570
                  %v1572 = vld [vmem:[%s1304 + $0x414] sm:$0xff]
                  %1573 = vst [vmem:[%s1305 + $0x214] sm:$0xff] %v1572
                  %v1574 = vld [vmem:[%s1304 + $0x418] sm:$0xff]
                  %1575 = vst [vmem:[%s1305 + $0x218] sm:$0xff] %v1574
                  %v1576 = vld [vmem:[%s1304 + $0x41c] sm:$0xff]
                  %1577 = vst [vmem:[%s1305 + $0x21c] sm:$0xff] %v1576
                  %v1578 = vld [vmem:[%s1304 + $0x420] sm:$0xff]
                  %1579 = vst [vmem:[%s1305 + $0x220] sm:$0xff] %v1578
                  %v1580 = vld [vmem:[%s1304 + $0x424] sm:$0xff]
                  %1581 = vst [vmem:[%s1305 + $0x224] sm:$0xff] %v1580
                  %v1582 = vld [vmem:[%s1304 + $0x428] sm:$0xff]
                  %1583 = vst [vmem:[%s1305 + $0x228] sm:$0xff] %v1582
                  %v1584 = vld [vmem:[%s1304 + $0x42c] sm:$0xff]
                  %1585 = vst [vmem:[%s1305 + $0x22c] sm:$0xff] %v1584
                  %v1586 = vld [vmem:[%s1304 + $0x430] sm:$0xff]
                  %1587 = vst [vmem:[%s1305 + $0x230] sm:$0xff] %v1586
                  %v1588 = vld [vmem:[%s1304 + $0x434] sm:$0xff]
                  %1589 = vst [vmem:[%s1305 + $0x234] sm:$0xff] %v1588
                  %v1590 = vld [vmem:[%s1304 + $0x438] sm:$0xff]
                  %1591 = vst [vmem:[%s1305 + $0x238] sm:$0xff] %v1590
                  %v1592 = vld [vmem:[%s1304 + $0x43c] sm:$0xff]
                  %1593 = vst [vmem:[%s1305 + $0x23c] sm:$0xff] %v1592
                  %v1594 = vld [vmem:[%s1304 + $0x440] sm:$0xff]
                  %1595 = vst [vmem:[%s1305 + $0x240] sm:$0xff] %v1594
                  %v1596 = vld [vmem:[%s1304 + $0x444] sm:$0xff]
                  %1597 = vst [vmem:[%s1305 + $0x244] sm:$0xff] %v1596
                  %v1598 = vld [vmem:[%s1304 + $0x448] sm:$0xff]
                  %1599 = vst [vmem:[%s1305 + $0x248] sm:$0xff] %v1598
                  %v1600 = vld [vmem:[%s1304 + $0x44c] sm:$0xff]
                  %1601 = vst [vmem:[%s1305 + $0x24c] sm:$0xff] %v1600
                  %v1602 = vld [vmem:[%s1304 + $0x450] sm:$0xff]
                  %1603 = vst [vmem:[%s1305 + $0x250] sm:$0xff] %v1602
                  %v1604 = vld [vmem:[%s1304 + $0x454] sm:$0xff]
                  %1605 = vst [vmem:[%s1305 + $0x254] sm:$0xff] %v1604
                  %v1606 = vld [vmem:[%s1304 + $0x458] sm:$0xff]
                  %1607 = vst [vmem:[%s1305 + $0x258] sm:$0xff] %v1606
                  %v1608 = vld [vmem:[%s1304 + $0x45c] sm:$0xff]
                  %1609 = vst [vmem:[%s1305 + $0x25c] sm:$0xff] %v1608
                  %v1610 = vld [vmem:[%s1304 + $0x460] sm:$0xff]
                  %1611 = vst [vmem:[%s1305 + $0x260] sm:$0xff] %v1610
                  %v1612 = vld [vmem:[%s1304 + $0x464] sm:$0xff]
                  %1613 = vst [vmem:[%s1305 + $0x264] sm:$0xff] %v1612
                  %v1614 = vld [vmem:[%s1304 + $0x468] sm:$0xff]
                  %1615 = vst [vmem:[%s1305 + $0x268] sm:$0xff] %v1614
                  %v1616 = vld [vmem:[%s1304 + $0x46c] sm:$0xff]
                  %1617 = vst [vmem:[%s1305 + $0x26c] sm:$0xff] %v1616
                  %v1618 = vld [vmem:[%s1304 + $0x470] sm:$0xff]
                  %1619 = vst [vmem:[%s1305 + $0x270] sm:$0xff] %v1618
                  %v1620 = vld [vmem:[%s1304 + $0x474] sm:$0xff]
                  %1621 = vst [vmem:[%s1305 + $0x274] sm:$0xff] %v1620
                  %v1622 = vld [vmem:[%s1304 + $0x478] sm:$0xff]
                  %1623 = vst [vmem:[%s1305 + $0x278] sm:$0xff] %v1622
                  %v1624 = vld [vmem:[%s1304 + $0x47c] sm:$0xff]
                  %1625 = vst [vmem:[%s1305 + $0x27c] sm:$0xff] %v1624
                  %v1626 = vld [vmem:[%s1304 + $0x500] sm:$0xff]
                  %1627 = vst [vmem:[%s1305 + $0x280] sm:$0xff] %v1626
                  %v1628 = vld [vmem:[%s1304 + $0x504] sm:$0xff]
                  %1629 = vst [vmem:[%s1305 + $0x284] sm:$0xff] %v1628
                  %v1630 = vld [vmem:[%s1304 + $0x508] sm:$0xff]
                  %1631 = vst [vmem:[%s1305 + $0x288] sm:$0xff] %v1630
                  %v1632 = vld [vmem:[%s1304 + $0x50c] sm:$0xff]
                  %1633 = vst [vmem:[%s1305 + $0x28c] sm:$0xff] %v1632
                  %v1634 = vld [vmem:[%s1304 + $0x510] sm:$0xff]
                  %1635 = vst [vmem:[%s1305 + $0x290] sm:$0xff] %v1634
                  %v1636 = vld [vmem:[%s1304 + $0x514] sm:$0xff]
                  %1637 = vst [vmem:[%s1305 + $0x294] sm:$0xff] %v1636
                  %v1638 = vld [vmem:[%s1304 + $0x518] sm:$0xff]
                  %1639 = vst [vmem:[%s1305 + $0x298] sm:$0xff] %v1638
                  %v1640 = vld [vmem:[%s1304 + $0x51c] sm:$0xff]
                  %1641 = vst [vmem:[%s1305 + $0x29c] sm:$0xff] %v1640
                  %v1642 = vld [vmem:[%s1304 + $0x520] sm:$0xff]
                  %1643 = vst [vmem:[%s1305 + $0x2a0] sm:$0xff] %v1642
                  %v1644 = vld [vmem:[%s1304 + $0x524] sm:$0xff]
                  %1645 = vst [vmem:[%s1305 + $0x2a4] sm:$0xff] %v1644
                  %v1646 = vld [vmem:[%s1304 + $0x528] sm:$0xff]
                  %1647 = vst [vmem:[%s1305 + $0x2a8] sm:$0xff] %v1646
                  %v1648 = vld [vmem:[%s1304 + $0x52c] sm:$0xff]
                  %1649 = vst [vmem:[%s1305 + $0x2ac] sm:$0xff] %v1648
                  %v1650 = vld [vmem:[%s1304 + $0x530] sm:$0xff]
                  %1651 = vst [vmem:[%s1305 + $0x2b0] sm:$0xff] %v1650
                  %v1652 = vld [vmem:[%s1304 + $0x534] sm:$0xff]
                  %1653 = vst [vmem:[%s1305 + $0x2b4] sm:$0xff] %v1652
                  %v1654 = vld [vmem:[%s1304 + $0x538] sm:$0xff]
                  %1655 = vst [vmem:[%s1305 + $0x2b8] sm:$0xff] %v1654
                  %v1656 = vld [vmem:[%s1304 + $0x53c] sm:$0xff]
                  %1657 = vst [vmem:[%s1305 + $0x2bc] sm:$0xff] %v1656
                  %v1658 = vld [vmem:[%s1304 + $0x540] sm:$0xff]
                  %1659 = vst [vmem:[%s1305 + $0x2c0] sm:$0xff] %v1658
                  %v1660 = vld [vmem:[%s1304 + $0x544] sm:$0xff]
                  %1661 = vst [vmem:[%s1305 + $0x2c4] sm:$0xff] %v1660
                  %v1662 = vld [vmem:[%s1304 + $0x548] sm:$0xff]
                  %1663 = vst [vmem:[%s1305 + $0x2c8] sm:$0xff] %v1662
                  %v1664 = vld [vmem:[%s1304 + $0x54c] sm:$0xff]
                  %1665 = vst [vmem:[%s1305 + $0x2cc] sm:$0xff] %v1664
                  %v1666 = vld [vmem:[%s1304 + $0x550] sm:$0xff]
                  %1667 = vst [vmem:[%s1305 + $0x2d0] sm:$0xff] %v1666
                  %v1668 = vld [vmem:[%s1304 + $0x554] sm:$0xff]
                  %1669 = vst [vmem:[%s1305 + $0x2d4] sm:$0xff] %v1668
                  %v1670 = vld [vmem:[%s1304 + $0x558] sm:$0xff]
                  %1671 = vst [vmem:[%s1305 + $0x2d8] sm:$0xff] %v1670
                  %v1672 = vld [vmem:[%s1304 + $0x55c] sm:$0xff]
                  %1673 = vst [vmem:[%s1305 + $0x2dc] sm:$0xff] %v1672
                  %v1674 = vld [vmem:[%s1304 + $0x560] sm:$0xff]
                  %1675 = vst [vmem:[%s1305 + $0x2e0] sm:$0xff] %v1674
                  %v1676 = vld [vmem:[%s1304 + $0x564] sm:$0xff]
                  %1677 = vst [vmem:[%s1305 + $0x2e4] sm:$0xff] %v1676
                  %v1678 = vld [vmem:[%s1304 + $0x568] sm:$0xff]
                  %1679 = vst [vmem:[%s1305 + $0x2e8] sm:$0xff] %v1678
                  %v1680 = vld [vmem:[%s1304 + $0x56c] sm:$0xff]
                  %1681 = vst [vmem:[%s1305 + $0x2ec] sm:$0xff] %v1680
                  %v1682 = vld [vmem:[%s1304 + $0x570] sm:$0xff]
                  %1683 = vst [vmem:[%s1305 + $0x2f0] sm:$0xff] %v1682
                  %v1684 = vld [vmem:[%s1304 + $0x574] sm:$0xff]
                  %1685 = vst [vmem:[%s1305 + $0x2f4] sm:$0xff] %v1684
                  %v1686 = vld [vmem:[%s1304 + $0x578] sm:$0xff]
                  %1687 = vst [vmem:[%s1305 + $0x2f8] sm:$0xff] %v1686
                  %v1688 = vld [vmem:[%s1304 + $0x57c] sm:$0xff]
                  %1689 = vst [vmem:[%s1305 + $0x2fc] sm:$0xff] %v1688
                  %v1690 = vld [vmem:[%s1304 + $0x600] sm:$0xff]
                  %1691 = vst [vmem:[%s1305 + $0x300] sm:$0xff] %v1690
                  %v1692 = vld [vmem:[%s1304 + $0x604] sm:$0xff]
                  %1693 = vst [vmem:[%s1305 + $0x304] sm:$0xff] %v1692
                  %v1694 = vld [vmem:[%s1304 + $0x608] sm:$0xff]
                  %1695 = vst [vmem:[%s1305 + $0x308] sm:$0xff] %v1694
                  %v1696 = vld [vmem:[%s1304 + $0x60c] sm:$0xff]
                  %1697 = vst [vmem:[%s1305 + $0x30c] sm:$0xff] %v1696
                  %v1698 = vld [vmem:[%s1304 + $0x610] sm:$0xff]
                  %1699 = vst [vmem:[%s1305 + $0x310] sm:$0xff] %v1698
                  %v1700 = vld [vmem:[%s1304 + $0x614] sm:$0xff]
                  %1701 = vst [vmem:[%s1305 + $0x314] sm:$0xff] %v1700
                  %v1702 = vld [vmem:[%s1304 + $0x618] sm:$0xff]
                  %1703 = vst [vmem:[%s1305 + $0x318] sm:$0xff] %v1702
                  %v1704 = vld [vmem:[%s1304 + $0x61c] sm:$0xff]
                  %1705 = vst [vmem:[%s1305 + $0x31c] sm:$0xff] %v1704
                  %v1706 = vld [vmem:[%s1304 + $0x620] sm:$0xff]
                  %1707 = vst [vmem:[%s1305 + $0x320] sm:$0xff] %v1706
                  %v1708 = vld [vmem:[%s1304 + $0x624] sm:$0xff]
                  %1709 = vst [vmem:[%s1305 + $0x324] sm:$0xff] %v1708
                  %v1710 = vld [vmem:[%s1304 + $0x628] sm:$0xff]
                  %1711 = vst [vmem:[%s1305 + $0x328] sm:$0xff] %v1710
                  %v1712 = vld [vmem:[%s1304 + $0x62c] sm:$0xff]
                  %1713 = vst [vmem:[%s1305 + $0x32c] sm:$0xff] %v1712
                  %v1714 = vld [vmem:[%s1304 + $0x630] sm:$0xff]
                  %1715 = vst [vmem:[%s1305 + $0x330] sm:$0xff] %v1714
                  %v1716 = vld [vmem:[%s1304 + $0x634] sm:$0xff]
                  %1717 = vst [vmem:[%s1305 + $0x334] sm:$0xff] %v1716
                  %v1718 = vld [vmem:[%s1304 + $0x638] sm:$0xff]
                  %1719 = vst [vmem:[%s1305 + $0x338] sm:$0xff] %v1718
                  %v1720 = vld [vmem:[%s1304 + $0x63c] sm:$0xff]
                  %1721 = vst [vmem:[%s1305 + $0x33c] sm:$0xff] %v1720
                  %v1722 = vld [vmem:[%s1304 + $0x640] sm:$0xff]
                  %1723 = vst [vmem:[%s1305 + $0x340] sm:$0xff] %v1722
                  %v1724 = vld [vmem:[%s1304 + $0x644] sm:$0xff]
                  %1725 = vst [vmem:[%s1305 + $0x344] sm:$0xff] %v1724
                  %v1726 = vld [vmem:[%s1304 + $0x648] sm:$0xff]
                  %1727 = vst [vmem:[%s1305 + $0x348] sm:$0xff] %v1726
                  %v1728 = vld [vmem:[%s1304 + $0x64c] sm:$0xff]
                  %1729 = vst [vmem:[%s1305 + $0x34c] sm:$0xff] %v1728
                  %v1730 = vld [vmem:[%s1304 + $0x650] sm:$0xff]
                  %1731 = vst [vmem:[%s1305 + $0x350] sm:$0xff] %v1730
                  %v1732 = vld [vmem:[%s1304 + $0x654] sm:$0xff]
                  %1733 = vst [vmem:[%s1305 + $0x354] sm:$0xff] %v1732
                  %v1734 = vld [vmem:[%s1304 + $0x658] sm:$0xff]
                  %1735 = vst [vmem:[%s1305 + $0x358] sm:$0xff] %v1734
                  %v1736 = vld [vmem:[%s1304 + $0x65c] sm:$0xff]
                  %1737 = vst [vmem:[%s1305 + $0x35c] sm:$0xff] %v1736
                  %v1738 = vld [vmem:[%s1304 + $0x660] sm:$0xff]
                  %1739 = vst [vmem:[%s1305 + $0x360] sm:$0xff] %v1738
                  %v1740 = vld [vmem:[%s1304 + $0x664] sm:$0xff]
                  %1741 = vst [vmem:[%s1305 + $0x364] sm:$0xff] %v1740
                  %v1742 = vld [vmem:[%s1304 + $0x668] sm:$0xff]
                  %1743 = vst [vmem:[%s1305 + $0x368] sm:$0xff] %v1742
                  %v1744 = vld [vmem:[%s1304 + $0x66c] sm:$0xff]
                  %1745 = vst [vmem:[%s1305 + $0x36c] sm:$0xff] %v1744
                  %v1746 = vld [vmem:[%s1304 + $0x670] sm:$0xff]
                  %1747 = vst [vmem:[%s1305 + $0x370] sm:$0xff] %v1746
                  %v1748 = vld [vmem:[%s1304 + $0x674] sm:$0xff]
                  %1749 = vst [vmem:[%s1305 + $0x374] sm:$0xff] %v1748
                  %v1750 = vld [vmem:[%s1304 + $0x678] sm:$0xff]
                  %1751 = vst [vmem:[%s1305 + $0x378] sm:$0xff] %v1750
                  %v1752 = vld [vmem:[%s1304 + $0x67c] sm:$0xff]
                  %1753 = vst [vmem:[%s1305 + $0x37c] sm:$0xff] %v1752
                  %v1754 = vld [vmem:[%s1304 + $0x700] sm:$0xff]
                  %1755 = vst [vmem:[%s1305 + $0x380] sm:$0xff] %v1754
                  %v1756 = vld [vmem:[%s1304 + $0x704] sm:$0xff]
                  %1757 = vst [vmem:[%s1305 + $0x384] sm:$0xff] %v1756
                  %v1758 = vld [vmem:[%s1304 + $0x708] sm:$0xff]
                  %1759 = vst [vmem:[%s1305 + $0x388] sm:$0xff] %v1758
                  %v1760 = vld [vmem:[%s1304 + $0x70c] sm:$0xff]
                  %1761 = vst [vmem:[%s1305 + $0x38c] sm:$0xff] %v1760
                  %v1762 = vld [vmem:[%s1304 + $0x710] sm:$0xff]
                  %1763 = vst [vmem:[%s1305 + $0x390] sm:$0xff] %v1762
                  %v1764 = vld [vmem:[%s1304 + $0x714] sm:$0xff]
                  %1765 = vst [vmem:[%s1305 + $0x394] sm:$0xff] %v1764
                  %v1766 = vld [vmem:[%s1304 + $0x718] sm:$0xff]
                  %1767 = vst [vmem:[%s1305 + $0x398] sm:$0xff] %v1766
                  %v1768 = vld [vmem:[%s1304 + $0x71c] sm:$0xff]
                  %1769 = vst [vmem:[%s1305 + $0x39c] sm:$0xff] %v1768
                  %v1770 = vld [vmem:[%s1304 + $0x720] sm:$0xff]
                  %1771 = vst [vmem:[%s1305 + $0x3a0] sm:$0xff] %v1770
                  %v1772 = vld [vmem:[%s1304 + $0x724] sm:$0xff]
                  %1773 = vst [vmem:[%s1305 + $0x3a4] sm:$0xff] %v1772
                  %v1774 = vld [vmem:[%s1304 + $0x728] sm:$0xff]
                  %1775 = vst [vmem:[%s1305 + $0x3a8] sm:$0xff] %v1774
                  %v1776 = vld [vmem:[%s1304 + $0x72c] sm:$0xff]
                  %1777 = vst [vmem:[%s1305 + $0x3ac] sm:$0xff] %v1776
                  %v1778 = vld [vmem:[%s1304 + $0x730] sm:$0xff]
                  %1779 = vst [vmem:[%s1305 + $0x3b0] sm:$0xff] %v1778
                  %v1780 = vld [vmem:[%s1304 + $0x734] sm:$0xff]
                  %1781 = vst [vmem:[%s1305 + $0x3b4] sm:$0xff] %v1780
                  %v1782 = vld [vmem:[%s1304 + $0x738] sm:$0xff]
                  %1783 = vst [vmem:[%s1305 + $0x3b8] sm:$0xff] %v1782
                  %v1784 = vld [vmem:[%s1304 + $0x73c] sm:$0xff]
                  %1785 = vst [vmem:[%s1305 + $0x3bc] sm:$0xff] %v1784
                  %v1786 = vld [vmem:[%s1304 + $0x740] sm:$0xff]
                  %1787 = vst [vmem:[%s1305 + $0x3c0] sm:$0xff] %v1786
                  %v1788 = vld [vmem:[%s1304 + $0x744] sm:$0xff]
                  %1789 = vst [vmem:[%s1305 + $0x3c4] sm:$0xff] %v1788
                  %v1790 = vld [vmem:[%s1304 + $0x748] sm:$0xff]
                  %1791 = vst [vmem:[%s1305 + $0x3c8] sm:$0xff] %v1790
                  %v1792 = vld [vmem:[%s1304 + $0x74c] sm:$0xff]
                  %1793 = vst [vmem:[%s1305 + $0x3cc] sm:$0xff] %v1792
                  %v1794 = vld [vmem:[%s1304 + $0x750] sm:$0xff]
                  %1795 = vst [vmem:[%s1305 + $0x3d0] sm:$0xff] %v1794
                  %v1796 = vld [vmem:[%s1304 + $0x754] sm:$0xff]
                  %1797 = vst [vmem:[%s1305 + $0x3d4] sm:$0xff] %v1796
                  %v1798 = vld [vmem:[%s1304 + $0x758] sm:$0xff]
                  %1799 = vst [vmem:[%s1305 + $0x3d8] sm:$0xff] %v1798
                  %v1800 = vld [vmem:[%s1304 + $0x75c] sm:$0xff]
                  %1801 = vst [vmem:[%s1305 + $0x3dc] sm:$0xff] %v1800
                  %v1802 = vld [vmem:[%s1304 + $0x760] sm:$0xff]
                  %1803 = vst [vmem:[%s1305 + $0x3e0] sm:$0xff] %v1802
                  %v1804 = vld [vmem:[%s1304 + $0x764] sm:$0xff]
                  %1805 = vst [vmem:[%s1305 + $0x3e4] sm:$0xff] %v1804
                  %v1806 = vld [vmem:[%s1304 + $0x768] sm:$0xff]
                  %1807 = vst [vmem:[%s1305 + $0x3e8] sm:$0xff] %v1806
                  %v1808 = vld [vmem:[%s1304 + $0x76c] sm:$0xff]
                  %1809 = vst [vmem:[%s1305 + $0x3ec] sm:$0xff] %v1808
                  %v1810 = vld [vmem:[%s1304 + $0x770] sm:$0xff]
                  %1811 = vst [vmem:[%s1305 + $0x3f0] sm:$0xff] %v1810
                  %v1812 = vld [vmem:[%s1304 + $0x774] sm:$0xff]
                  %1813 = vst [vmem:[%s1305 + $0x3f4] sm:$0xff] %v1812
                  %v1814 = vld [vmem:[%s1304 + $0x778] sm:$0xff]
                  %1815 = vst [vmem:[%s1305 + $0x3f8] sm:$0xff] %v1814
                  %v1816 = vld [vmem:[%s1304 + $0x77c] sm:$0xff]
                  %1817 = vst [vmem:[%s1305 + $0x3fc] sm:$0xff] %v1816
                  %v1818 = vld [vmem:[%s1304 + $0x800] sm:$0xff]
                  %1819 = vst [vmem:[%s1305 + $0x400] sm:$0xff] %v1818
                  %v1820 = vld [vmem:[%s1304 + $0x804] sm:$0xff]
                  %1821 = vst [vmem:[%s1305 + $0x404] sm:$0xff] %v1820
                  %v1822 = vld [vmem:[%s1304 + $0x808] sm:$0xff]
                  %1823 = vst [vmem:[%s1305 + $0x408] sm:$0xff] %v1822
                  %v1824 = vld [vmem:[%s1304 + $0x80c] sm:$0xff]
                  %1825 = vst [vmem:[%s1305 + $0x40c] sm:$0xff] %v1824
                  %v1826 = vld [vmem:[%s1304 + $0x810] sm:$0xff]
                  %1827 = vst [vmem:[%s1305 + $0x410] sm:$0xff] %v1826
                  %v1828 = vld [vmem:[%s1304 + $0x814] sm:$0xff]
                  %1829 = vst [vmem:[%s1305 + $0x414] sm:$0xff] %v1828
                  %v1830 = vld [vmem:[%s1304 + $0x818] sm:$0xff]
                  %1831 = vst [vmem:[%s1305 + $0x418] sm:$0xff] %v1830
                  %v1832 = vld [vmem:[%s1304 + $0x81c] sm:$0xff]
                  %1833 = vst [vmem:[%s1305 + $0x41c] sm:$0xff] %v1832
                  %v1834 = vld [vmem:[%s1304 + $0x820] sm:$0xff]
                  %1835 = vst [vmem:[%s1305 + $0x420] sm:$0xff] %v1834
                  %v1836 = vld [vmem:[%s1304 + $0x824] sm:$0xff]
                  %1837 = vst [vmem:[%s1305 + $0x424] sm:$0xff] %v1836
                  %v1838 = vld [vmem:[%s1304 + $0x828] sm:$0xff]
                  %1839 = vst [vmem:[%s1305 + $0x428] sm:$0xff] %v1838
                  %v1840 = vld [vmem:[%s1304 + $0x82c] sm:$0xff]
                  %1841 = vst [vmem:[%s1305 + $0x42c] sm:$0xff] %v1840
                  %v1842 = vld [vmem:[%s1304 + $0x830] sm:$0xff]
                  %1843 = vst [vmem:[%s1305 + $0x430] sm:$0xff] %v1842
                  %v1844 = vld [vmem:[%s1304 + $0x834] sm:$0xff]
                  %1845 = vst [vmem:[%s1305 + $0x434] sm:$0xff] %v1844
                  %v1846 = vld [vmem:[%s1304 + $0x838] sm:$0xff]
                  %1847 = vst [vmem:[%s1305 + $0x438] sm:$0xff] %v1846
                  %v1848 = vld [vmem:[%s1304 + $0x83c] sm:$0xff]
                  %1849 = vst [vmem:[%s1305 + $0x43c] sm:$0xff] %v1848
                  %v1850 = vld [vmem:[%s1304 + $0x840] sm:$0xff]
                  %1851 = vst [vmem:[%s1305 + $0x440] sm:$0xff] %v1850
                  %v1852 = vld [vmem:[%s1304 + $0x844] sm:$0xff]
                  %1853 = vst [vmem:[%s1305 + $0x444] sm:$0xff] %v1852
                  %v1854 = vld [vmem:[%s1304 + $0x848] sm:$0xff]
                  %1855 = vst [vmem:[%s1305 + $0x448] sm:$0xff] %v1854
                  %v1856 = vld [vmem:[%s1304 + $0x84c] sm:$0xff]
                  %1857 = vst [vmem:[%s1305 + $0x44c] sm:$0xff] %v1856
                  %v1858 = vld [vmem:[%s1304 + $0x850] sm:$0xff]
                  %1859 = vst [vmem:[%s1305 + $0x450] sm:$0xff] %v1858
                  %v1860 = vld [vmem:[%s1304 + $0x854] sm:$0xff]
                  %1861 = vst [vmem:[%s1305 + $0x454] sm:$0xff] %v1860
                  %v1862 = vld [vmem:[%s1304 + $0x858] sm:$0xff]
                  %1863 = vst [vmem:[%s1305 + $0x458] sm:$0xff] %v1862
                  %v1864 = vld [vmem:[%s1304 + $0x85c] sm:$0xff]
                  %1865 = vst [vmem:[%s1305 + $0x45c] sm:$0xff] %v1864
                  %v1866 = vld [vmem:[%s1304 + $0x860] sm:$0xff]
                  %1867 = vst [vmem:[%s1305 + $0x460] sm:$0xff] %v1866
                  %v1868 = vld [vmem:[%s1304 + $0x864] sm:$0xff]
                  %1869 = vst [vmem:[%s1305 + $0x464] sm:$0xff] %v1868
                  %v1870 = vld [vmem:[%s1304 + $0x868] sm:$0xff]
                  %1871 = vst [vmem:[%s1305 + $0x468] sm:$0xff] %v1870
                  %v1872 = vld [vmem:[%s1304 + $0x86c] sm:$0xff]
                  %1873 = vst [vmem:[%s1305 + $0x46c] sm:$0xff] %v1872
                  %v1874 = vld [vmem:[%s1304 + $0x870] sm:$0xff]
                  %1875 = vst [vmem:[%s1305 + $0x470] sm:$0xff] %v1874
                  %v1876 = vld [vmem:[%s1304 + $0x874] sm:$0xff]
                  %1877 = vst [vmem:[%s1305 + $0x474] sm:$0xff] %v1876
                  %v1878 = vld [vmem:[%s1304 + $0x878] sm:$0xff]
                  %1879 = vst [vmem:[%s1305 + $0x478] sm:$0xff] %v1878
                  %v1880 = vld [vmem:[%s1304 + $0x87c] sm:$0xff]
                  %1881 = vst [vmem:[%s1305 + $0x47c] sm:$0xff] %v1880
                  %v1882 = vld [vmem:[%s1304 + $0x900] sm:$0xff]
                  %1883 = vst [vmem:[%s1305 + $0x480] sm:$0xff] %v1882
                  %v1884 = vld [vmem:[%s1304 + $0x904] sm:$0xff]
                  %1885 = vst [vmem:[%s1305 + $0x484] sm:$0xff] %v1884
                  %v1886 = vld [vmem:[%s1304 + $0x908] sm:$0xff]
                  %1887 = vst [vmem:[%s1305 + $0x488] sm:$0xff] %v1886
                  %v1888 = vld [vmem:[%s1304 + $0x90c] sm:$0xff]
                  %1889 = vst [vmem:[%s1305 + $0x48c] sm:$0xff] %v1888
                  %v1890 = vld [vmem:[%s1304 + $0x910] sm:$0xff]
                  %1891 = vst [vmem:[%s1305 + $0x490] sm:$0xff] %v1890
                  %v1892 = vld [vmem:[%s1304 + $0x914] sm:$0xff]
                  %1893 = vst [vmem:[%s1305 + $0x494] sm:$0xff] %v1892
                  %v1894 = vld [vmem:[%s1304 + $0x918] sm:$0xff]
                  %1895 = vst [vmem:[%s1305 + $0x498] sm:$0xff] %v1894
                  %v1896 = vld [vmem:[%s1304 + $0x91c] sm:$0xff]
                  %1897 = vst [vmem:[%s1305 + $0x49c] sm:$0xff] %v1896
                  %v1898 = vld [vmem:[%s1304 + $0x920] sm:$0xff]
                  %1899 = vst [vmem:[%s1305 + $0x4a0] sm:$0xff] %v1898
                  %v1900 = vld [vmem:[%s1304 + $0x924] sm:$0xff]
                  %1901 = vst [vmem:[%s1305 + $0x4a4] sm:$0xff] %v1900
                  %v1902 = vld [vmem:[%s1304 + $0x928] sm:$0xff]
                  %1903 = vst [vmem:[%s1305 + $0x4a8] sm:$0xff] %v1902
                  %v1904 = vld [vmem:[%s1304 + $0x92c] sm:$0xff]
                  %1905 = vst [vmem:[%s1305 + $0x4ac] sm:$0xff] %v1904
                  %v1906 = vld [vmem:[%s1304 + $0x930] sm:$0xff]
                  %1907 = vst [vmem:[%s1305 + $0x4b0] sm:$0xff] %v1906
                  %v1908 = vld [vmem:[%s1304 + $0x934] sm:$0xff]
                  %1909 = vst [vmem:[%s1305 + $0x4b4] sm:$0xff] %v1908
                  %v1910 = vld [vmem:[%s1304 + $0x938] sm:$0xff]
                  %1911 = vst [vmem:[%s1305 + $0x4b8] sm:$0xff] %v1910
                  %v1912 = vld [vmem:[%s1304 + $0x93c] sm:$0xff]
                  %1913 = vst [vmem:[%s1305 + $0x4bc] sm:$0xff] %v1912
                  %v1914 = vld [vmem:[%s1304 + $0x940] sm:$0xff]
                  %1915 = vst [vmem:[%s1305 + $0x4c0] sm:$0xff] %v1914
                  %v1916 = vld [vmem:[%s1304 + $0x944] sm:$0xff]
                  %1917 = vst [vmem:[%s1305 + $0x4c4] sm:$0xff] %v1916
                  %v1918 = vld [vmem:[%s1304 + $0x948] sm:$0xff]
                  %1919 = vst [vmem:[%s1305 + $0x4c8] sm:$0xff] %v1918
                  %v1920 = vld [vmem:[%s1304 + $0x94c] sm:$0xff]
                  %1921 = vst [vmem:[%s1305 + $0x4cc] sm:$0xff] %v1920
                  %v1922 = vld [vmem:[%s1304 + $0x950] sm:$0xff]
                  %1923 = vst [vmem:[%s1305 + $0x4d0] sm:$0xff] %v1922
                  %v1924 = vld [vmem:[%s1304 + $0x954] sm:$0xff]
                  %1925 = vst [vmem:[%s1305 + $0x4d4] sm:$0xff] %v1924
                  %v1926 = vld [vmem:[%s1304 + $0x958] sm:$0xff]
                  %1927 = vst [vmem:[%s1305 + $0x4d8] sm:$0xff] %v1926
                  %v1928 = vld [vmem:[%s1304 + $0x95c] sm:$0xff]
                  %1929 = vst [vmem:[%s1305 + $0x4dc] sm:$0xff] %v1928
                  %v1930 = vld [vmem:[%s1304 + $0x960] sm:$0xff]
                  %1931 = vst [vmem:[%s1305 + $0x4e0] sm:$0xff] %v1930
                  %v1932 = vld [vmem:[%s1304 + $0x964] sm:$0xff]
                  %1933 = vst [vmem:[%s1305 + $0x4e4] sm:$0xff] %v1932
                  %v1934 = vld [vmem:[%s1304 + $0x968] sm:$0xff]
                  %1935 = vst [vmem:[%s1305 + $0x4e8] sm:$0xff] %v1934
                  %v1936 = vld [vmem:[%s1304 + $0x96c] sm:$0xff]
                  %1937 = vst [vmem:[%s1305 + $0x4ec] sm:$0xff] %v1936
                  %v1938 = vld [vmem:[%s1304 + $0x970] sm:$0xff]
                  %1939 = vst [vmem:[%s1305 + $0x4f0] sm:$0xff] %v1938
                  %v1940 = vld [vmem:[%s1304 + $0x974] sm:$0xff]
                  %1941 = vst [vmem:[%s1305 + $0x4f4] sm:$0xff] %v1940
                  %v1942 = vld [vmem:[%s1304 + $0x978] sm:$0xff]
                  %1943 = vst [vmem:[%s1305 + $0x4f8] sm:$0xff] %v1942
                  %v1944 = vld [vmem:[%s1304 + $0x97c] sm:$0xff]
                  %1945 = vst [vmem:[%s1305 + $0x4fc] sm:$0xff] %v1944
                  %v1946 = vld [vmem:[%s1304 + $0xa00] sm:$0xff]
                  %1947 = vst [vmem:[%s1305 + $0x500] sm:$0xff] %v1946
                  %v1948 = vld [vmem:[%s1304 + $0xa04] sm:$0xff]
                  %1949 = vst [vmem:[%s1305 + $0x504] sm:$0xff] %v1948
                  %v1950 = vld [vmem:[%s1304 + $0xa08] sm:$0xff]
                  %1951 = vst [vmem:[%s1305 + $0x508] sm:$0xff] %v1950
                  %v1952 = vld [vmem:[%s1304 + $0xa0c] sm:$0xff]
                  %1953 = vst [vmem:[%s1305 + $0x50c] sm:$0xff] %v1952
                  %v1954 = vld [vmem:[%s1304 + $0xa10] sm:$0xff]
                  %1955 = vst [vmem:[%s1305 + $0x510] sm:$0xff] %v1954
                  %v1956 = vld [vmem:[%s1304 + $0xa14] sm:$0xff]
                  %1957 = vst [vmem:[%s1305 + $0x514] sm:$0xff] %v1956
                  %v1958 = vld [vmem:[%s1304 + $0xa18] sm:$0xff]
                  %1959 = vst [vmem:[%s1305 + $0x518] sm:$0xff] %v1958
                  %v1960 = vld [vmem:[%s1304 + $0xa1c] sm:$0xff]
                  %1961 = vst [vmem:[%s1305 + $0x51c] sm:$0xff] %v1960
                  %v1962 = vld [vmem:[%s1304 + $0xa20] sm:$0xff]
                  %1963 = vst [vmem:[%s1305 + $0x520] sm:$0xff] %v1962
                  %v1964 = vld [vmem:[%s1304 + $0xa24] sm:$0xff]
                  %1965 = vst [vmem:[%s1305 + $0x524] sm:$0xff] %v1964
                  %v1966 = vld [vmem:[%s1304 + $0xa28] sm:$0xff]
                  %1967 = vst [vmem:[%s1305 + $0x528] sm:$0xff] %v1966
                  %v1968 = vld [vmem:[%s1304 + $0xa2c] sm:$0xff]
                  %1969 = vst [vmem:[%s1305 + $0x52c] sm:$0xff] %v1968
                  %v1970 = vld [vmem:[%s1304 + $0xa30] sm:$0xff]
                  %1971 = vst [vmem:[%s1305 + $0x530] sm:$0xff] %v1970
                  %v1972 = vld [vmem:[%s1304 + $0xa34] sm:$0xff]
                  %1973 = vst [vmem:[%s1305 + $0x534] sm:$0xff] %v1972
                  %v1974 = vld [vmem:[%s1304 + $0xa38] sm:$0xff]
                  %1975 = vst [vmem:[%s1305 + $0x538] sm:$0xff] %v1974
                  %v1976 = vld [vmem:[%s1304 + $0xa3c] sm:$0xff]
                  %1977 = vst [vmem:[%s1305 + $0x53c] sm:$0xff] %v1976
                  %v1978 = vld [vmem:[%s1304 + $0xa40] sm:$0xff]
                  %1979 = vst [vmem:[%s1305 + $0x540] sm:$0xff] %v1978
                  %v1980 = vld [vmem:[%s1304 + $0xa44] sm:$0xff]
                  %1981 = vst [vmem:[%s1305 + $0x544] sm:$0xff] %v1980
                  %v1982 = vld [vmem:[%s1304 + $0xa48] sm:$0xff]
                  %1983 = vst [vmem:[%s1305 + $0x548] sm:$0xff] %v1982
                  %v1984 = vld [vmem:[%s1304 + $0xa4c] sm:$0xff]
                  %1985 = vst [vmem:[%s1305 + $0x54c] sm:$0xff] %v1984
                  %v1986 = vld [vmem:[%s1304 + $0xa50] sm:$0xff]
                  %1987 = vst [vmem:[%s1305 + $0x550] sm:$0xff] %v1986
                  %v1988 = vld [vmem:[%s1304 + $0xa54] sm:$0xff]
                  %1989 = vst [vmem:[%s1305 + $0x554] sm:$0xff] %v1988
                  %v1990 = vld [vmem:[%s1304 + $0xa58] sm:$0xff]
                  %1991 = vst [vmem:[%s1305 + $0x558] sm:$0xff] %v1990
                  %v1992 = vld [vmem:[%s1304 + $0xa5c] sm:$0xff]
                  %1993 = vst [vmem:[%s1305 + $0x55c] sm:$0xff] %v1992
                  %v1994 = vld [vmem:[%s1304 + $0xa60] sm:$0xff]
                  %1995 = vst [vmem:[%s1305 + $0x560] sm:$0xff] %v1994
                  %v1996 = vld [vmem:[%s1304 + $0xa64] sm:$0xff]
                  %1997 = vst [vmem:[%s1305 + $0x564] sm:$0xff] %v1996
                  %v1998 = vld [vmem:[%s1304 + $0xa68] sm:$0xff]
                  %1999 = vst [vmem:[%s1305 + $0x568] sm:$0xff] %v1998
                  %v2000 = vld [vmem:[%s1304 + $0xa6c] sm:$0xff]
                  %2001 = vst [vmem:[%s1305 + $0x56c] sm:$0xff] %v2000
                  %v2002 = vld [vmem:[%s1304 + $0xa70] sm:$0xff]
                  %2003 = vst [vmem:[%s1305 + $0x570] sm:$0xff] %v2002
                  %v2004 = vld [vmem:[%s1304 + $0xa74] sm:$0xff]
                  %2005 = vst [vmem:[%s1305 + $0x574] sm:$0xff] %v2004
                  %v2006 = vld [vmem:[%s1304 + $0xa78] sm:$0xff]
                  %2007 = vst [vmem:[%s1305 + $0x578] sm:$0xff] %v2006
                  %v2008 = vld [vmem:[%s1304 + $0xa7c] sm:$0xff]
                  %2009 = vst [vmem:[%s1305 + $0x57c] sm:$0xff] %v2008
                  %v2010 = vld [vmem:[%s1304 + $0xb00] sm:$0xff]
                  %2011 = vst [vmem:[%s1305 + $0x580] sm:$0xff] %v2010
                  %v2012 = vld [vmem:[%s1304 + $0xb04] sm:$0xff]
                  %2013 = vst [vmem:[%s1305 + $0x584] sm:$0xff] %v2012
                  %v2014 = vld [vmem:[%s1304 + $0xb08] sm:$0xff]
                  %2015 = vst [vmem:[%s1305 + $0x588] sm:$0xff] %v2014
                  %v2016 = vld [vmem:[%s1304 + $0xb0c] sm:$0xff]
                  %2017 = vst [vmem:[%s1305 + $0x58c] sm:$0xff] %v2016
                  %v2018 = vld [vmem:[%s1304 + $0xb10] sm:$0xff]
                  %2019 = vst [vmem:[%s1305 + $0x590] sm:$0xff] %v2018
                  %v2020 = vld [vmem:[%s1304 + $0xb14] sm:$0xff]
                  %2021 = vst [vmem:[%s1305 + $0x594] sm:$0xff] %v2020
                  %v2022 = vld [vmem:[%s1304 + $0xb18] sm:$0xff]
                  %2023 = vst [vmem:[%s1305 + $0x598] sm:$0xff] %v2022
                  %v2024 = vld [vmem:[%s1304 + $0xb1c] sm:$0xff]
                  %2025 = vst [vmem:[%s1305 + $0x59c] sm:$0xff] %v2024
                  %v2026 = vld [vmem:[%s1304 + $0xb20] sm:$0xff]
                  %2027 = vst [vmem:[%s1305 + $0x5a0] sm:$0xff] %v2026
                  %v2028 = vld [vmem:[%s1304 + $0xb24] sm:$0xff]
                  %2029 = vst [vmem:[%s1305 + $0x5a4] sm:$0xff] %v2028
                  %v2030 = vld [vmem:[%s1304 + $0xb28] sm:$0xff]
                  %2031 = vst [vmem:[%s1305 + $0x5a8] sm:$0xff] %v2030
                  %v2032 = vld [vmem:[%s1304 + $0xb2c] sm:$0xff]
                  %2033 = vst [vmem:[%s1305 + $0x5ac] sm:$0xff] %v2032
                  %v2034 = vld [vmem:[%s1304 + $0xb30] sm:$0xff]
                  %2035 = vst [vmem:[%s1305 + $0x5b0] sm:$0xff] %v2034
                  %v2036 = vld [vmem:[%s1304 + $0xb34] sm:$0xff]
                  %2037 = vst [vmem:[%s1305 + $0x5b4] sm:$0xff] %v2036
                  %v2038 = vld [vmem:[%s1304 + $0xb38] sm:$0xff]
                  %2039 = vst [vmem:[%s1305 + $0x5b8] sm:$0xff] %v2038
                  %v2040 = vld [vmem:[%s1304 + $0xb3c] sm:$0xff]
                  %2041 = vst [vmem:[%s1305 + $0x5bc] sm:$0xff] %v2040
                  %v2042 = vld [vmem:[%s1304 + $0xb40] sm:$0xff]
                  %2043 = vst [vmem:[%s1305 + $0x5c0] sm:$0xff] %v2042
                  %v2044 = vld [vmem:[%s1304 + $0xb44] sm:$0xff]
                  %2045 = vst [vmem:[%s1305 + $0x5c4] sm:$0xff] %v2044
                  %v2046 = vld [vmem:[%s1304 + $0xb48] sm:$0xff]
                  %2047 = vst [vmem:[%s1305 + $0x5c8] sm:$0xff] %v2046
                  %v2048 = vld [vmem:[%s1304 + $0xb4c] sm:$0xff]
                  %2049 = vst [vmem:[%s1305 + $0x5cc] sm:$0xff] %v2048
                  %v2050 = vld [vmem:[%s1304 + $0xb50] sm:$0xff]
                  %2051 = vst [vmem:[%s1305 + $0x5d0] sm:$0xff] %v2050
                  %v2052 = vld [vmem:[%s1304 + $0xb54] sm:$0xff]
                  %2053 = vst [vmem:[%s1305 + $0x5d4] sm:$0xff] %v2052
                  %v2054 = vld [vmem:[%s1304 + $0xb58] sm:$0xff]
                  %2055 = vst [vmem:[%s1305 + $0x5d8] sm:$0xff] %v2054
                  %v2056 = vld [vmem:[%s1304 + $0xb5c] sm:$0xff]
                  %2057 = vst [vmem:[%s1305 + $0x5dc] sm:$0xff] %v2056
                  %v2058 = vld [vmem:[%s1304 + $0xb60] sm:$0xff]
                  %2059 = vst [vmem:[%s1305 + $0x5e0] sm:$0xff] %v2058
                  %v2060 = vld [vmem:[%s1304 + $0xb64] sm:$0xff]
                  %2061 = vst [vmem:[%s1305 + $0x5e4] sm:$0xff] %v2060
                  %v2062 = vld [vmem:[%s1304 + $0xb68] sm:$0xff]
                  %2063 = vst [vmem:[%s1305 + $0x5e8] sm:$0xff] %v2062
                  %v2064 = vld [vmem:[%s1304 + $0xb6c] sm:$0xff]
                  %2065 = vst [vmem:[%s1305 + $0x5ec] sm:$0xff] %v2064
                  %v2066 = vld [vmem:[%s1304 + $0xb70] sm:$0xff]
                  %2067 = vst [vmem:[%s1305 + $0x5f0] sm:$0xff] %v2066
                  %v2068 = vld [vmem:[%s1304 + $0xb74] sm:$0xff]
                  %2069 = vst [vmem:[%s1305 + $0x5f4] sm:$0xff] %v2068
                  %v2070 = vld [vmem:[%s1304 + $0xb78] sm:$0xff]
                  %2071 = vst [vmem:[%s1305 + $0x5f8] sm:$0xff] %v2070
                  %v2072 = vld [vmem:[%s1304 + $0xb7c] sm:$0xff]
                  %2073 = vst [vmem:[%s1305 + $0x5fc] sm:$0xff] %v2072
                  %v2074 = vld [vmem:[%s1304 + $0xc00] sm:$0xff]
                  %2075 = vst [vmem:[%s1305 + $0x600] sm:$0xff] %v2074
                  %v2076 = vld [vmem:[%s1304 + $0xc04] sm:$0xff]
                  %2077 = vst [vmem:[%s1305 + $0x604] sm:$0xff] %v2076
                  %v2078 = vld [vmem:[%s1304 + $0xc08] sm:$0xff]
                  %2079 = vst [vmem:[%s1305 + $0x608] sm:$0xff] %v2078
                  %v2080 = vld [vmem:[%s1304 + $0xc0c] sm:$0xff]
                  %2081 = vst [vmem:[%s1305 + $0x60c] sm:$0xff] %v2080
                  %v2082 = vld [vmem:[%s1304 + $0xc10] sm:$0xff]
                  %2083 = vst [vmem:[%s1305 + $0x610] sm:$0xff] %v2082
                  %v2084 = vld [vmem:[%s1304 + $0xc14] sm:$0xff]
                  %2085 = vst [vmem:[%s1305 + $0x614] sm:$0xff] %v2084
                  %v2086 = vld [vmem:[%s1304 + $0xc18] sm:$0xff]
                  %2087 = vst [vmem:[%s1305 + $0x618] sm:$0xff] %v2086
                  %v2088 = vld [vmem:[%s1304 + $0xc1c] sm:$0xff]
                  %2089 = vst [vmem:[%s1305 + $0x61c] sm:$0xff] %v2088
                  %v2090 = vld [vmem:[%s1304 + $0xc20] sm:$0xff]
                  %2091 = vst [vmem:[%s1305 + $0x620] sm:$0xff] %v2090
                  %v2092 = vld [vmem:[%s1304 + $0xc24] sm:$0xff]
                  %2093 = vst [vmem:[%s1305 + $0x624] sm:$0xff] %v2092
                  %v2094 = vld [vmem:[%s1304 + $0xc28] sm:$0xff]
                  %2095 = vst [vmem:[%s1305 + $0x628] sm:$0xff] %v2094
                  %v2096 = vld [vmem:[%s1304 + $0xc2c] sm:$0xff]
                  %2097 = vst [vmem:[%s1305 + $0x62c] sm:$0xff] %v2096
                  %v2098 = vld [vmem:[%s1304 + $0xc30] sm:$0xff]
                  %2099 = vst [vmem:[%s1305 + $0x630] sm:$0xff] %v2098
                  %v2100 = vld [vmem:[%s1304 + $0xc34] sm:$0xff]
                  %2101 = vst [vmem:[%s1305 + $0x634] sm:$0xff] %v2100
                  %v2102 = vld [vmem:[%s1304 + $0xc38] sm:$0xff]
                  %2103 = vst [vmem:[%s1305 + $0x638] sm:$0xff] %v2102
                  %v2104 = vld [vmem:[%s1304 + $0xc3c] sm:$0xff]
                  %2105 = vst [vmem:[%s1305 + $0x63c] sm:$0xff] %v2104
                  %v2106 = vld [vmem:[%s1304 + $0xc40] sm:$0xff]
                  %2107 = vst [vmem:[%s1305 + $0x640] sm:$0xff] %v2106
                  %v2108 = vld [vmem:[%s1304 + $0xc44] sm:$0xff]
                  %2109 = vst [vmem:[%s1305 + $0x644] sm:$0xff] %v2108
                  %v2110 = vld [vmem:[%s1304 + $0xc48] sm:$0xff]
                  %2111 = vst [vmem:[%s1305 + $0x648] sm:$0xff] %v2110
                  %v2112 = vld [vmem:[%s1304 + $0xc4c] sm:$0xff]
                  %2113 = vst [vmem:[%s1305 + $0x64c] sm:$0xff] %v2112
                  %v2114 = vld [vmem:[%s1304 + $0xc50] sm:$0xff]
                  %2115 = vst [vmem:[%s1305 + $0x650] sm:$0xff] %v2114
                  %v2116 = vld [vmem:[%s1304 + $0xc54] sm:$0xff]
                  %2117 = vst [vmem:[%s1305 + $0x654] sm:$0xff] %v2116
                  %v2118 = vld [vmem:[%s1304 + $0xc58] sm:$0xff]
                  %2119 = vst [vmem:[%s1305 + $0x658] sm:$0xff] %v2118
                  %v2120 = vld [vmem:[%s1304 + $0xc5c] sm:$0xff]
                  %2121 = vst [vmem:[%s1305 + $0x65c] sm:$0xff] %v2120
                  %v2122 = vld [vmem:[%s1304 + $0xc60] sm:$0xff]
                  %2123 = vst [vmem:[%s1305 + $0x660] sm:$0xff] %v2122
                  %v2124 = vld [vmem:[%s1304 + $0xc64] sm:$0xff]
                  %2125 = vst [vmem:[%s1305 + $0x664] sm:$0xff] %v2124
                  %v2126 = vld [vmem:[%s1304 + $0xc68] sm:$0xff]
                  %2127 = vst [vmem:[%s1305 + $0x668] sm:$0xff] %v2126
                  %v2128 = vld [vmem:[%s1304 + $0xc6c] sm:$0xff]
                  %2129 = vst [vmem:[%s1305 + $0x66c] sm:$0xff] %v2128
                  %v2130 = vld [vmem:[%s1304 + $0xc70] sm:$0xff]
                  %2131 = vst [vmem:[%s1305 + $0x670] sm:$0xff] %v2130
                  %v2132 = vld [vmem:[%s1304 + $0xc74] sm:$0xff]
                  %2133 = vst [vmem:[%s1305 + $0x674] sm:$0xff] %v2132
                  %v2134 = vld [vmem:[%s1304 + $0xc78] sm:$0xff]
                  %2135 = vst [vmem:[%s1305 + $0x678] sm:$0xff] %v2134
                  %v2136 = vld [vmem:[%s1304 + $0xc7c] sm:$0xff]
                  %2137 = vst [vmem:[%s1305 + $0x67c] sm:$0xff] %v2136
                  %v2138 = vld [vmem:[%s1304 + $0xd00] sm:$0xff]
                  %2139 = vst [vmem:[%s1305 + $0x680] sm:$0xff] %v2138
                  %v2140 = vld [vmem:[%s1304 + $0xd04] sm:$0xff]
                  %2141 = vst [vmem:[%s1305 + $0x684] sm:$0xff] %v2140
                  %v2142 = vld [vmem:[%s1304 + $0xd08] sm:$0xff]
                  %2143 = vst [vmem:[%s1305 + $0x688] sm:$0xff] %v2142
                  %v2144 = vld [vmem:[%s1304 + $0xd0c] sm:$0xff]
                  %2145 = vst [vmem:[%s1305 + $0x68c] sm:$0xff] %v2144
                  %v2146 = vld [vmem:[%s1304 + $0xd10] sm:$0xff]
                  %2147 = vst [vmem:[%s1305 + $0x690] sm:$0xff] %v2146
                  %v2148 = vld [vmem:[%s1304 + $0xd14] sm:$0xff]
                  %2149 = vst [vmem:[%s1305 + $0x694] sm:$0xff] %v2148
                  %v2150 = vld [vmem:[%s1304 + $0xd18] sm:$0xff]
                  %2151 = vst [vmem:[%s1305 + $0x698] sm:$0xff] %v2150
                  %v2152 = vld [vmem:[%s1304 + $0xd1c] sm:$0xff]
                  %2153 = vst [vmem:[%s1305 + $0x69c] sm:$0xff] %v2152
                  %v2154 = vld [vmem:[%s1304 + $0xd20] sm:$0xff]
                  %2155 = vst [vmem:[%s1305 + $0x6a0] sm:$0xff] %v2154
                  %v2156 = vld [vmem:[%s1304 + $0xd24] sm:$0xff]
                  %2157 = vst [vmem:[%s1305 + $0x6a4] sm:$0xff] %v2156
                  %v2158 = vld [vmem:[%s1304 + $0xd28] sm:$0xff]
                  %2159 = vst [vmem:[%s1305 + $0x6a8] sm:$0xff] %v2158
                  %v2160 = vld [vmem:[%s1304 + $0xd2c] sm:$0xff]
                  %2161 = vst [vmem:[%s1305 + $0x6ac] sm:$0xff] %v2160
                  %v2162 = vld [vmem:[%s1304 + $0xd30] sm:$0xff]
                  %2163 = vst [vmem:[%s1305 + $0x6b0] sm:$0xff] %v2162
                  %v2164 = vld [vmem:[%s1304 + $0xd34] sm:$0xff]
                  %2165 = vst [vmem:[%s1305 + $0x6b4] sm:$0xff] %v2164
                  %v2166 = vld [vmem:[%s1304 + $0xd38] sm:$0xff]
                  %2167 = vst [vmem:[%s1305 + $0x6b8] sm:$0xff] %v2166
                  %v2168 = vld [vmem:[%s1304 + $0xd3c] sm:$0xff]
                  %2169 = vst [vmem:[%s1305 + $0x6bc] sm:$0xff] %v2168
                  %v2170 = vld [vmem:[%s1304 + $0xd40] sm:$0xff]
                  %2171 = vst [vmem:[%s1305 + $0x6c0] sm:$0xff] %v2170
                  %v2172 = vld [vmem:[%s1304 + $0xd44] sm:$0xff]
                  %2173 = vst [vmem:[%s1305 + $0x6c4] sm:$0xff] %v2172
                  %v2174 = vld [vmem:[%s1304 + $0xd48] sm:$0xff]
                  %2175 = vst [vmem:[%s1305 + $0x6c8] sm:$0xff] %v2174
                  %v2176 = vld [vmem:[%s1304 + $0xd4c] sm:$0xff]
                  %2177 = vst [vmem:[%s1305 + $0x6cc] sm:$0xff] %v2176
                  %v2178 = vld [vmem:[%s1304 + $0xd50] sm:$0xff]
                  %2179 = vst [vmem:[%s1305 + $0x6d0] sm:$0xff] %v2178
                  %v2180 = vld [vmem:[%s1304 + $0xd54] sm:$0xff]
                  %2181 = vst [vmem:[%s1305 + $0x6d4] sm:$0xff] %v2180
                  %v2182 = vld [vmem:[%s1304 + $0xd58] sm:$0xff]
                  %2183 = vst [vmem:[%s1305 + $0x6d8] sm:$0xff] %v2182
                  %v2184 = vld [vmem:[%s1304 + $0xd5c] sm:$0xff]
                  %2185 = vst [vmem:[%s1305 + $0x6dc] sm:$0xff] %v2184
                  %v2186 = vld [vmem:[%s1304 + $0xd60] sm:$0xff]
                  %2187 = vst [vmem:[%s1305 + $0x6e0] sm:$0xff] %v2186
                  %v2188 = vld [vmem:[%s1304 + $0xd64] sm:$0xff]
                  %2189 = vst [vmem:[%s1305 + $0x6e4] sm:$0xff] %v2188
                  %v2190 = vld [vmem:[%s1304 + $0xd68] sm:$0xff]
                  %2191 = vst [vmem:[%s1305 + $0x6e8] sm:$0xff] %v2190
                  %v2192 = vld [vmem:[%s1304 + $0xd6c] sm:$0xff]
                  %2193 = vst [vmem:[%s1305 + $0x6ec] sm:$0xff] %v2192
                  %v2194 = vld [vmem:[%s1304 + $0xd70] sm:$0xff]
                  %2195 = vst [vmem:[%s1305 + $0x6f0] sm:$0xff] %v2194
                  %v2196 = vld [vmem:[%s1304 + $0xd74] sm:$0xff]
                  %2197 = vst [vmem:[%s1305 + $0x6f4] sm:$0xff] %v2196
                  %v2198 = vld [vmem:[%s1304 + $0xd78] sm:$0xff]
                  %2199 = vst [vmem:[%s1305 + $0x6f8] sm:$0xff] %v2198
                  %v2200 = vld [vmem:[%s1304 + $0xd7c] sm:$0xff]
                  %2201 = vst [vmem:[%s1305 + $0x6fc] sm:$0xff] %v2200
                  %v2202 = vld [vmem:[%s1304 + $0xe00] sm:$0xff]
                  %2203 = vst [vmem:[%s1305 + $0x700] sm:$0xff] %v2202
                  %v2204 = vld [vmem:[%s1304 + $0xe04] sm:$0xff]
                  %2205 = vst [vmem:[%s1305 + $0x704] sm:$0xff] %v2204
                  %v2206 = vld [vmem:[%s1304 + $0xe08] sm:$0xff]
                  %2207 = vst [vmem:[%s1305 + $0x708] sm:$0xff] %v2206
                  %v2208 = vld [vmem:[%s1304 + $0xe0c] sm:$0xff]
                  %2209 = vst [vmem:[%s1305 + $0x70c] sm:$0xff] %v2208
                  %v2210 = vld [vmem:[%s1304 + $0xe10] sm:$0xff]
                  %2211 = vst [vmem:[%s1305 + $0x710] sm:$0xff] %v2210
                  %v2212 = vld [vmem:[%s1304 + $0xe14] sm:$0xff]
                  %2213 = vst [vmem:[%s1305 + $0x714] sm:$0xff] %v2212
                  %v2214 = vld [vmem:[%s1304 + $0xe18] sm:$0xff]
                  %2215 = vst [vmem:[%s1305 + $0x718] sm:$0xff] %v2214
                  %v2216 = vld [vmem:[%s1304 + $0xe1c] sm:$0xff]
                  %2217 = vst [vmem:[%s1305 + $0x71c] sm:$0xff] %v2216
                  %v2218 = vld [vmem:[%s1304 + $0xe20] sm:$0xff]
                  %2219 = vst [vmem:[%s1305 + $0x720] sm:$0xff] %v2218
                  %v2220 = vld [vmem:[%s1304 + $0xe24] sm:$0xff]
                  %2221 = vst [vmem:[%s1305 + $0x724] sm:$0xff] %v2220
                  %v2222 = vld [vmem:[%s1304 + $0xe28] sm:$0xff]
                  %2223 = vst [vmem:[%s1305 + $0x728] sm:$0xff] %v2222
                  %v2224 = vld [vmem:[%s1304 + $0xe2c] sm:$0xff]
                  %2225 = vst [vmem:[%s1305 + $0x72c] sm:$0xff] %v2224
                  %v2226 = vld [vmem:[%s1304 + $0xe30] sm:$0xff]
                  %2227 = vst [vmem:[%s1305 + $0x730] sm:$0xff] %v2226
                  %v2228 = vld [vmem:[%s1304 + $0xe34] sm:$0xff]
                  %2229 = vst [vmem:[%s1305 + $0x734] sm:$0xff] %v2228
                  %v2230 = vld [vmem:[%s1304 + $0xe38] sm:$0xff]
                  %2231 = vst [vmem:[%s1305 + $0x738] sm:$0xff] %v2230
                  %v2232 = vld [vmem:[%s1304 + $0xe3c] sm:$0xff]
                  %2233 = vst [vmem:[%s1305 + $0x73c] sm:$0xff] %v2232
                  %v2234 = vld [vmem:[%s1304 + $0xe40] sm:$0xff]
                  %2235 = vst [vmem:[%s1305 + $0x740] sm:$0xff] %v2234
                  %v2236 = vld [vmem:[%s1304 + $0xe44] sm:$0xff]
                  %2237 = vst [vmem:[%s1305 + $0x744] sm:$0xff] %v2236
                  %v2238 = vld [vmem:[%s1304 + $0xe48] sm:$0xff]
                  %2239 = vst [vmem:[%s1305 + $0x748] sm:$0xff] %v2238
                  %v2240 = vld [vmem:[%s1304 + $0xe4c] sm:$0xff]
                  %2241 = vst [vmem:[%s1305 + $0x74c] sm:$0xff] %v2240
                  %v2242 = vld [vmem:[%s1304 + $0xe50] sm:$0xff]
                  %2243 = vst [vmem:[%s1305 + $0x750] sm:$0xff] %v2242
                  %v2244 = vld [vmem:[%s1304 + $0xe54] sm:$0xff]
                  %2245 = vst [vmem:[%s1305 + $0x754] sm:$0xff] %v2244
                  %v2246 = vld [vmem:[%s1304 + $0xe58] sm:$0xff]
                  %2247 = vst [vmem:[%s1305 + $0x758] sm:$0xff] %v2246
                  %v2248 = vld [vmem:[%s1304 + $0xe5c] sm:$0xff]
                  %2249 = vst [vmem:[%s1305 + $0x75c] sm:$0xff] %v2248
                  %v2250 = vld [vmem:[%s1304 + $0xe60] sm:$0xff]
                  %2251 = vst [vmem:[%s1305 + $0x760] sm:$0xff] %v2250
                  %v2252 = vld [vmem:[%s1304 + $0xe64] sm:$0xff]
                  %2253 = vst [vmem:[%s1305 + $0x764] sm:$0xff] %v2252
                  %v2254 = vld [vmem:[%s1304 + $0xe68] sm:$0xff]
                  %2255 = vst [vmem:[%s1305 + $0x768] sm:$0xff] %v2254
                  %v2256 = vld [vmem:[%s1304 + $0xe6c] sm:$0xff]
                  %2257 = vst [vmem:[%s1305 + $0x76c] sm:$0xff] %v2256
                  %v2258 = vld [vmem:[%s1304 + $0xe70] sm:$0xff]
                  %2259 = vst [vmem:[%s1305 + $0x770] sm:$0xff] %v2258
                  %v2260 = vld [vmem:[%s1304 + $0xe74] sm:$0xff]
                  %2261 = vst [vmem:[%s1305 + $0x774] sm:$0xff] %v2260
                  %v2262 = vld [vmem:[%s1304 + $0xe78] sm:$0xff]
                  %2263 = vst [vmem:[%s1305 + $0x778] sm:$0xff] %v2262
                  %v2264 = vld [vmem:[%s1304 + $0xe7c] sm:$0xff]
                  %2265 = vst [vmem:[%s1305 + $0x77c] sm:$0xff] %v2264
                  %v2266 = vld [vmem:[%s1304 + $0xf00] sm:$0xff]
                  %2267 = vst [vmem:[%s1305 + $0x780] sm:$0xff] %v2266
                  %v2268 = vld [vmem:[%s1304 + $0xf04] sm:$0xff]
                  %2269 = vst [vmem:[%s1305 + $0x784] sm:$0xff] %v2268
                  %v2270 = vld [vmem:[%s1304 + $0xf08] sm:$0xff]
                  %2271 = vst [vmem:[%s1305 + $0x788] sm:$0xff] %v2270
                  %v2272 = vld [vmem:[%s1304 + $0xf0c] sm:$0xff]
                  %2273 = vst [vmem:[%s1305 + $0x78c] sm:$0xff] %v2272
                  %v2274 = vld [vmem:[%s1304 + $0xf10] sm:$0xff]
                  %2275 = vst [vmem:[%s1305 + $0x790] sm:$0xff] %v2274
                  %v2276 = vld [vmem:[%s1304 + $0xf14] sm:$0xff]
                  %2277 = vst [vmem:[%s1305 + $0x794] sm:$0xff] %v2276
                  %v2278 = vld [vmem:[%s1304 + $0xf18] sm:$0xff]
                  %2279 = vst [vmem:[%s1305 + $0x798] sm:$0xff] %v2278
                  %v2280 = vld [vmem:[%s1304 + $0xf1c] sm:$0xff]
                  %2281 = vst [vmem:[%s1305 + $0x79c] sm:$0xff] %v2280
                  %v2282 = vld [vmem:[%s1304 + $0xf20] sm:$0xff]
                  %2283 = vst [vmem:[%s1305 + $0x7a0] sm:$0xff] %v2282
                  %v2284 = vld [vmem:[%s1304 + $0xf24] sm:$0xff]
                  %2285 = vst [vmem:[%s1305 + $0x7a4] sm:$0xff] %v2284
                  %v2286 = vld [vmem:[%s1304 + $0xf28] sm:$0xff]
                  %2287 = vst [vmem:[%s1305 + $0x7a8] sm:$0xff] %v2286
                  %v2288 = vld [vmem:[%s1304 + $0xf2c] sm:$0xff]
                  %2289 = vst [vmem:[%s1305 + $0x7ac] sm:$0xff] %v2288
                  %v2290 = vld [vmem:[%s1304 + $0xf30] sm:$0xff]
                  %2291 = vst [vmem:[%s1305 + $0x7b0] sm:$0xff] %v2290
                  %v2292 = vld [vmem:[%s1304 + $0xf34] sm:$0xff]
                  %2293 = vst [vmem:[%s1305 + $0x7b4] sm:$0xff] %v2292
                  %v2294 = vld [vmem:[%s1304 + $0xf38] sm:$0xff]
                  %2295 = vst [vmem:[%s1305 + $0x7b8] sm:$0xff] %v2294
                  %v2296 = vld [vmem:[%s1304 + $0xf3c] sm:$0xff]
                  %2297 = vst [vmem:[%s1305 + $0x7bc] sm:$0xff] %v2296
                  %v2298 = vld [vmem:[%s1304 + $0xf40] sm:$0xff]
                  %2299 = vst [vmem:[%s1305 + $0x7c0] sm:$0xff] %v2298
                  %v2300 = vld [vmem:[%s1304 + $0xf44] sm:$0xff]
                  %2301 = vst [vmem:[%s1305 + $0x7c4] sm:$0xff] %v2300
                  %v2302 = vld [vmem:[%s1304 + $0xf48] sm:$0xff]
                  %2303 = vst [vmem:[%s1305 + $0x7c8] sm:$0xff] %v2302
                  %v2304 = vld [vmem:[%s1304 + $0xf4c] sm:$0xff]
                  %2305 = vst [vmem:[%s1305 + $0x7cc] sm:$0xff] %v2304
                  %v2306 = vld [vmem:[%s1304 + $0xf50] sm:$0xff]
                  %2307 = vst [vmem:[%s1305 + $0x7d0] sm:$0xff] %v2306
                  %v2308 = vld [vmem:[%s1304 + $0xf54] sm:$0xff]
                  %2309 = vst [vmem:[%s1305 + $0x7d4] sm:$0xff] %v2308
                  %v2310 = vld [vmem:[%s1304 + $0xf58] sm:$0xff]
                  %2311 = vst [vmem:[%s1305 + $0x7d8] sm:$0xff] %v2310
                  %v2312 = vld [vmem:[%s1304 + $0xf5c] sm:$0xff]
                  %2313 = vst [vmem:[%s1305 + $0x7dc] sm:$0xff] %v2312
                  %v2314 = vld [vmem:[%s1304 + $0xf60] sm:$0xff]
                  %2315 = vst [vmem:[%s1305 + $0x7e0] sm:$0xff] %v2314
                  %v2316 = vld [vmem:[%s1304 + $0xf64] sm:$0xff]
                  %2317 = vst [vmem:[%s1305 + $0x7e4] sm:$0xff] %v2316
                  %v2318 = vld [vmem:[%s1304 + $0xf68] sm:$0xff]
                  %2319 = vst [vmem:[%s1305 + $0x7e8] sm:$0xff] %v2318
                  %v2320 = vld [vmem:[%s1304 + $0xf6c] sm:$0xff]
                  %2321 = vst [vmem:[%s1305 + $0x7ec] sm:$0xff] %v2320
                  %v2322 = vld [vmem:[%s1304 + $0xf70] sm:$0xff]
                  %2323 = vst [vmem:[%s1305 + $0x7f0] sm:$0xff] %v2322
                  %v2324 = vld [vmem:[%s1304 + $0xf74] sm:$0xff]
                  %2325 = vst [vmem:[%s1305 + $0x7f4] sm:$0xff] %v2324
                  %v2326 = vld [vmem:[%s1304 + $0xf78] sm:$0xff]
                  %2327 = vst [vmem:[%s1305 + $0x7f8] sm:$0xff] %v2326
                  %v2328 = vld [vmem:[%s1304 + $0xf7c] sm:$0xff]
                  %2329 = vst [vmem:[%s1305 + $0x7fc] sm:$0xff] %v2328
                  %s2330 = sadd.s32 1, %s1303
                  %p2331 = scmp.ge.s32.totalorder %s2330, 0
                  %s2332 = scalar_select %p2331, 0, %s2330
                  %s2333 = smul.u32 %s2332, 8
                  %s2334 = smul.u32 %s2332, 8
                  %s2335 = scalar_lea.vmem %s254, %s2333
                  %s2336 = scalar_lea.vmem %s248, %s2334 [#allocation3]
                $region72: #{net_forward.3} parent=66 // loop_footer
                  %s1302 = sadd.s32 1, %s1298
                $region73: #{net_forward.3} parent=66 // loop_footer_branch
                  %1297 = sbr.rel target = $region69
                $region74: #{net_forward.3} parent=66 // loop_exit
                  _
              $region67: #{net_forward.3} parent=51 // pred_fallthru
                _
              // Predicated region
              $region75: #{net_forward.3} parent=51 // pred_check
                _
              $region76: #{net_forward.3} parent=51 // pred_check_branch
                %2338 = sbr.rel (0) target = $region78
              $region77: #{net_forward.3} parent=51 // pred_region
                loop: start=0, step=1, limit=0
                $region79: #{net_forward.3} parent=77 // loop_pre_header
                  _
                $region80: #{net_forward.3} parent=77 // loop_header
                  %s2340 = sphi 0, %s2344
                  %p2341 = scmp.ge.s32.totalorder %s2340, 0
                  %s2345 = sphi 0, %s3374
                  %s2346 = sphi %s254, %s3377
                  %s2347 = sphi %s248, %s3378
                $region81: #{net_forward.3} parent=77 // loop_header_branch
                  %2343 = sbr.rel (%p2341) target = $region85
                $region82: #{net_forward.3} parent=77 // loop_body
                  %v2348 = vld [vmem:[%s2346] sm:$0xff]
                  %2349 = vst [vmem:[%s2347] sm:$0xff] %v2348
                  %v2350 = vld [vmem:[%s2346 + $0x4] sm:$0xff]
                  %2351 = vst [vmem:[%s2347 + $0x4] sm:$0xff] %v2350
                  %v2352 = vld [vmem:[%s2346 + $0x8] sm:$0xff]
                  %2353 = vst [vmem:[%s2347 + $0x8] sm:$0xff] %v2352
                  %v2354 = vld [vmem:[%s2346 + $0xc] sm:$0xff]
                  %2355 = vst [vmem:[%s2347 + $0xc] sm:$0xff] %v2354
                  %v2356 = vld [vmem:[%s2346 + $0x10] sm:$0xff]
                  %2357 = vst [vmem:[%s2347 + $0x10] sm:$0xff] %v2356
                  %v2358 = vld [vmem:[%s2346 + $0x14] sm:$0xff]
                  %2359 = vst [vmem:[%s2347 + $0x14] sm:$0xff] %v2358
                  %v2360 = vld [vmem:[%s2346 + $0x18] sm:$0xff]
                  %2361 = vst [vmem:[%s2347 + $0x18] sm:$0xff] %v2360
                  %v2362 = vld [vmem:[%s2346 + $0x1c] sm:$0xff]
                  %2363 = vst [vmem:[%s2347 + $0x1c] sm:$0xff] %v2362
                  %v2364 = vld [vmem:[%s2346 + $0x20] sm:$0xff]
                  %2365 = vst [vmem:[%s2347 + $0x20] sm:$0xff] %v2364
                  %v2366 = vld [vmem:[%s2346 + $0x24] sm:$0xff]
                  %2367 = vst [vmem:[%s2347 + $0x24] sm:$0xff] %v2366
                  %v2368 = vld [vmem:[%s2346 + $0x28] sm:$0xff]
                  %2369 = vst [vmem:[%s2347 + $0x28] sm:$0xff] %v2368
                  %v2370 = vld [vmem:[%s2346 + $0x2c] sm:$0xff]
                  %2371 = vst [vmem:[%s2347 + $0x2c] sm:$0xff] %v2370
                  %v2372 = vld [vmem:[%s2346 + $0x30] sm:$0xff]
                  %2373 = vst [vmem:[%s2347 + $0x30] sm:$0xff] %v2372
                  %v2374 = vld [vmem:[%s2346 + $0x34] sm:$0xff]
                  %2375 = vst [vmem:[%s2347 + $0x34] sm:$0xff] %v2374
                  %v2376 = vld [vmem:[%s2346 + $0x38] sm:$0xff]
                  %2377 = vst [vmem:[%s2347 + $0x38] sm:$0xff] %v2376
                  %v2378 = vld [vmem:[%s2346 + $0x3c] sm:$0xff]
                  %2379 = vst [vmem:[%s2347 + $0x3c] sm:$0xff] %v2378
                  %v2380 = vld [vmem:[%s2346 + $0x40] sm:$0xff]
                  %2381 = vst [vmem:[%s2347 + $0x40] sm:$0xff] %v2380
                  %v2382 = vld [vmem:[%s2346 + $0x44] sm:$0xff]
                  %2383 = vst [vmem:[%s2347 + $0x44] sm:$0xff] %v2382
                  %v2384 = vld [vmem:[%s2346 + $0x48] sm:$0xff]
                  %2385 = vst [vmem:[%s2347 + $0x48] sm:$0xff] %v2384
                  %v2386 = vld [vmem:[%s2346 + $0x4c] sm:$0xff]
                  %2387 = vst [vmem:[%s2347 + $0x4c] sm:$0xff] %v2386
                  %v2388 = vld [vmem:[%s2346 + $0x50] sm:$0xff]
                  %2389 = vst [vmem:[%s2347 + $0x50] sm:$0xff] %v2388
                  %v2390 = vld [vmem:[%s2346 + $0x54] sm:$0xff]
                  %2391 = vst [vmem:[%s2347 + $0x54] sm:$0xff] %v2390
                  %v2392 = vld [vmem:[%s2346 + $0x58] sm:$0xff]
                  %2393 = vst [vmem:[%s2347 + $0x58] sm:$0xff] %v2392
                  %v2394 = vld [vmem:[%s2346 + $0x5c] sm:$0xff]
                  %2395 = vst [vmem:[%s2347 + $0x5c] sm:$0xff] %v2394
                  %v2396 = vld [vmem:[%s2346 + $0x60] sm:$0xff]
                  %2397 = vst [vmem:[%s2347 + $0x60] sm:$0xff] %v2396
                  %v2398 = vld [vmem:[%s2346 + $0x64] sm:$0xff]
                  %2399 = vst [vmem:[%s2347 + $0x64] sm:$0xff] %v2398
                  %v2400 = vld [vmem:[%s2346 + $0x68] sm:$0xff]
                  %2401 = vst [vmem:[%s2347 + $0x68] sm:$0xff] %v2400
                  %v2402 = vld [vmem:[%s2346 + $0x6c] sm:$0xff]
                  %2403 = vst [vmem:[%s2347 + $0x6c] sm:$0xff] %v2402
                  %v2404 = vld [vmem:[%s2346 + $0x70] sm:$0xff]
                  %2405 = vst [vmem:[%s2347 + $0x70] sm:$0xff] %v2404
                  %v2406 = vld [vmem:[%s2346 + $0x74] sm:$0xff]
                  %2407 = vst [vmem:[%s2347 + $0x74] sm:$0xff] %v2406
                  %v2408 = vld [vmem:[%s2346 + $0x78] sm:$0xff]
                  %2409 = vst [vmem:[%s2347 + $0x78] sm:$0xff] %v2408
                  %v2410 = vld [vmem:[%s2346 + $0x7c] sm:$0xff]
                  %2411 = vst [vmem:[%s2347 + $0x7c] sm:$0xff] %v2410
                  %v2412 = vld [vmem:[%s2346 + $0x100] sm:$0xff]
                  %2413 = vst [vmem:[%s2347 + $0x80] sm:$0xff] %v2412
                  %v2414 = vld [vmem:[%s2346 + $0x104] sm:$0xff]
                  %2415 = vst [vmem:[%s2347 + $0x84] sm:$0xff] %v2414
                  %v2416 = vld [vmem:[%s2346 + $0x108] sm:$0xff]
                  %2417 = vst [vmem:[%s2347 + $0x88] sm:$0xff] %v2416
                  %v2418 = vld [vmem:[%s2346 + $0x10c] sm:$0xff]
                  %2419 = vst [vmem:[%s2347 + $0x8c] sm:$0xff] %v2418
                  %v2420 = vld [vmem:[%s2346 + $0x110] sm:$0xff]
                  %2421 = vst [vmem:[%s2347 + $0x90] sm:$0xff] %v2420
                  %v2422 = vld [vmem:[%s2346 + $0x114] sm:$0xff]
                  %2423 = vst [vmem:[%s2347 + $0x94] sm:$0xff] %v2422
                  %v2424 = vld [vmem:[%s2346 + $0x118] sm:$0xff]
                  %2425 = vst [vmem:[%s2347 + $0x98] sm:$0xff] %v2424
                  %v2426 = vld [vmem:[%s2346 + $0x11c] sm:$0xff]
                  %2427 = vst [vmem:[%s2347 + $0x9c] sm:$0xff] %v2426
                  %v2428 = vld [vmem:[%s2346 + $0x120] sm:$0xff]
                  %2429 = vst [vmem:[%s2347 + $0xa0] sm:$0xff] %v2428
                  %v2430 = vld [vmem:[%s2346 + $0x124] sm:$0xff]
                  %2431 = vst [vmem:[%s2347 + $0xa4] sm:$0xff] %v2430
                  %v2432 = vld [vmem:[%s2346 + $0x128] sm:$0xff]
                  %2433 = vst [vmem:[%s2347 + $0xa8] sm:$0xff] %v2432
                  %v2434 = vld [vmem:[%s2346 + $0x12c] sm:$0xff]
                  %2435 = vst [vmem:[%s2347 + $0xac] sm:$0xff] %v2434
                  %v2436 = vld [vmem:[%s2346 + $0x130] sm:$0xff]
                  %2437 = vst [vmem:[%s2347 + $0xb0] sm:$0xff] %v2436
                  %v2438 = vld [vmem:[%s2346 + $0x134] sm:$0xff]
                  %2439 = vst [vmem:[%s2347 + $0xb4] sm:$0xff] %v2438
                  %v2440 = vld [vmem:[%s2346 + $0x138] sm:$0xff]
                  %2441 = vst [vmem:[%s2347 + $0xb8] sm:$0xff] %v2440
                  %v2442 = vld [vmem:[%s2346 + $0x13c] sm:$0xff]
                  %2443 = vst [vmem:[%s2347 + $0xbc] sm:$0xff] %v2442
                  %v2444 = vld [vmem:[%s2346 + $0x140] sm:$0xff]
                  %2445 = vst [vmem:[%s2347 + $0xc0] sm:$0xff] %v2444
                  %v2446 = vld [vmem:[%s2346 + $0x144] sm:$0xff]
                  %2447 = vst [vmem:[%s2347 + $0xc4] sm:$0xff] %v2446
                  %v2448 = vld [vmem:[%s2346 + $0x148] sm:$0xff]
                  %2449 = vst [vmem:[%s2347 + $0xc8] sm:$0xff] %v2448
                  %v2450 = vld [vmem:[%s2346 + $0x14c] sm:$0xff]
                  %2451 = vst [vmem:[%s2347 + $0xcc] sm:$0xff] %v2450
                  %v2452 = vld [vmem:[%s2346 + $0x150] sm:$0xff]
                  %2453 = vst [vmem:[%s2347 + $0xd0] sm:$0xff] %v2452
                  %v2454 = vld [vmem:[%s2346 + $0x154] sm:$0xff]
                  %2455 = vst [vmem:[%s2347 + $0xd4] sm:$0xff] %v2454
                  %v2456 = vld [vmem:[%s2346 + $0x158] sm:$0xff]
                  %2457 = vst [vmem:[%s2347 + $0xd8] sm:$0xff] %v2456
                  %v2458 = vld [vmem:[%s2346 + $0x15c] sm:$0xff]
                  %2459 = vst [vmem:[%s2347 + $0xdc] sm:$0xff] %v2458
                  %v2460 = vld [vmem:[%s2346 + $0x160] sm:$0xff]
                  %2461 = vst [vmem:[%s2347 + $0xe0] sm:$0xff] %v2460
                  %v2462 = vld [vmem:[%s2346 + $0x164] sm:$0xff]
                  %2463 = vst [vmem:[%s2347 + $0xe4] sm:$0xff] %v2462
                  %v2464 = vld [vmem:[%s2346 + $0x168] sm:$0xff]
                  %2465 = vst [vmem:[%s2347 + $0xe8] sm:$0xff] %v2464
                  %v2466 = vld [vmem:[%s2346 + $0x16c] sm:$0xff]
                  %2467 = vst [vmem:[%s2347 + $0xec] sm:$0xff] %v2466
                  %v2468 = vld [vmem:[%s2346 + $0x170] sm:$0xff]
                  %2469 = vst [vmem:[%s2347 + $0xf0] sm:$0xff] %v2468
                  %v2470 = vld [vmem:[%s2346 + $0x174] sm:$0xff]
                  %2471 = vst [vmem:[%s2347 + $0xf4] sm:$0xff] %v2470
                  %v2472 = vld [vmem:[%s2346 + $0x178] sm:$0xff]
                  %2473 = vst [vmem:[%s2347 + $0xf8] sm:$0xff] %v2472
                  %v2474 = vld [vmem:[%s2346 + $0x17c] sm:$0xff]
                  %2475 = vst [vmem:[%s2347 + $0xfc] sm:$0xff] %v2474
                  %v2476 = vld [vmem:[%s2346 + $0x200] sm:$0xff]
                  %2477 = vst [vmem:[%s2347 + $0x100] sm:$0xff] %v2476
                  %v2478 = vld [vmem:[%s2346 + $0x204] sm:$0xff]
                  %2479 = vst [vmem:[%s2347 + $0x104] sm:$0xff] %v2478
                  %v2480 = vld [vmem:[%s2346 + $0x208] sm:$0xff]
                  %2481 = vst [vmem:[%s2347 + $0x108] sm:$0xff] %v2480
                  %v2482 = vld [vmem:[%s2346 + $0x20c] sm:$0xff]
                  %2483 = vst [vmem:[%s2347 + $0x10c] sm:$0xff] %v2482
                  %v2484 = vld [vmem:[%s2346 + $0x210] sm:$0xff]
                  %2485 = vst [vmem:[%s2347 + $0x110] sm:$0xff] %v2484
                  %v2486 = vld [vmem:[%s2346 + $0x214] sm:$0xff]
                  %2487 = vst [vmem:[%s2347 + $0x114] sm:$0xff] %v2486
                  %v2488 = vld [vmem:[%s2346 + $0x218] sm:$0xff]
                  %2489 = vst [vmem:[%s2347 + $0x118] sm:$0xff] %v2488
                  %v2490 = vld [vmem:[%s2346 + $0x21c] sm:$0xff]
                  %2491 = vst [vmem:[%s2347 + $0x11c] sm:$0xff] %v2490
                  %v2492 = vld [vmem:[%s2346 + $0x220] sm:$0xff]
                  %2493 = vst [vmem:[%s2347 + $0x120] sm:$0xff] %v2492
                  %v2494 = vld [vmem:[%s2346 + $0x224] sm:$0xff]
                  %2495 = vst [vmem:[%s2347 + $0x124] sm:$0xff] %v2494
                  %v2496 = vld [vmem:[%s2346 + $0x228] sm:$0xff]
                  %2497 = vst [vmem:[%s2347 + $0x128] sm:$0xff] %v2496
                  %v2498 = vld [vmem:[%s2346 + $0x22c] sm:$0xff]
                  %2499 = vst [vmem:[%s2347 + $0x12c] sm:$0xff] %v2498
                  %v2500 = vld [vmem:[%s2346 + $0x230] sm:$0xff]
                  %2501 = vst [vmem:[%s2347 + $0x130] sm:$0xff] %v2500
                  %v2502 = vld [vmem:[%s2346 + $0x234] sm:$0xff]
                  %2503 = vst [vmem:[%s2347 + $0x134] sm:$0xff] %v2502
                  %v2504 = vld [vmem:[%s2346 + $0x238] sm:$0xff]
                  %2505 = vst [vmem:[%s2347 + $0x138] sm:$0xff] %v2504
                  %v2506 = vld [vmem:[%s2346 + $0x23c] sm:$0xff]
                  %2507 = vst [vmem:[%s2347 + $0x13c] sm:$0xff] %v2506
                  %v2508 = vld [vmem:[%s2346 + $0x240] sm:$0xff]
                  %2509 = vst [vmem:[%s2347 + $0x140] sm:$0xff] %v2508
                  %v2510 = vld [vmem:[%s2346 + $0x244] sm:$0xff]
                  %2511 = vst [vmem:[%s2347 + $0x144] sm:$0xff] %v2510
                  %v2512 = vld [vmem:[%s2346 + $0x248] sm:$0xff]
                  %2513 = vst [vmem:[%s2347 + $0x148] sm:$0xff] %v2512
                  %v2514 = vld [vmem:[%s2346 + $0x24c] sm:$0xff]
                  %2515 = vst [vmem:[%s2347 + $0x14c] sm:$0xff] %v2514
                  %v2516 = vld [vmem:[%s2346 + $0x250] sm:$0xff]
                  %2517 = vst [vmem:[%s2347 + $0x150] sm:$0xff] %v2516
                  %v2518 = vld [vmem:[%s2346 + $0x254] sm:$0xff]
                  %2519 = vst [vmem:[%s2347 + $0x154] sm:$0xff] %v2518
                  %v2520 = vld [vmem:[%s2346 + $0x258] sm:$0xff]
                  %2521 = vst [vmem:[%s2347 + $0x158] sm:$0xff] %v2520
                  %v2522 = vld [vmem:[%s2346 + $0x25c] sm:$0xff]
                  %2523 = vst [vmem:[%s2347 + $0x15c] sm:$0xff] %v2522
                  %v2524 = vld [vmem:[%s2346 + $0x260] sm:$0xff]
                  %2525 = vst [vmem:[%s2347 + $0x160] sm:$0xff] %v2524
                  %v2526 = vld [vmem:[%s2346 + $0x264] sm:$0xff]
                  %2527 = vst [vmem:[%s2347 + $0x164] sm:$0xff] %v2526
                  %v2528 = vld [vmem:[%s2346 + $0x268] sm:$0xff]
                  %2529 = vst [vmem:[%s2347 + $0x168] sm:$0xff] %v2528
                  %v2530 = vld [vmem:[%s2346 + $0x26c] sm:$0xff]
                  %2531 = vst [vmem:[%s2347 + $0x16c] sm:$0xff] %v2530
                  %v2532 = vld [vmem:[%s2346 + $0x270] sm:$0xff]
                  %2533 = vst [vmem:[%s2347 + $0x170] sm:$0xff] %v2532
                  %v2534 = vld [vmem:[%s2346 + $0x274] sm:$0xff]
                  %2535 = vst [vmem:[%s2347 + $0x174] sm:$0xff] %v2534
                  %v2536 = vld [vmem:[%s2346 + $0x278] sm:$0xff]
                  %2537 = vst [vmem:[%s2347 + $0x178] sm:$0xff] %v2536
                  %v2538 = vld [vmem:[%s2346 + $0x27c] sm:$0xff]
                  %2539 = vst [vmem:[%s2347 + $0x17c] sm:$0xff] %v2538
                  %v2540 = vld [vmem:[%s2346 + $0x300] sm:$0xff]
                  %2541 = vst [vmem:[%s2347 + $0x180] sm:$0xff] %v2540
                  %v2542 = vld [vmem:[%s2346 + $0x304] sm:$0xff]
                  %2543 = vst [vmem:[%s2347 + $0x184] sm:$0xff] %v2542
                  %v2544 = vld [vmem:[%s2346 + $0x308] sm:$0xff]
                  %2545 = vst [vmem:[%s2347 + $0x188] sm:$0xff] %v2544
                  %v2546 = vld [vmem:[%s2346 + $0x30c] sm:$0xff]
                  %2547 = vst [vmem:[%s2347 + $0x18c] sm:$0xff] %v2546
                  %v2548 = vld [vmem:[%s2346 + $0x310] sm:$0xff]
                  %2549 = vst [vmem:[%s2347 + $0x190] sm:$0xff] %v2548
                  %v2550 = vld [vmem:[%s2346 + $0x314] sm:$0xff]
                  %2551 = vst [vmem:[%s2347 + $0x194] sm:$0xff] %v2550
                  %v2552 = vld [vmem:[%s2346 + $0x318] sm:$0xff]
                  %2553 = vst [vmem:[%s2347 + $0x198] sm:$0xff] %v2552
                  %v2554 = vld [vmem:[%s2346 + $0x31c] sm:$0xff]
                  %2555 = vst [vmem:[%s2347 + $0x19c] sm:$0xff] %v2554
                  %v2556 = vld [vmem:[%s2346 + $0x320] sm:$0xff]
                  %2557 = vst [vmem:[%s2347 + $0x1a0] sm:$0xff] %v2556
                  %v2558 = vld [vmem:[%s2346 + $0x324] sm:$0xff]
                  %2559 = vst [vmem:[%s2347 + $0x1a4] sm:$0xff] %v2558
                  %v2560 = vld [vmem:[%s2346 + $0x328] sm:$0xff]
                  %2561 = vst [vmem:[%s2347 + $0x1a8] sm:$0xff] %v2560
                  %v2562 = vld [vmem:[%s2346 + $0x32c] sm:$0xff]
                  %2563 = vst [vmem:[%s2347 + $0x1ac] sm:$0xff] %v2562
                  %v2564 = vld [vmem:[%s2346 + $0x330] sm:$0xff]
                  %2565 = vst [vmem:[%s2347 + $0x1b0] sm:$0xff] %v2564
                  %v2566 = vld [vmem:[%s2346 + $0x334] sm:$0xff]
                  %2567 = vst [vmem:[%s2347 + $0x1b4] sm:$0xff] %v2566
                  %v2568 = vld [vmem:[%s2346 + $0x338] sm:$0xff]
                  %2569 = vst [vmem:[%s2347 + $0x1b8] sm:$0xff] %v2568
                  %v2570 = vld [vmem:[%s2346 + $0x33c] sm:$0xff]
                  %2571 = vst [vmem:[%s2347 + $0x1bc] sm:$0xff] %v2570
                  %v2572 = vld [vmem:[%s2346 + $0x340] sm:$0xff]
                  %2573 = vst [vmem:[%s2347 + $0x1c0] sm:$0xff] %v2572
                  %v2574 = vld [vmem:[%s2346 + $0x344] sm:$0xff]
                  %2575 = vst [vmem:[%s2347 + $0x1c4] sm:$0xff] %v2574
                  %v2576 = vld [vmem:[%s2346 + $0x348] sm:$0xff]
                  %2577 = vst [vmem:[%s2347 + $0x1c8] sm:$0xff] %v2576
                  %v2578 = vld [vmem:[%s2346 + $0x34c] sm:$0xff]
                  %2579 = vst [vmem:[%s2347 + $0x1cc] sm:$0xff] %v2578
                  %v2580 = vld [vmem:[%s2346 + $0x350] sm:$0xff]
                  %2581 = vst [vmem:[%s2347 + $0x1d0] sm:$0xff] %v2580
                  %v2582 = vld [vmem:[%s2346 + $0x354] sm:$0xff]
                  %2583 = vst [vmem:[%s2347 + $0x1d4] sm:$0xff] %v2582
                  %v2584 = vld [vmem:[%s2346 + $0x358] sm:$0xff]
                  %2585 = vst [vmem:[%s2347 + $0x1d8] sm:$0xff] %v2584
                  %v2586 = vld [vmem:[%s2346 + $0x35c] sm:$0xff]
                  %2587 = vst [vmem:[%s2347 + $0x1dc] sm:$0xff] %v2586
                  %v2588 = vld [vmem:[%s2346 + $0x360] sm:$0xff]
                  %2589 = vst [vmem:[%s2347 + $0x1e0] sm:$0xff] %v2588
                  %v2590 = vld [vmem:[%s2346 + $0x364] sm:$0xff]
                  %2591 = vst [vmem:[%s2347 + $0x1e4] sm:$0xff] %v2590
                  %v2592 = vld [vmem:[%s2346 + $0x368] sm:$0xff]
                  %2593 = vst [vmem:[%s2347 + $0x1e8] sm:$0xff] %v2592
                  %v2594 = vld [vmem:[%s2346 + $0x36c] sm:$0xff]
                  %2595 = vst [vmem:[%s2347 + $0x1ec] sm:$0xff] %v2594
                  %v2596 = vld [vmem:[%s2346 + $0x370] sm:$0xff]
                  %2597 = vst [vmem:[%s2347 + $0x1f0] sm:$0xff] %v2596
                  %v2598 = vld [vmem:[%s2346 + $0x374] sm:$0xff]
                  %2599 = vst [vmem:[%s2347 + $0x1f4] sm:$0xff] %v2598
                  %v2600 = vld [vmem:[%s2346 + $0x378] sm:$0xff]
                  %2601 = vst [vmem:[%s2347 + $0x1f8] sm:$0xff] %v2600
                  %v2602 = vld [vmem:[%s2346 + $0x37c] sm:$0xff]
                  %2603 = vst [vmem:[%s2347 + $0x1fc] sm:$0xff] %v2602
                  %v2604 = vld [vmem:[%s2346 + $0x400] sm:$0xff]
                  %2605 = vst [vmem:[%s2347 + $0x200] sm:$0xff] %v2604
                  %v2606 = vld [vmem:[%s2346 + $0x404] sm:$0xff]
                  %2607 = vst [vmem:[%s2347 + $0x204] sm:$0xff] %v2606
                  %v2608 = vld [vmem:[%s2346 + $0x408] sm:$0xff]
                  %2609 = vst [vmem:[%s2347 + $0x208] sm:$0xff] %v2608
                  %v2610 = vld [vmem:[%s2346 + $0x40c] sm:$0xff]
                  %2611 = vst [vmem:[%s2347 + $0x20c] sm:$0xff] %v2610
                  %v2612 = vld [vmem:[%s2346 + $0x410] sm:$0xff]
                  %2613 = vst [vmem:[%s2347 + $0x210] sm:$0xff] %v2612
                  %v2614 = vld [vmem:[%s2346 + $0x414] sm:$0xff]
                  %2615 = vst [vmem:[%s2347 + $0x214] sm:$0xff] %v2614
                  %v2616 = vld [vmem:[%s2346 + $0x418] sm:$0xff]
                  %2617 = vst [vmem:[%s2347 + $0x218] sm:$0xff] %v2616
                  %v2618 = vld [vmem:[%s2346 + $0x41c] sm:$0xff]
                  %2619 = vst [vmem:[%s2347 + $0x21c] sm:$0xff] %v2618
                  %v2620 = vld [vmem:[%s2346 + $0x420] sm:$0xff]
                  %2621 = vst [vmem:[%s2347 + $0x220] sm:$0xff] %v2620
                  %v2622 = vld [vmem:[%s2346 + $0x424] sm:$0xff]
                  %2623 = vst [vmem:[%s2347 + $0x224] sm:$0xff] %v2622
                  %v2624 = vld [vmem:[%s2346 + $0x428] sm:$0xff]
                  %2625 = vst [vmem:[%s2347 + $0x228] sm:$0xff] %v2624
                  %v2626 = vld [vmem:[%s2346 + $0x42c] sm:$0xff]
                  %2627 = vst [vmem:[%s2347 + $0x22c] sm:$0xff] %v2626
                  %v2628 = vld [vmem:[%s2346 + $0x430] sm:$0xff]
                  %2629 = vst [vmem:[%s2347 + $0x230] sm:$0xff] %v2628
                  %v2630 = vld [vmem:[%s2346 + $0x434] sm:$0xff]
                  %2631 = vst [vmem:[%s2347 + $0x234] sm:$0xff] %v2630
                  %v2632 = vld [vmem:[%s2346 + $0x438] sm:$0xff]
                  %2633 = vst [vmem:[%s2347 + $0x238] sm:$0xff] %v2632
                  %v2634 = vld [vmem:[%s2346 + $0x43c] sm:$0xff]
                  %2635 = vst [vmem:[%s2347 + $0x23c] sm:$0xff] %v2634
                  %v2636 = vld [vmem:[%s2346 + $0x440] sm:$0xff]
                  %2637 = vst [vmem:[%s2347 + $0x240] sm:$0xff] %v2636
                  %v2638 = vld [vmem:[%s2346 + $0x444] sm:$0xff]
                  %2639 = vst [vmem:[%s2347 + $0x244] sm:$0xff] %v2638
                  %v2640 = vld [vmem:[%s2346 + $0x448] sm:$0xff]
                  %2641 = vst [vmem:[%s2347 + $0x248] sm:$0xff] %v2640
                  %v2642 = vld [vmem:[%s2346 + $0x44c] sm:$0xff]
                  %2643 = vst [vmem:[%s2347 + $0x24c] sm:$0xff] %v2642
                  %v2644 = vld [vmem:[%s2346 + $0x450] sm:$0xff]
                  %2645 = vst [vmem:[%s2347 + $0x250] sm:$0xff] %v2644
                  %v2646 = vld [vmem:[%s2346 + $0x454] sm:$0xff]
                  %2647 = vst [vmem:[%s2347 + $0x254] sm:$0xff] %v2646
                  %v2648 = vld [vmem:[%s2346 + $0x458] sm:$0xff]
                  %2649 = vst [vmem:[%s2347 + $0x258] sm:$0xff] %v2648
                  %v2650 = vld [vmem:[%s2346 + $0x45c] sm:$0xff]
                  %2651 = vst [vmem:[%s2347 + $0x25c] sm:$0xff] %v2650
                  %v2652 = vld [vmem:[%s2346 + $0x460] sm:$0xff]
                  %2653 = vst [vmem:[%s2347 + $0x260] sm:$0xff] %v2652
                  %v2654 = vld [vmem:[%s2346 + $0x464] sm:$0xff]
                  %2655 = vst [vmem:[%s2347 + $0x264] sm:$0xff] %v2654
                  %v2656 = vld [vmem:[%s2346 + $0x468] sm:$0xff]
                  %2657 = vst [vmem:[%s2347 + $0x268] sm:$0xff] %v2656
                  %v2658 = vld [vmem:[%s2346 + $0x46c] sm:$0xff]
                  %2659 = vst [vmem:[%s2347 + $0x26c] sm:$0xff] %v2658
                  %v2660 = vld [vmem:[%s2346 + $0x470] sm:$0xff]
                  %2661 = vst [vmem:[%s2347 + $0x270] sm:$0xff] %v2660
                  %v2662 = vld [vmem:[%s2346 + $0x474] sm:$0xff]
                  %2663 = vst [vmem:[%s2347 + $0x274] sm:$0xff] %v2662
                  %v2664 = vld [vmem:[%s2346 + $0x478] sm:$0xff]
                  %2665 = vst [vmem:[%s2347 + $0x278] sm:$0xff] %v2664
                  %v2666 = vld [vmem:[%s2346 + $0x47c] sm:$0xff]
                  %2667 = vst [vmem:[%s2347 + $0x27c] sm:$0xff] %v2666
                  %v2668 = vld [vmem:[%s2346 + $0x500] sm:$0xff]
                  %2669 = vst [vmem:[%s2347 + $0x280] sm:$0xff] %v2668
                  %v2670 = vld [vmem:[%s2346 + $0x504] sm:$0xff]
                  %2671 = vst [vmem:[%s2347 + $0x284] sm:$0xff] %v2670
                  %v2672 = vld [vmem:[%s2346 + $0x508] sm:$0xff]
                  %2673 = vst [vmem:[%s2347 + $0x288] sm:$0xff] %v2672
                  %v2674 = vld [vmem:[%s2346 + $0x50c] sm:$0xff]
                  %2675 = vst [vmem:[%s2347 + $0x28c] sm:$0xff] %v2674
                  %v2676 = vld [vmem:[%s2346 + $0x510] sm:$0xff]
                  %2677 = vst [vmem:[%s2347 + $0x290] sm:$0xff] %v2676
                  %v2678 = vld [vmem:[%s2346 + $0x514] sm:$0xff]
                  %2679 = vst [vmem:[%s2347 + $0x294] sm:$0xff] %v2678
                  %v2680 = vld [vmem:[%s2346 + $0x518] sm:$0xff]
                  %2681 = vst [vmem:[%s2347 + $0x298] sm:$0xff] %v2680
                  %v2682 = vld [vmem:[%s2346 + $0x51c] sm:$0xff]
                  %2683 = vst [vmem:[%s2347 + $0x29c] sm:$0xff] %v2682
                  %v2684 = vld [vmem:[%s2346 + $0x520] sm:$0xff]
                  %2685 = vst [vmem:[%s2347 + $0x2a0] sm:$0xff] %v2684
                  %v2686 = vld [vmem:[%s2346 + $0x524] sm:$0xff]
                  %2687 = vst [vmem:[%s2347 + $0x2a4] sm:$0xff] %v2686
                  %v2688 = vld [vmem:[%s2346 + $0x528] sm:$0xff]
                  %2689 = vst [vmem:[%s2347 + $0x2a8] sm:$0xff] %v2688
                  %v2690 = vld [vmem:[%s2346 + $0x52c] sm:$0xff]
                  %2691 = vst [vmem:[%s2347 + $0x2ac] sm:$0xff] %v2690
                  %v2692 = vld [vmem:[%s2346 + $0x530] sm:$0xff]
                  %2693 = vst [vmem:[%s2347 + $0x2b0] sm:$0xff] %v2692
                  %v2694 = vld [vmem:[%s2346 + $0x534] sm:$0xff]
                  %2695 = vst [vmem:[%s2347 + $0x2b4] sm:$0xff] %v2694
                  %v2696 = vld [vmem:[%s2346 + $0x538] sm:$0xff]
                  %2697 = vst [vmem:[%s2347 + $0x2b8] sm:$0xff] %v2696
                  %v2698 = vld [vmem:[%s2346 + $0x53c] sm:$0xff]
                  %2699 = vst [vmem:[%s2347 + $0x2bc] sm:$0xff] %v2698
                  %v2700 = vld [vmem:[%s2346 + $0x540] sm:$0xff]
                  %2701 = vst [vmem:[%s2347 + $0x2c0] sm:$0xff] %v2700
                  %v2702 = vld [vmem:[%s2346 + $0x544] sm:$0xff]
                  %2703 = vst [vmem:[%s2347 + $0x2c4] sm:$0xff] %v2702
                  %v2704 = vld [vmem:[%s2346 + $0x548] sm:$0xff]
                  %2705 = vst [vmem:[%s2347 + $0x2c8] sm:$0xff] %v2704
                  %v2706 = vld [vmem:[%s2346 + $0x54c] sm:$0xff]
                  %2707 = vst [vmem:[%s2347 + $0x2cc] sm:$0xff] %v2706
                  %v2708 = vld [vmem:[%s2346 + $0x550] sm:$0xff]
                  %2709 = vst [vmem:[%s2347 + $0x2d0] sm:$0xff] %v2708
                  %v2710 = vld [vmem:[%s2346 + $0x554] sm:$0xff]
                  %2711 = vst [vmem:[%s2347 + $0x2d4] sm:$0xff] %v2710
                  %v2712 = vld [vmem:[%s2346 + $0x558] sm:$0xff]
                  %2713 = vst [vmem:[%s2347 + $0x2d8] sm:$0xff] %v2712
                  %v2714 = vld [vmem:[%s2346 + $0x55c] sm:$0xff]
                  %2715 = vst [vmem:[%s2347 + $0x2dc] sm:$0xff] %v2714
                  %v2716 = vld [vmem:[%s2346 + $0x560] sm:$0xff]
                  %2717 = vst [vmem:[%s2347 + $0x2e0] sm:$0xff] %v2716
                  %v2718 = vld [vmem:[%s2346 + $0x564] sm:$0xff]
                  %2719 = vst [vmem:[%s2347 + $0x2e4] sm:$0xff] %v2718
                  %v2720 = vld [vmem:[%s2346 + $0x568] sm:$0xff]
                  %2721 = vst [vmem:[%s2347 + $0x2e8] sm:$0xff] %v2720
                  %v2722 = vld [vmem:[%s2346 + $0x56c] sm:$0xff]
                  %2723 = vst [vmem:[%s2347 + $0x2ec] sm:$0xff] %v2722
                  %v2724 = vld [vmem:[%s2346 + $0x570] sm:$0xff]
                  %2725 = vst [vmem:[%s2347 + $0x2f0] sm:$0xff] %v2724
                  %v2726 = vld [vmem:[%s2346 + $0x574] sm:$0xff]
                  %2727 = vst [vmem:[%s2347 + $0x2f4] sm:$0xff] %v2726
                  %v2728 = vld [vmem:[%s2346 + $0x578] sm:$0xff]
                  %2729 = vst [vmem:[%s2347 + $0x2f8] sm:$0xff] %v2728
                  %v2730 = vld [vmem:[%s2346 + $0x57c] sm:$0xff]
                  %2731 = vst [vmem:[%s2347 + $0x2fc] sm:$0xff] %v2730
                  %v2732 = vld [vmem:[%s2346 + $0x600] sm:$0xff]
                  %2733 = vst [vmem:[%s2347 + $0x300] sm:$0xff] %v2732
                  %v2734 = vld [vmem:[%s2346 + $0x604] sm:$0xff]
                  %2735 = vst [vmem:[%s2347 + $0x304] sm:$0xff] %v2734
                  %v2736 = vld [vmem:[%s2346 + $0x608] sm:$0xff]
                  %2737 = vst [vmem:[%s2347 + $0x308] sm:$0xff] %v2736
                  %v2738 = vld [vmem:[%s2346 + $0x60c] sm:$0xff]
                  %2739 = vst [vmem:[%s2347 + $0x30c] sm:$0xff] %v2738
                  %v2740 = vld [vmem:[%s2346 + $0x610] sm:$0xff]
                  %2741 = vst [vmem:[%s2347 + $0x310] sm:$0xff] %v2740
                  %v2742 = vld [vmem:[%s2346 + $0x614] sm:$0xff]
                  %2743 = vst [vmem:[%s2347 + $0x314] sm:$0xff] %v2742
                  %v2744 = vld [vmem:[%s2346 + $0x618] sm:$0xff]
                  %2745 = vst [vmem:[%s2347 + $0x318] sm:$0xff] %v2744
                  %v2746 = vld [vmem:[%s2346 + $0x61c] sm:$0xff]
                  %2747 = vst [vmem:[%s2347 + $0x31c] sm:$0xff] %v2746
                  %v2748 = vld [vmem:[%s2346 + $0x620] sm:$0xff]
                  %2749 = vst [vmem:[%s2347 + $0x320] sm:$0xff] %v2748
                  %v2750 = vld [vmem:[%s2346 + $0x624] sm:$0xff]
                  %2751 = vst [vmem:[%s2347 + $0x324] sm:$0xff] %v2750
                  %v2752 = vld [vmem:[%s2346 + $0x628] sm:$0xff]
                  %2753 = vst [vmem:[%s2347 + $0x328] sm:$0xff] %v2752
                  %v2754 = vld [vmem:[%s2346 + $0x62c] sm:$0xff]
                  %2755 = vst [vmem:[%s2347 + $0x32c] sm:$0xff] %v2754
                  %v2756 = vld [vmem:[%s2346 + $0x630] sm:$0xff]
                  %2757 = vst [vmem:[%s2347 + $0x330] sm:$0xff] %v2756
                  %v2758 = vld [vmem:[%s2346 + $0x634] sm:$0xff]
                  %2759 = vst [vmem:[%s2347 + $0x334] sm:$0xff] %v2758
                  %v2760 = vld [vmem:[%s2346 + $0x638] sm:$0xff]
                  %2761 = vst [vmem:[%s2347 + $0x338] sm:$0xff] %v2760
                  %v2762 = vld [vmem:[%s2346 + $0x63c] sm:$0xff]
                  %2763 = vst [vmem:[%s2347 + $0x33c] sm:$0xff] %v2762
                  %v2764 = vld [vmem:[%s2346 + $0x640] sm:$0xff]
                  %2765 = vst [vmem:[%s2347 + $0x340] sm:$0xff] %v2764
                  %v2766 = vld [vmem:[%s2346 + $0x644] sm:$0xff]
                  %2767 = vst [vmem:[%s2347 + $0x344] sm:$0xff] %v2766
                  %v2768 = vld [vmem:[%s2346 + $0x648] sm:$0xff]
                  %2769 = vst [vmem:[%s2347 + $0x348] sm:$0xff] %v2768
                  %v2770 = vld [vmem:[%s2346 + $0x64c] sm:$0xff]
                  %2771 = vst [vmem:[%s2347 + $0x34c] sm:$0xff] %v2770
                  %v2772 = vld [vmem:[%s2346 + $0x650] sm:$0xff]
                  %2773 = vst [vmem:[%s2347 + $0x350] sm:$0xff] %v2772
                  %v2774 = vld [vmem:[%s2346 + $0x654] sm:$0xff]
                  %2775 = vst [vmem:[%s2347 + $0x354] sm:$0xff] %v2774
                  %v2776 = vld [vmem:[%s2346 + $0x658] sm:$0xff]
                  %2777 = vst [vmem:[%s2347 + $0x358] sm:$0xff] %v2776
                  %v2778 = vld [vmem:[%s2346 + $0x65c] sm:$0xff]
                  %2779 = vst [vmem:[%s2347 + $0x35c] sm:$0xff] %v2778
                  %v2780 = vld [vmem:[%s2346 + $0x660] sm:$0xff]
                  %2781 = vst [vmem:[%s2347 + $0x360] sm:$0xff] %v2780
                  %v2782 = vld [vmem:[%s2346 + $0x664] sm:$0xff]
                  %2783 = vst [vmem:[%s2347 + $0x364] sm:$0xff] %v2782
                  %v2784 = vld [vmem:[%s2346 + $0x668] sm:$0xff]
                  %2785 = vst [vmem:[%s2347 + $0x368] sm:$0xff] %v2784
                  %v2786 = vld [vmem:[%s2346 + $0x66c] sm:$0xff]
                  %2787 = vst [vmem:[%s2347 + $0x36c] sm:$0xff] %v2786
                  %v2788 = vld [vmem:[%s2346 + $0x670] sm:$0xff]
                  %2789 = vst [vmem:[%s2347 + $0x370] sm:$0xff] %v2788
                  %v2790 = vld [vmem:[%s2346 + $0x674] sm:$0xff]
                  %2791 = vst [vmem:[%s2347 + $0x374] sm:$0xff] %v2790
                  %v2792 = vld [vmem:[%s2346 + $0x678] sm:$0xff]
                  %2793 = vst [vmem:[%s2347 + $0x378] sm:$0xff] %v2792
                  %v2794 = vld [vmem:[%s2346 + $0x67c] sm:$0xff]
                  %2795 = vst [vmem:[%s2347 + $0x37c] sm:$0xff] %v2794
                  %v2796 = vld [vmem:[%s2346 + $0x700] sm:$0xff]
                  %2797 = vst [vmem:[%s2347 + $0x380] sm:$0xff] %v2796
                  %v2798 = vld [vmem:[%s2346 + $0x704] sm:$0xff]
                  %2799 = vst [vmem:[%s2347 + $0x384] sm:$0xff] %v2798
                  %v2800 = vld [vmem:[%s2346 + $0x708] sm:$0xff]
                  %2801 = vst [vmem:[%s2347 + $0x388] sm:$0xff] %v2800
                  %v2802 = vld [vmem:[%s2346 + $0x70c] sm:$0xff]
                  %2803 = vst [vmem:[%s2347 + $0x38c] sm:$0xff] %v2802
                  %v2804 = vld [vmem:[%s2346 + $0x710] sm:$0xff]
                  %2805 = vst [vmem:[%s2347 + $0x390] sm:$0xff] %v2804
                  %v2806 = vld [vmem:[%s2346 + $0x714] sm:$0xff]
                  %2807 = vst [vmem:[%s2347 + $0x394] sm:$0xff] %v2806
                  %v2808 = vld [vmem:[%s2346 + $0x718] sm:$0xff]
                  %2809 = vst [vmem:[%s2347 + $0x398] sm:$0xff] %v2808
                  %v2810 = vld [vmem:[%s2346 + $0x71c] sm:$0xff]
                  %2811 = vst [vmem:[%s2347 + $0x39c] sm:$0xff] %v2810
                  %v2812 = vld [vmem:[%s2346 + $0x720] sm:$0xff]
                  %2813 = vst [vmem:[%s2347 + $0x3a0] sm:$0xff] %v2812
                  %v2814 = vld [vmem:[%s2346 + $0x724] sm:$0xff]
                  %2815 = vst [vmem:[%s2347 + $0x3a4] sm:$0xff] %v2814
                  %v2816 = vld [vmem:[%s2346 + $0x728] sm:$0xff]
                  %2817 = vst [vmem:[%s2347 + $0x3a8] sm:$0xff] %v2816
                  %v2818 = vld [vmem:[%s2346 + $0x72c] sm:$0xff]
                  %2819 = vst [vmem:[%s2347 + $0x3ac] sm:$0xff] %v2818
                  %v2820 = vld [vmem:[%s2346 + $0x730] sm:$0xff]
                  %2821 = vst [vmem:[%s2347 + $0x3b0] sm:$0xff] %v2820
                  %v2822 = vld [vmem:[%s2346 + $0x734] sm:$0xff]
                  %2823 = vst [vmem:[%s2347 + $0x3b4] sm:$0xff] %v2822
                  %v2824 = vld [vmem:[%s2346 + $0x738] sm:$0xff]
                  %2825 = vst [vmem:[%s2347 + $0x3b8] sm:$0xff] %v2824
                  %v2826 = vld [vmem:[%s2346 + $0x73c] sm:$0xff]
                  %2827 = vst [vmem:[%s2347 + $0x3bc] sm:$0xff] %v2826
                  %v2828 = vld [vmem:[%s2346 + $0x740] sm:$0xff]
                  %2829 = vst [vmem:[%s2347 + $0x3c0] sm:$0xff] %v2828
                  %v2830 = vld [vmem:[%s2346 + $0x744] sm:$0xff]
                  %2831 = vst [vmem:[%s2347 + $0x3c4] sm:$0xff] %v2830
                  %v2832 = vld [vmem:[%s2346 + $0x748] sm:$0xff]
                  %2833 = vst [vmem:[%s2347 + $0x3c8] sm:$0xff] %v2832
                  %v2834 = vld [vmem:[%s2346 + $0x74c] sm:$0xff]
                  %2835 = vst [vmem:[%s2347 + $0x3cc] sm:$0xff] %v2834
                  %v2836 = vld [vmem:[%s2346 + $0x750] sm:$0xff]
                  %2837 = vst [vmem:[%s2347 + $0x3d0] sm:$0xff] %v2836
                  %v2838 = vld [vmem:[%s2346 + $0x754] sm:$0xff]
                  %2839 = vst [vmem:[%s2347 + $0x3d4] sm:$0xff] %v2838
                  %v2840 = vld [vmem:[%s2346 + $0x758] sm:$0xff]
                  %2841 = vst [vmem:[%s2347 + $0x3d8] sm:$0xff] %v2840
                  %v2842 = vld [vmem:[%s2346 + $0x75c] sm:$0xff]
                  %2843 = vst [vmem:[%s2347 + $0x3dc] sm:$0xff] %v2842
                  %v2844 = vld [vmem:[%s2346 + $0x760] sm:$0xff]
                  %2845 = vst [vmem:[%s2347 + $0x3e0] sm:$0xff] %v2844
                  %v2846 = vld [vmem:[%s2346 + $0x764] sm:$0xff]
                  %2847 = vst [vmem:[%s2347 + $0x3e4] sm:$0xff] %v2846
                  %v2848 = vld [vmem:[%s2346 + $0x768] sm:$0xff]
                  %2849 = vst [vmem:[%s2347 + $0x3e8] sm:$0xff] %v2848
                  %v2850 = vld [vmem:[%s2346 + $0x76c] sm:$0xff]
                  %2851 = vst [vmem:[%s2347 + $0x3ec] sm:$0xff] %v2850
                  %v2852 = vld [vmem:[%s2346 + $0x770] sm:$0xff]
                  %2853 = vst [vmem:[%s2347 + $0x3f0] sm:$0xff] %v2852
                  %v2854 = vld [vmem:[%s2346 + $0x774] sm:$0xff]
                  %2855 = vst [vmem:[%s2347 + $0x3f4] sm:$0xff] %v2854
                  %v2856 = vld [vmem:[%s2346 + $0x778] sm:$0xff]
                  %2857 = vst [vmem:[%s2347 + $0x3f8] sm:$0xff] %v2856
                  %v2858 = vld [vmem:[%s2346 + $0x77c] sm:$0xff]
                  %2859 = vst [vmem:[%s2347 + $0x3fc] sm:$0xff] %v2858
                  %v2860 = vld [vmem:[%s2346 + $0x800] sm:$0xff]
                  %2861 = vst [vmem:[%s2347 + $0x400] sm:$0xff] %v2860
                  %v2862 = vld [vmem:[%s2346 + $0x804] sm:$0xff]
                  %2863 = vst [vmem:[%s2347 + $0x404] sm:$0xff] %v2862
                  %v2864 = vld [vmem:[%s2346 + $0x808] sm:$0xff]
                  %2865 = vst [vmem:[%s2347 + $0x408] sm:$0xff] %v2864
                  %v2866 = vld [vmem:[%s2346 + $0x80c] sm:$0xff]
                  %2867 = vst [vmem:[%s2347 + $0x40c] sm:$0xff] %v2866
                  %v2868 = vld [vmem:[%s2346 + $0x810] sm:$0xff]
                  %2869 = vst [vmem:[%s2347 + $0x410] sm:$0xff] %v2868
                  %v2870 = vld [vmem:[%s2346 + $0x814] sm:$0xff]
                  %2871 = vst [vmem:[%s2347 + $0x414] sm:$0xff] %v2870
                  %v2872 = vld [vmem:[%s2346 + $0x818] sm:$0xff]
                  %2873 = vst [vmem:[%s2347 + $0x418] sm:$0xff] %v2872
                  %v2874 = vld [vmem:[%s2346 + $0x81c] sm:$0xff]
                  %2875 = vst [vmem:[%s2347 + $0x41c] sm:$0xff] %v2874
                  %v2876 = vld [vmem:[%s2346 + $0x820] sm:$0xff]
                  %2877 = vst [vmem:[%s2347 + $0x420] sm:$0xff] %v2876
                  %v2878 = vld [vmem:[%s2346 + $0x824] sm:$0xff]
                  %2879 = vst [vmem:[%s2347 + $0x424] sm:$0xff] %v2878
                  %v2880 = vld [vmem:[%s2346 + $0x828] sm:$0xff]
                  %2881 = vst [vmem:[%s2347 + $0x428] sm:$0xff] %v2880
                  %v2882 = vld [vmem:[%s2346 + $0x82c] sm:$0xff]
                  %2883 = vst [vmem:[%s2347 + $0x42c] sm:$0xff] %v2882
                  %v2884 = vld [vmem:[%s2346 + $0x830] sm:$0xff]
                  %2885 = vst [vmem:[%s2347 + $0x430] sm:$0xff] %v2884
                  %v2886 = vld [vmem:[%s2346 + $0x834] sm:$0xff]
                  %2887 = vst [vmem:[%s2347 + $0x434] sm:$0xff] %v2886
                  %v2888 = vld [vmem:[%s2346 + $0x838] sm:$0xff]
                  %2889 = vst [vmem:[%s2347 + $0x438] sm:$0xff] %v2888
                  %v2890 = vld [vmem:[%s2346 + $0x83c] sm:$0xff]
                  %2891 = vst [vmem:[%s2347 + $0x43c] sm:$0xff] %v2890
                  %v2892 = vld [vmem:[%s2346 + $0x840] sm:$0xff]
                  %2893 = vst [vmem:[%s2347 + $0x440] sm:$0xff] %v2892
                  %v2894 = vld [vmem:[%s2346 + $0x844] sm:$0xff]
                  %2895 = vst [vmem:[%s2347 + $0x444] sm:$0xff] %v2894
                  %v2896 = vld [vmem:[%s2346 + $0x848] sm:$0xff]
                  %2897 = vst [vmem:[%s2347 + $0x448] sm:$0xff] %v2896
                  %v2898 = vld [vmem:[%s2346 + $0x84c] sm:$0xff]
                  %2899 = vst [vmem:[%s2347 + $0x44c] sm:$0xff] %v2898
                  %v2900 = vld [vmem:[%s2346 + $0x850] sm:$0xff]
                  %2901 = vst [vmem:[%s2347 + $0x450] sm:$0xff] %v2900
                  %v2902 = vld [vmem:[%s2346 + $0x854] sm:$0xff]
                  %2903 = vst [vmem:[%s2347 + $0x454] sm:$0xff] %v2902
                  %v2904 = vld [vmem:[%s2346 + $0x858] sm:$0xff]
                  %2905 = vst [vmem:[%s2347 + $0x458] sm:$0xff] %v2904
                  %v2906 = vld [vmem:[%s2346 + $0x85c] sm:$0xff]
                  %2907 = vst [vmem:[%s2347 + $0x45c] sm:$0xff] %v2906
                  %v2908 = vld [vmem:[%s2346 + $0x860] sm:$0xff]
                  %2909 = vst [vmem:[%s2347 + $0x460] sm:$0xff] %v2908
                  %v2910 = vld [vmem:[%s2346 + $0x864] sm:$0xff]
                  %2911 = vst [vmem:[%s2347 + $0x464] sm:$0xff] %v2910
                  %v2912 = vld [vmem:[%s2346 + $0x868] sm:$0xff]
                  %2913 = vst [vmem:[%s2347 + $0x468] sm:$0xff] %v2912
                  %v2914 = vld [vmem:[%s2346 + $0x86c] sm:$0xff]
                  %2915 = vst [vmem:[%s2347 + $0x46c] sm:$0xff] %v2914
                  %v2916 = vld [vmem:[%s2346 + $0x870] sm:$0xff]
                  %2917 = vst [vmem:[%s2347 + $0x470] sm:$0xff] %v2916
                  %v2918 = vld [vmem:[%s2346 + $0x874] sm:$0xff]
                  %2919 = vst [vmem:[%s2347 + $0x474] sm:$0xff] %v2918
                  %v2920 = vld [vmem:[%s2346 + $0x878] sm:$0xff]
                  %2921 = vst [vmem:[%s2347 + $0x478] sm:$0xff] %v2920
                  %v2922 = vld [vmem:[%s2346 + $0x87c] sm:$0xff]
                  %2923 = vst [vmem:[%s2347 + $0x47c] sm:$0xff] %v2922
                  %v2924 = vld [vmem:[%s2346 + $0x900] sm:$0xff]
                  %2925 = vst [vmem:[%s2347 + $0x480] sm:$0xff] %v2924
                  %v2926 = vld [vmem:[%s2346 + $0x904] sm:$0xff]
                  %2927 = vst [vmem:[%s2347 + $0x484] sm:$0xff] %v2926
                  %v2928 = vld [vmem:[%s2346 + $0x908] sm:$0xff]
                  %2929 = vst [vmem:[%s2347 + $0x488] sm:$0xff] %v2928
                  %v2930 = vld [vmem:[%s2346 + $0x90c] sm:$0xff]
                  %2931 = vst [vmem:[%s2347 + $0x48c] sm:$0xff] %v2930
                  %v2932 = vld [vmem:[%s2346 + $0x910] sm:$0xff]
                  %2933 = vst [vmem:[%s2347 + $0x490] sm:$0xff] %v2932
                  %v2934 = vld [vmem:[%s2346 + $0x914] sm:$0xff]
                  %2935 = vst [vmem:[%s2347 + $0x494] sm:$0xff] %v2934
                  %v2936 = vld [vmem:[%s2346 + $0x918] sm:$0xff]
                  %2937 = vst [vmem:[%s2347 + $0x498] sm:$0xff] %v2936
                  %v2938 = vld [vmem:[%s2346 + $0x91c] sm:$0xff]
                  %2939 = vst [vmem:[%s2347 + $0x49c] sm:$0xff] %v2938
                  %v2940 = vld [vmem:[%s2346 + $0x920] sm:$0xff]
                  %2941 = vst [vmem:[%s2347 + $0x4a0] sm:$0xff] %v2940
                  %v2942 = vld [vmem:[%s2346 + $0x924] sm:$0xff]
                  %2943 = vst [vmem:[%s2347 + $0x4a4] sm:$0xff] %v2942
                  %v2944 = vld [vmem:[%s2346 + $0x928] sm:$0xff]
                  %2945 = vst [vmem:[%s2347 + $0x4a8] sm:$0xff] %v2944
                  %v2946 = vld [vmem:[%s2346 + $0x92c] sm:$0xff]
                  %2947 = vst [vmem:[%s2347 + $0x4ac] sm:$0xff] %v2946
                  %v2948 = vld [vmem:[%s2346 + $0x930] sm:$0xff]
                  %2949 = vst [vmem:[%s2347 + $0x4b0] sm:$0xff] %v2948
                  %v2950 = vld [vmem:[%s2346 + $0x934] sm:$0xff]
                  %2951 = vst [vmem:[%s2347 + $0x4b4] sm:$0xff] %v2950
                  %v2952 = vld [vmem:[%s2346 + $0x938] sm:$0xff]
                  %2953 = vst [vmem:[%s2347 + $0x4b8] sm:$0xff] %v2952
                  %v2954 = vld [vmem:[%s2346 + $0x93c] sm:$0xff]
                  %2955 = vst [vmem:[%s2347 + $0x4bc] sm:$0xff] %v2954
                  %v2956 = vld [vmem:[%s2346 + $0x940] sm:$0xff]
                  %2957 = vst [vmem:[%s2347 + $0x4c0] sm:$0xff] %v2956
                  %v2958 = vld [vmem:[%s2346 + $0x944] sm:$0xff]
                  %2959 = vst [vmem:[%s2347 + $0x4c4] sm:$0xff] %v2958
                  %v2960 = vld [vmem:[%s2346 + $0x948] sm:$0xff]
                  %2961 = vst [vmem:[%s2347 + $0x4c8] sm:$0xff] %v2960
                  %v2962 = vld [vmem:[%s2346 + $0x94c] sm:$0xff]
                  %2963 = vst [vmem:[%s2347 + $0x4cc] sm:$0xff] %v2962
                  %v2964 = vld [vmem:[%s2346 + $0x950] sm:$0xff]
                  %2965 = vst [vmem:[%s2347 + $0x4d0] sm:$0xff] %v2964
                  %v2966 = vld [vmem:[%s2346 + $0x954] sm:$0xff]
                  %2967 = vst [vmem:[%s2347 + $0x4d4] sm:$0xff] %v2966
                  %v2968 = vld [vmem:[%s2346 + $0x958] sm:$0xff]
                  %2969 = vst [vmem:[%s2347 + $0x4d8] sm:$0xff] %v2968
                  %v2970 = vld [vmem:[%s2346 + $0x95c] sm:$0xff]
                  %2971 = vst [vmem:[%s2347 + $0x4dc] sm:$0xff] %v2970
                  %v2972 = vld [vmem:[%s2346 + $0x960] sm:$0xff]
                  %2973 = vst [vmem:[%s2347 + $0x4e0] sm:$0xff] %v2972
                  %v2974 = vld [vmem:[%s2346 + $0x964] sm:$0xff]
                  %2975 = vst [vmem:[%s2347 + $0x4e4] sm:$0xff] %v2974
                  %v2976 = vld [vmem:[%s2346 + $0x968] sm:$0xff]
                  %2977 = vst [vmem:[%s2347 + $0x4e8] sm:$0xff] %v2976
                  %v2978 = vld [vmem:[%s2346 + $0x96c] sm:$0xff]
                  %2979 = vst [vmem:[%s2347 + $0x4ec] sm:$0xff] %v2978
                  %v2980 = vld [vmem:[%s2346 + $0x970] sm:$0xff]
                  %2981 = vst [vmem:[%s2347 + $0x4f0] sm:$0xff] %v2980
                  %v2982 = vld [vmem:[%s2346 + $0x974] sm:$0xff]
                  %2983 = vst [vmem:[%s2347 + $0x4f4] sm:$0xff] %v2982
                  %v2984 = vld [vmem:[%s2346 + $0x978] sm:$0xff]
                  %2985 = vst [vmem:[%s2347 + $0x4f8] sm:$0xff] %v2984
                  %v2986 = vld [vmem:[%s2346 + $0x97c] sm:$0xff]
                  %2987 = vst [vmem:[%s2347 + $0x4fc] sm:$0xff] %v2986
                  %v2988 = vld [vmem:[%s2346 + $0xa00] sm:$0xff]
                  %2989 = vst [vmem:[%s2347 + $0x500] sm:$0xff] %v2988
                  %v2990 = vld [vmem:[%s2346 + $0xa04] sm:$0xff]
                  %2991 = vst [vmem:[%s2347 + $0x504] sm:$0xff] %v2990
                  %v2992 = vld [vmem:[%s2346 + $0xa08] sm:$0xff]
                  %2993 = vst [vmem:[%s2347 + $0x508] sm:$0xff] %v2992
                  %v2994 = vld [vmem:[%s2346 + $0xa0c] sm:$0xff]
                  %2995 = vst [vmem:[%s2347 + $0x50c] sm:$0xff] %v2994
                  %v2996 = vld [vmem:[%s2346 + $0xa10] sm:$0xff]
                  %2997 = vst [vmem:[%s2347 + $0x510] sm:$0xff] %v2996
                  %v2998 = vld [vmem:[%s2346 + $0xa14] sm:$0xff]
                  %2999 = vst [vmem:[%s2347 + $0x514] sm:$0xff] %v2998
                  %v3000 = vld [vmem:[%s2346 + $0xa18] sm:$0xff]
                  %3001 = vst [vmem:[%s2347 + $0x518] sm:$0xff] %v3000
                  %v3002 = vld [vmem:[%s2346 + $0xa1c] sm:$0xff]
                  %3003 = vst [vmem:[%s2347 + $0x51c] sm:$0xff] %v3002
                  %v3004 = vld [vmem:[%s2346 + $0xa20] sm:$0xff]
                  %3005 = vst [vmem:[%s2347 + $0x520] sm:$0xff] %v3004
                  %v3006 = vld [vmem:[%s2346 + $0xa24] sm:$0xff]
                  %3007 = vst [vmem:[%s2347 + $0x524] sm:$0xff] %v3006
                  %v3008 = vld [vmem:[%s2346 + $0xa28] sm:$0xff]
                  %3009 = vst [vmem:[%s2347 + $0x528] sm:$0xff] %v3008
                  %v3010 = vld [vmem:[%s2346 + $0xa2c] sm:$0xff]
                  %3011 = vst [vmem:[%s2347 + $0x52c] sm:$0xff] %v3010
                  %v3012 = vld [vmem:[%s2346 + $0xa30] sm:$0xff]
                  %3013 = vst [vmem:[%s2347 + $0x530] sm:$0xff] %v3012
                  %v3014 = vld [vmem:[%s2346 + $0xa34] sm:$0xff]
                  %3015 = vst [vmem:[%s2347 + $0x534] sm:$0xff] %v3014
                  %v3016 = vld [vmem:[%s2346 + $0xa38] sm:$0xff]
                  %3017 = vst [vmem:[%s2347 + $0x538] sm:$0xff] %v3016
                  %v3018 = vld [vmem:[%s2346 + $0xa3c] sm:$0xff]
                  %3019 = vst [vmem:[%s2347 + $0x53c] sm:$0xff] %v3018
                  %v3020 = vld [vmem:[%s2346 + $0xa40] sm:$0xff]
                  %3021 = vst [vmem:[%s2347 + $0x540] sm:$0xff] %v3020
                  %v3022 = vld [vmem:[%s2346 + $0xa44] sm:$0xff]
                  %3023 = vst [vmem:[%s2347 + $0x544] sm:$0xff] %v3022
                  %v3024 = vld [vmem:[%s2346 + $0xa48] sm:$0xff]
                  %3025 = vst [vmem:[%s2347 + $0x548] sm:$0xff] %v3024
                  %v3026 = vld [vmem:[%s2346 + $0xa4c] sm:$0xff]
                  %3027 = vst [vmem:[%s2347 + $0x54c] sm:$0xff] %v3026
                  %v3028 = vld [vmem:[%s2346 + $0xa50] sm:$0xff]
                  %3029 = vst [vmem:[%s2347 + $0x550] sm:$0xff] %v3028
                  %v3030 = vld [vmem:[%s2346 + $0xa54] sm:$0xff]
                  %3031 = vst [vmem:[%s2347 + $0x554] sm:$0xff] %v3030
                  %v3032 = vld [vmem:[%s2346 + $0xa58] sm:$0xff]
                  %3033 = vst [vmem:[%s2347 + $0x558] sm:$0xff] %v3032
                  %v3034 = vld [vmem:[%s2346 + $0xa5c] sm:$0xff]
                  %3035 = vst [vmem:[%s2347 + $0x55c] sm:$0xff] %v3034
                  %v3036 = vld [vmem:[%s2346 + $0xa60] sm:$0xff]
                  %3037 = vst [vmem:[%s2347 + $0x560] sm:$0xff] %v3036
                  %v3038 = vld [vmem:[%s2346 + $0xa64] sm:$0xff]
                  %3039 = vst [vmem:[%s2347 + $0x564] sm:$0xff] %v3038
                  %v3040 = vld [vmem:[%s2346 + $0xa68] sm:$0xff]
                  %3041 = vst [vmem:[%s2347 + $0x568] sm:$0xff] %v3040
                  %v3042 = vld [vmem:[%s2346 + $0xa6c] sm:$0xff]
                  %3043 = vst [vmem:[%s2347 + $0x56c] sm:$0xff] %v3042
                  %v3044 = vld [vmem:[%s2346 + $0xa70] sm:$0xff]
                  %3045 = vst [vmem:[%s2347 + $0x570] sm:$0xff] %v3044
                  %v3046 = vld [vmem:[%s2346 + $0xa74] sm:$0xff]
                  %3047 = vst [vmem:[%s2347 + $0x574] sm:$0xff] %v3046
                  %v3048 = vld [vmem:[%s2346 + $0xa78] sm:$0xff]
                  %3049 = vst [vmem:[%s2347 + $0x578] sm:$0xff] %v3048
                  %v3050 = vld [vmem:[%s2346 + $0xa7c] sm:$0xff]
                  %3051 = vst [vmem:[%s2347 + $0x57c] sm:$0xff] %v3050
                  %v3052 = vld [vmem:[%s2346 + $0xb00] sm:$0xff]
                  %3053 = vst [vmem:[%s2347 + $0x580] sm:$0xff] %v3052
                  %v3054 = vld [vmem:[%s2346 + $0xb04] sm:$0xff]
                  %3055 = vst [vmem:[%s2347 + $0x584] sm:$0xff] %v3054
                  %v3056 = vld [vmem:[%s2346 + $0xb08] sm:$0xff]
                  %3057 = vst [vmem:[%s2347 + $0x588] sm:$0xff] %v3056
                  %v3058 = vld [vmem:[%s2346 + $0xb0c] sm:$0xff]
                  %3059 = vst [vmem:[%s2347 + $0x58c] sm:$0xff] %v3058
                  %v3060 = vld [vmem:[%s2346 + $0xb10] sm:$0xff]
                  %3061 = vst [vmem:[%s2347 + $0x590] sm:$0xff] %v3060
                  %v3062 = vld [vmem:[%s2346 + $0xb14] sm:$0xff]
                  %3063 = vst [vmem:[%s2347 + $0x594] sm:$0xff] %v3062
                  %v3064 = vld [vmem:[%s2346 + $0xb18] sm:$0xff]
                  %3065 = vst [vmem:[%s2347 + $0x598] sm:$0xff] %v3064
                  %v3066 = vld [vmem:[%s2346 + $0xb1c] sm:$0xff]
                  %3067 = vst [vmem:[%s2347 + $0x59c] sm:$0xff] %v3066
                  %v3068 = vld [vmem:[%s2346 + $0xb20] sm:$0xff]
                  %3069 = vst [vmem:[%s2347 + $0x5a0] sm:$0xff] %v3068
                  %v3070 = vld [vmem:[%s2346 + $0xb24] sm:$0xff]
                  %3071 = vst [vmem:[%s2347 + $0x5a4] sm:$0xff] %v3070
                  %v3072 = vld [vmem:[%s2346 + $0xb28] sm:$0xff]
                  %3073 = vst [vmem:[%s2347 + $0x5a8] sm:$0xff] %v3072
                  %v3074 = vld [vmem:[%s2346 + $0xb2c] sm:$0xff]
                  %3075 = vst [vmem:[%s2347 + $0x5ac] sm:$0xff] %v3074
                  %v3076 = vld [vmem:[%s2346 + $0xb30] sm:$0xff]
                  %3077 = vst [vmem:[%s2347 + $0x5b0] sm:$0xff] %v3076
                  %v3078 = vld [vmem:[%s2346 + $0xb34] sm:$0xff]
                  %3079 = vst [vmem:[%s2347 + $0x5b4] sm:$0xff] %v3078
                  %v3080 = vld [vmem:[%s2346 + $0xb38] sm:$0xff]
                  %3081 = vst [vmem:[%s2347 + $0x5b8] sm:$0xff] %v3080
                  %v3082 = vld [vmem:[%s2346 + $0xb3c] sm:$0xff]
                  %3083 = vst [vmem:[%s2347 + $0x5bc] sm:$0xff] %v3082
                  %v3084 = vld [vmem:[%s2346 + $0xb40] sm:$0xff]
                  %3085 = vst [vmem:[%s2347 + $0x5c0] sm:$0xff] %v3084
                  %v3086 = vld [vmem:[%s2346 + $0xb44] sm:$0xff]
                  %3087 = vst [vmem:[%s2347 + $0x5c4] sm:$0xff] %v3086
                  %v3088 = vld [vmem:[%s2346 + $0xb48] sm:$0xff]
                  %3089 = vst [vmem:[%s2347 + $0x5c8] sm:$0xff] %v3088
                  %v3090 = vld [vmem:[%s2346 + $0xb4c] sm:$0xff]
                  %3091 = vst [vmem:[%s2347 + $0x5cc] sm:$0xff] %v3090
                  %v3092 = vld [vmem:[%s2346 + $0xb50] sm:$0xff]
                  %3093 = vst [vmem:[%s2347 + $0x5d0] sm:$0xff] %v3092
                  %v3094 = vld [vmem:[%s2346 + $0xb54] sm:$0xff]
                  %3095 = vst [vmem:[%s2347 + $0x5d4] sm:$0xff] %v3094
                  %v3096 = vld [vmem:[%s2346 + $0xb58] sm:$0xff]
                  %3097 = vst [vmem:[%s2347 + $0x5d8] sm:$0xff] %v3096
                  %v3098 = vld [vmem:[%s2346 + $0xb5c] sm:$0xff]
                  %3099 = vst [vmem:[%s2347 + $0x5dc] sm:$0xff] %v3098
                  %v3100 = vld [vmem:[%s2346 + $0xb60] sm:$0xff]
                  %3101 = vst [vmem:[%s2347 + $0x5e0] sm:$0xff] %v3100
                  %v3102 = vld [vmem:[%s2346 + $0xb64] sm:$0xff]
                  %3103 = vst [vmem:[%s2347 + $0x5e4] sm:$0xff] %v3102
                  %v3104 = vld [vmem:[%s2346 + $0xb68] sm:$0xff]
                  %3105 = vst [vmem:[%s2347 + $0x5e8] sm:$0xff] %v3104
                  %v3106 = vld [vmem:[%s2346 + $0xb6c] sm:$0xff]
                  %3107 = vst [vmem:[%s2347 + $0x5ec] sm:$0xff] %v3106
                  %v3108 = vld [vmem:[%s2346 + $0xb70] sm:$0xff]
                  %3109 = vst [vmem:[%s2347 + $0x5f0] sm:$0xff] %v3108
                  %v3110 = vld [vmem:[%s2346 + $0xb74] sm:$0xff]
                  %3111 = vst [vmem:[%s2347 + $0x5f4] sm:$0xff] %v3110
                  %v3112 = vld [vmem:[%s2346 + $0xb78] sm:$0xff]
                  %3113 = vst [vmem:[%s2347 + $0x5f8] sm:$0xff] %v3112
                  %v3114 = vld [vmem:[%s2346 + $0xb7c] sm:$0xff]
                  %3115 = vst [vmem:[%s2347 + $0x5fc] sm:$0xff] %v3114
                  %v3116 = vld [vmem:[%s2346 + $0xc00] sm:$0xff]
                  %3117 = vst [vmem:[%s2347 + $0x600] sm:$0xff] %v3116
                  %v3118 = vld [vmem:[%s2346 + $0xc04] sm:$0xff]
                  %3119 = vst [vmem:[%s2347 + $0x604] sm:$0xff] %v3118
                  %v3120 = vld [vmem:[%s2346 + $0xc08] sm:$0xff]
                  %3121 = vst [vmem:[%s2347 + $0x608] sm:$0xff] %v3120
                  %v3122 = vld [vmem:[%s2346 + $0xc0c] sm:$0xff]
                  %3123 = vst [vmem:[%s2347 + $0x60c] sm:$0xff] %v3122
                  %v3124 = vld [vmem:[%s2346 + $0xc10] sm:$0xff]
                  %3125 = vst [vmem:[%s2347 + $0x610] sm:$0xff] %v3124
                  %v3126 = vld [vmem:[%s2346 + $0xc14] sm:$0xff]
                  %3127 = vst [vmem:[%s2347 + $0x614] sm:$0xff] %v3126
                  %v3128 = vld [vmem:[%s2346 + $0xc18] sm:$0xff]
                  %3129 = vst [vmem:[%s2347 + $0x618] sm:$0xff] %v3128
                  %v3130 = vld [vmem:[%s2346 + $0xc1c] sm:$0xff]
                  %3131 = vst [vmem:[%s2347 + $0x61c] sm:$0xff] %v3130
                  %v3132 = vld [vmem:[%s2346 + $0xc20] sm:$0xff]
                  %3133 = vst [vmem:[%s2347 + $0x620] sm:$0xff] %v3132
                  %v3134 = vld [vmem:[%s2346 + $0xc24] sm:$0xff]
                  %3135 = vst [vmem:[%s2347 + $0x624] sm:$0xff] %v3134
                  %v3136 = vld [vmem:[%s2346 + $0xc28] sm:$0xff]
                  %3137 = vst [vmem:[%s2347 + $0x628] sm:$0xff] %v3136
                  %v3138 = vld [vmem:[%s2346 + $0xc2c] sm:$0xff]
                  %3139 = vst [vmem:[%s2347 + $0x62c] sm:$0xff] %v3138
                  %v3140 = vld [vmem:[%s2346 + $0xc30] sm:$0xff]
                  %3141 = vst [vmem:[%s2347 + $0x630] sm:$0xff] %v3140
                  %v3142 = vld [vmem:[%s2346 + $0xc34] sm:$0xff]
                  %3143 = vst [vmem:[%s2347 + $0x634] sm:$0xff] %v3142
                  %v3144 = vld [vmem:[%s2346 + $0xc38] sm:$0xff]
                  %3145 = vst [vmem:[%s2347 + $0x638] sm:$0xff] %v3144
                  %v3146 = vld [vmem:[%s2346 + $0xc3c] sm:$0xff]
                  %3147 = vst [vmem:[%s2347 + $0x63c] sm:$0xff] %v3146
                  %v3148 = vld [vmem:[%s2346 + $0xc40] sm:$0xff]
                  %3149 = vst [vmem:[%s2347 + $0x640] sm:$0xff] %v3148
                  %v3150 = vld [vmem:[%s2346 + $0xc44] sm:$0xff]
                  %3151 = vst [vmem:[%s2347 + $0x644] sm:$0xff] %v3150
                  %v3152 = vld [vmem:[%s2346 + $0xc48] sm:$0xff]
                  %3153 = vst [vmem:[%s2347 + $0x648] sm:$0xff] %v3152
                  %v3154 = vld [vmem:[%s2346 + $0xc4c] sm:$0xff]
                  %3155 = vst [vmem:[%s2347 + $0x64c] sm:$0xff] %v3154
                  %v3156 = vld [vmem:[%s2346 + $0xc50] sm:$0xff]
                  %3157 = vst [vmem:[%s2347 + $0x650] sm:$0xff] %v3156
                  %v3158 = vld [vmem:[%s2346 + $0xc54] sm:$0xff]
                  %3159 = vst [vmem:[%s2347 + $0x654] sm:$0xff] %v3158
                  %v3160 = vld [vmem:[%s2346 + $0xc58] sm:$0xff]
                  %3161 = vst [vmem:[%s2347 + $0x658] sm:$0xff] %v3160
                  %v3162 = vld [vmem:[%s2346 + $0xc5c] sm:$0xff]
                  %3163 = vst [vmem:[%s2347 + $0x65c] sm:$0xff] %v3162
                  %v3164 = vld [vmem:[%s2346 + $0xc60] sm:$0xff]
                  %3165 = vst [vmem:[%s2347 + $0x660] sm:$0xff] %v3164
                  %v3166 = vld [vmem:[%s2346 + $0xc64] sm:$0xff]
                  %3167 = vst [vmem:[%s2347 + $0x664] sm:$0xff] %v3166
                  %v3168 = vld [vmem:[%s2346 + $0xc68] sm:$0xff]
                  %3169 = vst [vmem:[%s2347 + $0x668] sm:$0xff] %v3168
                  %v3170 = vld [vmem:[%s2346 + $0xc6c] sm:$0xff]
                  %3171 = vst [vmem:[%s2347 + $0x66c] sm:$0xff] %v3170
                  %v3172 = vld [vmem:[%s2346 + $0xc70] sm:$0xff]
                  %3173 = vst [vmem:[%s2347 + $0x670] sm:$0xff] %v3172
                  %v3174 = vld [vmem:[%s2346 + $0xc74] sm:$0xff]
                  %3175 = vst [vmem:[%s2347 + $0x674] sm:$0xff] %v3174
                  %v3176 = vld [vmem:[%s2346 + $0xc78] sm:$0xff]
                  %3177 = vst [vmem:[%s2347 + $0x678] sm:$0xff] %v3176
                  %v3178 = vld [vmem:[%s2346 + $0xc7c] sm:$0xff]
                  %3179 = vst [vmem:[%s2347 + $0x67c] sm:$0xff] %v3178
                  %v3180 = vld [vmem:[%s2346 + $0xd00] sm:$0xff]
                  %3181 = vst [vmem:[%s2347 + $0x680] sm:$0xff] %v3180
                  %v3182 = vld [vmem:[%s2346 + $0xd04] sm:$0xff]
                  %3183 = vst [vmem:[%s2347 + $0x684] sm:$0xff] %v3182
                  %v3184 = vld [vmem:[%s2346 + $0xd08] sm:$0xff]
                  %3185 = vst [vmem:[%s2347 + $0x688] sm:$0xff] %v3184
                  %v3186 = vld [vmem:[%s2346 + $0xd0c] sm:$0xff]
                  %3187 = vst [vmem:[%s2347 + $0x68c] sm:$0xff] %v3186
                  %v3188 = vld [vmem:[%s2346 + $0xd10] sm:$0xff]
                  %3189 = vst [vmem:[%s2347 + $0x690] sm:$0xff] %v3188
                  %v3190 = vld [vmem:[%s2346 + $0xd14] sm:$0xff]
                  %3191 = vst [vmem:[%s2347 + $0x694] sm:$0xff] %v3190
                  %v3192 = vld [vmem:[%s2346 + $0xd18] sm:$0xff]
                  %3193 = vst [vmem:[%s2347 + $0x698] sm:$0xff] %v3192
                  %v3194 = vld [vmem:[%s2346 + $0xd1c] sm:$0xff]
                  %3195 = vst [vmem:[%s2347 + $0x69c] sm:$0xff] %v3194
                  %v3196 = vld [vmem:[%s2346 + $0xd20] sm:$0xff]
                  %3197 = vst [vmem:[%s2347 + $0x6a0] sm:$0xff] %v3196
                  %v3198 = vld [vmem:[%s2346 + $0xd24] sm:$0xff]
                  %3199 = vst [vmem:[%s2347 + $0x6a4] sm:$0xff] %v3198
                  %v3200 = vld [vmem:[%s2346 + $0xd28] sm:$0xff]
                  %3201 = vst [vmem:[%s2347 + $0x6a8] sm:$0xff] %v3200
                  %v3202 = vld [vmem:[%s2346 + $0xd2c] sm:$0xff]
                  %3203 = vst [vmem:[%s2347 + $0x6ac] sm:$0xff] %v3202
                  %v3204 = vld [vmem:[%s2346 + $0xd30] sm:$0xff]
                  %3205 = vst [vmem:[%s2347 + $0x6b0] sm:$0xff] %v3204
                  %v3206 = vld [vmem:[%s2346 + $0xd34] sm:$0xff]
                  %3207 = vst [vmem:[%s2347 + $0x6b4] sm:$0xff] %v3206
                  %v3208 = vld [vmem:[%s2346 + $0xd38] sm:$0xff]
                  %3209 = vst [vmem:[%s2347 + $0x6b8] sm:$0xff] %v3208
                  %v3210 = vld [vmem:[%s2346 + $0xd3c] sm:$0xff]
                  %3211 = vst [vmem:[%s2347 + $0x6bc] sm:$0xff] %v3210
                  %v3212 = vld [vmem:[%s2346 + $0xd40] sm:$0xff]
                  %3213 = vst [vmem:[%s2347 + $0x6c0] sm:$0xff] %v3212
                  %v3214 = vld [vmem:[%s2346 + $0xd44] sm:$0xff]
                  %3215 = vst [vmem:[%s2347 + $0x6c4] sm:$0xff] %v3214
                  %v3216 = vld [vmem:[%s2346 + $0xd48] sm:$0xff]
                  %3217 = vst [vmem:[%s2347 + $0x6c8] sm:$0xff] %v3216
                  %v3218 = vld [vmem:[%s2346 + $0xd4c] sm:$0xff]
                  %3219 = vst [vmem:[%s2347 + $0x6cc] sm:$0xff] %v3218
                  %v3220 = vld [vmem:[%s2346 + $0xd50] sm:$0xff]
                  %3221 = vst [vmem:[%s2347 + $0x6d0] sm:$0xff] %v3220
                  %v3222 = vld [vmem:[%s2346 + $0xd54] sm:$0xff]
                  %3223 = vst [vmem:[%s2347 + $0x6d4] sm:$0xff] %v3222
                  %v3224 = vld [vmem:[%s2346 + $0xd58] sm:$0xff]
                  %3225 = vst [vmem:[%s2347 + $0x6d8] sm:$0xff] %v3224
                  %v3226 = vld [vmem:[%s2346 + $0xd5c] sm:$0xff]
                  %3227 = vst [vmem:[%s2347 + $0x6dc] sm:$0xff] %v3226
                  %v3228 = vld [vmem:[%s2346 + $0xd60] sm:$0xff]
                  %3229 = vst [vmem:[%s2347 + $0x6e0] sm:$0xff] %v3228
                  %v3230 = vld [vmem:[%s2346 + $0xd64] sm:$0xff]
                  %3231 = vst [vmem:[%s2347 + $0x6e4] sm:$0xff] %v3230
                  %v3232 = vld [vmem:[%s2346 + $0xd68] sm:$0xff]
                  %3233 = vst [vmem:[%s2347 + $0x6e8] sm:$0xff] %v3232
                  %v3234 = vld [vmem:[%s2346 + $0xd6c] sm:$0xff]
                  %3235 = vst [vmem:[%s2347 + $0x6ec] sm:$0xff] %v3234
                  %v3236 = vld [vmem:[%s2346 + $0xd70] sm:$0xff]
                  %3237 = vst [vmem:[%s2347 + $0x6f0] sm:$0xff] %v3236
                  %v3238 = vld [vmem:[%s2346 + $0xd74] sm:$0xff]
                  %3239 = vst [vmem:[%s2347 + $0x6f4] sm:$0xff] %v3238
                  %v3240 = vld [vmem:[%s2346 + $0xd78] sm:$0xff]
                  %3241 = vst [vmem:[%s2347 + $0x6f8] sm:$0xff] %v3240
                  %v3242 = vld [vmem:[%s2346 + $0xd7c] sm:$0xff]
                  %3243 = vst [vmem:[%s2347 + $0x6fc] sm:$0xff] %v3242
                  %v3244 = vld [vmem:[%s2346 + $0xe00] sm:$0xff]
                  %3245 = vst [vmem:[%s2347 + $0x700] sm:$0xff] %v3244
                  %v3246 = vld [vmem:[%s2346 + $0xe04] sm:$0xff]
                  %3247 = vst [vmem:[%s2347 + $0x704] sm:$0xff] %v3246
                  %v3248 = vld [vmem:[%s2346 + $0xe08] sm:$0xff]
                  %3249 = vst [vmem:[%s2347 + $0x708] sm:$0xff] %v3248
                  %v3250 = vld [vmem:[%s2346 + $0xe0c] sm:$0xff]
                  %3251 = vst [vmem:[%s2347 + $0x70c] sm:$0xff] %v3250
                  %v3252 = vld [vmem:[%s2346 + $0xe10] sm:$0xff]
                  %3253 = vst [vmem:[%s2347 + $0x710] sm:$0xff] %v3252
                  %v3254 = vld [vmem:[%s2346 + $0xe14] sm:$0xff]
                  %3255 = vst [vmem:[%s2347 + $0x714] sm:$0xff] %v3254
                  %v3256 = vld [vmem:[%s2346 + $0xe18] sm:$0xff]
                  %3257 = vst [vmem:[%s2347 + $0x718] sm:$0xff] %v3256
                  %v3258 = vld [vmem:[%s2346 + $0xe1c] sm:$0xff]
                  %3259 = vst [vmem:[%s2347 + $0x71c] sm:$0xff] %v3258
                  %v3260 = vld [vmem:[%s2346 + $0xe20] sm:$0xff]
                  %3261 = vst [vmem:[%s2347 + $0x720] sm:$0xff] %v3260
                  %v3262 = vld [vmem:[%s2346 + $0xe24] sm:$0xff]
                  %3263 = vst [vmem:[%s2347 + $0x724] sm:$0xff] %v3262
                  %v3264 = vld [vmem:[%s2346 + $0xe28] sm:$0xff]
                  %3265 = vst [vmem:[%s2347 + $0x728] sm:$0xff] %v3264
                  %v3266 = vld [vmem:[%s2346 + $0xe2c] sm:$0xff]
                  %3267 = vst [vmem:[%s2347 + $0x72c] sm:$0xff] %v3266
                  %v3268 = vld [vmem:[%s2346 + $0xe30] sm:$0xff]
                  %3269 = vst [vmem:[%s2347 + $0x730] sm:$0xff] %v3268
                  %v3270 = vld [vmem:[%s2346 + $0xe34] sm:$0xff]
                  %3271 = vst [vmem:[%s2347 + $0x734] sm:$0xff] %v3270
                  %v3272 = vld [vmem:[%s2346 + $0xe38] sm:$0xff]
                  %3273 = vst [vmem:[%s2347 + $0x738] sm:$0xff] %v3272
                  %v3274 = vld [vmem:[%s2346 + $0xe3c] sm:$0xff]
                  %3275 = vst [vmem:[%s2347 + $0x73c] sm:$0xff] %v3274
                  %v3276 = vld [vmem:[%s2346 + $0xe40] sm:$0xff]
                  %3277 = vst [vmem:[%s2347 + $0x740] sm:$0xff] %v3276
                  %v3278 = vld [vmem:[%s2346 + $0xe44] sm:$0xff]
                  %3279 = vst [vmem:[%s2347 + $0x744] sm:$0xff] %v3278
                  %v3280 = vld [vmem:[%s2346 + $0xe48] sm:$0xff]
                  %3281 = vst [vmem:[%s2347 + $0x748] sm:$0xff] %v3280
                  %v3282 = vld [vmem:[%s2346 + $0xe4c] sm:$0xff]
                  %3283 = vst [vmem:[%s2347 + $0x74c] sm:$0xff] %v3282
                  %v3284 = vld [vmem:[%s2346 + $0xe50] sm:$0xff]
                  %3285 = vst [vmem:[%s2347 + $0x750] sm:$0xff] %v3284
                  %v3286 = vld [vmem:[%s2346 + $0xe54] sm:$0xff]
                  %3287 = vst [vmem:[%s2347 + $0x754] sm:$0xff] %v3286
                  %v3288 = vld [vmem:[%s2346 + $0xe58] sm:$0xff]
                  %3289 = vst [vmem:[%s2347 + $0x758] sm:$0xff] %v3288
                  %v3290 = vld [vmem:[%s2346 + $0xe5c] sm:$0xff]
                  %3291 = vst [vmem:[%s2347 + $0x75c] sm:$0xff] %v3290
                  %v3292 = vld [vmem:[%s2346 + $0xe60] sm:$0xff]
                  %3293 = vst [vmem:[%s2347 + $0x760] sm:$0xff] %v3292
                  %v3294 = vld [vmem:[%s2346 + $0xe64] sm:$0xff]
                  %3295 = vst [vmem:[%s2347 + $0x764] sm:$0xff] %v3294
                  %v3296 = vld [vmem:[%s2346 + $0xe68] sm:$0xff]
                  %3297 = vst [vmem:[%s2347 + $0x768] sm:$0xff] %v3296
                  %v3298 = vld [vmem:[%s2346 + $0xe6c] sm:$0xff]
                  %3299 = vst [vmem:[%s2347 + $0x76c] sm:$0xff] %v3298
                  %v3300 = vld [vmem:[%s2346 + $0xe70] sm:$0xff]
                  %3301 = vst [vmem:[%s2347 + $0x770] sm:$0xff] %v3300
                  %v3302 = vld [vmem:[%s2346 + $0xe74] sm:$0xff]
                  %3303 = vst [vmem:[%s2347 + $0x774] sm:$0xff] %v3302
                  %v3304 = vld [vmem:[%s2346 + $0xe78] sm:$0xff]
                  %3305 = vst [vmem:[%s2347 + $0x778] sm:$0xff] %v3304
                  %v3306 = vld [vmem:[%s2346 + $0xe7c] sm:$0xff]
                  %3307 = vst [vmem:[%s2347 + $0x77c] sm:$0xff] %v3306
                  %v3308 = vld [vmem:[%s2346 + $0xf00] sm:$0xff]
                  %3309 = vst [vmem:[%s2347 + $0x780] sm:$0xff] %v3308
                  %v3310 = vld [vmem:[%s2346 + $0xf04] sm:$0xff]
                  %3311 = vst [vmem:[%s2347 + $0x784] sm:$0xff] %v3310
                  %v3312 = vld [vmem:[%s2346 + $0xf08] sm:$0xff]
                  %3313 = vst [vmem:[%s2347 + $0x788] sm:$0xff] %v3312
                  %v3314 = vld [vmem:[%s2346 + $0xf0c] sm:$0xff]
                  %3315 = vst [vmem:[%s2347 + $0x78c] sm:$0xff] %v3314
                  %v3316 = vld [vmem:[%s2346 + $0xf10] sm:$0xff]
                  %3317 = vst [vmem:[%s2347 + $0x790] sm:$0xff] %v3316
                  %v3318 = vld [vmem:[%s2346 + $0xf14] sm:$0xff]
                  %3319 = vst [vmem:[%s2347 + $0x794] sm:$0xff] %v3318
                  %v3320 = vld [vmem:[%s2346 + $0xf18] sm:$0xff]
                  %3321 = vst [vmem:[%s2347 + $0x798] sm:$0xff] %v3320
                  %v3322 = vld [vmem:[%s2346 + $0xf1c] sm:$0xff]
                  %3323 = vst [vmem:[%s2347 + $0x79c] sm:$0xff] %v3322
                  %v3324 = vld [vmem:[%s2346 + $0xf20] sm:$0xff]
                  %3325 = vst [vmem:[%s2347 + $0x7a0] sm:$0xff] %v3324
                  %v3326 = vld [vmem:[%s2346 + $0xf24] sm:$0xff]
                  %3327 = vst [vmem:[%s2347 + $0x7a4] sm:$0xff] %v3326
                  %v3328 = vld [vmem:[%s2346 + $0xf28] sm:$0xff]
                  %3329 = vst [vmem:[%s2347 + $0x7a8] sm:$0xff] %v3328
                  %v3330 = vld [vmem:[%s2346 + $0xf2c] sm:$0xff]
                  %3331 = vst [vmem:[%s2347 + $0x7ac] sm:$0xff] %v3330
                  %v3332 = vld [vmem:[%s2346 + $0xf30] sm:$0xff]
                  %3333 = vst [vmem:[%s2347 + $0x7b0] sm:$0xff] %v3332
                  %v3334 = vld [vmem:[%s2346 + $0xf34] sm:$0xff]
                  %3335 = vst [vmem:[%s2347 + $0x7b4] sm:$0xff] %v3334
                  %v3336 = vld [vmem:[%s2346 + $0xf38] sm:$0xff]
                  %3337 = vst [vmem:[%s2347 + $0x7b8] sm:$0xff] %v3336
                  %v3338 = vld [vmem:[%s2346 + $0xf3c] sm:$0xff]
                  %3339 = vst [vmem:[%s2347 + $0x7bc] sm:$0xff] %v3338
                  %v3340 = vld [vmem:[%s2346 + $0xf40] sm:$0xff]
                  %3341 = vst [vmem:[%s2347 + $0x7c0] sm:$0xff] %v3340
                  %v3342 = vld [vmem:[%s2346 + $0xf44] sm:$0xff]
                  %3343 = vst [vmem:[%s2347 + $0x7c4] sm:$0xff] %v3342
                  %v3344 = vld [vmem:[%s2346 + $0xf48] sm:$0xff]
                  %3345 = vst [vmem:[%s2347 + $0x7c8] sm:$0xff] %v3344
                  %v3346 = vld [vmem:[%s2346 + $0xf4c] sm:$0xff]
                  %3347 = vst [vmem:[%s2347 + $0x7cc] sm:$0xff] %v3346
                  %v3348 = vld [vmem:[%s2346 + $0xf50] sm:$0xff]
                  %3349 = vst [vmem:[%s2347 + $0x7d0] sm:$0xff] %v3348
                  %v3350 = vld [vmem:[%s2346 + $0xf54] sm:$0xff]
                  %3351 = vst [vmem:[%s2347 + $0x7d4] sm:$0xff] %v3350
                  %v3352 = vld [vmem:[%s2346 + $0xf58] sm:$0xff]
                  %3353 = vst [vmem:[%s2347 + $0x7d8] sm:$0xff] %v3352
                  %v3354 = vld [vmem:[%s2346 + $0xf5c] sm:$0xff]
                  %3355 = vst [vmem:[%s2347 + $0x7dc] sm:$0xff] %v3354
                  %v3356 = vld [vmem:[%s2346 + $0xf60] sm:$0xff]
                  %3357 = vst [vmem:[%s2347 + $0x7e0] sm:$0xff] %v3356
                  %v3358 = vld [vmem:[%s2346 + $0xf64] sm:$0xff]
                  %3359 = vst [vmem:[%s2347 + $0x7e4] sm:$0xff] %v3358
                  %v3360 = vld [vmem:[%s2346 + $0xf68] sm:$0xff]
                  %3361 = vst [vmem:[%s2347 + $0x7e8] sm:$0xff] %v3360
                  %v3362 = vld [vmem:[%s2346 + $0xf6c] sm:$0xff]
                  %3363 = vst [vmem:[%s2347 + $0x7ec] sm:$0xff] %v3362
                  %v3364 = vld [vmem:[%s2346 + $0xf70] sm:$0xff]
                  %3365 = vst [vmem:[%s2347 + $0x7f0] sm:$0xff] %v3364
                  %v3366 = vld [vmem:[%s2346 + $0xf74] sm:$0xff]
                  %3367 = vst [vmem:[%s2347 + $0x7f4] sm:$0xff] %v3366
                  %v3368 = vld [vmem:[%s2346 + $0xf78] sm:$0xff]
                  %3369 = vst [vmem:[%s2347 + $0x7f8] sm:$0xff] %v3368
                  %v3370 = vld [vmem:[%s2346 + $0xf7c] sm:$0xff]
                  %3371 = vst [vmem:[%s2347 + $0x7fc] sm:$0xff] %v3370
                  %s3372 = sadd.s32 1, %s2345
                  %p3373 = scmp.ge.s32.totalorder %s3372, 0
                  %s3374 = scalar_select %p3373, 0, %s3372
                  %s3375 = smul.u32 %s3374, 8
                  %s3376 = smul.u32 %s3374, 8
                  %s3377 = scalar_lea.vmem %s254, %s3375
                  %s3378 = scalar_lea.vmem %s248, %s3376 [#allocation3]
                $region83: #{net_forward.3} parent=77 // loop_footer
                  %s2344 = sadd.s32 1, %s2340
                $region84: #{net_forward.3} parent=77 // loop_footer_branch
                  %2339 = sbr.rel target = $region80
                $region85: #{net_forward.3} parent=77 // loop_exit
                  _
                %s3380 = ssub.s32 16, 1
                loop: start=0, step=1, limit=1
                $region86: #{net_forward.3} parent=77 // loop_pre_header
                  _
                $region87: #{net_forward.3} parent=77 // loop_header
                  %s3382 = sphi 0, %s3386
                  %p3383 = scmp.ge.s32.totalorder %s3382, 1
                  %s3387 = sphi %s254, %s254
                  %s3388 = sphi %s248, %s248
                $region88: #{net_forward.3} parent=77 // loop_header_branch
                  %3385 = sbr.rel (%p3383) target = $region92
                $region89: #{net_forward.3} parent=77 // loop_body
                  %v3389 = vld [vmem:[%s3387] sm:%s3380]
                  %3390 = vst [vmem:[%s3388] sm:%s3380] %v3389
                  %v3391 = vld [vmem:[%s3387 + $0x4] sm:%s3380]
                  %3392 = vst [vmem:[%s3388 + $0x4] sm:%s3380] %v3391
                  %v3393 = vld [vmem:[%s3387 + $0x8] sm:%s3380]
                  %3394 = vst [vmem:[%s3388 + $0x8] sm:%s3380] %v3393
                  %v3395 = vld [vmem:[%s3387 + $0xc] sm:%s3380]
                  %3396 = vst [vmem:[%s3388 + $0xc] sm:%s3380] %v3395
                  %v3397 = vld [vmem:[%s3387 + $0x10] sm:%s3380]
                  %3398 = vst [vmem:[%s3388 + $0x10] sm:%s3380] %v3397
                  %v3399 = vld [vmem:[%s3387 + $0x14] sm:%s3380]
                  %3400 = vst [vmem:[%s3388 + $0x14] sm:%s3380] %v3399
                  %v3401 = vld [vmem:[%s3387 + $0x18] sm:%s3380]
                  %3402 = vst [vmem:[%s3388 + $0x18] sm:%s3380] %v3401
                  %v3403 = vld [vmem:[%s3387 + $0x1c] sm:%s3380]
                  %3404 = vst [vmem:[%s3388 + $0x1c] sm:%s3380] %v3403
                  %v3405 = vld [vmem:[%s3387 + $0x20] sm:%s3380]
                  %3406 = vst [vmem:[%s3388 + $0x20] sm:%s3380] %v3405
                  %v3407 = vld [vmem:[%s3387 + $0x24] sm:%s3380]
                  %3408 = vst [vmem:[%s3388 + $0x24] sm:%s3380] %v3407
                  %v3409 = vld [vmem:[%s3387 + $0x28] sm:%s3380]
                  %3410 = vst [vmem:[%s3388 + $0x28] sm:%s3380] %v3409
                  %v3411 = vld [vmem:[%s3387 + $0x2c] sm:%s3380]
                  %3412 = vst [vmem:[%s3388 + $0x2c] sm:%s3380] %v3411
                  %v3413 = vld [vmem:[%s3387 + $0x30] sm:%s3380]
                  %3414 = vst [vmem:[%s3388 + $0x30] sm:%s3380] %v3413
                  %v3415 = vld [vmem:[%s3387 + $0x34] sm:%s3380]
                  %3416 = vst [vmem:[%s3388 + $0x34] sm:%s3380] %v3415
                  %v3417 = vld [vmem:[%s3387 + $0x38] sm:%s3380]
                  %3418 = vst [vmem:[%s3388 + $0x38] sm:%s3380] %v3417
                  %v3419 = vld [vmem:[%s3387 + $0x3c] sm:%s3380]
                  %3420 = vst [vmem:[%s3388 + $0x3c] sm:%s3380] %v3419
                  %v3421 = vld [vmem:[%s3387 + $0x40] sm:%s3380]
                  %3422 = vst [vmem:[%s3388 + $0x40] sm:%s3380] %v3421
                  %v3423 = vld [vmem:[%s3387 + $0x44] sm:%s3380]
                  %3424 = vst [vmem:[%s3388 + $0x44] sm:%s3380] %v3423
                  %v3425 = vld [vmem:[%s3387 + $0x48] sm:%s3380]
                  %3426 = vst [vmem:[%s3388 + $0x48] sm:%s3380] %v3425
                  %v3427 = vld [vmem:[%s3387 + $0x4c] sm:%s3380]
                  %3428 = vst [vmem:[%s3388 + $0x4c] sm:%s3380] %v3427
                  %v3429 = vld [vmem:[%s3387 + $0x50] sm:%s3380]
                  %3430 = vst [vmem:[%s3388 + $0x50] sm:%s3380] %v3429
                  %v3431 = vld [vmem:[%s3387 + $0x54] sm:%s3380]
                  %3432 = vst [vmem:[%s3388 + $0x54] sm:%s3380] %v3431
                  %v3433 = vld [vmem:[%s3387 + $0x58] sm:%s3380]
                  %3434 = vst [vmem:[%s3388 + $0x58] sm:%s3380] %v3433
                  %v3435 = vld [vmem:[%s3387 + $0x5c] sm:%s3380]
                  %3436 = vst [vmem:[%s3388 + $0x5c] sm:%s3380] %v3435
                  %v3437 = vld [vmem:[%s3387 + $0x60] sm:%s3380]
                  %3438 = vst [vmem:[%s3388 + $0x60] sm:%s3380] %v3437
                  %v3439 = vld [vmem:[%s3387 + $0x64] sm:%s3380]
                  %3440 = vst [vmem:[%s3388 + $0x64] sm:%s3380] %v3439
                  %v3441 = vld [vmem:[%s3387 + $0x68] sm:%s3380]
                  %3442 = vst [vmem:[%s3388 + $0x68] sm:%s3380] %v3441
                  %v3443 = vld [vmem:[%s3387 + $0x6c] sm:%s3380]
                  %3444 = vst [vmem:[%s3388 + $0x6c] sm:%s3380] %v3443
                  %v3445 = vld [vmem:[%s3387 + $0x70] sm:%s3380]
                  %3446 = vst [vmem:[%s3388 + $0x70] sm:%s3380] %v3445
                  %v3447 = vld [vmem:[%s3387 + $0x74] sm:%s3380]
                  %3448 = vst [vmem:[%s3388 + $0x74] sm:%s3380] %v3447
                  %v3449 = vld [vmem:[%s3387 + $0x78] sm:%s3380]
                  %3450 = vst [vmem:[%s3388 + $0x78] sm:%s3380] %v3449
                  %v3451 = vld [vmem:[%s3387 + $0x7c] sm:%s3380]
                  %3452 = vst [vmem:[%s3388 + $0x7c] sm:%s3380] %v3451
                  %v3453 = vld [vmem:[%s3387 + $0x100] sm:%s3380]
                  %3454 = vst [vmem:[%s3388 + $0x80] sm:%s3380] %v3453
                  %v3455 = vld [vmem:[%s3387 + $0x104] sm:%s3380]
                  %3456 = vst [vmem:[%s3388 + $0x84] sm:%s3380] %v3455
                  %v3457 = vld [vmem:[%s3387 + $0x108] sm:%s3380]
                  %3458 = vst [vmem:[%s3388 + $0x88] sm:%s3380] %v3457
                  %v3459 = vld [vmem:[%s3387 + $0x10c] sm:%s3380]
                  %3460 = vst [vmem:[%s3388 + $0x8c] sm:%s3380] %v3459
                  %v3461 = vld [vmem:[%s3387 + $0x110] sm:%s3380]
                  %3462 = vst [vmem:[%s3388 + $0x90] sm:%s3380] %v3461
                  %v3463 = vld [vmem:[%s3387 + $0x114] sm:%s3380]
                  %3464 = vst [vmem:[%s3388 + $0x94] sm:%s3380] %v3463
                  %v3465 = vld [vmem:[%s3387 + $0x118] sm:%s3380]
                  %3466 = vst [vmem:[%s3388 + $0x98] sm:%s3380] %v3465
                  %v3467 = vld [vmem:[%s3387 + $0x11c] sm:%s3380]
                  %3468 = vst [vmem:[%s3388 + $0x9c] sm:%s3380] %v3467
                  %v3469 = vld [vmem:[%s3387 + $0x120] sm:%s3380]
                  %3470 = vst [vmem:[%s3388 + $0xa0] sm:%s3380] %v3469
                  %v3471 = vld [vmem:[%s3387 + $0x124] sm:%s3380]
                  %3472 = vst [vmem:[%s3388 + $0xa4] sm:%s3380] %v3471
                  %v3473 = vld [vmem:[%s3387 + $0x128] sm:%s3380]
                  %3474 = vst [vmem:[%s3388 + $0xa8] sm:%s3380] %v3473
                  %v3475 = vld [vmem:[%s3387 + $0x12c] sm:%s3380]
                  %3476 = vst [vmem:[%s3388 + $0xac] sm:%s3380] %v3475
                  %v3477 = vld [vmem:[%s3387 + $0x130] sm:%s3380]
                  %3478 = vst [vmem:[%s3388 + $0xb0] sm:%s3380] %v3477
                  %v3479 = vld [vmem:[%s3387 + $0x134] sm:%s3380]
                  %3480 = vst [vmem:[%s3388 + $0xb4] sm:%s3380] %v3479
                  %v3481 = vld [vmem:[%s3387 + $0x138] sm:%s3380]
                  %3482 = vst [vmem:[%s3388 + $0xb8] sm:%s3380] %v3481
                  %v3483 = vld [vmem:[%s3387 + $0x13c] sm:%s3380]
                  %3484 = vst [vmem:[%s3388 + $0xbc] sm:%s3380] %v3483
                  %v3485 = vld [vmem:[%s3387 + $0x140] sm:%s3380]
                  %3486 = vst [vmem:[%s3388 + $0xc0] sm:%s3380] %v3485
                  %v3487 = vld [vmem:[%s3387 + $0x144] sm:%s3380]
                  %3488 = vst [vmem:[%s3388 + $0xc4] sm:%s3380] %v3487
                  %v3489 = vld [vmem:[%s3387 + $0x148] sm:%s3380]
                  %3490 = vst [vmem:[%s3388 + $0xc8] sm:%s3380] %v3489
                  %v3491 = vld [vmem:[%s3387 + $0x14c] sm:%s3380]
                  %3492 = vst [vmem:[%s3388 + $0xcc] sm:%s3380] %v3491
                  %v3493 = vld [vmem:[%s3387 + $0x150] sm:%s3380]
                  %3494 = vst [vmem:[%s3388 + $0xd0] sm:%s3380] %v3493
                  %v3495 = vld [vmem:[%s3387 + $0x154] sm:%s3380]
                  %3496 = vst [vmem:[%s3388 + $0xd4] sm:%s3380] %v3495
                  %v3497 = vld [vmem:[%s3387 + $0x158] sm:%s3380]
                  %3498 = vst [vmem:[%s3388 + $0xd8] sm:%s3380] %v3497
                  %v3499 = vld [vmem:[%s3387 + $0x15c] sm:%s3380]
                  %3500 = vst [vmem:[%s3388 + $0xdc] sm:%s3380] %v3499
                  %v3501 = vld [vmem:[%s3387 + $0x160] sm:%s3380]
                  %3502 = vst [vmem:[%s3388 + $0xe0] sm:%s3380] %v3501
                  %v3503 = vld [vmem:[%s3387 + $0x164] sm:%s3380]
                  %3504 = vst [vmem:[%s3388 + $0xe4] sm:%s3380] %v3503
                  %v3505 = vld [vmem:[%s3387 + $0x168] sm:%s3380]
                  %3506 = vst [vmem:[%s3388 + $0xe8] sm:%s3380] %v3505
                  %v3507 = vld [vmem:[%s3387 + $0x16c] sm:%s3380]
                  %3508 = vst [vmem:[%s3388 + $0xec] sm:%s3380] %v3507
                  %v3509 = vld [vmem:[%s3387 + $0x170] sm:%s3380]
                  %3510 = vst [vmem:[%s3388 + $0xf0] sm:%s3380] %v3509
                  %v3511 = vld [vmem:[%s3387 + $0x174] sm:%s3380]
                  %3512 = vst [vmem:[%s3388 + $0xf4] sm:%s3380] %v3511
                  %v3513 = vld [vmem:[%s3387 + $0x178] sm:%s3380]
                  %3514 = vst [vmem:[%s3388 + $0xf8] sm:%s3380] %v3513
                  %v3515 = vld [vmem:[%s3387 + $0x17c] sm:%s3380]
                  %3516 = vst [vmem:[%s3388 + $0xfc] sm:%s3380] %v3515
                  %v3517 = vld [vmem:[%s3387 + $0x200] sm:%s3380]
                  %3518 = vst [vmem:[%s3388 + $0x100] sm:%s3380] %v3517
                  %v3519 = vld [vmem:[%s3387 + $0x204] sm:%s3380]
                  %3520 = vst [vmem:[%s3388 + $0x104] sm:%s3380] %v3519
                  %v3521 = vld [vmem:[%s3387 + $0x208] sm:%s3380]
                  %3522 = vst [vmem:[%s3388 + $0x108] sm:%s3380] %v3521
                  %v3523 = vld [vmem:[%s3387 + $0x20c] sm:%s3380]
                  %3524 = vst [vmem:[%s3388 + $0x10c] sm:%s3380] %v3523
                  %v3525 = vld [vmem:[%s3387 + $0x210] sm:%s3380]
                  %3526 = vst [vmem:[%s3388 + $0x110] sm:%s3380] %v3525
                  %v3527 = vld [vmem:[%s3387 + $0x214] sm:%s3380]
                  %3528 = vst [vmem:[%s3388 + $0x114] sm:%s3380] %v3527
                  %v3529 = vld [vmem:[%s3387 + $0x218] sm:%s3380]
                  %3530 = vst [vmem:[%s3388 + $0x118] sm:%s3380] %v3529
                  %v3531 = vld [vmem:[%s3387 + $0x21c] sm:%s3380]
                  %3532 = vst [vmem:[%s3388 + $0x11c] sm:%s3380] %v3531
                  %v3533 = vld [vmem:[%s3387 + $0x220] sm:%s3380]
                  %3534 = vst [vmem:[%s3388 + $0x120] sm:%s3380] %v3533
                  %v3535 = vld [vmem:[%s3387 + $0x224] sm:%s3380]
                  %3536 = vst [vmem:[%s3388 + $0x124] sm:%s3380] %v3535
                  %v3537 = vld [vmem:[%s3387 + $0x228] sm:%s3380]
                  %3538 = vst [vmem:[%s3388 + $0x128] sm:%s3380] %v3537
                  %v3539 = vld [vmem:[%s3387 + $0x22c] sm:%s3380]
                  %3540 = vst [vmem:[%s3388 + $0x12c] sm:%s3380] %v3539
                  %v3541 = vld [vmem:[%s3387 + $0x230] sm:%s3380]
                  %3542 = vst [vmem:[%s3388 + $0x130] sm:%s3380] %v3541
                  %v3543 = vld [vmem:[%s3387 + $0x234] sm:%s3380]
                  %3544 = vst [vmem:[%s3388 + $0x134] sm:%s3380] %v3543
                  %v3545 = vld [vmem:[%s3387 + $0x238] sm:%s3380]
                  %3546 = vst [vmem:[%s3388 + $0x138] sm:%s3380] %v3545
                  %v3547 = vld [vmem:[%s3387 + $0x23c] sm:%s3380]
                  %3548 = vst [vmem:[%s3388 + $0x13c] sm:%s3380] %v3547
                  %v3549 = vld [vmem:[%s3387 + $0x240] sm:%s3380]
                  %3550 = vst [vmem:[%s3388 + $0x140] sm:%s3380] %v3549
                  %v3551 = vld [vmem:[%s3387 + $0x244] sm:%s3380]
                  %3552 = vst [vmem:[%s3388 + $0x144] sm:%s3380] %v3551
                  %v3553 = vld [vmem:[%s3387 + $0x248] sm:%s3380]
                  %3554 = vst [vmem:[%s3388 + $0x148] sm:%s3380] %v3553
                  %v3555 = vld [vmem:[%s3387 + $0x24c] sm:%s3380]
                  %3556 = vst [vmem:[%s3388 + $0x14c] sm:%s3380] %v3555
                  %v3557 = vld [vmem:[%s3387 + $0x250] sm:%s3380]
                  %3558 = vst [vmem:[%s3388 + $0x150] sm:%s3380] %v3557
                  %v3559 = vld [vmem:[%s3387 + $0x254] sm:%s3380]
                  %3560 = vst [vmem:[%s3388 + $0x154] sm:%s3380] %v3559
                  %v3561 = vld [vmem:[%s3387 + $0x258] sm:%s3380]
                  %3562 = vst [vmem:[%s3388 + $0x158] sm:%s3380] %v3561
                  %v3563 = vld [vmem:[%s3387 + $0x25c] sm:%s3380]
                  %3564 = vst [vmem:[%s3388 + $0x15c] sm:%s3380] %v3563
                  %v3565 = vld [vmem:[%s3387 + $0x260] sm:%s3380]
                  %3566 = vst [vmem:[%s3388 + $0x160] sm:%s3380] %v3565
                  %v3567 = vld [vmem:[%s3387 + $0x264] sm:%s3380]
                  %3568 = vst [vmem:[%s3388 + $0x164] sm:%s3380] %v3567
                  %v3569 = vld [vmem:[%s3387 + $0x268] sm:%s3380]
                  %3570 = vst [vmem:[%s3388 + $0x168] sm:%s3380] %v3569
                  %v3571 = vld [vmem:[%s3387 + $0x26c] sm:%s3380]
                  %3572 = vst [vmem:[%s3388 + $0x16c] sm:%s3380] %v3571
                  %v3573 = vld [vmem:[%s3387 + $0x270] sm:%s3380]
                  %3574 = vst [vmem:[%s3388 + $0x170] sm:%s3380] %v3573
                  %v3575 = vld [vmem:[%s3387 + $0x274] sm:%s3380]
                  %3576 = vst [vmem:[%s3388 + $0x174] sm:%s3380] %v3575
                  %v3577 = vld [vmem:[%s3387 + $0x278] sm:%s3380]
                  %3578 = vst [vmem:[%s3388 + $0x178] sm:%s3380] %v3577
                  %v3579 = vld [vmem:[%s3387 + $0x27c] sm:%s3380]
                  %3580 = vst [vmem:[%s3388 + $0x17c] sm:%s3380] %v3579
                  %v3581 = vld [vmem:[%s3387 + $0x300] sm:%s3380]
                  %3582 = vst [vmem:[%s3388 + $0x180] sm:%s3380] %v3581
                  %v3583 = vld [vmem:[%s3387 + $0x304] sm:%s3380]
                  %3584 = vst [vmem:[%s3388 + $0x184] sm:%s3380] %v3583
                  %v3585 = vld [vmem:[%s3387 + $0x308] sm:%s3380]
                  %3586 = vst [vmem:[%s3388 + $0x188] sm:%s3380] %v3585
                  %v3587 = vld [vmem:[%s3387 + $0x30c] sm:%s3380]
                  %3588 = vst [vmem:[%s3388 + $0x18c] sm:%s3380] %v3587
                  %v3589 = vld [vmem:[%s3387 + $0x310] sm:%s3380]
                  %3590 = vst [vmem:[%s3388 + $0x190] sm:%s3380] %v3589
                  %v3591 = vld [vmem:[%s3387 + $0x314] sm:%s3380]
                  %3592 = vst [vmem:[%s3388 + $0x194] sm:%s3380] %v3591
                  %v3593 = vld [vmem:[%s3387 + $0x318] sm:%s3380]
                  %3594 = vst [vmem:[%s3388 + $0x198] sm:%s3380] %v3593
                  %v3595 = vld [vmem:[%s3387 + $0x31c] sm:%s3380]
                  %3596 = vst [vmem:[%s3388 + $0x19c] sm:%s3380] %v3595
                  %v3597 = vld [vmem:[%s3387 + $0x320] sm:%s3380]
                  %3598 = vst [vmem:[%s3388 + $0x1a0] sm:%s3380] %v3597
                  %v3599 = vld [vmem:[%s3387 + $0x324] sm:%s3380]
                  %3600 = vst [vmem:[%s3388 + $0x1a4] sm:%s3380] %v3599
                  %v3601 = vld [vmem:[%s3387 + $0x328] sm:%s3380]
                  %3602 = vst [vmem:[%s3388 + $0x1a8] sm:%s3380] %v3601
                  %v3603 = vld [vmem:[%s3387 + $0x32c] sm:%s3380]
                  %3604 = vst [vmem:[%s3388 + $0x1ac] sm:%s3380] %v3603
                  %v3605 = vld [vmem:[%s3387 + $0x330] sm:%s3380]
                  %3606 = vst [vmem:[%s3388 + $0x1b0] sm:%s3380] %v3605
                  %v3607 = vld [vmem:[%s3387 + $0x334] sm:%s3380]
                  %3608 = vst [vmem:[%s3388 + $0x1b4] sm:%s3380] %v3607
                  %v3609 = vld [vmem:[%s3387 + $0x338] sm:%s3380]
                  %3610 = vst [vmem:[%s3388 + $0x1b8] sm:%s3380] %v3609
                  %v3611 = vld [vmem:[%s3387 + $0x33c] sm:%s3380]
                  %3612 = vst [vmem:[%s3388 + $0x1bc] sm:%s3380] %v3611
                  %v3613 = vld [vmem:[%s3387 + $0x340] sm:%s3380]
                  %3614 = vst [vmem:[%s3388 + $0x1c0] sm:%s3380] %v3613
                  %v3615 = vld [vmem:[%s3387 + $0x344] sm:%s3380]
                  %3616 = vst [vmem:[%s3388 + $0x1c4] sm:%s3380] %v3615
                  %v3617 = vld [vmem:[%s3387 + $0x348] sm:%s3380]
                  %3618 = vst [vmem:[%s3388 + $0x1c8] sm:%s3380] %v3617
                  %v3619 = vld [vmem:[%s3387 + $0x34c] sm:%s3380]
                  %3620 = vst [vmem:[%s3388 + $0x1cc] sm:%s3380] %v3619
                  %v3621 = vld [vmem:[%s3387 + $0x350] sm:%s3380]
                  %3622 = vst [vmem:[%s3388 + $0x1d0] sm:%s3380] %v3621
                  %v3623 = vld [vmem:[%s3387 + $0x354] sm:%s3380]
                  %3624 = vst [vmem:[%s3388 + $0x1d4] sm:%s3380] %v3623
                  %v3625 = vld [vmem:[%s3387 + $0x358] sm:%s3380]
                  %3626 = vst [vmem:[%s3388 + $0x1d8] sm:%s3380] %v3625
                  %v3627 = vld [vmem:[%s3387 + $0x35c] sm:%s3380]
                  %3628 = vst [vmem:[%s3388 + $0x1dc] sm:%s3380] %v3627
                  %v3629 = vld [vmem:[%s3387 + $0x360] sm:%s3380]
                  %3630 = vst [vmem:[%s3388 + $0x1e0] sm:%s3380] %v3629
                  %v3631 = vld [vmem:[%s3387 + $0x364] sm:%s3380]
                  %3632 = vst [vmem:[%s3388 + $0x1e4] sm:%s3380] %v3631
                  %v3633 = vld [vmem:[%s3387 + $0x368] sm:%s3380]
                  %3634 = vst [vmem:[%s3388 + $0x1e8] sm:%s3380] %v3633
                  %v3635 = vld [vmem:[%s3387 + $0x36c] sm:%s3380]
                  %3636 = vst [vmem:[%s3388 + $0x1ec] sm:%s3380] %v3635
                  %v3637 = vld [vmem:[%s3387 + $0x370] sm:%s3380]
                  %3638 = vst [vmem:[%s3388 + $0x1f0] sm:%s3380] %v3637
                  %v3639 = vld [vmem:[%s3387 + $0x374] sm:%s3380]
                  %3640 = vst [vmem:[%s3388 + $0x1f4] sm:%s3380] %v3639
                  %v3641 = vld [vmem:[%s3387 + $0x378] sm:%s3380]
                  %3642 = vst [vmem:[%s3388 + $0x1f8] sm:%s3380] %v3641
                  %v3643 = vld [vmem:[%s3387 + $0x37c] sm:%s3380]
                  %3644 = vst [vmem:[%s3388 + $0x1fc] sm:%s3380] %v3643
                  %v3645 = vld [vmem:[%s3387 + $0x400] sm:%s3380]
                  %3646 = vst [vmem:[%s3388 + $0x200] sm:%s3380] %v3645
                  %v3647 = vld [vmem:[%s3387 + $0x404] sm:%s3380]
                  %3648 = vst [vmem:[%s3388 + $0x204] sm:%s3380] %v3647
                  %v3649 = vld [vmem:[%s3387 + $0x408] sm:%s3380]
                  %3650 = vst [vmem:[%s3388 + $0x208] sm:%s3380] %v3649
                  %v3651 = vld [vmem:[%s3387 + $0x40c] sm:%s3380]
                  %3652 = vst [vmem:[%s3388 + $0x20c] sm:%s3380] %v3651
                  %v3653 = vld [vmem:[%s3387 + $0x410] sm:%s3380]
                  %3654 = vst [vmem:[%s3388 + $0x210] sm:%s3380] %v3653
                  %v3655 = vld [vmem:[%s3387 + $0x414] sm:%s3380]
                  %3656 = vst [vmem:[%s3388 + $0x214] sm:%s3380] %v3655
                  %v3657 = vld [vmem:[%s3387 + $0x418] sm:%s3380]
                  %3658 = vst [vmem:[%s3388 + $0x218] sm:%s3380] %v3657
                  %v3659 = vld [vmem:[%s3387 + $0x41c] sm:%s3380]
                  %3660 = vst [vmem:[%s3388 + $0x21c] sm:%s3380] %v3659
                  %v3661 = vld [vmem:[%s3387 + $0x420] sm:%s3380]
                  %3662 = vst [vmem:[%s3388 + $0x220] sm:%s3380] %v3661
                  %v3663 = vld [vmem:[%s3387 + $0x424] sm:%s3380]
                  %3664 = vst [vmem:[%s3388 + $0x224] sm:%s3380] %v3663
                  %v3665 = vld [vmem:[%s3387 + $0x428] sm:%s3380]
                  %3666 = vst [vmem:[%s3388 + $0x228] sm:%s3380] %v3665
                  %v3667 = vld [vmem:[%s3387 + $0x42c] sm:%s3380]
                  %3668 = vst [vmem:[%s3388 + $0x22c] sm:%s3380] %v3667
                  %v3669 = vld [vmem:[%s3387 + $0x430] sm:%s3380]
                  %3670 = vst [vmem:[%s3388 + $0x230] sm:%s3380] %v3669
                  %v3671 = vld [vmem:[%s3387 + $0x434] sm:%s3380]
                  %3672 = vst [vmem:[%s3388 + $0x234] sm:%s3380] %v3671
                  %v3673 = vld [vmem:[%s3387 + $0x438] sm:%s3380]
                  %3674 = vst [vmem:[%s3388 + $0x238] sm:%s3380] %v3673
                  %v3675 = vld [vmem:[%s3387 + $0x43c] sm:%s3380]
                  %3676 = vst [vmem:[%s3388 + $0x23c] sm:%s3380] %v3675
                  %v3677 = vld [vmem:[%s3387 + $0x440] sm:%s3380]
                  %3678 = vst [vmem:[%s3388 + $0x240] sm:%s3380] %v3677
                  %v3679 = vld [vmem:[%s3387 + $0x444] sm:%s3380]
                  %3680 = vst [vmem:[%s3388 + $0x244] sm:%s3380] %v3679
                  %v3681 = vld [vmem:[%s3387 + $0x448] sm:%s3380]
                  %3682 = vst [vmem:[%s3388 + $0x248] sm:%s3380] %v3681
                  %v3683 = vld [vmem:[%s3387 + $0x44c] sm:%s3380]
                  %3684 = vst [vmem:[%s3388 + $0x24c] sm:%s3380] %v3683
                  %v3685 = vld [vmem:[%s3387 + $0x450] sm:%s3380]
                  %3686 = vst [vmem:[%s3388 + $0x250] sm:%s3380] %v3685
                  %v3687 = vld [vmem:[%s3387 + $0x454] sm:%s3380]
                  %3688 = vst [vmem:[%s3388 + $0x254] sm:%s3380] %v3687
                  %v3689 = vld [vmem:[%s3387 + $0x458] sm:%s3380]
                  %3690 = vst [vmem:[%s3388 + $0x258] sm:%s3380] %v3689
                  %v3691 = vld [vmem:[%s3387 + $0x45c] sm:%s3380]
                  %3692 = vst [vmem:[%s3388 + $0x25c] sm:%s3380] %v3691
                  %v3693 = vld [vmem:[%s3387 + $0x460] sm:%s3380]
                  %3694 = vst [vmem:[%s3388 + $0x260] sm:%s3380] %v3693
                  %v3695 = vld [vmem:[%s3387 + $0x464] sm:%s3380]
                  %3696 = vst [vmem:[%s3388 + $0x264] sm:%s3380] %v3695
                  %v3697 = vld [vmem:[%s3387 + $0x468] sm:%s3380]
                  %3698 = vst [vmem:[%s3388 + $0x268] sm:%s3380] %v3697
                  %v3699 = vld [vmem:[%s3387 + $0x46c] sm:%s3380]
                  %3700 = vst [vmem:[%s3388 + $0x26c] sm:%s3380] %v3699
                  %v3701 = vld [vmem:[%s3387 + $0x470] sm:%s3380]
                  %3702 = vst [vmem:[%s3388 + $0x270] sm:%s3380] %v3701
                  %v3703 = vld [vmem:[%s3387 + $0x474] sm:%s3380]
                  %3704 = vst [vmem:[%s3388 + $0x274] sm:%s3380] %v3703
                  %v3705 = vld [vmem:[%s3387 + $0x478] sm:%s3380]
                  %3706 = vst [vmem:[%s3388 + $0x278] sm:%s3380] %v3705
                  %v3707 = vld [vmem:[%s3387 + $0x47c] sm:%s3380]
                  %3708 = vst [vmem:[%s3388 + $0x27c] sm:%s3380] %v3707
                  %v3709 = vld [vmem:[%s3387 + $0x500] sm:%s3380]
                  %3710 = vst [vmem:[%s3388 + $0x280] sm:%s3380] %v3709
                  %v3711 = vld [vmem:[%s3387 + $0x504] sm:%s3380]
                  %3712 = vst [vmem:[%s3388 + $0x284] sm:%s3380] %v3711
                  %v3713 = vld [vmem:[%s3387 + $0x508] sm:%s3380]
                  %3714 = vst [vmem:[%s3388 + $0x288] sm:%s3380] %v3713
                  %v3715 = vld [vmem:[%s3387 + $0x50c] sm:%s3380]
                  %3716 = vst [vmem:[%s3388 + $0x28c] sm:%s3380] %v3715
                  %v3717 = vld [vmem:[%s3387 + $0x510] sm:%s3380]
                  %3718 = vst [vmem:[%s3388 + $0x290] sm:%s3380] %v3717
                  %v3719 = vld [vmem:[%s3387 + $0x514] sm:%s3380]
                  %3720 = vst [vmem:[%s3388 + $0x294] sm:%s3380] %v3719
                  %v3721 = vld [vmem:[%s3387 + $0x518] sm:%s3380]
                  %3722 = vst [vmem:[%s3388 + $0x298] sm:%s3380] %v3721
                  %v3723 = vld [vmem:[%s3387 + $0x51c] sm:%s3380]
                  %3724 = vst [vmem:[%s3388 + $0x29c] sm:%s3380] %v3723
                  %v3725 = vld [vmem:[%s3387 + $0x520] sm:%s3380]
                  %3726 = vst [vmem:[%s3388 + $0x2a0] sm:%s3380] %v3725
                  %v3727 = vld [vmem:[%s3387 + $0x524] sm:%s3380]
                  %3728 = vst [vmem:[%s3388 + $0x2a4] sm:%s3380] %v3727
                  %v3729 = vld [vmem:[%s3387 + $0x528] sm:%s3380]
                  %3730 = vst [vmem:[%s3388 + $0x2a8] sm:%s3380] %v3729
                  %v3731 = vld [vmem:[%s3387 + $0x52c] sm:%s3380]
                  %3732 = vst [vmem:[%s3388 + $0x2ac] sm:%s3380] %v3731
                  %v3733 = vld [vmem:[%s3387 + $0x530] sm:%s3380]
                  %3734 = vst [vmem:[%s3388 + $0x2b0] sm:%s3380] %v3733
                  %v3735 = vld [vmem:[%s3387 + $0x534] sm:%s3380]
                  %3736 = vst [vmem:[%s3388 + $0x2b4] sm:%s3380] %v3735
                  %v3737 = vld [vmem:[%s3387 + $0x538] sm:%s3380]
                  %3738 = vst [vmem:[%s3388 + $0x2b8] sm:%s3380] %v3737
                  %v3739 = vld [vmem:[%s3387 + $0x53c] sm:%s3380]
                  %3740 = vst [vmem:[%s3388 + $0x2bc] sm:%s3380] %v3739
                  %v3741 = vld [vmem:[%s3387 + $0x540] sm:%s3380]
                  %3742 = vst [vmem:[%s3388 + $0x2c0] sm:%s3380] %v3741
                  %v3743 = vld [vmem:[%s3387 + $0x544] sm:%s3380]
                  %3744 = vst [vmem:[%s3388 + $0x2c4] sm:%s3380] %v3743
                  %v3745 = vld [vmem:[%s3387 + $0x548] sm:%s3380]
                  %3746 = vst [vmem:[%s3388 + $0x2c8] sm:%s3380] %v3745
                  %v3747 = vld [vmem:[%s3387 + $0x54c] sm:%s3380]
                  %3748 = vst [vmem:[%s3388 + $0x2cc] sm:%s3380] %v3747
                  %v3749 = vld [vmem:[%s3387 + $0x550] sm:%s3380]
                  %3750 = vst [vmem:[%s3388 + $0x2d0] sm:%s3380] %v3749
                  %v3751 = vld [vmem:[%s3387 + $0x554] sm:%s3380]
                  %3752 = vst [vmem:[%s3388 + $0x2d4] sm:%s3380] %v3751
                  %v3753 = vld [vmem:[%s3387 + $0x558] sm:%s3380]
                  %3754 = vst [vmem:[%s3388 + $0x2d8] sm:%s3380] %v3753
                  %v3755 = vld [vmem:[%s3387 + $0x55c] sm:%s3380]
                  %3756 = vst [vmem:[%s3388 + $0x2dc] sm:%s3380] %v3755
                  %v3757 = vld [vmem:[%s3387 + $0x560] sm:%s3380]
                  %3758 = vst [vmem:[%s3388 + $0x2e0] sm:%s3380] %v3757
                  %v3759 = vld [vmem:[%s3387 + $0x564] sm:%s3380]
                  %3760 = vst [vmem:[%s3388 + $0x2e4] sm:%s3380] %v3759
                  %v3761 = vld [vmem:[%s3387 + $0x568] sm:%s3380]
                  %3762 = vst [vmem:[%s3388 + $0x2e8] sm:%s3380] %v3761
                  %v3763 = vld [vmem:[%s3387 + $0x56c] sm:%s3380]
                  %3764 = vst [vmem:[%s3388 + $0x2ec] sm:%s3380] %v3763
                  %v3765 = vld [vmem:[%s3387 + $0x570] sm:%s3380]
                  %3766 = vst [vmem:[%s3388 + $0x2f0] sm:%s3380] %v3765
                  %v3767 = vld [vmem:[%s3387 + $0x574] sm:%s3380]
                  %3768 = vst [vmem:[%s3388 + $0x2f4] sm:%s3380] %v3767
                  %v3769 = vld [vmem:[%s3387 + $0x578] sm:%s3380]
                  %3770 = vst [vmem:[%s3388 + $0x2f8] sm:%s3380] %v3769
                  %v3771 = vld [vmem:[%s3387 + $0x57c] sm:%s3380]
                  %3772 = vst [vmem:[%s3388 + $0x2fc] sm:%s3380] %v3771
                  %v3773 = vld [vmem:[%s3387 + $0x600] sm:%s3380]
                  %3774 = vst [vmem:[%s3388 + $0x300] sm:%s3380] %v3773
                  %v3775 = vld [vmem:[%s3387 + $0x604] sm:%s3380]
                  %3776 = vst [vmem:[%s3388 + $0x304] sm:%s3380] %v3775
                  %v3777 = vld [vmem:[%s3387 + $0x608] sm:%s3380]
                  %3778 = vst [vmem:[%s3388 + $0x308] sm:%s3380] %v3777
                  %v3779 = vld [vmem:[%s3387 + $0x60c] sm:%s3380]
                  %3780 = vst [vmem:[%s3388 + $0x30c] sm:%s3380] %v3779
                  %v3781 = vld [vmem:[%s3387 + $0x610] sm:%s3380]
                  %3782 = vst [vmem:[%s3388 + $0x310] sm:%s3380] %v3781
                  %v3783 = vld [vmem:[%s3387 + $0x614] sm:%s3380]
                  %3784 = vst [vmem:[%s3388 + $0x314] sm:%s3380] %v3783
                  %v3785 = vld [vmem:[%s3387 + $0x618] sm:%s3380]
                  %3786 = vst [vmem:[%s3388 + $0x318] sm:%s3380] %v3785
                  %v3787 = vld [vmem:[%s3387 + $0x61c] sm:%s3380]
                  %3788 = vst [vmem:[%s3388 + $0x31c] sm:%s3380] %v3787
                  %v3789 = vld [vmem:[%s3387 + $0x620] sm:%s3380]
                  %3790 = vst [vmem:[%s3388 + $0x320] sm:%s3380] %v3789
                  %v3791 = vld [vmem:[%s3387 + $0x624] sm:%s3380]
                  %3792 = vst [vmem:[%s3388 + $0x324] sm:%s3380] %v3791
                  %v3793 = vld [vmem:[%s3387 + $0x628] sm:%s3380]
                  %3794 = vst [vmem:[%s3388 + $0x328] sm:%s3380] %v3793
                  %v3795 = vld [vmem:[%s3387 + $0x62c] sm:%s3380]
                  %3796 = vst [vmem:[%s3388 + $0x32c] sm:%s3380] %v3795
                  %v3797 = vld [vmem:[%s3387 + $0x630] sm:%s3380]
                  %3798 = vst [vmem:[%s3388 + $0x330] sm:%s3380] %v3797
                  %v3799 = vld [vmem:[%s3387 + $0x634] sm:%s3380]
                  %3800 = vst [vmem:[%s3388 + $0x334] sm:%s3380] %v3799
                  %v3801 = vld [vmem:[%s3387 + $0x638] sm:%s3380]
                  %3802 = vst [vmem:[%s3388 + $0x338] sm:%s3380] %v3801
                  %v3803 = vld [vmem:[%s3387 + $0x63c] sm:%s3380]
                  %3804 = vst [vmem:[%s3388 + $0x33c] sm:%s3380] %v3803
                  %v3805 = vld [vmem:[%s3387 + $0x640] sm:%s3380]
                  %3806 = vst [vmem:[%s3388 + $0x340] sm:%s3380] %v3805
                  %v3807 = vld [vmem:[%s3387 + $0x644] sm:%s3380]
                  %3808 = vst [vmem:[%s3388 + $0x344] sm:%s3380] %v3807
                  %v3809 = vld [vmem:[%s3387 + $0x648] sm:%s3380]
                  %3810 = vst [vmem:[%s3388 + $0x348] sm:%s3380] %v3809
                  %v3811 = vld [vmem:[%s3387 + $0x64c] sm:%s3380]
                  %3812 = vst [vmem:[%s3388 + $0x34c] sm:%s3380] %v3811
                  %v3813 = vld [vmem:[%s3387 + $0x650] sm:%s3380]
                  %3814 = vst [vmem:[%s3388 + $0x350] sm:%s3380] %v3813
                  %v3815 = vld [vmem:[%s3387 + $0x654] sm:%s3380]
                  %3816 = vst [vmem:[%s3388 + $0x354] sm:%s3380] %v3815
                  %v3817 = vld [vmem:[%s3387 + $0x658] sm:%s3380]
                  %3818 = vst [vmem:[%s3388 + $0x358] sm:%s3380] %v3817
                  %v3819 = vld [vmem:[%s3387 + $0x65c] sm:%s3380]
                  %3820 = vst [vmem:[%s3388 + $0x35c] sm:%s3380] %v3819
                  %v3821 = vld [vmem:[%s3387 + $0x660] sm:%s3380]
                  %3822 = vst [vmem:[%s3388 + $0x360] sm:%s3380] %v3821
                  %v3823 = vld [vmem:[%s3387 + $0x664] sm:%s3380]
                  %3824 = vst [vmem:[%s3388 + $0x364] sm:%s3380] %v3823
                  %v3825 = vld [vmem:[%s3387 + $0x668] sm:%s3380]
                  %3826 = vst [vmem:[%s3388 + $0x368] sm:%s3380] %v3825
                  %v3827 = vld [vmem:[%s3387 + $0x66c] sm:%s3380]
                  %3828 = vst [vmem:[%s3388 + $0x36c] sm:%s3380] %v3827
                  %v3829 = vld [vmem:[%s3387 + $0x670] sm:%s3380]
                  %3830 = vst [vmem:[%s3388 + $0x370] sm:%s3380] %v3829
                  %v3831 = vld [vmem:[%s3387 + $0x674] sm:%s3380]
                  %3832 = vst [vmem:[%s3388 + $0x374] sm:%s3380] %v3831
                  %v3833 = vld [vmem:[%s3387 + $0x678] sm:%s3380]
                  %3834 = vst [vmem:[%s3388 + $0x378] sm:%s3380] %v3833
                  %v3835 = vld [vmem:[%s3387 + $0x67c] sm:%s3380]
                  %3836 = vst [vmem:[%s3388 + $0x37c] sm:%s3380] %v3835
                  %v3837 = vld [vmem:[%s3387 + $0x700] sm:%s3380]
                  %3838 = vst [vmem:[%s3388 + $0x380] sm:%s3380] %v3837
                  %v3839 = vld [vmem:[%s3387 + $0x704] sm:%s3380]
                  %3840 = vst [vmem:[%s3388 + $0x384] sm:%s3380] %v3839
                  %v3841 = vld [vmem:[%s3387 + $0x708] sm:%s3380]
                  %3842 = vst [vmem:[%s3388 + $0x388] sm:%s3380] %v3841
                  %v3843 = vld [vmem:[%s3387 + $0x70c] sm:%s3380]
                  %3844 = vst [vmem:[%s3388 + $0x38c] sm:%s3380] %v3843
                  %v3845 = vld [vmem:[%s3387 + $0x710] sm:%s3380]
                  %3846 = vst [vmem:[%s3388 + $0x390] sm:%s3380] %v3845
                  %v3847 = vld [vmem:[%s3387 + $0x714] sm:%s3380]
                  %3848 = vst [vmem:[%s3388 + $0x394] sm:%s3380] %v3847
                  %v3849 = vld [vmem:[%s3387 + $0x718] sm:%s3380]
                  %3850 = vst [vmem:[%s3388 + $0x398] sm:%s3380] %v3849
                  %v3851 = vld [vmem:[%s3387 + $0x71c] sm:%s3380]
                  %3852 = vst [vmem:[%s3388 + $0x39c] sm:%s3380] %v3851
                  %v3853 = vld [vmem:[%s3387 + $0x720] sm:%s3380]
                  %3854 = vst [vmem:[%s3388 + $0x3a0] sm:%s3380] %v3853
                  %v3855 = vld [vmem:[%s3387 + $0x724] sm:%s3380]
                  %3856 = vst [vmem:[%s3388 + $0x3a4] sm:%s3380] %v3855
                  %v3857 = vld [vmem:[%s3387 + $0x728] sm:%s3380]
                  %3858 = vst [vmem:[%s3388 + $0x3a8] sm:%s3380] %v3857
                  %v3859 = vld [vmem:[%s3387 + $0x72c] sm:%s3380]
                  %3860 = vst [vmem:[%s3388 + $0x3ac] sm:%s3380] %v3859
                  %v3861 = vld [vmem:[%s3387 + $0x730] sm:%s3380]
                  %3862 = vst [vmem:[%s3388 + $0x3b0] sm:%s3380] %v3861
                  %v3863 = vld [vmem:[%s3387 + $0x734] sm:%s3380]
                  %3864 = vst [vmem:[%s3388 + $0x3b4] sm:%s3380] %v3863
                  %v3865 = vld [vmem:[%s3387 + $0x738] sm:%s3380]
                  %3866 = vst [vmem:[%s3388 + $0x3b8] sm:%s3380] %v3865
                  %v3867 = vld [vmem:[%s3387 + $0x73c] sm:%s3380]
                  %3868 = vst [vmem:[%s3388 + $0x3bc] sm:%s3380] %v3867
                  %v3869 = vld [vmem:[%s3387 + $0x740] sm:%s3380]
                  %3870 = vst [vmem:[%s3388 + $0x3c0] sm:%s3380] %v3869
                  %v3871 = vld [vmem:[%s3387 + $0x744] sm:%s3380]
                  %3872 = vst [vmem:[%s3388 + $0x3c4] sm:%s3380] %v3871
                  %v3873 = vld [vmem:[%s3387 + $0x748] sm:%s3380]
                  %3874 = vst [vmem:[%s3388 + $0x3c8] sm:%s3380] %v3873
                  %v3875 = vld [vmem:[%s3387 + $0x74c] sm:%s3380]
                  %3876 = vst [vmem:[%s3388 + $0x3cc] sm:%s3380] %v3875
                  %v3877 = vld [vmem:[%s3387 + $0x750] sm:%s3380]
                  %3878 = vst [vmem:[%s3388 + $0x3d0] sm:%s3380] %v3877
                  %v3879 = vld [vmem:[%s3387 + $0x754] sm:%s3380]
                  %3880 = vst [vmem:[%s3388 + $0x3d4] sm:%s3380] %v3879
                  %v3881 = vld [vmem:[%s3387 + $0x758] sm:%s3380]
                  %3882 = vst [vmem:[%s3388 + $0x3d8] sm:%s3380] %v3881
                  %v3883 = vld [vmem:[%s3387 + $0x75c] sm:%s3380]
                  %3884 = vst [vmem:[%s3388 + $0x3dc] sm:%s3380] %v3883
                  %v3885 = vld [vmem:[%s3387 + $0x760] sm:%s3380]
                  %3886 = vst [vmem:[%s3388 + $0x3e0] sm:%s3380] %v3885
                  %v3887 = vld [vmem:[%s3387 + $0x764] sm:%s3380]
                  %3888 = vst [vmem:[%s3388 + $0x3e4] sm:%s3380] %v3887
                  %v3889 = vld [vmem:[%s3387 + $0x768] sm:%s3380]
                  %3890 = vst [vmem:[%s3388 + $0x3e8] sm:%s3380] %v3889
                  %v3891 = vld [vmem:[%s3387 + $0x76c] sm:%s3380]
                  %3892 = vst [vmem:[%s3388 + $0x3ec] sm:%s3380] %v3891
                  %v3893 = vld [vmem:[%s3387 + $0x770] sm:%s3380]
                  %3894 = vst [vmem:[%s3388 + $0x3f0] sm:%s3380] %v3893
                  %v3895 = vld [vmem:[%s3387 + $0x774] sm:%s3380]
                  %3896 = vst [vmem:[%s3388 + $0x3f4] sm:%s3380] %v3895
                  %v3897 = vld [vmem:[%s3387 + $0x778] sm:%s3380]
                  %3898 = vst [vmem:[%s3388 + $0x3f8] sm:%s3380] %v3897
                  %v3899 = vld [vmem:[%s3387 + $0x77c] sm:%s3380]
                  %3900 = vst [vmem:[%s3388 + $0x3fc] sm:%s3380] %v3899
                  %v3901 = vld [vmem:[%s3387 + $0x800] sm:%s3380]
                  %3902 = vst [vmem:[%s3388 + $0x400] sm:%s3380] %v3901
                  %v3903 = vld [vmem:[%s3387 + $0x804] sm:%s3380]
                  %3904 = vst [vmem:[%s3388 + $0x404] sm:%s3380] %v3903
                  %v3905 = vld [vmem:[%s3387 + $0x808] sm:%s3380]
                  %3906 = vst [vmem:[%s3388 + $0x408] sm:%s3380] %v3905
                  %v3907 = vld [vmem:[%s3387 + $0x80c] sm:%s3380]
                  %3908 = vst [vmem:[%s3388 + $0x40c] sm:%s3380] %v3907
                  %v3909 = vld [vmem:[%s3387 + $0x810] sm:%s3380]
                  %3910 = vst [vmem:[%s3388 + $0x410] sm:%s3380] %v3909
                  %v3911 = vld [vmem:[%s3387 + $0x814] sm:%s3380]
                  %3912 = vst [vmem:[%s3388 + $0x414] sm:%s3380] %v3911
                  %v3913 = vld [vmem:[%s3387 + $0x818] sm:%s3380]
                  %3914 = vst [vmem:[%s3388 + $0x418] sm:%s3380] %v3913
                  %v3915 = vld [vmem:[%s3387 + $0x81c] sm:%s3380]
                  %3916 = vst [vmem:[%s3388 + $0x41c] sm:%s3380] %v3915
                  %v3917 = vld [vmem:[%s3387 + $0x820] sm:%s3380]
                  %3918 = vst [vmem:[%s3388 + $0x420] sm:%s3380] %v3917
                  %v3919 = vld [vmem:[%s3387 + $0x824] sm:%s3380]
                  %3920 = vst [vmem:[%s3388 + $0x424] sm:%s3380] %v3919
                  %v3921 = vld [vmem:[%s3387 + $0x828] sm:%s3380]
                  %3922 = vst [vmem:[%s3388 + $0x428] sm:%s3380] %v3921
                  %v3923 = vld [vmem:[%s3387 + $0x82c] sm:%s3380]
                  %3924 = vst [vmem:[%s3388 + $0x42c] sm:%s3380] %v3923
                  %v3925 = vld [vmem:[%s3387 + $0x830] sm:%s3380]
                  %3926 = vst [vmem:[%s3388 + $0x430] sm:%s3380] %v3925
                  %v3927 = vld [vmem:[%s3387 + $0x834] sm:%s3380]
                  %3928 = vst [vmem:[%s3388 + $0x434] sm:%s3380] %v3927
                  %v3929 = vld [vmem:[%s3387 + $0x838] sm:%s3380]
                  %3930 = vst [vmem:[%s3388 + $0x438] sm:%s3380] %v3929
                  %v3931 = vld [vmem:[%s3387 + $0x83c] sm:%s3380]
                  %3932 = vst [vmem:[%s3388 + $0x43c] sm:%s3380] %v3931
                  %v3933 = vld [vmem:[%s3387 + $0x840] sm:%s3380]
                  %3934 = vst [vmem:[%s3388 + $0x440] sm:%s3380] %v3933
                  %v3935 = vld [vmem:[%s3387 + $0x844] sm:%s3380]
                  %3936 = vst [vmem:[%s3388 + $0x444] sm:%s3380] %v3935
                  %v3937 = vld [vmem:[%s3387 + $0x848] sm:%s3380]
                  %3938 = vst [vmem:[%s3388 + $0x448] sm:%s3380] %v3937
                  %v3939 = vld [vmem:[%s3387 + $0x84c] sm:%s3380]
                  %3940 = vst [vmem:[%s3388 + $0x44c] sm:%s3380] %v3939
                  %v3941 = vld [vmem:[%s3387 + $0x850] sm:%s3380]
                  %3942 = vst [vmem:[%s3388 + $0x450] sm:%s3380] %v3941
                  %v3943 = vld [vmem:[%s3387 + $0x854] sm:%s3380]
                  %3944 = vst [vmem:[%s3388 + $0x454] sm:%s3380] %v3943
                  %v3945 = vld [vmem:[%s3387 + $0x858] sm:%s3380]
                  %3946 = vst [vmem:[%s3388 + $0x458] sm:%s3380] %v3945
                  %v3947 = vld [vmem:[%s3387 + $0x85c] sm:%s3380]
                  %3948 = vst [vmem:[%s3388 + $0x45c] sm:%s3380] %v3947
                  %v3949 = vld [vmem:[%s3387 + $0x860] sm:%s3380]
                  %3950 = vst [vmem:[%s3388 + $0x460] sm:%s3380] %v3949
                  %v3951 = vld [vmem:[%s3387 + $0x864] sm:%s3380]
                  %3952 = vst [vmem:[%s3388 + $0x464] sm:%s3380] %v3951
                  %v3953 = vld [vmem:[%s3387 + $0x868] sm:%s3380]
                  %3954 = vst [vmem:[%s3388 + $0x468] sm:%s3380] %v3953
                  %v3955 = vld [vmem:[%s3387 + $0x86c] sm:%s3380]
                  %3956 = vst [vmem:[%s3388 + $0x46c] sm:%s3380] %v3955
                  %v3957 = vld [vmem:[%s3387 + $0x870] sm:%s3380]
                  %3958 = vst [vmem:[%s3388 + $0x470] sm:%s3380] %v3957
                  %v3959 = vld [vmem:[%s3387 + $0x874] sm:%s3380]
                  %3960 = vst [vmem:[%s3388 + $0x474] sm:%s3380] %v3959
                  %v3961 = vld [vmem:[%s3387 + $0x878] sm:%s3380]
                  %3962 = vst [vmem:[%s3388 + $0x478] sm:%s3380] %v3961
                  %v3963 = vld [vmem:[%s3387 + $0x87c] sm:%s3380]
                  %3964 = vst [vmem:[%s3388 + $0x47c] sm:%s3380] %v3963
                  %v3965 = vld [vmem:[%s3387 + $0x900] sm:%s3380]
                  %3966 = vst [vmem:[%s3388 + $0x480] sm:%s3380] %v3965
                  %v3967 = vld [vmem:[%s3387 + $0x904] sm:%s3380]
                  %3968 = vst [vmem:[%s3388 + $0x484] sm:%s3380] %v3967
                  %v3969 = vld [vmem:[%s3387 + $0x908] sm:%s3380]
                  %3970 = vst [vmem:[%s3388 + $0x488] sm:%s3380] %v3969
                  %v3971 = vld [vmem:[%s3387 + $0x90c] sm:%s3380]
                  %3972 = vst [vmem:[%s3388 + $0x48c] sm:%s3380] %v3971
                  %v3973 = vld [vmem:[%s3387 + $0x910] sm:%s3380]
                  %3974 = vst [vmem:[%s3388 + $0x490] sm:%s3380] %v3973
                  %v3975 = vld [vmem:[%s3387 + $0x914] sm:%s3380]
                  %3976 = vst [vmem:[%s3388 + $0x494] sm:%s3380] %v3975
                  %v3977 = vld [vmem:[%s3387 + $0x918] sm:%s3380]
                  %3978 = vst [vmem:[%s3388 + $0x498] sm:%s3380] %v3977
                  %v3979 = vld [vmem:[%s3387 + $0x91c] sm:%s3380]
                  %3980 = vst [vmem:[%s3388 + $0x49c] sm:%s3380] %v3979
                  %v3981 = vld [vmem:[%s3387 + $0x920] sm:%s3380]
                  %3982 = vst [vmem:[%s3388 + $0x4a0] sm:%s3380] %v3981
                  %v3983 = vld [vmem:[%s3387 + $0x924] sm:%s3380]
                  %3984 = vst [vmem:[%s3388 + $0x4a4] sm:%s3380] %v3983
                  %v3985 = vld [vmem:[%s3387 + $0x928] sm:%s3380]
                  %3986 = vst [vmem:[%s3388 + $0x4a8] sm:%s3380] %v3985
                  %v3987 = vld [vmem:[%s3387 + $0x92c] sm:%s3380]
                  %3988 = vst [vmem:[%s3388 + $0x4ac] sm:%s3380] %v3987
                  %v3989 = vld [vmem:[%s3387 + $0x930] sm:%s3380]
                  %3990 = vst [vmem:[%s3388 + $0x4b0] sm:%s3380] %v3989
                  %v3991 = vld [vmem:[%s3387 + $0x934] sm:%s3380]
                  %3992 = vst [vmem:[%s3388 + $0x4b4] sm:%s3380] %v3991
                  %v3993 = vld [vmem:[%s3387 + $0x938] sm:%s3380]
                  %3994 = vst [vmem:[%s3388 + $0x4b8] sm:%s3380] %v3993
                  %v3995 = vld [vmem:[%s3387 + $0x93c] sm:%s3380]
                  %3996 = vst [vmem:[%s3388 + $0x4bc] sm:%s3380] %v3995
                  %v3997 = vld [vmem:[%s3387 + $0x940] sm:%s3380]
                  %3998 = vst [vmem:[%s3388 + $0x4c0] sm:%s3380] %v3997
                  %v3999 = vld [vmem:[%s3387 + $0x944] sm:%s3380]
                  %4000 = vst [vmem:[%s3388 + $0x4c4] sm:%s3380] %v3999
                  %v4001 = vld [vmem:[%s3387 + $0x948] sm:%s3380]
                  %4002 = vst [vmem:[%s3388 + $0x4c8] sm:%s3380] %v4001
                  %v4003 = vld [vmem:[%s3387 + $0x94c] sm:%s3380]
                  %4004 = vst [vmem:[%s3388 + $0x4cc] sm:%s3380] %v4003
                  %v4005 = vld [vmem:[%s3387 + $0x950] sm:%s3380]
                  %4006 = vst [vmem:[%s3388 + $0x4d0] sm:%s3380] %v4005
                  %v4007 = vld [vmem:[%s3387 + $0x954] sm:%s3380]
                  %4008 = vst [vmem:[%s3388 + $0x4d4] sm:%s3380] %v4007
                  %v4009 = vld [vmem:[%s3387 + $0x958] sm:%s3380]
                  %4010 = vst [vmem:[%s3388 + $0x4d8] sm:%s3380] %v4009
                  %v4011 = vld [vmem:[%s3387 + $0x95c] sm:%s3380]
                  %4012 = vst [vmem:[%s3388 + $0x4dc] sm:%s3380] %v4011
                  %v4013 = vld [vmem:[%s3387 + $0x960] sm:%s3380]
                  %4014 = vst [vmem:[%s3388 + $0x4e0] sm:%s3380] %v4013
                  %v4015 = vld [vmem:[%s3387 + $0x964] sm:%s3380]
                  %4016 = vst [vmem:[%s3388 + $0x4e4] sm:%s3380] %v4015
                  %v4017 = vld [vmem:[%s3387 + $0x968] sm:%s3380]
                  %4018 = vst [vmem:[%s3388 + $0x4e8] sm:%s3380] %v4017
                  %v4019 = vld [vmem:[%s3387 + $0x96c] sm:%s3380]
                  %4020 = vst [vmem:[%s3388 + $0x4ec] sm:%s3380] %v4019
                  %v4021 = vld [vmem:[%s3387 + $0x970] sm:%s3380]
                  %4022 = vst [vmem:[%s3388 + $0x4f0] sm:%s3380] %v4021
                  %v4023 = vld [vmem:[%s3387 + $0x974] sm:%s3380]
                  %4024 = vst [vmem:[%s3388 + $0x4f4] sm:%s3380] %v4023
                  %v4025 = vld [vmem:[%s3387 + $0x978] sm:%s3380]
                  %4026 = vst [vmem:[%s3388 + $0x4f8] sm:%s3380] %v4025
                  %v4027 = vld [vmem:[%s3387 + $0x97c] sm:%s3380]
                  %4028 = vst [vmem:[%s3388 + $0x4fc] sm:%s3380] %v4027
                  %v4029 = vld [vmem:[%s3387 + $0xa00] sm:%s3380]
                  %4030 = vst [vmem:[%s3388 + $0x500] sm:%s3380] %v4029
                  %v4031 = vld [vmem:[%s3387 + $0xa04] sm:%s3380]
                  %4032 = vst [vmem:[%s3388 + $0x504] sm:%s3380] %v4031
                  %v4033 = vld [vmem:[%s3387 + $0xa08] sm:%s3380]
                  %4034 = vst [vmem:[%s3388 + $0x508] sm:%s3380] %v4033
                  %v4035 = vld [vmem:[%s3387 + $0xa0c] sm:%s3380]
                  %4036 = vst [vmem:[%s3388 + $0x50c] sm:%s3380] %v4035
                  %v4037 = vld [vmem:[%s3387 + $0xa10] sm:%s3380]
                  %4038 = vst [vmem:[%s3388 + $0x510] sm:%s3380] %v4037
                  %v4039 = vld [vmem:[%s3387 + $0xa14] sm:%s3380]
                  %4040 = vst [vmem:[%s3388 + $0x514] sm:%s3380] %v4039
                  %v4041 = vld [vmem:[%s3387 + $0xa18] sm:%s3380]
                  %4042 = vst [vmem:[%s3388 + $0x518] sm:%s3380] %v4041
                  %v4043 = vld [vmem:[%s3387 + $0xa1c] sm:%s3380]
                  %4044 = vst [vmem:[%s3388 + $0x51c] sm:%s3380] %v4043
                  %v4045 = vld [vmem:[%s3387 + $0xa20] sm:%s3380]
                  %4046 = vst [vmem:[%s3388 + $0x520] sm:%s3380] %v4045
                  %v4047 = vld [vmem:[%s3387 + $0xa24] sm:%s3380]
                  %4048 = vst [vmem:[%s3388 + $0x524] sm:%s3380] %v4047
                  %v4049 = vld [vmem:[%s3387 + $0xa28] sm:%s3380]
                  %4050 = vst [vmem:[%s3388 + $0x528] sm:%s3380] %v4049
                  %v4051 = vld [vmem:[%s3387 + $0xa2c] sm:%s3380]
                  %4052 = vst [vmem:[%s3388 + $0x52c] sm:%s3380] %v4051
                  %v4053 = vld [vmem:[%s3387 + $0xa30] sm:%s3380]
                  %4054 = vst [vmem:[%s3388 + $0x530] sm:%s3380] %v4053
                  %v4055 = vld [vmem:[%s3387 + $0xa34] sm:%s3380]
                  %4056 = vst [vmem:[%s3388 + $0x534] sm:%s3380] %v4055
                  %v4057 = vld [vmem:[%s3387 + $0xa38] sm:%s3380]
                  %4058 = vst [vmem:[%s3388 + $0x538] sm:%s3380] %v4057
                  %v4059 = vld [vmem:[%s3387 + $0xa3c] sm:%s3380]
                  %4060 = vst [vmem:[%s3388 + $0x53c] sm:%s3380] %v4059
                  %v4061 = vld [vmem:[%s3387 + $0xa40] sm:%s3380]
                  %4062 = vst [vmem:[%s3388 + $0x540] sm:%s3380] %v4061
                  %v4063 = vld [vmem:[%s3387 + $0xa44] sm:%s3380]
                  %4064 = vst [vmem:[%s3388 + $0x544] sm:%s3380] %v4063
                  %v4065 = vld [vmem:[%s3387 + $0xa48] sm:%s3380]
                  %4066 = vst [vmem:[%s3388 + $0x548] sm:%s3380] %v4065
                  %v4067 = vld [vmem:[%s3387 + $0xa4c] sm:%s3380]
                  %4068 = vst [vmem:[%s3388 + $0x54c] sm:%s3380] %v4067
                  %v4069 = vld [vmem:[%s3387 + $0xa50] sm:%s3380]
                  %4070 = vst [vmem:[%s3388 + $0x550] sm:%s3380] %v4069
                  %v4071 = vld [vmem:[%s3387 + $0xa54] sm:%s3380]
                  %4072 = vst [vmem:[%s3388 + $0x554] sm:%s3380] %v4071
                  %v4073 = vld [vmem:[%s3387 + $0xa58] sm:%s3380]
                  %4074 = vst [vmem:[%s3388 + $0x558] sm:%s3380] %v4073
                  %v4075 = vld [vmem:[%s3387 + $0xa5c] sm:%s3380]
                  %4076 = vst [vmem:[%s3388 + $0x55c] sm:%s3380] %v4075
                  %v4077 = vld [vmem:[%s3387 + $0xa60] sm:%s3380]
                  %4078 = vst [vmem:[%s3388 + $0x560] sm:%s3380] %v4077
                  %v4079 = vld [vmem:[%s3387 + $0xa64] sm:%s3380]
                  %4080 = vst [vmem:[%s3388 + $0x564] sm:%s3380] %v4079
                  %v4081 = vld [vmem:[%s3387 + $0xa68] sm:%s3380]
                  %4082 = vst [vmem:[%s3388 + $0x568] sm:%s3380] %v4081
                  %v4083 = vld [vmem:[%s3387 + $0xa6c] sm:%s3380]
                  %4084 = vst [vmem:[%s3388 + $0x56c] sm:%s3380] %v4083
                  %v4085 = vld [vmem:[%s3387 + $0xa70] sm:%s3380]
                  %4086 = vst [vmem:[%s3388 + $0x570] sm:%s3380] %v4085
                  %v4087 = vld [vmem:[%s3387 + $0xa74] sm:%s3380]
                  %4088 = vst [vmem:[%s3388 + $0x574] sm:%s3380] %v4087
                  %v4089 = vld [vmem:[%s3387 + $0xa78] sm:%s3380]
                  %4090 = vst [vmem:[%s3388 + $0x578] sm:%s3380] %v4089
                  %v4091 = vld [vmem:[%s3387 + $0xa7c] sm:%s3380]
                  %4092 = vst [vmem:[%s3388 + $0x57c] sm:%s3380] %v4091
                  %v4093 = vld [vmem:[%s3387 + $0xb00] sm:%s3380]
                  %4094 = vst [vmem:[%s3388 + $0x580] sm:%s3380] %v4093
                  %v4095 = vld [vmem:[%s3387 + $0xb04] sm:%s3380]
                  %4096 = vst [vmem:[%s3388 + $0x584] sm:%s3380] %v4095
                  %v4097 = vld [vmem:[%s3387 + $0xb08] sm:%s3380]
                  %4098 = vst [vmem:[%s3388 + $0x588] sm:%s3380] %v4097
                  %v4099 = vld [vmem:[%s3387 + $0xb0c] sm:%s3380]
                  %4100 = vst [vmem:[%s3388 + $0x58c] sm:%s3380] %v4099
                  %v4101 = vld [vmem:[%s3387 + $0xb10] sm:%s3380]
                  %4102 = vst [vmem:[%s3388 + $0x590] sm:%s3380] %v4101
                  %v4103 = vld [vmem:[%s3387 + $0xb14] sm:%s3380]
                  %4104 = vst [vmem:[%s3388 + $0x594] sm:%s3380] %v4103
                  %v4105 = vld [vmem:[%s3387 + $0xb18] sm:%s3380]
                  %4106 = vst [vmem:[%s3388 + $0x598] sm:%s3380] %v4105
                  %v4107 = vld [vmem:[%s3387 + $0xb1c] sm:%s3380]
                  %4108 = vst [vmem:[%s3388 + $0x59c] sm:%s3380] %v4107
                  %v4109 = vld [vmem:[%s3387 + $0xb20] sm:%s3380]
                  %4110 = vst [vmem:[%s3388 + $0x5a0] sm:%s3380] %v4109
                  %v4111 = vld [vmem:[%s3387 + $0xb24] sm:%s3380]
                  %4112 = vst [vmem:[%s3388 + $0x5a4] sm:%s3380] %v4111
                  %v4113 = vld [vmem:[%s3387 + $0xb28] sm:%s3380]
                  %4114 = vst [vmem:[%s3388 + $0x5a8] sm:%s3380] %v4113
                  %v4115 = vld [vmem:[%s3387 + $0xb2c] sm:%s3380]
                  %4116 = vst [vmem:[%s3388 + $0x5ac] sm:%s3380] %v4115
                  %v4117 = vld [vmem:[%s3387 + $0xb30] sm:%s3380]
                  %4118 = vst [vmem:[%s3388 + $0x5b0] sm:%s3380] %v4117
                  %v4119 = vld [vmem:[%s3387 + $0xb34] sm:%s3380]
                  %4120 = vst [vmem:[%s3388 + $0x5b4] sm:%s3380] %v4119
                  %v4121 = vld [vmem:[%s3387 + $0xb38] sm:%s3380]
                  %4122 = vst [vmem:[%s3388 + $0x5b8] sm:%s3380] %v4121
                  %v4123 = vld [vmem:[%s3387 + $0xb3c] sm:%s3380]
                  %4124 = vst [vmem:[%s3388 + $0x5bc] sm:%s3380] %v4123
                  %v4125 = vld [vmem:[%s3387 + $0xb40] sm:%s3380]
                  %4126 = vst [vmem:[%s3388 + $0x5c0] sm:%s3380] %v4125
                  %v4127 = vld [vmem:[%s3387 + $0xb44] sm:%s3380]
                  %4128 = vst [vmem:[%s3388 + $0x5c4] sm:%s3380] %v4127
                  %v4129 = vld [vmem:[%s3387 + $0xb48] sm:%s3380]
                  %4130 = vst [vmem:[%s3388 + $0x5c8] sm:%s3380] %v4129
                  %v4131 = vld [vmem:[%s3387 + $0xb4c] sm:%s3380]
                  %4132 = vst [vmem:[%s3388 + $0x5cc] sm:%s3380] %v4131
                  %v4133 = vld [vmem:[%s3387 + $0xb50] sm:%s3380]
                  %4134 = vst [vmem:[%s3388 + $0x5d0] sm:%s3380] %v4133
                  %v4135 = vld [vmem:[%s3387 + $0xb54] sm:%s3380]
                  %4136 = vst [vmem:[%s3388 + $0x5d4] sm:%s3380] %v4135
                  %v4137 = vld [vmem:[%s3387 + $0xb58] sm:%s3380]
                  %4138 = vst [vmem:[%s3388 + $0x5d8] sm:%s3380] %v4137
                  %v4139 = vld [vmem:[%s3387 + $0xb5c] sm:%s3380]
                  %4140 = vst [vmem:[%s3388 + $0x5dc] sm:%s3380] %v4139
                  %v4141 = vld [vmem:[%s3387 + $0xb60] sm:%s3380]
                  %4142 = vst [vmem:[%s3388 + $0x5e0] sm:%s3380] %v4141
                  %v4143 = vld [vmem:[%s3387 + $0xb64] sm:%s3380]
                  %4144 = vst [vmem:[%s3388 + $0x5e4] sm:%s3380] %v4143
                  %v4145 = vld [vmem:[%s3387 + $0xb68] sm:%s3380]
                  %4146 = vst [vmem:[%s3388 + $0x5e8] sm:%s3380] %v4145
                  %v4147 = vld [vmem:[%s3387 + $0xb6c] sm:%s3380]
                  %4148 = vst [vmem:[%s3388 + $0x5ec] sm:%s3380] %v4147
                  %v4149 = vld [vmem:[%s3387 + $0xb70] sm:%s3380]
                  %4150 = vst [vmem:[%s3388 + $0x5f0] sm:%s3380] %v4149
                  %v4151 = vld [vmem:[%s3387 + $0xb74] sm:%s3380]
                  %4152 = vst [vmem:[%s3388 + $0x5f4] sm:%s3380] %v4151
                  %v4153 = vld [vmem:[%s3387 + $0xb78] sm:%s3380]
                  %4154 = vst [vmem:[%s3388 + $0x5f8] sm:%s3380] %v4153
                  %v4155 = vld [vmem:[%s3387 + $0xb7c] sm:%s3380]
                  %4156 = vst [vmem:[%s3388 + $0x5fc] sm:%s3380] %v4155
                  %v4157 = vld [vmem:[%s3387 + $0xc00] sm:%s3380]
                  %4158 = vst [vmem:[%s3388 + $0x600] sm:%s3380] %v4157
                  %v4159 = vld [vmem:[%s3387 + $0xc04] sm:%s3380]
                  %4160 = vst [vmem:[%s3388 + $0x604] sm:%s3380] %v4159
                  %v4161 = vld [vmem:[%s3387 + $0xc08] sm:%s3380]
                  %4162 = vst [vmem:[%s3388 + $0x608] sm:%s3380] %v4161
                  %v4163 = vld [vmem:[%s3387 + $0xc0c] sm:%s3380]
                  %4164 = vst [vmem:[%s3388 + $0x60c] sm:%s3380] %v4163
                  %v4165 = vld [vmem:[%s3387 + $0xc10] sm:%s3380]
                  %4166 = vst [vmem:[%s3388 + $0x610] sm:%s3380] %v4165
                  %v4167 = vld [vmem:[%s3387 + $0xc14] sm:%s3380]
                  %4168 = vst [vmem:[%s3388 + $0x614] sm:%s3380] %v4167
                  %v4169 = vld [vmem:[%s3387 + $0xc18] sm:%s3380]
                  %4170 = vst [vmem:[%s3388 + $0x618] sm:%s3380] %v4169
                  %v4171 = vld [vmem:[%s3387 + $0xc1c] sm:%s3380]
                  %4172 = vst [vmem:[%s3388 + $0x61c] sm:%s3380] %v4171
                  %v4173 = vld [vmem:[%s3387 + $0xc20] sm:%s3380]
                  %4174 = vst [vmem:[%s3388 + $0x620] sm:%s3380] %v4173
                  %v4175 = vld [vmem:[%s3387 + $0xc24] sm:%s3380]
                  %4176 = vst [vmem:[%s3388 + $0x624] sm:%s3380] %v4175
                  %v4177 = vld [vmem:[%s3387 + $0xc28] sm:%s3380]
                  %4178 = vst [vmem:[%s3388 + $0x628] sm:%s3380] %v4177
                  %v4179 = vld [vmem:[%s3387 + $0xc2c] sm:%s3380]
                  %4180 = vst [vmem:[%s3388 + $0x62c] sm:%s3380] %v4179
                  %v4181 = vld [vmem:[%s3387 + $0xc30] sm:%s3380]
                  %4182 = vst [vmem:[%s3388 + $0x630] sm:%s3380] %v4181
                  %v4183 = vld [vmem:[%s3387 + $0xc34] sm:%s3380]
                  %4184 = vst [vmem:[%s3388 + $0x634] sm:%s3380] %v4183
                  %v4185 = vld [vmem:[%s3387 + $0xc38] sm:%s3380]
                  %4186 = vst [vmem:[%s3388 + $0x638] sm:%s3380] %v4185
                  %v4187 = vld [vmem:[%s3387 + $0xc3c] sm:%s3380]
                  %4188 = vst [vmem:[%s3388 + $0x63c] sm:%s3380] %v4187
                  %v4189 = vld [vmem:[%s3387 + $0xc40] sm:%s3380]
                  %4190 = vst [vmem:[%s3388 + $0x640] sm:%s3380] %v4189
                  %v4191 = vld [vmem:[%s3387 + $0xc44] sm:%s3380]
                  %4192 = vst [vmem:[%s3388 + $0x644] sm:%s3380] %v4191
                  %v4193 = vld [vmem:[%s3387 + $0xc48] sm:%s3380]
                  %4194 = vst [vmem:[%s3388 + $0x648] sm:%s3380] %v4193
                  %v4195 = vld [vmem:[%s3387 + $0xc4c] sm:%s3380]
                  %4196 = vst [vmem:[%s3388 + $0x64c] sm:%s3380] %v4195
                  %v4197 = vld [vmem:[%s3387 + $0xc50] sm:%s3380]
                  %4198 = vst [vmem:[%s3388 + $0x650] sm:%s3380] %v4197
                  %v4199 = vld [vmem:[%s3387 + $0xc54] sm:%s3380]
                  %4200 = vst [vmem:[%s3388 + $0x654] sm:%s3380] %v4199
                  %v4201 = vld [vmem:[%s3387 + $0xc58] sm:%s3380]
                  %4202 = vst [vmem:[%s3388 + $0x658] sm:%s3380] %v4201
                  %v4203 = vld [vmem:[%s3387 + $0xc5c] sm:%s3380]
                  %4204 = vst [vmem:[%s3388 + $0x65c] sm:%s3380] %v4203
                  %v4205 = vld [vmem:[%s3387 + $0xc60] sm:%s3380]
                  %4206 = vst [vmem:[%s3388 + $0x660] sm:%s3380] %v4205
                  %v4207 = vld [vmem:[%s3387 + $0xc64] sm:%s3380]
                  %4208 = vst [vmem:[%s3388 + $0x664] sm:%s3380] %v4207
                  %v4209 = vld [vmem:[%s3387 + $0xc68] sm:%s3380]
                  %4210 = vst [vmem:[%s3388 + $0x668] sm:%s3380] %v4209
                  %v4211 = vld [vmem:[%s3387 + $0xc6c] sm:%s3380]
                  %4212 = vst [vmem:[%s3388 + $0x66c] sm:%s3380] %v4211
                  %v4213 = vld [vmem:[%s3387 + $0xc70] sm:%s3380]
                  %4214 = vst [vmem:[%s3388 + $0x670] sm:%s3380] %v4213
                  %v4215 = vld [vmem:[%s3387 + $0xc74] sm:%s3380]
                  %4216 = vst [vmem:[%s3388 + $0x674] sm:%s3380] %v4215
                  %v4217 = vld [vmem:[%s3387 + $0xc78] sm:%s3380]
                  %4218 = vst [vmem:[%s3388 + $0x678] sm:%s3380] %v4217
                  %v4219 = vld [vmem:[%s3387 + $0xc7c] sm:%s3380]
                  %4220 = vst [vmem:[%s3388 + $0x67c] sm:%s3380] %v4219
                  %v4221 = vld [vmem:[%s3387 + $0xd00] sm:%s3380]
                  %4222 = vst [vmem:[%s3388 + $0x680] sm:%s3380] %v4221
                  %v4223 = vld [vmem:[%s3387 + $0xd04] sm:%s3380]
                  %4224 = vst [vmem:[%s3388 + $0x684] sm:%s3380] %v4223
                  %v4225 = vld [vmem:[%s3387 + $0xd08] sm:%s3380]
                  %4226 = vst [vmem:[%s3388 + $0x688] sm:%s3380] %v4225
                  %v4227 = vld [vmem:[%s3387 + $0xd0c] sm:%s3380]
                  %4228 = vst [vmem:[%s3388 + $0x68c] sm:%s3380] %v4227
                  %v4229 = vld [vmem:[%s3387 + $0xd10] sm:%s3380]
                  %4230 = vst [vmem:[%s3388 + $0x690] sm:%s3380] %v4229
                  %v4231 = vld [vmem:[%s3387 + $0xd14] sm:%s3380]
                  %4232 = vst [vmem:[%s3388 + $0x694] sm:%s3380] %v4231
                  %v4233 = vld [vmem:[%s3387 + $0xd18] sm:%s3380]
                  %4234 = vst [vmem:[%s3388 + $0x698] sm:%s3380] %v4233
                  %v4235 = vld [vmem:[%s3387 + $0xd1c] sm:%s3380]
                  %4236 = vst [vmem:[%s3388 + $0x69c] sm:%s3380] %v4235
                  %v4237 = vld [vmem:[%s3387 + $0xd20] sm:%s3380]
                  %4238 = vst [vmem:[%s3388 + $0x6a0] sm:%s3380] %v4237
                  %v4239 = vld [vmem:[%s3387 + $0xd24] sm:%s3380]
                  %4240 = vst [vmem:[%s3388 + $0x6a4] sm:%s3380] %v4239
                  %v4241 = vld [vmem:[%s3387 + $0xd28] sm:%s3380]
                  %4242 = vst [vmem:[%s3388 + $0x6a8] sm:%s3380] %v4241
                  %v4243 = vld [vmem:[%s3387 + $0xd2c] sm:%s3380]
                  %4244 = vst [vmem:[%s3388 + $0x6ac] sm:%s3380] %v4243
                  %v4245 = vld [vmem:[%s3387 + $0xd30] sm:%s3380]
                  %4246 = vst [vmem:[%s3388 + $0x6b0] sm:%s3380] %v4245
                  %v4247 = vld [vmem:[%s3387 + $0xd34] sm:%s3380]
                  %4248 = vst [vmem:[%s3388 + $0x6b4] sm:%s3380] %v4247
                  %v4249 = vld [vmem:[%s3387 + $0xd38] sm:%s3380]
                  %4250 = vst [vmem:[%s3388 + $0x6b8] sm:%s3380] %v4249
                  %v4251 = vld [vmem:[%s3387 + $0xd3c] sm:%s3380]
                  %4252 = vst [vmem:[%s3388 + $0x6bc] sm:%s3380] %v4251
                  %v4253 = vld [vmem:[%s3387 + $0xd40] sm:%s3380]
                  %4254 = vst [vmem:[%s3388 + $0x6c0] sm:%s3380] %v4253
                  %v4255 = vld [vmem:[%s3387 + $0xd44] sm:%s3380]
                  %4256 = vst [vmem:[%s3388 + $0x6c4] sm:%s3380] %v4255
                  %v4257 = vld [vmem:[%s3387 + $0xd48] sm:%s3380]
                  %4258 = vst [vmem:[%s3388 + $0x6c8] sm:%s3380] %v4257
                  %v4259 = vld [vmem:[%s3387 + $0xd4c] sm:%s3380]
                  %4260 = vst [vmem:[%s3388 + $0x6cc] sm:%s3380] %v4259
                  %v4261 = vld [vmem:[%s3387 + $0xd50] sm:%s3380]
                  %4262 = vst [vmem:[%s3388 + $0x6d0] sm:%s3380] %v4261
                  %v4263 = vld [vmem:[%s3387 + $0xd54] sm:%s3380]
                  %4264 = vst [vmem:[%s3388 + $0x6d4] sm:%s3380] %v4263
                  %v4265 = vld [vmem:[%s3387 + $0xd58] sm:%s3380]
                  %4266 = vst [vmem:[%s3388 + $0x6d8] sm:%s3380] %v4265
                  %v4267 = vld [vmem:[%s3387 + $0xd5c] sm:%s3380]
                  %4268 = vst [vmem:[%s3388 + $0x6dc] sm:%s3380] %v4267
                  %v4269 = vld [vmem:[%s3387 + $0xd60] sm:%s3380]
                  %4270 = vst [vmem:[%s3388 + $0x6e0] sm:%s3380] %v4269
                  %v4271 = vld [vmem:[%s3387 + $0xd64] sm:%s3380]
                  %4272 = vst [vmem:[%s3388 + $0x6e4] sm:%s3380] %v4271
                  %v4273 = vld [vmem:[%s3387 + $0xd68] sm:%s3380]
                  %4274 = vst [vmem:[%s3388 + $0x6e8] sm:%s3380] %v4273
                  %v4275 = vld [vmem:[%s3387 + $0xd6c] sm:%s3380]
                  %4276 = vst [vmem:[%s3388 + $0x6ec] sm:%s3380] %v4275
                  %v4277 = vld [vmem:[%s3387 + $0xd70] sm:%s3380]
                  %4278 = vst [vmem:[%s3388 + $0x6f0] sm:%s3380] %v4277
                  %v4279 = vld [vmem:[%s3387 + $0xd74] sm:%s3380]
                  %4280 = vst [vmem:[%s3388 + $0x6f4] sm:%s3380] %v4279
                  %v4281 = vld [vmem:[%s3387 + $0xd78] sm:%s3380]
                  %4282 = vst [vmem:[%s3388 + $0x6f8] sm:%s3380] %v4281
                  %v4283 = vld [vmem:[%s3387 + $0xd7c] sm:%s3380]
                  %4284 = vst [vmem:[%s3388 + $0x6fc] sm:%s3380] %v4283
                  %v4285 = vld [vmem:[%s3387 + $0xe00] sm:%s3380]
                  %4286 = vst [vmem:[%s3388 + $0x700] sm:%s3380] %v4285
                  %v4287 = vld [vmem:[%s3387 + $0xe04] sm:%s3380]
                  %4288 = vst [vmem:[%s3388 + $0x704] sm:%s3380] %v4287
                  %v4289 = vld [vmem:[%s3387 + $0xe08] sm:%s3380]
                  %4290 = vst [vmem:[%s3388 + $0x708] sm:%s3380] %v4289
                  %v4291 = vld [vmem:[%s3387 + $0xe0c] sm:%s3380]
                  %4292 = vst [vmem:[%s3388 + $0x70c] sm:%s3380] %v4291
                  %v4293 = vld [vmem:[%s3387 + $0xe10] sm:%s3380]
                  %4294 = vst [vmem:[%s3388 + $0x710] sm:%s3380] %v4293
                  %v4295 = vld [vmem:[%s3387 + $0xe14] sm:%s3380]
                  %4296 = vst [vmem:[%s3388 + $0x714] sm:%s3380] %v4295
                  %v4297 = vld [vmem:[%s3387 + $0xe18] sm:%s3380]
                  %4298 = vst [vmem:[%s3388 + $0x718] sm:%s3380] %v4297
                  %v4299 = vld [vmem:[%s3387 + $0xe1c] sm:%s3380]
                  %4300 = vst [vmem:[%s3388 + $0x71c] sm:%s3380] %v4299
                  %v4301 = vld [vmem:[%s3387 + $0xe20] sm:%s3380]
                  %4302 = vst [vmem:[%s3388 + $0x720] sm:%s3380] %v4301
                  %v4303 = vld [vmem:[%s3387 + $0xe24] sm:%s3380]
                  %4304 = vst [vmem:[%s3388 + $0x724] sm:%s3380] %v4303
                  %v4305 = vld [vmem:[%s3387 + $0xe28] sm:%s3380]
                  %4306 = vst [vmem:[%s3388 + $0x728] sm:%s3380] %v4305
                  %v4307 = vld [vmem:[%s3387 + $0xe2c] sm:%s3380]
                  %4308 = vst [vmem:[%s3388 + $0x72c] sm:%s3380] %v4307
                  %v4309 = vld [vmem:[%s3387 + $0xe30] sm:%s3380]
                  %4310 = vst [vmem:[%s3388 + $0x730] sm:%s3380] %v4309
                  %v4311 = vld [vmem:[%s3387 + $0xe34] sm:%s3380]
                  %4312 = vst [vmem:[%s3388 + $0x734] sm:%s3380] %v4311
                  %v4313 = vld [vmem:[%s3387 + $0xe38] sm:%s3380]
                  %4314 = vst [vmem:[%s3388 + $0x738] sm:%s3380] %v4313
                  %v4315 = vld [vmem:[%s3387 + $0xe3c] sm:%s3380]
                  %4316 = vst [vmem:[%s3388 + $0x73c] sm:%s3380] %v4315
                  %v4317 = vld [vmem:[%s3387 + $0xe40] sm:%s3380]
                  %4318 = vst [vmem:[%s3388 + $0x740] sm:%s3380] %v4317
                  %v4319 = vld [vmem:[%s3387 + $0xe44] sm:%s3380]
                  %4320 = vst [vmem:[%s3388 + $0x744] sm:%s3380] %v4319
                  %v4321 = vld [vmem:[%s3387 + $0xe48] sm:%s3380]
                  %4322 = vst [vmem:[%s3388 + $0x748] sm:%s3380] %v4321
                  %v4323 = vld [vmem:[%s3387 + $0xe4c] sm:%s3380]
                  %4324 = vst [vmem:[%s3388 + $0x74c] sm:%s3380] %v4323
                  %v4325 = vld [vmem:[%s3387 + $0xe50] sm:%s3380]
                  %4326 = vst [vmem:[%s3388 + $0x750] sm:%s3380] %v4325
                  %v4327 = vld [vmem:[%s3387 + $0xe54] sm:%s3380]
                  %4328 = vst [vmem:[%s3388 + $0x754] sm:%s3380] %v4327
                  %v4329 = vld [vmem:[%s3387 + $0xe58] sm:%s3380]
                  %4330 = vst [vmem:[%s3388 + $0x758] sm:%s3380] %v4329
                  %v4331 = vld [vmem:[%s3387 + $0xe5c] sm:%s3380]
                  %4332 = vst [vmem:[%s3388 + $0x75c] sm:%s3380] %v4331
                  %v4333 = vld [vmem:[%s3387 + $0xe60] sm:%s3380]
                  %4334 = vst [vmem:[%s3388 + $0x760] sm:%s3380] %v4333
                  %v4335 = vld [vmem:[%s3387 + $0xe64] sm:%s3380]
                  %4336 = vst [vmem:[%s3388 + $0x764] sm:%s3380] %v4335
                  %v4337 = vld [vmem:[%s3387 + $0xe68] sm:%s3380]
                  %4338 = vst [vmem:[%s3388 + $0x768] sm:%s3380] %v4337
                  %v4339 = vld [vmem:[%s3387 + $0xe6c] sm:%s3380]
                  %4340 = vst [vmem:[%s3388 + $0x76c] sm:%s3380] %v4339
                  %v4341 = vld [vmem:[%s3387 + $0xe70] sm:%s3380]
                  %4342 = vst [vmem:[%s3388 + $0x770] sm:%s3380] %v4341
                  %v4343 = vld [vmem:[%s3387 + $0xe74] sm:%s3380]
                  %4344 = vst [vmem:[%s3388 + $0x774] sm:%s3380] %v4343
                  %v4345 = vld [vmem:[%s3387 + $0xe78] sm:%s3380]
                  %4346 = vst [vmem:[%s3388 + $0x778] sm:%s3380] %v4345
                  %v4347 = vld [vmem:[%s3387 + $0xe7c] sm:%s3380]
                  %4348 = vst [vmem:[%s3388 + $0x77c] sm:%s3380] %v4347
                  %v4349 = vld [vmem:[%s3387 + $0xf00] sm:%s3380]
                  %4350 = vst [vmem:[%s3388 + $0x780] sm:%s3380] %v4349
                  %v4351 = vld [vmem:[%s3387 + $0xf04] sm:%s3380]
                  %4352 = vst [vmem:[%s3388 + $0x784] sm:%s3380] %v4351
                  %v4353 = vld [vmem:[%s3387 + $0xf08] sm:%s3380]
                  %4354 = vst [vmem:[%s3388 + $0x788] sm:%s3380] %v4353
                  %v4355 = vld [vmem:[%s3387 + $0xf0c] sm:%s3380]
                  %4356 = vst [vmem:[%s3388 + $0x78c] sm:%s3380] %v4355
                  %v4357 = vld [vmem:[%s3387 + $0xf10] sm:%s3380]
                  %4358 = vst [vmem:[%s3388 + $0x790] sm:%s3380] %v4357
                  %v4359 = vld [vmem:[%s3387 + $0xf14] sm:%s3380]
                  %4360 = vst [vmem:[%s3388 + $0x794] sm:%s3380] %v4359
                  %v4361 = vld [vmem:[%s3387 + $0xf18] sm:%s3380]
                  %4362 = vst [vmem:[%s3388 + $0x798] sm:%s3380] %v4361
                  %v4363 = vld [vmem:[%s3387 + $0xf1c] sm:%s3380]
                  %4364 = vst [vmem:[%s3388 + $0x79c] sm:%s3380] %v4363
                  %v4365 = vld [vmem:[%s3387 + $0xf20] sm:%s3380]
                  %4366 = vst [vmem:[%s3388 + $0x7a0] sm:%s3380] %v4365
                  %v4367 = vld [vmem:[%s3387 + $0xf24] sm:%s3380]
                  %4368 = vst [vmem:[%s3388 + $0x7a4] sm:%s3380] %v4367
                  %v4369 = vld [vmem:[%s3387 + $0xf28] sm:%s3380]
                  %4370 = vst [vmem:[%s3388 + $0x7a8] sm:%s3380] %v4369
                  %v4371 = vld [vmem:[%s3387 + $0xf2c] sm:%s3380]
                  %4372 = vst [vmem:[%s3388 + $0x7ac] sm:%s3380] %v4371
                  %v4373 = vld [vmem:[%s3387 + $0xf30] sm:%s3380]
                  %4374 = vst [vmem:[%s3388 + $0x7b0] sm:%s3380] %v4373
                  %v4375 = vld [vmem:[%s3387 + $0xf34] sm:%s3380]
                  %4376 = vst [vmem:[%s3388 + $0x7b4] sm:%s3380] %v4375
                  %v4377 = vld [vmem:[%s3387 + $0xf38] sm:%s3380]
                  %4378 = vst [vmem:[%s3388 + $0x7b8] sm:%s3380] %v4377
                  %v4379 = vld [vmem:[%s3387 + $0xf3c] sm:%s3380]
                  %4380 = vst [vmem:[%s3388 + $0x7bc] sm:%s3380] %v4379
                  %v4381 = vld [vmem:[%s3387 + $0xf40] sm:%s3380]
                  %4382 = vst [vmem:[%s3388 + $0x7c0] sm:%s3380] %v4381
                  %v4383 = vld [vmem:[%s3387 + $0xf44] sm:%s3380]
                  %4384 = vst [vmem:[%s3388 + $0x7c4] sm:%s3380] %v4383
                  %v4385 = vld [vmem:[%s3387 + $0xf48] sm:%s3380]
                  %4386 = vst [vmem:[%s3388 + $0x7c8] sm:%s3380] %v4385
                  %v4387 = vld [vmem:[%s3387 + $0xf4c] sm:%s3380]
                  %4388 = vst [vmem:[%s3388 + $0x7cc] sm:%s3380] %v4387
                  %v4389 = vld [vmem:[%s3387 + $0xf50] sm:%s3380]
                  %4390 = vst [vmem:[%s3388 + $0x7d0] sm:%s3380] %v4389
                  %v4391 = vld [vmem:[%s3387 + $0xf54] sm:%s3380]
                  %4392 = vst [vmem:[%s3388 + $0x7d4] sm:%s3380] %v4391
                  %v4393 = vld [vmem:[%s3387 + $0xf58] sm:%s3380]
                  %4394 = vst [vmem:[%s3388 + $0x7d8] sm:%s3380] %v4393
                  %v4395 = vld [vmem:[%s3387 + $0xf5c] sm:%s3380]
                  %4396 = vst [vmem:[%s3388 + $0x7dc] sm:%s3380] %v4395
                  %v4397 = vld [vmem:[%s3387 + $0xf60] sm:%s3380]
                  %4398 = vst [vmem:[%s3388 + $0x7e0] sm:%s3380] %v4397
                  %v4399 = vld [vmem:[%s3387 + $0xf64] sm:%s3380]
                  %4400 = vst [vmem:[%s3388 + $0x7e4] sm:%s3380] %v4399
                  %v4401 = vld [vmem:[%s3387 + $0xf68] sm:%s3380]
                  %4402 = vst [vmem:[%s3388 + $0x7e8] sm:%s3380] %v4401
                  %v4403 = vld [vmem:[%s3387 + $0xf6c] sm:%s3380]
                  %4404 = vst [vmem:[%s3388 + $0x7ec] sm:%s3380] %v4403
                  %v4405 = vld [vmem:[%s3387 + $0xf70] sm:%s3380]
                  %4406 = vst [vmem:[%s3388 + $0x7f0] sm:%s3380] %v4405
                  %v4407 = vld [vmem:[%s3387 + $0xf74] sm:%s3380]
                  %4408 = vst [vmem:[%s3388 + $0x7f4] sm:%s3380] %v4407
                  %v4409 = vld [vmem:[%s3387 + $0xf78] sm:%s3380]
                  %4410 = vst [vmem:[%s3388 + $0x7f8] sm:%s3380] %v4409
                  %v4411 = vld [vmem:[%s3387 + $0xf7c] sm:%s3380]
                  %4412 = vst [vmem:[%s3388 + $0x7fc] sm:%s3380] %v4411
                $region90: #{net_forward.3} parent=77 // loop_footer
                  %s3386 = sadd.s32 1, %s3382
                $region91: #{net_forward.3} parent=77 // loop_footer_branch
                  %3381 = sbr.rel target = $region87
                $region92: #{net_forward.3} parent=77 // loop_exit
                  _
              $region78: #{net_forward.3} parent=51 // pred_fallthru
                _
            $region52: #{net_forward.3} parent=47 // pred_fallthru
              _
            // Predicated region
            $region53: #{net_forward.3} parent=47 // pred_check
              _
            $region54: #{net_forward.3} parent=47 // pred_check_branch
              %260 = sbr.rel (0) target = $region56
            $region55: #{net_forward.3} parent=47 // pred_region
              %s262 = ssub.s32 16, 1
              loop: start=0, step=1, limit=1
              $region57: #{net_forward.3} parent=55 // loop_pre_header
                _
              $region58: #{net_forward.3} parent=55 // loop_header
                %s264 = sphi 0, %s268
                %p265 = scmp.ge.s32.totalorder %s264, 1
                %s269 = sphi %s254, %s254
                %s270 = sphi %s248, %s248
              $region59: #{net_forward.3} parent=55 // loop_header_branch
                %267 = sbr.rel (%p265) target = $region63
              $region60: #{net_forward.3} parent=55 // loop_body
                %v271 = vld [vmem:[%s269] sm:%s262]
                %272 = vst [vmem:[%s270] sm:%s262] %v271
                %v273 = vld [vmem:[%s269 + $0x4] sm:%s262]
                %274 = vst [vmem:[%s270 + $0x4] sm:%s262] %v273
                %v275 = vld [vmem:[%s269 + $0x8] sm:%s262]
                %276 = vst [vmem:[%s270 + $0x8] sm:%s262] %v275
                %v277 = vld [vmem:[%s269 + $0xc] sm:%s262]
                %278 = vst [vmem:[%s270 + $0xc] sm:%s262] %v277
                %v279 = vld [vmem:[%s269 + $0x10] sm:%s262]
                %280 = vst [vmem:[%s270 + $0x10] sm:%s262] %v279
                %v281 = vld [vmem:[%s269 + $0x14] sm:%s262]
                %282 = vst [vmem:[%s270 + $0x14] sm:%s262] %v281
                %v283 = vld [vmem:[%s269 + $0x18] sm:%s262]
                %284 = vst [vmem:[%s270 + $0x18] sm:%s262] %v283
                %v285 = vld [vmem:[%s269 + $0x1c] sm:%s262]
                %286 = vst [vmem:[%s270 + $0x1c] sm:%s262] %v285
                %v287 = vld [vmem:[%s269 + $0x20] sm:%s262]
                %288 = vst [vmem:[%s270 + $0x20] sm:%s262] %v287
                %v289 = vld [vmem:[%s269 + $0x24] sm:%s262]
                %290 = vst [vmem:[%s270 + $0x24] sm:%s262] %v289
                %v291 = vld [vmem:[%s269 + $0x28] sm:%s262]
                %292 = vst [vmem:[%s270 + $0x28] sm:%s262] %v291
                %v293 = vld [vmem:[%s269 + $0x2c] sm:%s262]
                %294 = vst [vmem:[%s270 + $0x2c] sm:%s262] %v293
                %v295 = vld [vmem:[%s269 + $0x30] sm:%s262]
                %296 = vst [vmem:[%s270 + $0x30] sm:%s262] %v295
                %v297 = vld [vmem:[%s269 + $0x34] sm:%s262]
                %298 = vst [vmem:[%s270 + $0x34] sm:%s262] %v297
                %v299 = vld [vmem:[%s269 + $0x38] sm:%s262]
                %300 = vst [vmem:[%s270 + $0x38] sm:%s262] %v299
                %v301 = vld [vmem:[%s269 + $0x3c] sm:%s262]
                %302 = vst [vmem:[%s270 + $0x3c] sm:%s262] %v301
                %v303 = vld [vmem:[%s269 + $0x40] sm:%s262]
                %304 = vst [vmem:[%s270 + $0x40] sm:%s262] %v303
                %v305 = vld [vmem:[%s269 + $0x44] sm:%s262]
                %306 = vst [vmem:[%s270 + $0x44] sm:%s262] %v305
                %v307 = vld [vmem:[%s269 + $0x48] sm:%s262]
                %308 = vst [vmem:[%s270 + $0x48] sm:%s262] %v307
                %v309 = vld [vmem:[%s269 + $0x4c] sm:%s262]
                %310 = vst [vmem:[%s270 + $0x4c] sm:%s262] %v309
                %v311 = vld [vmem:[%s269 + $0x50] sm:%s262]
                %312 = vst [vmem:[%s270 + $0x50] sm:%s262] %v311
                %v313 = vld [vmem:[%s269 + $0x54] sm:%s262]
                %314 = vst [vmem:[%s270 + $0x54] sm:%s262] %v313
                %v315 = vld [vmem:[%s269 + $0x58] sm:%s262]
                %316 = vst [vmem:[%s270 + $0x58] sm:%s262] %v315
                %v317 = vld [vmem:[%s269 + $0x5c] sm:%s262]
                %318 = vst [vmem:[%s270 + $0x5c] sm:%s262] %v317
                %v319 = vld [vmem:[%s269 + $0x60] sm:%s262]
                %320 = vst [vmem:[%s270 + $0x60] sm:%s262] %v319
                %v321 = vld [vmem:[%s269 + $0x64] sm:%s262]
                %322 = vst [vmem:[%s270 + $0x64] sm:%s262] %v321
                %v323 = vld [vmem:[%s269 + $0x68] sm:%s262]
                %324 = vst [vmem:[%s270 + $0x68] sm:%s262] %v323
                %v325 = vld [vmem:[%s269 + $0x6c] sm:%s262]
                %326 = vst [vmem:[%s270 + $0x6c] sm:%s262] %v325
                %v327 = vld [vmem:[%s269 + $0x70] sm:%s262]
                %328 = vst [vmem:[%s270 + $0x70] sm:%s262] %v327
                %v329 = vld [vmem:[%s269 + $0x74] sm:%s262]
                %330 = vst [vmem:[%s270 + $0x74] sm:%s262] %v329
                %v331 = vld [vmem:[%s269 + $0x78] sm:%s262]
                %332 = vst [vmem:[%s270 + $0x78] sm:%s262] %v331
                %v333 = vld [vmem:[%s269 + $0x7c] sm:%s262]
                %334 = vst [vmem:[%s270 + $0x7c] sm:%s262] %v333
                %v335 = vld [vmem:[%s269 + $0x100] sm:%s262]
                %336 = vst [vmem:[%s270 + $0x80] sm:%s262] %v335
                %v337 = vld [vmem:[%s269 + $0x104] sm:%s262]
                %338 = vst [vmem:[%s270 + $0x84] sm:%s262] %v337
                %v339 = vld [vmem:[%s269 + $0x108] sm:%s262]
                %340 = vst [vmem:[%s270 + $0x88] sm:%s262] %v339
                %v341 = vld [vmem:[%s269 + $0x10c] sm:%s262]
                %342 = vst [vmem:[%s270 + $0x8c] sm:%s262] %v341
                %v343 = vld [vmem:[%s269 + $0x110] sm:%s262]
                %344 = vst [vmem:[%s270 + $0x90] sm:%s262] %v343
                %v345 = vld [vmem:[%s269 + $0x114] sm:%s262]
                %346 = vst [vmem:[%s270 + $0x94] sm:%s262] %v345
                %v347 = vld [vmem:[%s269 + $0x118] sm:%s262]
                %348 = vst [vmem:[%s270 + $0x98] sm:%s262] %v347
                %v349 = vld [vmem:[%s269 + $0x11c] sm:%s262]
                %350 = vst [vmem:[%s270 + $0x9c] sm:%s262] %v349
                %v351 = vld [vmem:[%s269 + $0x120] sm:%s262]
                %352 = vst [vmem:[%s270 + $0xa0] sm:%s262] %v351
                %v353 = vld [vmem:[%s269 + $0x124] sm:%s262]
                %354 = vst [vmem:[%s270 + $0xa4] sm:%s262] %v353
                %v355 = vld [vmem:[%s269 + $0x128] sm:%s262]
                %356 = vst [vmem:[%s270 + $0xa8] sm:%s262] %v355
                %v357 = vld [vmem:[%s269 + $0x12c] sm:%s262]
                %358 = vst [vmem:[%s270 + $0xac] sm:%s262] %v357
                %v359 = vld [vmem:[%s269 + $0x130] sm:%s262]
                %360 = vst [vmem:[%s270 + $0xb0] sm:%s262] %v359
                %v361 = vld [vmem:[%s269 + $0x134] sm:%s262]
                %362 = vst [vmem:[%s270 + $0xb4] sm:%s262] %v361
                %v363 = vld [vmem:[%s269 + $0x138] sm:%s262]
                %364 = vst [vmem:[%s270 + $0xb8] sm:%s262] %v363
                %v365 = vld [vmem:[%s269 + $0x13c] sm:%s262]
                %366 = vst [vmem:[%s270 + $0xbc] sm:%s262] %v365
                %v367 = vld [vmem:[%s269 + $0x140] sm:%s262]
                %368 = vst [vmem:[%s270 + $0xc0] sm:%s262] %v367
                %v369 = vld [vmem:[%s269 + $0x144] sm:%s262]
                %370 = vst [vmem:[%s270 + $0xc4] sm:%s262] %v369
                %v371 = vld [vmem:[%s269 + $0x148] sm:%s262]
                %372 = vst [vmem:[%s270 + $0xc8] sm:%s262] %v371
                %v373 = vld [vmem:[%s269 + $0x14c] sm:%s262]
                %374 = vst [vmem:[%s270 + $0xcc] sm:%s262] %v373
                %v375 = vld [vmem:[%s269 + $0x150] sm:%s262]
                %376 = vst [vmem:[%s270 + $0xd0] sm:%s262] %v375
                %v377 = vld [vmem:[%s269 + $0x154] sm:%s262]
                %378 = vst [vmem:[%s270 + $0xd4] sm:%s262] %v377
                %v379 = vld [vmem:[%s269 + $0x158] sm:%s262]
                %380 = vst [vmem:[%s270 + $0xd8] sm:%s262] %v379
                %v381 = vld [vmem:[%s269 + $0x15c] sm:%s262]
                %382 = vst [vmem:[%s270 + $0xdc] sm:%s262] %v381
                %v383 = vld [vmem:[%s269 + $0x160] sm:%s262]
                %384 = vst [vmem:[%s270 + $0xe0] sm:%s262] %v383
                %v385 = vld [vmem:[%s269 + $0x164] sm:%s262]
                %386 = vst [vmem:[%s270 + $0xe4] sm:%s262] %v385
                %v387 = vld [vmem:[%s269 + $0x168] sm:%s262]
                %388 = vst [vmem:[%s270 + $0xe8] sm:%s262] %v387
                %v389 = vld [vmem:[%s269 + $0x16c] sm:%s262]
                %390 = vst [vmem:[%s270 + $0xec] sm:%s262] %v389
                %v391 = vld [vmem:[%s269 + $0x170] sm:%s262]
                %392 = vst [vmem:[%s270 + $0xf0] sm:%s262] %v391
                %v393 = vld [vmem:[%s269 + $0x174] sm:%s262]
                %394 = vst [vmem:[%s270 + $0xf4] sm:%s262] %v393
                %v395 = vld [vmem:[%s269 + $0x178] sm:%s262]
                %396 = vst [vmem:[%s270 + $0xf8] sm:%s262] %v395
                %v397 = vld [vmem:[%s269 + $0x17c] sm:%s262]
                %398 = vst [vmem:[%s270 + $0xfc] sm:%s262] %v397
                %v399 = vld [vmem:[%s269 + $0x200] sm:%s262]
                %400 = vst [vmem:[%s270 + $0x100] sm:%s262] %v399
                %v401 = vld [vmem:[%s269 + $0x204] sm:%s262]
                %402 = vst [vmem:[%s270 + $0x104] sm:%s262] %v401
                %v403 = vld [vmem:[%s269 + $0x208] sm:%s262]
                %404 = vst [vmem:[%s270 + $0x108] sm:%s262] %v403
                %v405 = vld [vmem:[%s269 + $0x20c] sm:%s262]
                %406 = vst [vmem:[%s270 + $0x10c] sm:%s262] %v405
                %v407 = vld [vmem:[%s269 + $0x210] sm:%s262]
                %408 = vst [vmem:[%s270 + $0x110] sm:%s262] %v407
                %v409 = vld [vmem:[%s269 + $0x214] sm:%s262]
                %410 = vst [vmem:[%s270 + $0x114] sm:%s262] %v409
                %v411 = vld [vmem:[%s269 + $0x218] sm:%s262]
                %412 = vst [vmem:[%s270 + $0x118] sm:%s262] %v411
                %v413 = vld [vmem:[%s269 + $0x21c] sm:%s262]
                %414 = vst [vmem:[%s270 + $0x11c] sm:%s262] %v413
                %v415 = vld [vmem:[%s269 + $0x220] sm:%s262]
                %416 = vst [vmem:[%s270 + $0x120] sm:%s262] %v415
                %v417 = vld [vmem:[%s269 + $0x224] sm:%s262]
                %418 = vst [vmem:[%s270 + $0x124] sm:%s262] %v417
                %v419 = vld [vmem:[%s269 + $0x228] sm:%s262]
                %420 = vst [vmem:[%s270 + $0x128] sm:%s262] %v419
                %v421 = vld [vmem:[%s269 + $0x22c] sm:%s262]
                %422 = vst [vmem:[%s270 + $0x12c] sm:%s262] %v421
                %v423 = vld [vmem:[%s269 + $0x230] sm:%s262]
                %424 = vst [vmem:[%s270 + $0x130] sm:%s262] %v423
                %v425 = vld [vmem:[%s269 + $0x234] sm:%s262]
                %426 = vst [vmem:[%s270 + $0x134] sm:%s262] %v425
                %v427 = vld [vmem:[%s269 + $0x238] sm:%s262]
                %428 = vst [vmem:[%s270 + $0x138] sm:%s262] %v427
                %v429 = vld [vmem:[%s269 + $0x23c] sm:%s262]
                %430 = vst [vmem:[%s270 + $0x13c] sm:%s262] %v429
                %v431 = vld [vmem:[%s269 + $0x240] sm:%s262]
                %432 = vst [vmem:[%s270 + $0x140] sm:%s262] %v431
                %v433 = vld [vmem:[%s269 + $0x244] sm:%s262]
                %434 = vst [vmem:[%s270 + $0x144] sm:%s262] %v433
                %v435 = vld [vmem:[%s269 + $0x248] sm:%s262]
                %436 = vst [vmem:[%s270 + $0x148] sm:%s262] %v435
                %v437 = vld [vmem:[%s269 + $0x24c] sm:%s262]
                %438 = vst [vmem:[%s270 + $0x14c] sm:%s262] %v437
                %v439 = vld [vmem:[%s269 + $0x250] sm:%s262]
                %440 = vst [vmem:[%s270 + $0x150] sm:%s262] %v439
                %v441 = vld [vmem:[%s269 + $0x254] sm:%s262]
                %442 = vst [vmem:[%s270 + $0x154] sm:%s262] %v441
                %v443 = vld [vmem:[%s269 + $0x258] sm:%s262]
                %444 = vst [vmem:[%s270 + $0x158] sm:%s262] %v443
                %v445 = vld [vmem:[%s269 + $0x25c] sm:%s262]
                %446 = vst [vmem:[%s270 + $0x15c] sm:%s262] %v445
                %v447 = vld [vmem:[%s269 + $0x260] sm:%s262]
                %448 = vst [vmem:[%s270 + $0x160] sm:%s262] %v447
                %v449 = vld [vmem:[%s269 + $0x264] sm:%s262]
                %450 = vst [vmem:[%s270 + $0x164] sm:%s262] %v449
                %v451 = vld [vmem:[%s269 + $0x268] sm:%s262]
                %452 = vst [vmem:[%s270 + $0x168] sm:%s262] %v451
                %v453 = vld [vmem:[%s269 + $0x26c] sm:%s262]
                %454 = vst [vmem:[%s270 + $0x16c] sm:%s262] %v453
                %v455 = vld [vmem:[%s269 + $0x270] sm:%s262]
                %456 = vst [vmem:[%s270 + $0x170] sm:%s262] %v455
                %v457 = vld [vmem:[%s269 + $0x274] sm:%s262]
                %458 = vst [vmem:[%s270 + $0x174] sm:%s262] %v457
                %v459 = vld [vmem:[%s269 + $0x278] sm:%s262]
                %460 = vst [vmem:[%s270 + $0x178] sm:%s262] %v459
                %v461 = vld [vmem:[%s269 + $0x27c] sm:%s262]
                %462 = vst [vmem:[%s270 + $0x17c] sm:%s262] %v461
                %v463 = vld [vmem:[%s269 + $0x300] sm:%s262]
                %464 = vst [vmem:[%s270 + $0x180] sm:%s262] %v463
                %v465 = vld [vmem:[%s269 + $0x304] sm:%s262]
                %466 = vst [vmem:[%s270 + $0x184] sm:%s262] %v465
                %v467 = vld [vmem:[%s269 + $0x308] sm:%s262]
                %468 = vst [vmem:[%s270 + $0x188] sm:%s262] %v467
                %v469 = vld [vmem:[%s269 + $0x30c] sm:%s262]
                %470 = vst [vmem:[%s270 + $0x18c] sm:%s262] %v469
                %v471 = vld [vmem:[%s269 + $0x310] sm:%s262]
                %472 = vst [vmem:[%s270 + $0x190] sm:%s262] %v471
                %v473 = vld [vmem:[%s269 + $0x314] sm:%s262]
                %474 = vst [vmem:[%s270 + $0x194] sm:%s262] %v473
                %v475 = vld [vmem:[%s269 + $0x318] sm:%s262]
                %476 = vst [vmem:[%s270 + $0x198] sm:%s262] %v475
                %v477 = vld [vmem:[%s269 + $0x31c] sm:%s262]
                %478 = vst [vmem:[%s270 + $0x19c] sm:%s262] %v477
                %v479 = vld [vmem:[%s269 + $0x320] sm:%s262]
                %480 = vst [vmem:[%s270 + $0x1a0] sm:%s262] %v479
                %v481 = vld [vmem:[%s269 + $0x324] sm:%s262]
                %482 = vst [vmem:[%s270 + $0x1a4] sm:%s262] %v481
                %v483 = vld [vmem:[%s269 + $0x328] sm:%s262]
                %484 = vst [vmem:[%s270 + $0x1a8] sm:%s262] %v483
                %v485 = vld [vmem:[%s269 + $0x32c] sm:%s262]
                %486 = vst [vmem:[%s270 + $0x1ac] sm:%s262] %v485
                %v487 = vld [vmem:[%s269 + $0x330] sm:%s262]
                %488 = vst [vmem:[%s270 + $0x1b0] sm:%s262] %v487
                %v489 = vld [vmem:[%s269 + $0x334] sm:%s262]
                %490 = vst [vmem:[%s270 + $0x1b4] sm:%s262] %v489
                %v491 = vld [vmem:[%s269 + $0x338] sm:%s262]
                %492 = vst [vmem:[%s270 + $0x1b8] sm:%s262] %v491
                %v493 = vld [vmem:[%s269 + $0x33c] sm:%s262]
                %494 = vst [vmem:[%s270 + $0x1bc] sm:%s262] %v493
                %v495 = vld [vmem:[%s269 + $0x340] sm:%s262]
                %496 = vst [vmem:[%s270 + $0x1c0] sm:%s262] %v495
                %v497 = vld [vmem:[%s269 + $0x344] sm:%s262]
                %498 = vst [vmem:[%s270 + $0x1c4] sm:%s262] %v497
                %v499 = vld [vmem:[%s269 + $0x348] sm:%s262]
                %500 = vst [vmem:[%s270 + $0x1c8] sm:%s262] %v499
                %v501 = vld [vmem:[%s269 + $0x34c] sm:%s262]
                %502 = vst [vmem:[%s270 + $0x1cc] sm:%s262] %v501
                %v503 = vld [vmem:[%s269 + $0x350] sm:%s262]
                %504 = vst [vmem:[%s270 + $0x1d0] sm:%s262] %v503
                %v505 = vld [vmem:[%s269 + $0x354] sm:%s262]
                %506 = vst [vmem:[%s270 + $0x1d4] sm:%s262] %v505
                %v507 = vld [vmem:[%s269 + $0x358] sm:%s262]
                %508 = vst [vmem:[%s270 + $0x1d8] sm:%s262] %v507
                %v509 = vld [vmem:[%s269 + $0x35c] sm:%s262]
                %510 = vst [vmem:[%s270 + $0x1dc] sm:%s262] %v509
                %v511 = vld [vmem:[%s269 + $0x360] sm:%s262]
                %512 = vst [vmem:[%s270 + $0x1e0] sm:%s262] %v511
                %v513 = vld [vmem:[%s269 + $0x364] sm:%s262]
                %514 = vst [vmem:[%s270 + $0x1e4] sm:%s262] %v513
                %v515 = vld [vmem:[%s269 + $0x368] sm:%s262]
                %516 = vst [vmem:[%s270 + $0x1e8] sm:%s262] %v515
                %v517 = vld [vmem:[%s269 + $0x36c] sm:%s262]
                %518 = vst [vmem:[%s270 + $0x1ec] sm:%s262] %v517
                %v519 = vld [vmem:[%s269 + $0x370] sm:%s262]
                %520 = vst [vmem:[%s270 + $0x1f0] sm:%s262] %v519
                %v521 = vld [vmem:[%s269 + $0x374] sm:%s262]
                %522 = vst [vmem:[%s270 + $0x1f4] sm:%s262] %v521
                %v523 = vld [vmem:[%s269 + $0x378] sm:%s262]
                %524 = vst [vmem:[%s270 + $0x1f8] sm:%s262] %v523
                %v525 = vld [vmem:[%s269 + $0x37c] sm:%s262]
                %526 = vst [vmem:[%s270 + $0x1fc] sm:%s262] %v525
                %v527 = vld [vmem:[%s269 + $0x400] sm:%s262]
                %528 = vst [vmem:[%s270 + $0x200] sm:%s262] %v527
                %v529 = vld [vmem:[%s269 + $0x404] sm:%s262]
                %530 = vst [vmem:[%s270 + $0x204] sm:%s262] %v529
                %v531 = vld [vmem:[%s269 + $0x408] sm:%s262]
                %532 = vst [vmem:[%s270 + $0x208] sm:%s262] %v531
                %v533 = vld [vmem:[%s269 + $0x40c] sm:%s262]
                %534 = vst [vmem:[%s270 + $0x20c] sm:%s262] %v533
                %v535 = vld [vmem:[%s269 + $0x410] sm:%s262]
                %536 = vst [vmem:[%s270 + $0x210] sm:%s262] %v535
                %v537 = vld [vmem:[%s269 + $0x414] sm:%s262]
                %538 = vst [vmem:[%s270 + $0x214] sm:%s262] %v537
                %v539 = vld [vmem:[%s269 + $0x418] sm:%s262]
                %540 = vst [vmem:[%s270 + $0x218] sm:%s262] %v539
                %v541 = vld [vmem:[%s269 + $0x41c] sm:%s262]
                %542 = vst [vmem:[%s270 + $0x21c] sm:%s262] %v541
                %v543 = vld [vmem:[%s269 + $0x420] sm:%s262]
                %544 = vst [vmem:[%s270 + $0x220] sm:%s262] %v543
                %v545 = vld [vmem:[%s269 + $0x424] sm:%s262]
                %546 = vst [vmem:[%s270 + $0x224] sm:%s262] %v545
                %v547 = vld [vmem:[%s269 + $0x428] sm:%s262]
                %548 = vst [vmem:[%s270 + $0x228] sm:%s262] %v547
                %v549 = vld [vmem:[%s269 + $0x42c] sm:%s262]
                %550 = vst [vmem:[%s270 + $0x22c] sm:%s262] %v549
                %v551 = vld [vmem:[%s269 + $0x430] sm:%s262]
                %552 = vst [vmem:[%s270 + $0x230] sm:%s262] %v551
                %v553 = vld [vmem:[%s269 + $0x434] sm:%s262]
                %554 = vst [vmem:[%s270 + $0x234] sm:%s262] %v553
                %v555 = vld [vmem:[%s269 + $0x438] sm:%s262]
                %556 = vst [vmem:[%s270 + $0x238] sm:%s262] %v555
                %v557 = vld [vmem:[%s269 + $0x43c] sm:%s262]
                %558 = vst [vmem:[%s270 + $0x23c] sm:%s262] %v557
                %v559 = vld [vmem:[%s269 + $0x440] sm:%s262]
                %560 = vst [vmem:[%s270 + $0x240] sm:%s262] %v559
                %v561 = vld [vmem:[%s269 + $0x444] sm:%s262]
                %562 = vst [vmem:[%s270 + $0x244] sm:%s262] %v561
                %v563 = vld [vmem:[%s269 + $0x448] sm:%s262]
                %564 = vst [vmem:[%s270 + $0x248] sm:%s262] %v563
                %v565 = vld [vmem:[%s269 + $0x44c] sm:%s262]
                %566 = vst [vmem:[%s270 + $0x24c] sm:%s262] %v565
                %v567 = vld [vmem:[%s269 + $0x450] sm:%s262]
                %568 = vst [vmem:[%s270 + $0x250] sm:%s262] %v567
                %v569 = vld [vmem:[%s269 + $0x454] sm:%s262]
                %570 = vst [vmem:[%s270 + $0x254] sm:%s262] %v569
                %v571 = vld [vmem:[%s269 + $0x458] sm:%s262]
                %572 = vst [vmem:[%s270 + $0x258] sm:%s262] %v571
                %v573 = vld [vmem:[%s269 + $0x45c] sm:%s262]
                %574 = vst [vmem:[%s270 + $0x25c] sm:%s262] %v573
                %v575 = vld [vmem:[%s269 + $0x460] sm:%s262]
                %576 = vst [vmem:[%s270 + $0x260] sm:%s262] %v575
                %v577 = vld [vmem:[%s269 + $0x464] sm:%s262]
                %578 = vst [vmem:[%s270 + $0x264] sm:%s262] %v577
                %v579 = vld [vmem:[%s269 + $0x468] sm:%s262]
                %580 = vst [vmem:[%s270 + $0x268] sm:%s262] %v579
                %v581 = vld [vmem:[%s269 + $0x46c] sm:%s262]
                %582 = vst [vmem:[%s270 + $0x26c] sm:%s262] %v581
                %v583 = vld [vmem:[%s269 + $0x470] sm:%s262]
                %584 = vst [vmem:[%s270 + $0x270] sm:%s262] %v583
                %v585 = vld [vmem:[%s269 + $0x474] sm:%s262]
                %586 = vst [vmem:[%s270 + $0x274] sm:%s262] %v585
                %v587 = vld [vmem:[%s269 + $0x478] sm:%s262]
                %588 = vst [vmem:[%s270 + $0x278] sm:%s262] %v587
                %v589 = vld [vmem:[%s269 + $0x47c] sm:%s262]
                %590 = vst [vmem:[%s270 + $0x27c] sm:%s262] %v589
                %v591 = vld [vmem:[%s269 + $0x500] sm:%s262]
                %592 = vst [vmem:[%s270 + $0x280] sm:%s262] %v591
                %v593 = vld [vmem:[%s269 + $0x504] sm:%s262]
                %594 = vst [vmem:[%s270 + $0x284] sm:%s262] %v593
                %v595 = vld [vmem:[%s269 + $0x508] sm:%s262]
                %596 = vst [vmem:[%s270 + $0x288] sm:%s262] %v595
                %v597 = vld [vmem:[%s269 + $0x50c] sm:%s262]
                %598 = vst [vmem:[%s270 + $0x28c] sm:%s262] %v597
                %v599 = vld [vmem:[%s269 + $0x510] sm:%s262]
                %600 = vst [vmem:[%s270 + $0x290] sm:%s262] %v599
                %v601 = vld [vmem:[%s269 + $0x514] sm:%s262]
                %602 = vst [vmem:[%s270 + $0x294] sm:%s262] %v601
                %v603 = vld [vmem:[%s269 + $0x518] sm:%s262]
                %604 = vst [vmem:[%s270 + $0x298] sm:%s262] %v603
                %v605 = vld [vmem:[%s269 + $0x51c] sm:%s262]
                %606 = vst [vmem:[%s270 + $0x29c] sm:%s262] %v605
                %v607 = vld [vmem:[%s269 + $0x520] sm:%s262]
                %608 = vst [vmem:[%s270 + $0x2a0] sm:%s262] %v607
                %v609 = vld [vmem:[%s269 + $0x524] sm:%s262]
                %610 = vst [vmem:[%s270 + $0x2a4] sm:%s262] %v609
                %v611 = vld [vmem:[%s269 + $0x528] sm:%s262]
                %612 = vst [vmem:[%s270 + $0x2a8] sm:%s262] %v611
                %v613 = vld [vmem:[%s269 + $0x52c] sm:%s262]
                %614 = vst [vmem:[%s270 + $0x2ac] sm:%s262] %v613
                %v615 = vld [vmem:[%s269 + $0x530] sm:%s262]
                %616 = vst [vmem:[%s270 + $0x2b0] sm:%s262] %v615
                %v617 = vld [vmem:[%s269 + $0x534] sm:%s262]
                %618 = vst [vmem:[%s270 + $0x2b4] sm:%s262] %v617
                %v619 = vld [vmem:[%s269 + $0x538] sm:%s262]
                %620 = vst [vmem:[%s270 + $0x2b8] sm:%s262] %v619
                %v621 = vld [vmem:[%s269 + $0x53c] sm:%s262]
                %622 = vst [vmem:[%s270 + $0x2bc] sm:%s262] %v621
                %v623 = vld [vmem:[%s269 + $0x540] sm:%s262]
                %624 = vst [vmem:[%s270 + $0x2c0] sm:%s262] %v623
                %v625 = vld [vmem:[%s269 + $0x544] sm:%s262]
                %626 = vst [vmem:[%s270 + $0x2c4] sm:%s262] %v625
                %v627 = vld [vmem:[%s269 + $0x548] sm:%s262]
                %628 = vst [vmem:[%s270 + $0x2c8] sm:%s262] %v627
                %v629 = vld [vmem:[%s269 + $0x54c] sm:%s262]
                %630 = vst [vmem:[%s270 + $0x2cc] sm:%s262] %v629
                %v631 = vld [vmem:[%s269 + $0x550] sm:%s262]
                %632 = vst [vmem:[%s270 + $0x2d0] sm:%s262] %v631
                %v633 = vld [vmem:[%s269 + $0x554] sm:%s262]
                %634 = vst [vmem:[%s270 + $0x2d4] sm:%s262] %v633
                %v635 = vld [vmem:[%s269 + $0x558] sm:%s262]
                %636 = vst [vmem:[%s270 + $0x2d8] sm:%s262] %v635
                %v637 = vld [vmem:[%s269 + $0x55c] sm:%s262]
                %638 = vst [vmem:[%s270 + $0x2dc] sm:%s262] %v637
                %v639 = vld [vmem:[%s269 + $0x560] sm:%s262]
                %640 = vst [vmem:[%s270 + $0x2e0] sm:%s262] %v639
                %v641 = vld [vmem:[%s269 + $0x564] sm:%s262]
                %642 = vst [vmem:[%s270 + $0x2e4] sm:%s262] %v641
                %v643 = vld [vmem:[%s269 + $0x568] sm:%s262]
                %644 = vst [vmem:[%s270 + $0x2e8] sm:%s262] %v643
                %v645 = vld [vmem:[%s269 + $0x56c] sm:%s262]
                %646 = vst [vmem:[%s270 + $0x2ec] sm:%s262] %v645
                %v647 = vld [vmem:[%s269 + $0x570] sm:%s262]
                %648 = vst [vmem:[%s270 + $0x2f0] sm:%s262] %v647
                %v649 = vld [vmem:[%s269 + $0x574] sm:%s262]
                %650 = vst [vmem:[%s270 + $0x2f4] sm:%s262] %v649
                %v651 = vld [vmem:[%s269 + $0x578] sm:%s262]
                %652 = vst [vmem:[%s270 + $0x2f8] sm:%s262] %v651
                %v653 = vld [vmem:[%s269 + $0x57c] sm:%s262]
                %654 = vst [vmem:[%s270 + $0x2fc] sm:%s262] %v653
                %v655 = vld [vmem:[%s269 + $0x600] sm:%s262]
                %656 = vst [vmem:[%s270 + $0x300] sm:%s262] %v655
                %v657 = vld [vmem:[%s269 + $0x604] sm:%s262]
                %658 = vst [vmem:[%s270 + $0x304] sm:%s262] %v657
                %v659 = vld [vmem:[%s269 + $0x608] sm:%s262]
                %660 = vst [vmem:[%s270 + $0x308] sm:%s262] %v659
                %v661 = vld [vmem:[%s269 + $0x60c] sm:%s262]
                %662 = vst [vmem:[%s270 + $0x30c] sm:%s262] %v661
                %v663 = vld [vmem:[%s269 + $0x610] sm:%s262]
                %664 = vst [vmem:[%s270 + $0x310] sm:%s262] %v663
                %v665 = vld [vmem:[%s269 + $0x614] sm:%s262]
                %666 = vst [vmem:[%s270 + $0x314] sm:%s262] %v665
                %v667 = vld [vmem:[%s269 + $0x618] sm:%s262]
                %668 = vst [vmem:[%s270 + $0x318] sm:%s262] %v667
                %v669 = vld [vmem:[%s269 + $0x61c] sm:%s262]
                %670 = vst [vmem:[%s270 + $0x31c] sm:%s262] %v669
                %v671 = vld [vmem:[%s269 + $0x620] sm:%s262]
                %672 = vst [vmem:[%s270 + $0x320] sm:%s262] %v671
                %v673 = vld [vmem:[%s269 + $0x624] sm:%s262]
                %674 = vst [vmem:[%s270 + $0x324] sm:%s262] %v673
                %v675 = vld [vmem:[%s269 + $0x628] sm:%s262]
                %676 = vst [vmem:[%s270 + $0x328] sm:%s262] %v675
                %v677 = vld [vmem:[%s269 + $0x62c] sm:%s262]
                %678 = vst [vmem:[%s270 + $0x32c] sm:%s262] %v677
                %v679 = vld [vmem:[%s269 + $0x630] sm:%s262]
                %680 = vst [vmem:[%s270 + $0x330] sm:%s262] %v679
                %v681 = vld [vmem:[%s269 + $0x634] sm:%s262]
                %682 = vst [vmem:[%s270 + $0x334] sm:%s262] %v681
                %v683 = vld [vmem:[%s269 + $0x638] sm:%s262]
                %684 = vst [vmem:[%s270 + $0x338] sm:%s262] %v683
                %v685 = vld [vmem:[%s269 + $0x63c] sm:%s262]
                %686 = vst [vmem:[%s270 + $0x33c] sm:%s262] %v685
                %v687 = vld [vmem:[%s269 + $0x640] sm:%s262]
                %688 = vst [vmem:[%s270 + $0x340] sm:%s262] %v687
                %v689 = vld [vmem:[%s269 + $0x644] sm:%s262]
                %690 = vst [vmem:[%s270 + $0x344] sm:%s262] %v689
                %v691 = vld [vmem:[%s269 + $0x648] sm:%s262]
                %692 = vst [vmem:[%s270 + $0x348] sm:%s262] %v691
                %v693 = vld [vmem:[%s269 + $0x64c] sm:%s262]
                %694 = vst [vmem:[%s270 + $0x34c] sm:%s262] %v693
                %v695 = vld [vmem:[%s269 + $0x650] sm:%s262]
                %696 = vst [vmem:[%s270 + $0x350] sm:%s262] %v695
                %v697 = vld [vmem:[%s269 + $0x654] sm:%s262]
                %698 = vst [vmem:[%s270 + $0x354] sm:%s262] %v697
                %v699 = vld [vmem:[%s269 + $0x658] sm:%s262]
                %700 = vst [vmem:[%s270 + $0x358] sm:%s262] %v699
                %v701 = vld [vmem:[%s269 + $0x65c] sm:%s262]
                %702 = vst [vmem:[%s270 + $0x35c] sm:%s262] %v701
                %v703 = vld [vmem:[%s269 + $0x660] sm:%s262]
                %704 = vst [vmem:[%s270 + $0x360] sm:%s262] %v703
                %v705 = vld [vmem:[%s269 + $0x664] sm:%s262]
                %706 = vst [vmem:[%s270 + $0x364] sm:%s262] %v705
                %v707 = vld [vmem:[%s269 + $0x668] sm:%s262]
                %708 = vst [vmem:[%s270 + $0x368] sm:%s262] %v707
                %v709 = vld [vmem:[%s269 + $0x66c] sm:%s262]
                %710 = vst [vmem:[%s270 + $0x36c] sm:%s262] %v709
                %v711 = vld [vmem:[%s269 + $0x670] sm:%s262]
                %712 = vst [vmem:[%s270 + $0x370] sm:%s262] %v711
                %v713 = vld [vmem:[%s269 + $0x674] sm:%s262]
                %714 = vst [vmem:[%s270 + $0x374] sm:%s262] %v713
                %v715 = vld [vmem:[%s269 + $0x678] sm:%s262]
                %716 = vst [vmem:[%s270 + $0x378] sm:%s262] %v715
                %v717 = vld [vmem:[%s269 + $0x67c] sm:%s262]
                %718 = vst [vmem:[%s270 + $0x37c] sm:%s262] %v717
                %v719 = vld [vmem:[%s269 + $0x700] sm:%s262]
                %720 = vst [vmem:[%s270 + $0x380] sm:%s262] %v719
                %v721 = vld [vmem:[%s269 + $0x704] sm:%s262]
                %722 = vst [vmem:[%s270 + $0x384] sm:%s262] %v721
                %v723 = vld [vmem:[%s269 + $0x708] sm:%s262]
                %724 = vst [vmem:[%s270 + $0x388] sm:%s262] %v723
                %v725 = vld [vmem:[%s269 + $0x70c] sm:%s262]
                %726 = vst [vmem:[%s270 + $0x38c] sm:%s262] %v725
                %v727 = vld [vmem:[%s269 + $0x710] sm:%s262]
                %728 = vst [vmem:[%s270 + $0x390] sm:%s262] %v727
                %v729 = vld [vmem:[%s269 + $0x714] sm:%s262]
                %730 = vst [vmem:[%s270 + $0x394] sm:%s262] %v729
                %v731 = vld [vmem:[%s269 + $0x718] sm:%s262]
                %732 = vst [vmem:[%s270 + $0x398] sm:%s262] %v731
                %v733 = vld [vmem:[%s269 + $0x71c] sm:%s262]
                %734 = vst [vmem:[%s270 + $0x39c] sm:%s262] %v733
                %v735 = vld [vmem:[%s269 + $0x720] sm:%s262]
                %736 = vst [vmem:[%s270 + $0x3a0] sm:%s262] %v735
                %v737 = vld [vmem:[%s269 + $0x724] sm:%s262]
                %738 = vst [vmem:[%s270 + $0x3a4] sm:%s262] %v737
                %v739 = vld [vmem:[%s269 + $0x728] sm:%s262]
                %740 = vst [vmem:[%s270 + $0x3a8] sm:%s262] %v739
                %v741 = vld [vmem:[%s269 + $0x72c] sm:%s262]
                %742 = vst [vmem:[%s270 + $0x3ac] sm:%s262] %v741
                %v743 = vld [vmem:[%s269 + $0x730] sm:%s262]
                %744 = vst [vmem:[%s270 + $0x3b0] sm:%s262] %v743
                %v745 = vld [vmem:[%s269 + $0x734] sm:%s262]
                %746 = vst [vmem:[%s270 + $0x3b4] sm:%s262] %v745
                %v747 = vld [vmem:[%s269 + $0x738] sm:%s262]
                %748 = vst [vmem:[%s270 + $0x3b8] sm:%s262] %v747
                %v749 = vld [vmem:[%s269 + $0x73c] sm:%s262]
                %750 = vst [vmem:[%s270 + $0x3bc] sm:%s262] %v749
                %v751 = vld [vmem:[%s269 + $0x740] sm:%s262]
                %752 = vst [vmem:[%s270 + $0x3c0] sm:%s262] %v751
                %v753 = vld [vmem:[%s269 + $0x744] sm:%s262]
                %754 = vst [vmem:[%s270 + $0x3c4] sm:%s262] %v753
                %v755 = vld [vmem:[%s269 + $0x748] sm:%s262]
                %756 = vst [vmem:[%s270 + $0x3c8] sm:%s262] %v755
                %v757 = vld [vmem:[%s269 + $0x74c] sm:%s262]
                %758 = vst [vmem:[%s270 + $0x3cc] sm:%s262] %v757
                %v759 = vld [vmem:[%s269 + $0x750] sm:%s262]
                %760 = vst [vmem:[%s270 + $0x3d0] sm:%s262] %v759
                %v761 = vld [vmem:[%s269 + $0x754] sm:%s262]
                %762 = vst [vmem:[%s270 + $0x3d4] sm:%s262] %v761
                %v763 = vld [vmem:[%s269 + $0x758] sm:%s262]
                %764 = vst [vmem:[%s270 + $0x3d8] sm:%s262] %v763
                %v765 = vld [vmem:[%s269 + $0x75c] sm:%s262]
                %766 = vst [vmem:[%s270 + $0x3dc] sm:%s262] %v765
                %v767 = vld [vmem:[%s269 + $0x760] sm:%s262]
                %768 = vst [vmem:[%s270 + $0x3e0] sm:%s262] %v767
                %v769 = vld [vmem:[%s269 + $0x764] sm:%s262]
                %770 = vst [vmem:[%s270 + $0x3e4] sm:%s262] %v769
                %v771 = vld [vmem:[%s269 + $0x768] sm:%s262]
                %772 = vst [vmem:[%s270 + $0x3e8] sm:%s262] %v771
                %v773 = vld [vmem:[%s269 + $0x76c] sm:%s262]
                %774 = vst [vmem:[%s270 + $0x3ec] sm:%s262] %v773
                %v775 = vld [vmem:[%s269 + $0x770] sm:%s262]
                %776 = vst [vmem:[%s270 + $0x3f0] sm:%s262] %v775
                %v777 = vld [vmem:[%s269 + $0x774] sm:%s262]
                %778 = vst [vmem:[%s270 + $0x3f4] sm:%s262] %v777
                %v779 = vld [vmem:[%s269 + $0x778] sm:%s262]
                %780 = vst [vmem:[%s270 + $0x3f8] sm:%s262] %v779
                %v781 = vld [vmem:[%s269 + $0x77c] sm:%s262]
                %782 = vst [vmem:[%s270 + $0x3fc] sm:%s262] %v781
                %v783 = vld [vmem:[%s269 + $0x800] sm:%s262]
                %784 = vst [vmem:[%s270 + $0x400] sm:%s262] %v783
                %v785 = vld [vmem:[%s269 + $0x804] sm:%s262]
                %786 = vst [vmem:[%s270 + $0x404] sm:%s262] %v785
                %v787 = vld [vmem:[%s269 + $0x808] sm:%s262]
                %788 = vst [vmem:[%s270 + $0x408] sm:%s262] %v787
                %v789 = vld [vmem:[%s269 + $0x80c] sm:%s262]
                %790 = vst [vmem:[%s270 + $0x40c] sm:%s262] %v789
                %v791 = vld [vmem:[%s269 + $0x810] sm:%s262]
                %792 = vst [vmem:[%s270 + $0x410] sm:%s262] %v791
                %v793 = vld [vmem:[%s269 + $0x814] sm:%s262]
                %794 = vst [vmem:[%s270 + $0x414] sm:%s262] %v793
                %v795 = vld [vmem:[%s269 + $0x818] sm:%s262]
                %796 = vst [vmem:[%s270 + $0x418] sm:%s262] %v795
                %v797 = vld [vmem:[%s269 + $0x81c] sm:%s262]
                %798 = vst [vmem:[%s270 + $0x41c] sm:%s262] %v797
                %v799 = vld [vmem:[%s269 + $0x820] sm:%s262]
                %800 = vst [vmem:[%s270 + $0x420] sm:%s262] %v799
                %v801 = vld [vmem:[%s269 + $0x824] sm:%s262]
                %802 = vst [vmem:[%s270 + $0x424] sm:%s262] %v801
                %v803 = vld [vmem:[%s269 + $0x828] sm:%s262]
                %804 = vst [vmem:[%s270 + $0x428] sm:%s262] %v803
                %v805 = vld [vmem:[%s269 + $0x82c] sm:%s262]
                %806 = vst [vmem:[%s270 + $0x42c] sm:%s262] %v805
                %v807 = vld [vmem:[%s269 + $0x830] sm:%s262]
                %808 = vst [vmem:[%s270 + $0x430] sm:%s262] %v807
                %v809 = vld [vmem:[%s269 + $0x834] sm:%s262]
                %810 = vst [vmem:[%s270 + $0x434] sm:%s262] %v809
                %v811 = vld [vmem:[%s269 + $0x838] sm:%s262]
                %812 = vst [vmem:[%s270 + $0x438] sm:%s262] %v811
                %v813 = vld [vmem:[%s269 + $0x83c] sm:%s262]
                %814 = vst [vmem:[%s270 + $0x43c] sm:%s262] %v813
                %v815 = vld [vmem:[%s269 + $0x840] sm:%s262]
                %816 = vst [vmem:[%s270 + $0x440] sm:%s262] %v815
                %v817 = vld [vmem:[%s269 + $0x844] sm:%s262]
                %818 = vst [vmem:[%s270 + $0x444] sm:%s262] %v817
                %v819 = vld [vmem:[%s269 + $0x848] sm:%s262]
                %820 = vst [vmem:[%s270 + $0x448] sm:%s262] %v819
                %v821 = vld [vmem:[%s269 + $0x84c] sm:%s262]
                %822 = vst [vmem:[%s270 + $0x44c] sm:%s262] %v821
                %v823 = vld [vmem:[%s269 + $0x850] sm:%s262]
                %824 = vst [vmem:[%s270 + $0x450] sm:%s262] %v823
                %v825 = vld [vmem:[%s269 + $0x854] sm:%s262]
                %826 = vst [vmem:[%s270 + $0x454] sm:%s262] %v825
                %v827 = vld [vmem:[%s269 + $0x858] sm:%s262]
                %828 = vst [vmem:[%s270 + $0x458] sm:%s262] %v827
                %v829 = vld [vmem:[%s269 + $0x85c] sm:%s262]
                %830 = vst [vmem:[%s270 + $0x45c] sm:%s262] %v829
                %v831 = vld [vmem:[%s269 + $0x860] sm:%s262]
                %832 = vst [vmem:[%s270 + $0x460] sm:%s262] %v831
                %v833 = vld [vmem:[%s269 + $0x864] sm:%s262]
                %834 = vst [vmem:[%s270 + $0x464] sm:%s262] %v833
                %v835 = vld [vmem:[%s269 + $0x868] sm:%s262]
                %836 = vst [vmem:[%s270 + $0x468] sm:%s262] %v835
                %v837 = vld [vmem:[%s269 + $0x86c] sm:%s262]
                %838 = vst [vmem:[%s270 + $0x46c] sm:%s262] %v837
                %v839 = vld [vmem:[%s269 + $0x870] sm:%s262]
                %840 = vst [vmem:[%s270 + $0x470] sm:%s262] %v839
                %v841 = vld [vmem:[%s269 + $0x874] sm:%s262]
                %842 = vst [vmem:[%s270 + $0x474] sm:%s262] %v841
                %v843 = vld [vmem:[%s269 + $0x878] sm:%s262]
                %844 = vst [vmem:[%s270 + $0x478] sm:%s262] %v843
                %v845 = vld [vmem:[%s269 + $0x87c] sm:%s262]
                %846 = vst [vmem:[%s270 + $0x47c] sm:%s262] %v845
                %v847 = vld [vmem:[%s269 + $0x900] sm:%s262]
                %848 = vst [vmem:[%s270 + $0x480] sm:%s262] %v847
                %v849 = vld [vmem:[%s269 + $0x904] sm:%s262]
                %850 = vst [vmem:[%s270 + $0x484] sm:%s262] %v849
                %v851 = vld [vmem:[%s269 + $0x908] sm:%s262]
                %852 = vst [vmem:[%s270 + $0x488] sm:%s262] %v851
                %v853 = vld [vmem:[%s269 + $0x90c] sm:%s262]
                %854 = vst [vmem:[%s270 + $0x48c] sm:%s262] %v853
                %v855 = vld [vmem:[%s269 + $0x910] sm:%s262]
                %856 = vst [vmem:[%s270 + $0x490] sm:%s262] %v855
                %v857 = vld [vmem:[%s269 + $0x914] sm:%s262]
                %858 = vst [vmem:[%s270 + $0x494] sm:%s262] %v857
                %v859 = vld [vmem:[%s269 + $0x918] sm:%s262]
                %860 = vst [vmem:[%s270 + $0x498] sm:%s262] %v859
                %v861 = vld [vmem:[%s269 + $0x91c] sm:%s262]
                %862 = vst [vmem:[%s270 + $0x49c] sm:%s262] %v861
                %v863 = vld [vmem:[%s269 + $0x920] sm:%s262]
                %864 = vst [vmem:[%s270 + $0x4a0] sm:%s262] %v863
                %v865 = vld [vmem:[%s269 + $0x924] sm:%s262]
                %866 = vst [vmem:[%s270 + $0x4a4] sm:%s262] %v865
                %v867 = vld [vmem:[%s269 + $0x928] sm:%s262]
                %868 = vst [vmem:[%s270 + $0x4a8] sm:%s262] %v867
                %v869 = vld [vmem:[%s269 + $0x92c] sm:%s262]
                %870 = vst [vmem:[%s270 + $0x4ac] sm:%s262] %v869
                %v871 = vld [vmem:[%s269 + $0x930] sm:%s262]
                %872 = vst [vmem:[%s270 + $0x4b0] sm:%s262] %v871
                %v873 = vld [vmem:[%s269 + $0x934] sm:%s262]
                %874 = vst [vmem:[%s270 + $0x4b4] sm:%s262] %v873
                %v875 = vld [vmem:[%s269 + $0x938] sm:%s262]
                %876 = vst [vmem:[%s270 + $0x4b8] sm:%s262] %v875
                %v877 = vld [vmem:[%s269 + $0x93c] sm:%s262]
                %878 = vst [vmem:[%s270 + $0x4bc] sm:%s262] %v877
                %v879 = vld [vmem:[%s269 + $0x940] sm:%s262]
                %880 = vst [vmem:[%s270 + $0x4c0] sm:%s262] %v879
                %v881 = vld [vmem:[%s269 + $0x944] sm:%s262]
                %882 = vst [vmem:[%s270 + $0x4c4] sm:%s262] %v881
                %v883 = vld [vmem:[%s269 + $0x948] sm:%s262]
                %884 = vst [vmem:[%s270 + $0x4c8] sm:%s262] %v883
                %v885 = vld [vmem:[%s269 + $0x94c] sm:%s262]
                %886 = vst [vmem:[%s270 + $0x4cc] sm:%s262] %v885
                %v887 = vld [vmem:[%s269 + $0x950] sm:%s262]
                %888 = vst [vmem:[%s270 + $0x4d0] sm:%s262] %v887
                %v889 = vld [vmem:[%s269 + $0x954] sm:%s262]
                %890 = vst [vmem:[%s270 + $0x4d4] sm:%s262] %v889
                %v891 = vld [vmem:[%s269 + $0x958] sm:%s262]
                %892 = vst [vmem:[%s270 + $0x4d8] sm:%s262] %v891
                %v893 = vld [vmem:[%s269 + $0x95c] sm:%s262]
                %894 = vst [vmem:[%s270 + $0x4dc] sm:%s262] %v893
                %v895 = vld [vmem:[%s269 + $0x960] sm:%s262]
                %896 = vst [vmem:[%s270 + $0x4e0] sm:%s262] %v895
                %v897 = vld [vmem:[%s269 + $0x964] sm:%s262]
                %898 = vst [vmem:[%s270 + $0x4e4] sm:%s262] %v897
                %v899 = vld [vmem:[%s269 + $0x968] sm:%s262]
                %900 = vst [vmem:[%s270 + $0x4e8] sm:%s262] %v899
                %v901 = vld [vmem:[%s269 + $0x96c] sm:%s262]
                %902 = vst [vmem:[%s270 + $0x4ec] sm:%s262] %v901
                %v903 = vld [vmem:[%s269 + $0x970] sm:%s262]
                %904 = vst [vmem:[%s270 + $0x4f0] sm:%s262] %v903
                %v905 = vld [vmem:[%s269 + $0x974] sm:%s262]
                %906 = vst [vmem:[%s270 + $0x4f4] sm:%s262] %v905
                %v907 = vld [vmem:[%s269 + $0x978] sm:%s262]
                %908 = vst [vmem:[%s270 + $0x4f8] sm:%s262] %v907
                %v909 = vld [vmem:[%s269 + $0x97c] sm:%s262]
                %910 = vst [vmem:[%s270 + $0x4fc] sm:%s262] %v909
                %v911 = vld [vmem:[%s269 + $0xa00] sm:%s262]
                %912 = vst [vmem:[%s270 + $0x500] sm:%s262] %v911
                %v913 = vld [vmem:[%s269 + $0xa04] sm:%s262]
                %914 = vst [vmem:[%s270 + $0x504] sm:%s262] %v913
                %v915 = vld [vmem:[%s269 + $0xa08] sm:%s262]
                %916 = vst [vmem:[%s270 + $0x508] sm:%s262] %v915
                %v917 = vld [vmem:[%s269 + $0xa0c] sm:%s262]
                %918 = vst [vmem:[%s270 + $0x50c] sm:%s262] %v917
                %v919 = vld [vmem:[%s269 + $0xa10] sm:%s262]
                %920 = vst [vmem:[%s270 + $0x510] sm:%s262] %v919
                %v921 = vld [vmem:[%s269 + $0xa14] sm:%s262]
                %922 = vst [vmem:[%s270 + $0x514] sm:%s262] %v921
                %v923 = vld [vmem:[%s269 + $0xa18] sm:%s262]
                %924 = vst [vmem:[%s270 + $0x518] sm:%s262] %v923
                %v925 = vld [vmem:[%s269 + $0xa1c] sm:%s262]
                %926 = vst [vmem:[%s270 + $0x51c] sm:%s262] %v925
                %v927 = vld [vmem:[%s269 + $0xa20] sm:%s262]
                %928 = vst [vmem:[%s270 + $0x520] sm:%s262] %v927
                %v929 = vld [vmem:[%s269 + $0xa24] sm:%s262]
                %930 = vst [vmem:[%s270 + $0x524] sm:%s262] %v929
                %v931 = vld [vmem:[%s269 + $0xa28] sm:%s262]
                %932 = vst [vmem:[%s270 + $0x528] sm:%s262] %v931
                %v933 = vld [vmem:[%s269 + $0xa2c] sm:%s262]
                %934 = vst [vmem:[%s270 + $0x52c] sm:%s262] %v933
                %v935 = vld [vmem:[%s269 + $0xa30] sm:%s262]
                %936 = vst [vmem:[%s270 + $0x530] sm:%s262] %v935
                %v937 = vld [vmem:[%s269 + $0xa34] sm:%s262]
                %938 = vst [vmem:[%s270 + $0x534] sm:%s262] %v937
                %v939 = vld [vmem:[%s269 + $0xa38] sm:%s262]
                %940 = vst [vmem:[%s270 + $0x538] sm:%s262] %v939
                %v941 = vld [vmem:[%s269 + $0xa3c] sm:%s262]
                %942 = vst [vmem:[%s270 + $0x53c] sm:%s262] %v941
                %v943 = vld [vmem:[%s269 + $0xa40] sm:%s262]
                %944 = vst [vmem:[%s270 + $0x540] sm:%s262] %v943
                %v945 = vld [vmem:[%s269 + $0xa44] sm:%s262]
                %946 = vst [vmem:[%s270 + $0x544] sm:%s262] %v945
                %v947 = vld [vmem:[%s269 + $0xa48] sm:%s262]
                %948 = vst [vmem:[%s270 + $0x548] sm:%s262] %v947
                %v949 = vld [vmem:[%s269 + $0xa4c] sm:%s262]
                %950 = vst [vmem:[%s270 + $0x54c] sm:%s262] %v949
                %v951 = vld [vmem:[%s269 + $0xa50] sm:%s262]
                %952 = vst [vmem:[%s270 + $0x550] sm:%s262] %v951
                %v953 = vld [vmem:[%s269 + $0xa54] sm:%s262]
                %954 = vst [vmem:[%s270 + $0x554] sm:%s262] %v953
                %v955 = vld [vmem:[%s269 + $0xa58] sm:%s262]
                %956 = vst [vmem:[%s270 + $0x558] sm:%s262] %v955
                %v957 = vld [vmem:[%s269 + $0xa5c] sm:%s262]
                %958 = vst [vmem:[%s270 + $0x55c] sm:%s262] %v957
                %v959 = vld [vmem:[%s269 + $0xa60] sm:%s262]
                %960 = vst [vmem:[%s270 + $0x560] sm:%s262] %v959
                %v961 = vld [vmem:[%s269 + $0xa64] sm:%s262]
                %962 = vst [vmem:[%s270 + $0x564] sm:%s262] %v961
                %v963 = vld [vmem:[%s269 + $0xa68] sm:%s262]
                %964 = vst [vmem:[%s270 + $0x568] sm:%s262] %v963
                %v965 = vld [vmem:[%s269 + $0xa6c] sm:%s262]
                %966 = vst [vmem:[%s270 + $0x56c] sm:%s262] %v965
                %v967 = vld [vmem:[%s269 + $0xa70] sm:%s262]
                %968 = vst [vmem:[%s270 + $0x570] sm:%s262] %v967
                %v969 = vld [vmem:[%s269 + $0xa74] sm:%s262]
                %970 = vst [vmem:[%s270 + $0x574] sm:%s262] %v969
                %v971 = vld [vmem:[%s269 + $0xa78] sm:%s262]
                %972 = vst [vmem:[%s270 + $0x578] sm:%s262] %v971
                %v973 = vld [vmem:[%s269 + $0xa7c] sm:%s262]
                %974 = vst [vmem:[%s270 + $0x57c] sm:%s262] %v973
                %v975 = vld [vmem:[%s269 + $0xb00] sm:%s262]
                %976 = vst [vmem:[%s270 + $0x580] sm:%s262] %v975
                %v977 = vld [vmem:[%s269 + $0xb04] sm:%s262]
                %978 = vst [vmem:[%s270 + $0x584] sm:%s262] %v977
                %v979 = vld [vmem:[%s269 + $0xb08] sm:%s262]
                %980 = vst [vmem:[%s270 + $0x588] sm:%s262] %v979
                %v981 = vld [vmem:[%s269 + $0xb0c] sm:%s262]
                %982 = vst [vmem:[%s270 + $0x58c] sm:%s262] %v981
                %v983 = vld [vmem:[%s269 + $0xb10] sm:%s262]
                %984 = vst [vmem:[%s270 + $0x590] sm:%s262] %v983
                %v985 = vld [vmem:[%s269 + $0xb14] sm:%s262]
                %986 = vst [vmem:[%s270 + $0x594] sm:%s262] %v985
                %v987 = vld [vmem:[%s269 + $0xb18] sm:%s262]
                %988 = vst [vmem:[%s270 + $0x598] sm:%s262] %v987
                %v989 = vld [vmem:[%s269 + $0xb1c] sm:%s262]
                %990 = vst [vmem:[%s270 + $0x59c] sm:%s262] %v989
                %v991 = vld [vmem:[%s269 + $0xb20] sm:%s262]
                %992 = vst [vmem:[%s270 + $0x5a0] sm:%s262] %v991
                %v993 = vld [vmem:[%s269 + $0xb24] sm:%s262]
                %994 = vst [vmem:[%s270 + $0x5a4] sm:%s262] %v993
                %v995 = vld [vmem:[%s269 + $0xb28] sm:%s262]
                %996 = vst [vmem:[%s270 + $0x5a8] sm:%s262] %v995
                %v997 = vld [vmem:[%s269 + $0xb2c] sm:%s262]
                %998 = vst [vmem:[%s270 + $0x5ac] sm:%s262] %v997
                %v999 = vld [vmem:[%s269 + $0xb30] sm:%s262]
                %1000 = vst [vmem:[%s270 + $0x5b0] sm:%s262] %v999
                %v1001 = vld [vmem:[%s269 + $0xb34] sm:%s262]
                %1002 = vst [vmem:[%s270 + $0x5b4] sm:%s262] %v1001
                %v1003 = vld [vmem:[%s269 + $0xb38] sm:%s262]
                %1004 = vst [vmem:[%s270 + $0x5b8] sm:%s262] %v1003
                %v1005 = vld [vmem:[%s269 + $0xb3c] sm:%s262]
                %1006 = vst [vmem:[%s270 + $0x5bc] sm:%s262] %v1005
                %v1007 = vld [vmem:[%s269 + $0xb40] sm:%s262]
                %1008 = vst [vmem:[%s270 + $0x5c0] sm:%s262] %v1007
                %v1009 = vld [vmem:[%s269 + $0xb44] sm:%s262]
                %1010 = vst [vmem:[%s270 + $0x5c4] sm:%s262] %v1009
                %v1011 = vld [vmem:[%s269 + $0xb48] sm:%s262]
                %1012 = vst [vmem:[%s270 + $0x5c8] sm:%s262] %v1011
                %v1013 = vld [vmem:[%s269 + $0xb4c] sm:%s262]
                %1014 = vst [vmem:[%s270 + $0x5cc] sm:%s262] %v1013
                %v1015 = vld [vmem:[%s269 + $0xb50] sm:%s262]
                %1016 = vst [vmem:[%s270 + $0x5d0] sm:%s262] %v1015
                %v1017 = vld [vmem:[%s269 + $0xb54] sm:%s262]
                %1018 = vst [vmem:[%s270 + $0x5d4] sm:%s262] %v1017
                %v1019 = vld [vmem:[%s269 + $0xb58] sm:%s262]
                %1020 = vst [vmem:[%s270 + $0x5d8] sm:%s262] %v1019
                %v1021 = vld [vmem:[%s269 + $0xb5c] sm:%s262]
                %1022 = vst [vmem:[%s270 + $0x5dc] sm:%s262] %v1021
                %v1023 = vld [vmem:[%s269 + $0xb60] sm:%s262]
                %1024 = vst [vmem:[%s270 + $0x5e0] sm:%s262] %v1023
                %v1025 = vld [vmem:[%s269 + $0xb64] sm:%s262]
                %1026 = vst [vmem:[%s270 + $0x5e4] sm:%s262] %v1025
                %v1027 = vld [vmem:[%s269 + $0xb68] sm:%s262]
                %1028 = vst [vmem:[%s270 + $0x5e8] sm:%s262] %v1027
                %v1029 = vld [vmem:[%s269 + $0xb6c] sm:%s262]
                %1030 = vst [vmem:[%s270 + $0x5ec] sm:%s262] %v1029
                %v1031 = vld [vmem:[%s269 + $0xb70] sm:%s262]
                %1032 = vst [vmem:[%s270 + $0x5f0] sm:%s262] %v1031
                %v1033 = vld [vmem:[%s269 + $0xb74] sm:%s262]
                %1034 = vst [vmem:[%s270 + $0x5f4] sm:%s262] %v1033
                %v1035 = vld [vmem:[%s269 + $0xb78] sm:%s262]
                %1036 = vst [vmem:[%s270 + $0x5f8] sm:%s262] %v1035
                %v1037 = vld [vmem:[%s269 + $0xb7c] sm:%s262]
                %1038 = vst [vmem:[%s270 + $0x5fc] sm:%s262] %v1037
                %v1039 = vld [vmem:[%s269 + $0xc00] sm:%s262]
                %1040 = vst [vmem:[%s270 + $0x600] sm:%s262] %v1039
                %v1041 = vld [vmem:[%s269 + $0xc04] sm:%s262]
                %1042 = vst [vmem:[%s270 + $0x604] sm:%s262] %v1041
                %v1043 = vld [vmem:[%s269 + $0xc08] sm:%s262]
                %1044 = vst [vmem:[%s270 + $0x608] sm:%s262] %v1043
                %v1045 = vld [vmem:[%s269 + $0xc0c] sm:%s262]
                %1046 = vst [vmem:[%s270 + $0x60c] sm:%s262] %v1045
                %v1047 = vld [vmem:[%s269 + $0xc10] sm:%s262]
                %1048 = vst [vmem:[%s270 + $0x610] sm:%s262] %v1047
                %v1049 = vld [vmem:[%s269 + $0xc14] sm:%s262]
                %1050 = vst [vmem:[%s270 + $0x614] sm:%s262] %v1049
                %v1051 = vld [vmem:[%s269 + $0xc18] sm:%s262]
                %1052 = vst [vmem:[%s270 + $0x618] sm:%s262] %v1051
                %v1053 = vld [vmem:[%s269 + $0xc1c] sm:%s262]
                %1054 = vst [vmem:[%s270 + $0x61c] sm:%s262] %v1053
                %v1055 = vld [vmem:[%s269 + $0xc20] sm:%s262]
                %1056 = vst [vmem:[%s270 + $0x620] sm:%s262] %v1055
                %v1057 = vld [vmem:[%s269 + $0xc24] sm:%s262]
                %1058 = vst [vmem:[%s270 + $0x624] sm:%s262] %v1057
                %v1059 = vld [vmem:[%s269 + $0xc28] sm:%s262]
                %1060 = vst [vmem:[%s270 + $0x628] sm:%s262] %v1059
                %v1061 = vld [vmem:[%s269 + $0xc2c] sm:%s262]
                %1062 = vst [vmem:[%s270 + $0x62c] sm:%s262] %v1061
                %v1063 = vld [vmem:[%s269 + $0xc30] sm:%s262]
                %1064 = vst [vmem:[%s270 + $0x630] sm:%s262] %v1063
                %v1065 = vld [vmem:[%s269 + $0xc34] sm:%s262]
                %1066 = vst [vmem:[%s270 + $0x634] sm:%s262] %v1065
                %v1067 = vld [vmem:[%s269 + $0xc38] sm:%s262]
                %1068 = vst [vmem:[%s270 + $0x638] sm:%s262] %v1067
                %v1069 = vld [vmem:[%s269 + $0xc3c] sm:%s262]
                %1070 = vst [vmem:[%s270 + $0x63c] sm:%s262] %v1069
                %v1071 = vld [vmem:[%s269 + $0xc40] sm:%s262]
                %1072 = vst [vmem:[%s270 + $0x640] sm:%s262] %v1071
                %v1073 = vld [vmem:[%s269 + $0xc44] sm:%s262]
                %1074 = vst [vmem:[%s270 + $0x644] sm:%s262] %v1073
                %v1075 = vld [vmem:[%s269 + $0xc48] sm:%s262]
                %1076 = vst [vmem:[%s270 + $0x648] sm:%s262] %v1075
                %v1077 = vld [vmem:[%s269 + $0xc4c] sm:%s262]
                %1078 = vst [vmem:[%s270 + $0x64c] sm:%s262] %v1077
                %v1079 = vld [vmem:[%s269 + $0xc50] sm:%s262]
                %1080 = vst [vmem:[%s270 + $0x650] sm:%s262] %v1079
                %v1081 = vld [vmem:[%s269 + $0xc54] sm:%s262]
                %1082 = vst [vmem:[%s270 + $0x654] sm:%s262] %v1081
                %v1083 = vld [vmem:[%s269 + $0xc58] sm:%s262]
                %1084 = vst [vmem:[%s270 + $0x658] sm:%s262] %v1083
                %v1085 = vld [vmem:[%s269 + $0xc5c] sm:%s262]
                %1086 = vst [vmem:[%s270 + $0x65c] sm:%s262] %v1085
                %v1087 = vld [vmem:[%s269 + $0xc60] sm:%s262]
                %1088 = vst [vmem:[%s270 + $0x660] sm:%s262] %v1087
                %v1089 = vld [vmem:[%s269 + $0xc64] sm:%s262]
                %1090 = vst [vmem:[%s270 + $0x664] sm:%s262] %v1089
                %v1091 = vld [vmem:[%s269 + $0xc68] sm:%s262]
                %1092 = vst [vmem:[%s270 + $0x668] sm:%s262] %v1091
                %v1093 = vld [vmem:[%s269 + $0xc6c] sm:%s262]
                %1094 = vst [vmem:[%s270 + $0x66c] sm:%s262] %v1093
                %v1095 = vld [vmem:[%s269 + $0xc70] sm:%s262]
                %1096 = vst [vmem:[%s270 + $0x670] sm:%s262] %v1095
                %v1097 = vld [vmem:[%s269 + $0xc74] sm:%s262]
                %1098 = vst [vmem:[%s270 + $0x674] sm:%s262] %v1097
                %v1099 = vld [vmem:[%s269 + $0xc78] sm:%s262]
                %1100 = vst [vmem:[%s270 + $0x678] sm:%s262] %v1099
                %v1101 = vld [vmem:[%s269 + $0xc7c] sm:%s262]
                %1102 = vst [vmem:[%s270 + $0x67c] sm:%s262] %v1101
                %v1103 = vld [vmem:[%s269 + $0xd00] sm:%s262]
                %1104 = vst [vmem:[%s270 + $0x680] sm:%s262] %v1103
                %v1105 = vld [vmem:[%s269 + $0xd04] sm:%s262]
                %1106 = vst [vmem:[%s270 + $0x684] sm:%s262] %v1105
                %v1107 = vld [vmem:[%s269 + $0xd08] sm:%s262]
                %1108 = vst [vmem:[%s270 + $0x688] sm:%s262] %v1107
                %v1109 = vld [vmem:[%s269 + $0xd0c] sm:%s262]
                %1110 = vst [vmem:[%s270 + $0x68c] sm:%s262] %v1109
                %v1111 = vld [vmem:[%s269 + $0xd10] sm:%s262]
                %1112 = vst [vmem:[%s270 + $0x690] sm:%s262] %v1111
                %v1113 = vld [vmem:[%s269 + $0xd14] sm:%s262]
                %1114 = vst [vmem:[%s270 + $0x694] sm:%s262] %v1113
                %v1115 = vld [vmem:[%s269 + $0xd18] sm:%s262]
                %1116 = vst [vmem:[%s270 + $0x698] sm:%s262] %v1115
                %v1117 = vld [vmem:[%s269 + $0xd1c] sm:%s262]
                %1118 = vst [vmem:[%s270 + $0x69c] sm:%s262] %v1117
                %v1119 = vld [vmem:[%s269 + $0xd20] sm:%s262]
                %1120 = vst [vmem:[%s270 + $0x6a0] sm:%s262] %v1119
                %v1121 = vld [vmem:[%s269 + $0xd24] sm:%s262]
                %1122 = vst [vmem:[%s270 + $0x6a4] sm:%s262] %v1121
                %v1123 = vld [vmem:[%s269 + $0xd28] sm:%s262]
                %1124 = vst [vmem:[%s270 + $0x6a8] sm:%s262] %v1123
                %v1125 = vld [vmem:[%s269 + $0xd2c] sm:%s262]
                %1126 = vst [vmem:[%s270 + $0x6ac] sm:%s262] %v1125
                %v1127 = vld [vmem:[%s269 + $0xd30] sm:%s262]
                %1128 = vst [vmem:[%s270 + $0x6b0] sm:%s262] %v1127
                %v1129 = vld [vmem:[%s269 + $0xd34] sm:%s262]
                %1130 = vst [vmem:[%s270 + $0x6b4] sm:%s262] %v1129
                %v1131 = vld [vmem:[%s269 + $0xd38] sm:%s262]
                %1132 = vst [vmem:[%s270 + $0x6b8] sm:%s262] %v1131
                %v1133 = vld [vmem:[%s269 + $0xd3c] sm:%s262]
                %1134 = vst [vmem:[%s270 + $0x6bc] sm:%s262] %v1133
                %v1135 = vld [vmem:[%s269 + $0xd40] sm:%s262]
                %1136 = vst [vmem:[%s270 + $0x6c0] sm:%s262] %v1135
                %v1137 = vld [vmem:[%s269 + $0xd44] sm:%s262]
                %1138 = vst [vmem:[%s270 + $0x6c4] sm:%s262] %v1137
                %v1139 = vld [vmem:[%s269 + $0xd48] sm:%s262]
                %1140 = vst [vmem:[%s270 + $0x6c8] sm:%s262] %v1139
                %v1141 = vld [vmem:[%s269 + $0xd4c] sm:%s262]
                %1142 = vst [vmem:[%s270 + $0x6cc] sm:%s262] %v1141
                %v1143 = vld [vmem:[%s269 + $0xd50] sm:%s262]
                %1144 = vst [vmem:[%s270 + $0x6d0] sm:%s262] %v1143
                %v1145 = vld [vmem:[%s269 + $0xd54] sm:%s262]
                %1146 = vst [vmem:[%s270 + $0x6d4] sm:%s262] %v1145
                %v1147 = vld [vmem:[%s269 + $0xd58] sm:%s262]
                %1148 = vst [vmem:[%s270 + $0x6d8] sm:%s262] %v1147
                %v1149 = vld [vmem:[%s269 + $0xd5c] sm:%s262]
                %1150 = vst [vmem:[%s270 + $0x6dc] sm:%s262] %v1149
                %v1151 = vld [vmem:[%s269 + $0xd60] sm:%s262]
                %1152 = vst [vmem:[%s270 + $0x6e0] sm:%s262] %v1151
                %v1153 = vld [vmem:[%s269 + $0xd64] sm:%s262]
                %1154 = vst [vmem:[%s270 + $0x6e4] sm:%s262] %v1153
                %v1155 = vld [vmem:[%s269 + $0xd68] sm:%s262]
                %1156 = vst [vmem:[%s270 + $0x6e8] sm:%s262] %v1155
                %v1157 = vld [vmem:[%s269 + $0xd6c] sm:%s262]
                %1158 = vst [vmem:[%s270 + $0x6ec] sm:%s262] %v1157
                %v1159 = vld [vmem:[%s269 + $0xd70] sm:%s262]
                %1160 = vst [vmem:[%s270 + $0x6f0] sm:%s262] %v1159
                %v1161 = vld [vmem:[%s269 + $0xd74] sm:%s262]
                %1162 = vst [vmem:[%s270 + $0x6f4] sm:%s262] %v1161
                %v1163 = vld [vmem:[%s269 + $0xd78] sm:%s262]
                %1164 = vst [vmem:[%s270 + $0x6f8] sm:%s262] %v1163
                %v1165 = vld [vmem:[%s269 + $0xd7c] sm:%s262]
                %1166 = vst [vmem:[%s270 + $0x6fc] sm:%s262] %v1165
                %v1167 = vld [vmem:[%s269 + $0xe00] sm:%s262]
                %1168 = vst [vmem:[%s270 + $0x700] sm:%s262] %v1167
                %v1169 = vld [vmem:[%s269 + $0xe04] sm:%s262]
                %1170 = vst [vmem:[%s270 + $0x704] sm:%s262] %v1169
                %v1171 = vld [vmem:[%s269 + $0xe08] sm:%s262]
                %1172 = vst [vmem:[%s270 + $0x708] sm:%s262] %v1171
                %v1173 = vld [vmem:[%s269 + $0xe0c] sm:%s262]
                %1174 = vst [vmem:[%s270 + $0x70c] sm:%s262] %v1173
                %v1175 = vld [vmem:[%s269 + $0xe10] sm:%s262]
                %1176 = vst [vmem:[%s270 + $0x710] sm:%s262] %v1175
                %v1177 = vld [vmem:[%s269 + $0xe14] sm:%s262]
                %1178 = vst [vmem:[%s270 + $0x714] sm:%s262] %v1177
                %v1179 = vld [vmem:[%s269 + $0xe18] sm:%s262]
                %1180 = vst [vmem:[%s270 + $0x718] sm:%s262] %v1179
                %v1181 = vld [vmem:[%s269 + $0xe1c] sm:%s262]
                %1182 = vst [vmem:[%s270 + $0x71c] sm:%s262] %v1181
                %v1183 = vld [vmem:[%s269 + $0xe20] sm:%s262]
                %1184 = vst [vmem:[%s270 + $0x720] sm:%s262] %v1183
                %v1185 = vld [vmem:[%s269 + $0xe24] sm:%s262]
                %1186 = vst [vmem:[%s270 + $0x724] sm:%s262] %v1185
                %v1187 = vld [vmem:[%s269 + $0xe28] sm:%s262]
                %1188 = vst [vmem:[%s270 + $0x728] sm:%s262] %v1187
                %v1189 = vld [vmem:[%s269 + $0xe2c] sm:%s262]
                %1190 = vst [vmem:[%s270 + $0x72c] sm:%s262] %v1189
                %v1191 = vld [vmem:[%s269 + $0xe30] sm:%s262]
                %1192 = vst [vmem:[%s270 + $0x730] sm:%s262] %v1191
                %v1193 = vld [vmem:[%s269 + $0xe34] sm:%s262]
                %1194 = vst [vmem:[%s270 + $0x734] sm:%s262] %v1193
                %v1195 = vld [vmem:[%s269 + $0xe38] sm:%s262]
                %1196 = vst [vmem:[%s270 + $0x738] sm:%s262] %v1195
                %v1197 = vld [vmem:[%s269 + $0xe3c] sm:%s262]
                %1198 = vst [vmem:[%s270 + $0x73c] sm:%s262] %v1197
                %v1199 = vld [vmem:[%s269 + $0xe40] sm:%s262]
                %1200 = vst [vmem:[%s270 + $0x740] sm:%s262] %v1199
                %v1201 = vld [vmem:[%s269 + $0xe44] sm:%s262]
                %1202 = vst [vmem:[%s270 + $0x744] sm:%s262] %v1201
                %v1203 = vld [vmem:[%s269 + $0xe48] sm:%s262]
                %1204 = vst [vmem:[%s270 + $0x748] sm:%s262] %v1203
                %v1205 = vld [vmem:[%s269 + $0xe4c] sm:%s262]
                %1206 = vst [vmem:[%s270 + $0x74c] sm:%s262] %v1205
                %v1207 = vld [vmem:[%s269 + $0xe50] sm:%s262]
                %1208 = vst [vmem:[%s270 + $0x750] sm:%s262] %v1207
                %v1209 = vld [vmem:[%s269 + $0xe54] sm:%s262]
                %1210 = vst [vmem:[%s270 + $0x754] sm:%s262] %v1209
                %v1211 = vld [vmem:[%s269 + $0xe58] sm:%s262]
                %1212 = vst [vmem:[%s270 + $0x758] sm:%s262] %v1211
                %v1213 = vld [vmem:[%s269 + $0xe5c] sm:%s262]
                %1214 = vst [vmem:[%s270 + $0x75c] sm:%s262] %v1213
                %v1215 = vld [vmem:[%s269 + $0xe60] sm:%s262]
                %1216 = vst [vmem:[%s270 + $0x760] sm:%s262] %v1215
                %v1217 = vld [vmem:[%s269 + $0xe64] sm:%s262]
                %1218 = vst [vmem:[%s270 + $0x764] sm:%s262] %v1217
                %v1219 = vld [vmem:[%s269 + $0xe68] sm:%s262]
                %1220 = vst [vmem:[%s270 + $0x768] sm:%s262] %v1219
                %v1221 = vld [vmem:[%s269 + $0xe6c] sm:%s262]
                %1222 = vst [vmem:[%s270 + $0x76c] sm:%s262] %v1221
                %v1223 = vld [vmem:[%s269 + $0xe70] sm:%s262]
                %1224 = vst [vmem:[%s270 + $0x770] sm:%s262] %v1223
                %v1225 = vld [vmem:[%s269 + $0xe74] sm:%s262]
                %1226 = vst [vmem:[%s270 + $0x774] sm:%s262] %v1225
                %v1227 = vld [vmem:[%s269 + $0xe78] sm:%s262]
                %1228 = vst [vmem:[%s270 + $0x778] sm:%s262] %v1227
                %v1229 = vld [vmem:[%s269 + $0xe7c] sm:%s262]
                %1230 = vst [vmem:[%s270 + $0x77c] sm:%s262] %v1229
                %v1231 = vld [vmem:[%s269 + $0xf00] sm:%s262]
                %1232 = vst [vmem:[%s270 + $0x780] sm:%s262] %v1231
                %v1233 = vld [vmem:[%s269 + $0xf04] sm:%s262]
                %1234 = vst [vmem:[%s270 + $0x784] sm:%s262] %v1233
                %v1235 = vld [vmem:[%s269 + $0xf08] sm:%s262]
                %1236 = vst [vmem:[%s270 + $0x788] sm:%s262] %v1235
                %v1237 = vld [vmem:[%s269 + $0xf0c] sm:%s262]
                %1238 = vst [vmem:[%s270 + $0x78c] sm:%s262] %v1237
                %v1239 = vld [vmem:[%s269 + $0xf10] sm:%s262]
                %1240 = vst [vmem:[%s270 + $0x790] sm:%s262] %v1239
                %v1241 = vld [vmem:[%s269 + $0xf14] sm:%s262]
                %1242 = vst [vmem:[%s270 + $0x794] sm:%s262] %v1241
                %v1243 = vld [vmem:[%s269 + $0xf18] sm:%s262]
                %1244 = vst [vmem:[%s270 + $0x798] sm:%s262] %v1243
                %v1245 = vld [vmem:[%s269 + $0xf1c] sm:%s262]
                %1246 = vst [vmem:[%s270 + $0x79c] sm:%s262] %v1245
                %v1247 = vld [vmem:[%s269 + $0xf20] sm:%s262]
                %1248 = vst [vmem:[%s270 + $0x7a0] sm:%s262] %v1247
                %v1249 = vld [vmem:[%s269 + $0xf24] sm:%s262]
                %1250 = vst [vmem:[%s270 + $0x7a4] sm:%s262] %v1249
                %v1251 = vld [vmem:[%s269 + $0xf28] sm:%s262]
                %1252 = vst [vmem:[%s270 + $0x7a8] sm:%s262] %v1251
                %v1253 = vld [vmem:[%s269 + $0xf2c] sm:%s262]
                %1254 = vst [vmem:[%s270 + $0x7ac] sm:%s262] %v1253
                %v1255 = vld [vmem:[%s269 + $0xf30] sm:%s262]
                %1256 = vst [vmem:[%s270 + $0x7b0] sm:%s262] %v1255
                %v1257 = vld [vmem:[%s269 + $0xf34] sm:%s262]
                %1258 = vst [vmem:[%s270 + $0x7b4] sm:%s262] %v1257
                %v1259 = vld [vmem:[%s269 + $0xf38] sm:%s262]
                %1260 = vst [vmem:[%s270 + $0x7b8] sm:%s262] %v1259
                %v1261 = vld [vmem:[%s269 + $0xf3c] sm:%s262]
                %1262 = vst [vmem:[%s270 + $0x7bc] sm:%s262] %v1261
                %v1263 = vld [vmem:[%s269 + $0xf40] sm:%s262]
                %1264 = vst [vmem:[%s270 + $0x7c0] sm:%s262] %v1263
                %v1265 = vld [vmem:[%s269 + $0xf44] sm:%s262]
                %1266 = vst [vmem:[%s270 + $0x7c4] sm:%s262] %v1265
                %v1267 = vld [vmem:[%s269 + $0xf48] sm:%s262]
                %1268 = vst [vmem:[%s270 + $0x7c8] sm:%s262] %v1267
                %v1269 = vld [vmem:[%s269 + $0xf4c] sm:%s262]
                %1270 = vst [vmem:[%s270 + $0x7cc] sm:%s262] %v1269
                %v1271 = vld [vmem:[%s269 + $0xf50] sm:%s262]
                %1272 = vst [vmem:[%s270 + $0x7d0] sm:%s262] %v1271
                %v1273 = vld [vmem:[%s269 + $0xf54] sm:%s262]
                %1274 = vst [vmem:[%s270 + $0x7d4] sm:%s262] %v1273
                %v1275 = vld [vmem:[%s269 + $0xf58] sm:%s262]
                %1276 = vst [vmem:[%s270 + $0x7d8] sm:%s262] %v1275
                %v1277 = vld [vmem:[%s269 + $0xf5c] sm:%s262]
                %1278 = vst [vmem:[%s270 + $0x7dc] sm:%s262] %v1277
                %v1279 = vld [vmem:[%s269 + $0xf60] sm:%s262]
                %1280 = vst [vmem:[%s270 + $0x7e0] sm:%s262] %v1279
                %v1281 = vld [vmem:[%s269 + $0xf64] sm:%s262]
                %1282 = vst [vmem:[%s270 + $0x7e4] sm:%s262] %v1281
                %v1283 = vld [vmem:[%s269 + $0xf68] sm:%s262]
                %1284 = vst [vmem:[%s270 + $0x7e8] sm:%s262] %v1283
                %v1285 = vld [vmem:[%s269 + $0xf6c] sm:%s262]
                %1286 = vst [vmem:[%s270 + $0x7ec] sm:%s262] %v1285
                %v1287 = vld [vmem:[%s269 + $0xf70] sm:%s262]
                %1288 = vst [vmem:[%s270 + $0x7f0] sm:%s262] %v1287
                %v1289 = vld [vmem:[%s269 + $0xf74] sm:%s262]
                %1290 = vst [vmem:[%s270 + $0x7f4] sm:%s262] %v1289
                %v1291 = vld [vmem:[%s269 + $0xf78] sm:%s262]
                %1292 = vst [vmem:[%s270 + $0x7f8] sm:%s262] %v1291
                %v1293 = vld [vmem:[%s269 + $0xf7c] sm:%s262]
                %1294 = vst [vmem:[%s270 + $0x7fc] sm:%s262] %v1293
              $region61: #{net_forward.3} parent=55 // loop_footer
                %s268 = sadd.s32 1, %s264
              $region62: #{net_forward.3} parent=55 // loop_footer_branch
                %263 = sbr.rel target = $region58
              $region63: #{net_forward.3} parent=55 // loop_exit
                _
            $region56: #{net_forward.3} parent=47 // pred_fallthru
              _
          $region48: #{net_forward.3} parent=43 // pred_fallthru
            _
          %4413 = vnop
        $region44: #{net_forward.3} parent=39 // pred_fallthru
          _
      $region40: #{net_forward.3} parent=5 // pred_fallthru
        _
      %p4414 = scmp.le.s32.totalorder 1, %s13
      %p4415 = scmp.lt.s32.totalorder %s13, 9
      %p4416 = pnand %p4414, %p4415
      %p4417 = pneg %p4416
      // Predicated region
      $region93: #{net_forward.3} parent=5 // pred_check
        _
      $region94: #{net_forward.3} parent=5 // pred_check_branch
        %4419 = sbr.rel (%p4416) target = $region96
      $region95: #{net_forward.3} parent=5 // pred_region
        %s4420 = ssub.s32 %s13, 1
        %s4421 = sand.u32 %s40, 1
        %s4422 = sand.u32 %s40, 1
        %s4423 = smul.addr %s4422, 2048
        %s4424 = scalar_lea.vmem [#allocation3], %s4423
        // Predicated region
        $region97: #{net_forward.3} parent=95 // pred_check
          %p4425 = pneg %p53
        $region98: #{net_forward.3} parent=95 // pred_check_branch
          %4427 = sbr.rel (%p4425) target = $region100
        $region99: #{net_forward.3} parent=95 // pred_region
          _
        $region100: #{net_forward.3} parent=95 // pred_fallthru
          _
        %s4428 = sand.u32 %s40, 1
        %s4429 = sand.u32 %s40, 1
        %s4430 = smul.addr %s4429, 2048
        %s4431 = scalar_lea.vmem [#allocation3], %s4430
        %p4432 = pneg %p53
        %p4433 = pneg %p50
        %p4434 = pneg %p74
        %p4435 = pneg %p71
        %p4436 = pneg %p95
        %p4437 = pneg %p92
        %p4438 = pneg %p116
        %p4439 = pneg %p113
        %p4440 = pneg %p137
        %p4441 = pneg %p134
        %p4442 = pneg %p158
        %p4443 = pneg %p155
        %p4444 = pneg %p179
        %p4445 = pneg %p176
        %p4446 = pneg %p205
        %p4447 = pneg %p202
        %p4448 = scmp.lt.s32.totalorder %s22, 1
        %s4449 = scalar_select %p4448, %s22, 1
        %s4450 = smul.addr %s4449, 2
        %s4451 = smul.addr %s4450, 8
        %s4452 = scalar_lea.vmem %s7, %s4451
        %s4453 = smul.u32 4, %s23
        %p4454 = scmp.lt.s32.totalorder %s22, 1
        %s4455 = scalar_select %p4454, %s22, 1
        %s4456 = smul.addr %s4455, 2
        %s4457 = smul.addr %s4456, 8
        %s4458 = scalar_lea.vmem %s7, %s4457
        %p4460 = scmp.eq.s32.totalorder %s23, 0
        // Predicated region
        $region101: #{net_forward.3} parent=95 // pred_check
          %p4461 = pneg %p4460
        $region102: #{net_forward.3} parent=95 // pred_check_branch
          %4463 = sbr.rel (%p4461) target = $region104
        $region103: #{net_forward.3} parent=95 // pred_region
          %vm4464 = vcmask 523264
          %4465 = vst.msk [vmem:[#allocation2] sm:$0xff] %vm4464, 0.0
          %4466 = vst.msk [vmem:[#allocation2 + $0x8] sm:$0xff] %vm4464, 0.0
          %4467 = vst.msk [vmem:[#allocation2 + $0x10] sm:$0xff] %vm4464, 0.0
          %4468 = vst.msk [vmem:[#allocation2 + $0x18] sm:$0xff] %vm4464, 0.0
          %4469 = vst.msk [vmem:[#allocation2 + $0x20] sm:$0xff] %vm4464, 0.0
          %4470 = vst.msk [vmem:[#allocation2 + $0x28] sm:$0xff] %vm4464, 0.0
          %vm4471 = vcmask 517120
          %4472 = vst.msk [vmem:[#allocation2 + $0x30] sm:$0x3] %vm4471, 0.0
        $region104: #{net_forward.3} parent=95 // pred_fallthru
          _
        %v4473 = vld [vmem:[%s1] sm:$0xff]
        %v4474 = vld [vmem:[%s1 + $0x8] sm:$0xff]
        %v4475 = vld [vmem:[%s1 + $0x10] sm:$0x33]
        %v4476 = vld [vmem:[%s4424] sm:$0xf]
        %v4477 = vld [vmem:[%s4424 + $0x4] sm:$0xf]
        %v4478 = vld [vmem:[%s4424 + $0x8] sm:$0xf]
        %v4479 = vld [vmem:[%s4424 + $0xc] sm:$0xf]
        %v4480 = vld [vmem:[%s4424 + $0x10] sm:$0xf]
        %v4481 = vld [vmem:[%s4424 + $0x14] sm:$0xf]
        %v4482 = vld [vmem:[%s4424 + $0x18] sm:$0xf]
        %v4483 = vld [vmem:[%s4424 + $0x1c] sm:$0xf]
        %v4484 = vld [vmem:[%s4424 + $0x20] sm:$0xf]
        %v4485 = vld [vmem:[%s4424 + $0x24] sm:$0xf]
        %v4486 = vld [vmem:[%s4424 + $0x28] sm:$0xf]
        %v4487 = vld [vmem:[%s4424 + $0x2c] sm:$0xf]
        %v4488 = vld [vmem:[%s4424 + $0x30] sm:$0xf]
        %v4489 = vld [vmem:[%s4424 + $0x34] sm:$0xf]
        %v4490 = vld [vmem:[%s4424 + $0x38] sm:$0xf]
        %v4491 = vld [vmem:[%s4424 + $0x3c] sm:$0xf]
        %v4492 = vld [vmem:[%s4424 + $0x40] sm:$0xf]
        %v4493 = vld [vmem:[%s4424 + $0x44] sm:$0xf]
        %v4494 = vld [vmem:[%s4424 + $0x48] sm:$0xf]
        %v4495 = vld [vmem:[%s4424 + $0x4c] sm:$0xf]
        %v4496 = vld [vmem:[%s4424 + $0x50] sm:$0xf]
        %v4497 = vld [vmem:[%s4424 + $0x54] sm:$0xf]
        %v4498 = vld [vmem:[%s4424 + $0x58] sm:$0xf]
        %v4499 = vld [vmem:[%s4424 + $0x5c] sm:$0xf]
        %v4500 = vld [vmem:[%s4424 + $0x60] sm:$0xf]
        %v4501 = vld [vmem:[%s4424 + $0x64] sm:$0xf]
        %v4502 = vld [vmem:[%s4424 + $0x68] sm:$0xf]
        %v4503 = vld [vmem:[%s4424 + $0x6c] sm:$0xf]
        %v4504 = vld [vmem:[%s4424 + $0x70] sm:$0xf]
        %v4505 = vld [vmem:[%s4424 + $0x74] sm:$0xf]
        %v4506 = vld [vmem:[%s4424 + $0x78] sm:$0xf]
        %v4507 = vld [vmem:[%s4424 + $0x7c] sm:$0xf]
        %v4511 = vunpack.c.l.b16 %v4473
        %v4512 = vunpack.c.h.b16 %v4473
        %v4513 = vunpack.c.l.b16 %v4474
        %v4514 = vunpack.c.h.b16 %v4474
        %v4515 = vunpack.c.l.b16 %v4475
        %v4516 = vunpack.c.h.b16 %v4475
        %v4517 = vpack.c.b16 %v4513, %v4511
        %v4518 = vpack.c.b16 %v4514, %v4512
        %v4519 = vpack.c.b16 %v4515, %v4515
        %v4520 = vpack.c.b16 %v4516, %v4516
        %v4557 = vunpack.c.l.b16 %v4476
        %v4558 = vunpack.c.l.b16 %v4477
        %v4559 = vunpack.c.l.b16 %v4478
        %v4560 = vunpack.c.l.b16 %v4479
        %v4561 = vunpack.c.l.b16 %v4480
        %v4562 = vunpack.c.l.b16 %v4481
        %v4563 = vunpack.c.l.b16 %v4482
        %v4564 = vunpack.c.l.b16 %v4483
        %v4565 = vunpack.c.l.b16 %v4484
        %v4566 = vunpack.c.l.b16 %v4485
        %v4567 = vunpack.c.l.b16 %v4486
        %v4568 = vunpack.c.l.b16 %v4487
        %v4569 = vunpack.c.l.b16 %v4488
        %v4570 = vunpack.c.l.b16 %v4489
        %v4571 = vunpack.c.l.b16 %v4490
        %v4572 = vunpack.c.l.b16 %v4491
        %v4573 = vunpack.c.l.b16 %v4492
        %v4574 = vunpack.c.l.b16 %v4493
        %v4575 = vunpack.c.l.b16 %v4494
        %v4576 = vunpack.c.l.b16 %v4495
        %v4577 = vunpack.c.l.b16 %v4496
        %v4578 = vunpack.c.l.b16 %v4497
        %v4579 = vunpack.c.l.b16 %v4498
        %v4580 = vunpack.c.l.b16 %v4499
        %v4581 = vunpack.c.l.b16 %v4500
        %v4582 = vunpack.c.l.b16 %v4501
        %v4583 = vunpack.c.l.b16 %v4502
        %v4584 = vunpack.c.l.b16 %v4503
        %v4585 = vunpack.c.l.b16 %v4504
        %v4586 = vunpack.c.l.b16 %v4505
        %v4587 = vunpack.c.l.b16 %v4506
        %v4588 = vunpack.c.l.b16 %v4507
        %v4589 = vpack.c.b16 %v4558, %v4557
        %v4590 = vpack.c.b16 %v4560, %v4559
        %v4591 = vpack.c.b16 %v4562, %v4561
        %v4592 = vpack.c.b16 %v4564, %v4563
        %v4593 = vpack.c.b16 %v4566, %v4565
        %v4594 = vpack.c.b16 %v4568, %v4567
        %v4595 = vpack.c.b16 %v4570, %v4569
        %v4596 = vpack.c.b16 %v4572, %v4571
        %v4597 = vpack.c.b16 %v4574, %v4573
        %v4598 = vpack.c.b16 %v4576, %v4575
        %v4599 = vpack.c.b16 %v4578, %v4577
        %v4600 = vpack.c.b16 %v4580, %v4579
        %v4601 = vpack.c.b16 %v4582, %v4581
        %v4602 = vpack.c.b16 %v4584, %v4583
        %v4603 = vpack.c.b16 %v4586, %v4585
        %v4604 = vpack.c.b16 %v4588, %v4587
        %4621 = vmatpush.bf16.msra.mxu0 %v4596
        %4622 = vmatpush.bf16.msra.mxu0 %v4595
        %4623 = vmatpush.bf16.msra.mxu0 %v4594
        %4624 = vmatpush.bf16.msra.mxu0 %v4593
        %4625 = vmatpush.bf16.msra.mxu0 %v4592
        %4626 = vmatpush.bf16.msra.mxu0 %v4591
        %4627 = vmatpush.bf16.msra.mxu0 %v4590
        %4628 = vmatpush.bf16.msra.mxu0 %v4589
        %4629 = vmatmul.bf16.gmra.mxu0 %v4517
        %v4630 = vpop.f32.mrf.mxu0
        %v4631 = vadd.f32 0.0, %v4630
        %v4632 = vpop.f32.mrf.mxu0
        %v4633 = vadd.f32 0.0, %v4632
        %4634 = vmatmul.bf16.gmra.mxu0 %v4519
        %v4635 = vpop.f32.mrf.mxu0
        %v4636 = vadd.f32 0.0, %v4635
        %v4637 = vpop.f32.mrf.mxu0
        %4638 = vdwg.mxu0
        %4639 = vmatpush.bf16.msra.mxu0 %v4604
        %4640 = vmatpush.bf16.msra.mxu0 %v4603
        %4641 = vmatpush.bf16.msra.mxu0 %v4602
        %4642 = vmatpush.bf16.msra.mxu0 %v4601
        %4643 = vmatpush.bf16.msra.mxu0 %v4600
        %4644 = vmatpush.bf16.msra.mxu0 %v4599
        %4645 = vmatpush.bf16.msra.mxu0 %v4598
        %4646 = vmatpush.bf16.msra.mxu0 %v4597
        %4647 = vmatmul.bf16.gmra.mxu0 %v4518
        %v4648 = vpop.f32.mrf.mxu0
        %v4649 = vadd.f32 %v4631, %v4648
        %v4650 = vpop.f32.mrf.mxu0
        %v4651 = vadd.f32 %v4633, %v4650
        %4652 = vmatmul.bf16.gmra.mxu0 %v4520
        %v4653 = vpop.f32.mrf.mxu0
        %v4654 = vadd.f32 %v4636, %v4653
        %v4655 = vpop.f32.mrf.mxu0
        %4656 = vdwg.mxu0
        %s4657 = scalar_lea.vmem %s4424, 128 [#allocation3]
        %v4658 = vld [vmem:[%s4657] sm:$0xf]
        %v4659 = vld [vmem:[%s4657 + $0x4] sm:$0xf]
        %v4660 = vld [vmem:[%s4657 + $0x8] sm:$0xf]
        %v4661 = vld [vmem:[%s4657 + $0xc] sm:$0xf]
        %v4662 = vld [vmem:[%s4657 + $0x10] sm:$0xf]
        %v4663 = vld [vmem:[%s4657 + $0x14] sm:$0xf]
        %v4664 = vld [vmem:[%s4657 + $0x18] sm:$0xf]
        %v4665 = vld [vmem:[%s4657 + $0x1c] sm:$0xf]
        %v4666 = vld [vmem:[%s4657 + $0x20] sm:$0xf]
        %v4667 = vld [vmem:[%s4657 + $0x24] sm:$0xf]
        %v4668 = vld [vmem:[%s4657 + $0x28] sm:$0xf]
        %v4669 = vld [vmem:[%s4657 + $0x2c] sm:$0xf]
        %v4670 = vld [vmem:[%s4657 + $0x30] sm:$0xf]
        %v4671 = vld [vmem:[%s4657 + $0x34] sm:$0xf]
        %v4672 = vld [vmem:[%s4657 + $0x38] sm:$0xf]
        %v4673 = vld [vmem:[%s4657 + $0x3c] sm:$0xf]
        %v4674 = vld [vmem:[%s4657 + $0x40] sm:$0xf]
        %v4675 = vld [vmem:[%s4657 + $0x44] sm:$0xf]
        %v4676 = vld [vmem:[%s4657 + $0x48] sm:$0xf]
        %v4677 = vld [vmem:[%s4657 + $0x4c] sm:$0xf]
        %v4678 = vld [vmem:[%s4657 + $0x50] sm:$0xf]
        %v4679 = vld [vmem:[%s4657 + $0x54] sm:$0xf]
        %v4680 = vld [vmem:[%s4657 + $0x58] sm:$0xf]
        %v4681 = vld [vmem:[%s4657 + $0x5c] sm:$0xf]
        %v4682 = vld [vmem:[%s4657 + $0x60] sm:$0xf]
        %v4683 = vld [vmem:[%s4657 + $0x64] sm:$0xf]
        %v4684 = vld [vmem:[%s4657 + $0x68] sm:$0xf]
        %v4685 = vld [vmem:[%s4657 + $0x6c] sm:$0xf]
        %v4686 = vld [vmem:[%s4657 + $0x70] sm:$0xf]
        %v4687 = vld [vmem:[%s4657 + $0x74] sm:$0xf]
        %v4688 = vld [vmem:[%s4657 + $0x78] sm:$0xf]
        %v4689 = vld [vmem:[%s4657 + $0x7c] sm:$0xf]
        %v4722 = vunpack.c.l.b16 %v4658
        %v4723 = vunpack.c.l.b16 %v4659
        %v4724 = vunpack.c.l.b16 %v4660
        %v4725 = vunpack.c.l.b16 %v4661
        %v4726 = vunpack.c.l.b16 %v4662
        %v4727 = vunpack.c.l.b16 %v4663
        %v4728 = vunpack.c.l.b16 %v4664
        %v4729 = vunpack.c.l.b16 %v4665
        %v4730 = vunpack.c.l.b16 %v4666
        %v4731 = vunpack.c.l.b16 %v4667
        %v4732 = vunpack.c.l.b16 %v4668
        %v4733 = vunpack.c.l.b16 %v4669
        %v4734 = vunpack.c.l.b16 %v4670
        %v4735 = vunpack.c.l.b16 %v4671
        %v4736 = vunpack.c.l.b16 %v4672
        %v4737 = vunpack.c.l.b16 %v4673
        %v4738 = vunpack.c.l.b16 %v4674
        %v4739 = vunpack.c.l.b16 %v4675
        %v4740 = vunpack.c.l.b16 %v4676
        %v4741 = vunpack.c.l.b16 %v4677
        %v4742 = vunpack.c.l.b16 %v4678
        %v4743 = vunpack.c.l.b16 %v4679
        %v4744 = vunpack.c.l.b16 %v4680
        %v4745 = vunpack.c.l.b16 %v4681
        %v4746 = vunpack.c.l.b16 %v4682
        %v4747 = vunpack.c.l.b16 %v4683
        %v4748 = vunpack.c.l.b16 %v4684
        %v4749 = vunpack.c.l.b16 %v4685
        %v4750 = vunpack.c.l.b16 %v4686
        %v4751 = vunpack.c.l.b16 %v4687
        %v4752 = vunpack.c.l.b16 %v4688
        %v4753 = vunpack.c.l.b16 %v4689
        %v4754 = vpack.c.b16 %v4723, %v4722
        %v4755 = vpack.c.b16 %v4725, %v4724
        %v4756 = vpack.c.b16 %v4727, %v4726
        %v4757 = vpack.c.b16 %v4729, %v4728
        %v4758 = vpack.c.b16 %v4731, %v4730
        %v4759 = vpack.c.b16 %v4733, %v4732
        %v4760 = vpack.c.b16 %v4735, %v4734
        %v4761 = vpack.c.b16 %v4737, %v4736
        %v4762 = vpack.c.b16 %v4739, %v4738
        %v4763 = vpack.c.b16 %v4741, %v4740
        %v4764 = vpack.c.b16 %v4743, %v4742
        %v4765 = vpack.c.b16 %v4745, %v4744
        %v4766 = vpack.c.b16 %v4747, %v4746
        %v4767 = vpack.c.b16 %v4749, %v4748
        %v4768 = vpack.c.b16 %v4751, %v4750
        %v4769 = vpack.c.b16 %v4753, %v4752
        %4786 = vmatpush.bf16.msra.mxu0 %v4761
        %4787 = vmatpush.bf16.msra.mxu0 %v4760
        %4788 = vmatpush.bf16.msra.mxu0 %v4759
        %4789 = vmatpush.bf16.msra.mxu0 %v4758
        %4790 = vmatpush.bf16.msra.mxu0 %v4757
        %4791 = vmatpush.bf16.msra.mxu0 %v4756
        %4792 = vmatpush.bf16.msra.mxu0 %v4755
        %4793 = vmatpush.bf16.msra.mxu0 %v4754
        %4794 = vmatmul.bf16.gmra.mxu0 %v4517
        %v4795 = vpop.f32.mrf.mxu0
        %v4796 = vadd.f32 0.0, %v4795
        %v4797 = vpop.f32.mrf.mxu0
        %v4798 = vadd.f32 0.0, %v4797
        %4799 = vmatmul.bf16.gmra.mxu0 %v4519
        %v4800 = vpop.f32.mrf.mxu0
        %v4801 = vadd.f32 0.0, %v4800
        %v4802 = vpop.f32.mrf.mxu0
        %4803 = vdwg.mxu0
        %4804 = vmatpush.bf16.msra.mxu0 %v4769
        %4805 = vmatpush.bf16.msra.mxu0 %v4768
        %4806 = vmatpush.bf16.msra.mxu0 %v4767
        %4807 = vmatpush.bf16.msra.mxu0 %v4766
        %4808 = vmatpush.bf16.msra.mxu0 %v4765
        %4809 = vmatpush.bf16.msra.mxu0 %v4764
        %4810 = vmatpush.bf16.msra.mxu0 %v4763
        %4811 = vmatpush.bf16.msra.mxu0 %v4762
        %4812 = vmatmul.bf16.gmra.mxu0 %v4518
        %v4813 = vpop.f32.mrf.mxu0
        %v4814 = vadd.f32 %v4796, %v4813
        %v4815 = vpop.f32.mrf.mxu0
        %v4816 = vadd.f32 %v4798, %v4815
        %4817 = vmatmul.bf16.gmra.mxu0 %v4520
        %v4818 = vpop.f32.mrf.mxu0
        %v4819 = vadd.f32 %v4801, %v4818
        %v4820 = vpop.f32.mrf.mxu0
        %4821 = vdwg.mxu0
        %v4822 = vmax.f32 %v4649, %v4814
        %v4823 = vmax.f32 %v4651, %v4816
        %v4824 = vmax.f32 %v4654, %v4819
        %s4825 = scalar_lea.vmem %s4424, 256 [#allocation3]
        %v4826 = vld [vmem:[%s4825] sm:$0xf]
        %v4827 = vld [vmem:[%s4825 + $0x4] sm:$0xf]
        %v4828 = vld [vmem:[%s4825 + $0x8] sm:$0xf]
        %v4829 = vld [vmem:[%s4825 + $0xc] sm:$0xf]
        %v4830 = vld [vmem:[%s4825 + $0x10] sm:$0xf]
        %v4831 = vld [vmem:[%s4825 + $0x14] sm:$0xf]
        %v4832 = vld [vmem:[%s4825 + $0x18] sm:$0xf]
        %v4833 = vld [vmem:[%s4825 + $0x1c] sm:$0xf]
        %v4834 = vld [vmem:[%s4825 + $0x20] sm:$0xf]
        %v4835 = vld [vmem:[%s4825 + $0x24] sm:$0xf]
        %v4836 = vld [vmem:[%s4825 + $0x28] sm:$0xf]
        %v4837 = vld [vmem:[%s4825 + $0x2c] sm:$0xf]
        %v4838 = vld [vmem:[%s4825 + $0x30] sm:$0xf]
        %v4839 = vld [vmem:[%s4825 + $0x34] sm:$0xf]
        %v4840 = vld [vmem:[%s4825 + $0x38] sm:$0xf]
        %v4841 = vld [vmem:[%s4825 + $0x3c] sm:$0xf]
        %v4842 = vld [vmem:[%s4825 + $0x40] sm:$0xf]
        %v4843 = vld [vmem:[%s4825 + $0x44] sm:$0xf]
        %v4844 = vld [vmem:[%s4825 + $0x48] sm:$0xf]
        %v4845 = vld [vmem:[%s4825 + $0x4c] sm:$0xf]
        %v4846 = vld [vmem:[%s4825 + $0x50] sm:$0xf]
        %v4847 = vld [vmem:[%s4825 + $0x54] sm:$0xf]
        %v4848 = vld [vmem:[%s4825 + $0x58] sm:$0xf]
        %v4849 = vld [vmem:[%s4825 + $0x5c] sm:$0xf]
        %v4850 = vld [vmem:[%s4825 + $0x60] sm:$0xf]
        %v4851 = vld [vmem:[%s4825 + $0x64] sm:$0xf]
        %v4852 = vld [vmem:[%s4825 + $0x68] sm:$0xf]
        %v4853 = vld [vmem:[%s4825 + $0x6c] sm:$0xf]
        %v4854 = vld [vmem:[%s4825 + $0x70] sm:$0xf]
        %v4855 = vld [vmem:[%s4825 + $0x74] sm:$0xf]
        %v4856 = vld [vmem:[%s4825 + $0x78] sm:$0xf]
        %v4857 = vld [vmem:[%s4825 + $0x7c] sm:$0xf]
        %v4890 = vunpack.c.l.b16 %v4826
        %v4891 = vunpack.c.l.b16 %v4827
        %v4892 = vunpack.c.l.b16 %v4828
        %v4893 = vunpack.c.l.b16 %v4829
        %v4894 = vunpack.c.l.b16 %v4830
        %v4895 = vunpack.c.l.b16 %v4831
        %v4896 = vunpack.c.l.b16 %v4832
        %v4897 = vunpack.c.l.b16 %v4833
        %v4898 = vunpack.c.l.b16 %v4834
        %v4899 = vunpack.c.l.b16 %v4835
        %v4900 = vunpack.c.l.b16 %v4836
        %v4901 = vunpack.c.l.b16 %v4837
        %v4902 = vunpack.c.l.b16 %v4838
        %v4903 = vunpack.c.l.b16 %v4839
        %v4904 = vunpack.c.l.b16 %v4840
        %v4905 = vunpack.c.l.b16 %v4841
        %v4906 = vunpack.c.l.b16 %v4842
        %v4907 = vunpack.c.l.b16 %v4843
        %v4908 = vunpack.c.l.b16 %v4844
        %v4909 = vunpack.c.l.b16 %v4845
        %v4910 = vunpack.c.l.b16 %v4846
        %v4911 = vunpack.c.l.b16 %v4847
        %v4912 = vunpack.c.l.b16 %v4848
        %v4913 = vunpack.c.l.b16 %v4849
        %v4914 = vunpack.c.l.b16 %v4850
        %v4915 = vunpack.c.l.b16 %v4851
        %v4916 = vunpack.c.l.b16 %v4852
        %v4917 = vunpack.c.l.b16 %v4853
        %v4918 = vunpack.c.l.b16 %v4854
        %v4919 = vunpack.c.l.b16 %v4855
        %v4920 = vunpack.c.l.b16 %v4856
        %v4921 = vunpack.c.l.b16 %v4857
        %v4922 = vpack.c.b16 %v4891, %v4890
        %v4923 = vpack.c.b16 %v4893, %v4892
        %v4924 = vpack.c.b16 %v4895, %v4894
        %v4925 = vpack.c.b16 %v4897, %v4896
        %v4926 = vpack.c.b16 %v4899, %v4898
        %v4927 = vpack.c.b16 %v4901, %v4900
        %v4928 = vpack.c.b16 %v4903, %v4902
        %v4929 = vpack.c.b16 %v4905, %v4904
        %v4930 = vpack.c.b16 %v4907, %v4906
        %v4931 = vpack.c.b16 %v4909, %v4908
        %v4932 = vpack.c.b16 %v4911, %v4910
        %v4933 = vpack.c.b16 %v4913, %v4912
        %v4934 = vpack.c.b16 %v4915, %v4914
        %v4935 = vpack.c.b16 %v4917, %v4916
        %v4936 = vpack.c.b16 %v4919, %v4918
        %v4937 = vpack.c.b16 %v4921, %v4920
        %4954 = vmatpush.bf16.msra.mxu0 %v4929
        %4955 = vmatpush.bf16.msra.mxu0 %v4928
        %4956 = vmatpush.bf16.msra.mxu0 %v4927
        %4957 = vmatpush.bf16.msra.mxu0 %v4926
        %4958 = vmatpush.bf16.msra.mxu0 %v4925
        %4959 = vmatpush.bf16.msra.mxu0 %v4924
        %4960 = vmatpush.bf16.msra.mxu0 %v4923
        %4961 = vmatpush.bf16.msra.mxu0 %v4922
        %4962 = vmatmul.bf16.gmra.mxu0 %v4517
        %v4963 = vpop.f32.mrf.mxu0
        %v4964 = vadd.f32 0.0, %v4963
        %v4965 = vpop.f32.mrf.mxu0
        %v4966 = vadd.f32 0.0, %v4965
        %4967 = vmatmul.bf16.gmra.mxu0 %v4519
        %v4968 = vpop.f32.mrf.mxu0
        %v4969 = vadd.f32 0.0, %v4968
        %v4970 = vpop.f32.mrf.mxu0
        %4971 = vdwg.mxu0
        %4972 = vmatpush.bf16.msra.mxu0 %v4937
        %4973 = vmatpush.bf16.msra.mxu0 %v4936
        %4974 = vmatpush.bf16.msra.mxu0 %v4935
        %4975 = vmatpush.bf16.msra.mxu0 %v4934
        %4976 = vmatpush.bf16.msra.mxu0 %v4933
        %4977 = vmatpush.bf16.msra.mxu0 %v4932
        %4978 = vmatpush.bf16.msra.mxu0 %v4931
        %4979 = vmatpush.bf16.msra.mxu0 %v4930
        %4980 = vmatmul.bf16.gmra.mxu0 %v4518
        %v4981 = vpop.f32.mrf.mxu0
        %v4982 = vadd.f32 %v4964, %v4981
        %v4983 = vpop.f32.mrf.mxu0
        %v4984 = vadd.f32 %v4966, %v4983
        %4985 = vmatmul.bf16.gmra.mxu0 %v4520
        %v4986 = vpop.f32.mrf.mxu0
        %v4987 = vadd.f32 %v4969, %v4986
        %v4988 = vpop.f32.mrf.mxu0
        %4989 = vdwg.mxu0
        %v4990 = vmax.f32 %v4822, %v4982
        %v4991 = vmax.f32 %v4823, %v4984
        %v4992 = vmax.f32 %v4824, %v4987
        %s4993 = scalar_lea.vmem %s4424, 384 [#allocation3]
        %v4994 = vld [vmem:[%s4993] sm:$0xf]
        %v4995 = vld [vmem:[%s4993 + $0x4] sm:$0xf]
        %v4996 = vld [vmem:[%s4993 + $0x8] sm:$0xf]
        %v4997 = vld [vmem:[%s4993 + $0xc] sm:$0xf]
        %v4998 = vld [vmem:[%s4993 + $0x10] sm:$0xf]
        %v4999 = vld [vmem:[%s4993 + $0x14] sm:$0xf]
        %v5000 = vld [vmem:[%s4993 + $0x18] sm:$0xf]
        %v5001 = vld [vmem:[%s4993 + $0x1c] sm:$0xf]
        %v5002 = vld [vmem:[%s4993 + $0x20] sm:$0xf]
        %v5003 = vld [vmem:[%s4993 + $0x24] sm:$0xf]
        %v5004 = vld [vmem:[%s4993 + $0x28] sm:$0xf]
        %v5005 = vld [vmem:[%s4993 + $0x2c] sm:$0xf]
        %v5006 = vld [vmem:[%s4993 + $0x30] sm:$0xf]
        %v5007 = vld [vmem:[%s4993 + $0x34] sm:$0xf]
        %v5008 = vld [vmem:[%s4993 + $0x38] sm:$0xf]
        %v5009 = vld [vmem:[%s4993 + $0x3c] sm:$0xf]
        %v5010 = vld [vmem:[%s4993 + $0x40] sm:$0xf]
        %v5011 = vld [vmem:[%s4993 + $0x44] sm:$0xf]
        %v5012 = vld [vmem:[%s4993 + $0x48] sm:$0xf]
        %v5013 = vld [vmem:[%s4993 + $0x4c] sm:$0xf]
        %v5014 = vld [vmem:[%s4993 + $0x50] sm:$0xf]
        %v5015 = vld [vmem:[%s4993 + $0x54] sm:$0xf]
        %v5016 = vld [vmem:[%s4993 + $0x58] sm:$0xf]
        %v5017 = vld [vmem:[%s4993 + $0x5c] sm:$0xf]
        %v5018 = vld [vmem:[%s4993 + $0x60] sm:$0xf]
        %v5019 = vld [vmem:[%s4993 + $0x64] sm:$0xf]
        %v5020 = vld [vmem:[%s4993 + $0x68] sm:$0xf]
        %v5021 = vld [vmem:[%s4993 + $0x6c] sm:$0xf]
        %v5022 = vld [vmem:[%s4993 + $0x70] sm:$0xf]
        %v5023 = vld [vmem:[%s4993 + $0x74] sm:$0xf]
        %v5024 = vld [vmem:[%s4993 + $0x78] sm:$0xf]
        %v5025 = vld [vmem:[%s4993 + $0x7c] sm:$0xf]
        %v5058 = vunpack.c.l.b16 %v4994
        %v5059 = vunpack.c.l.b16 %v4995
        %v5060 = vunpack.c.l.b16 %v4996
        %v5061 = vunpack.c.l.b16 %v4997
        %v5062 = vunpack.c.l.b16 %v4998
        %v5063 = vunpack.c.l.b16 %v4999
        %v5064 = vunpack.c.l.b16 %v5000
        %v5065 = vunpack.c.l.b16 %v5001
        %v5066 = vunpack.c.l.b16 %v5002
        %v5067 = vunpack.c.l.b16 %v5003
        %v5068 = vunpack.c.l.b16 %v5004
        %v5069 = vunpack.c.l.b16 %v5005
        %v5070 = vunpack.c.l.b16 %v5006
        %v5071 = vunpack.c.l.b16 %v5007
        %v5072 = vunpack.c.l.b16 %v5008
        %v5073 = vunpack.c.l.b16 %v5009
        %v5074 = vunpack.c.l.b16 %v5010
        %v5075 = vunpack.c.l.b16 %v5011
        %v5076 = vunpack.c.l.b16 %v5012
        %v5077 = vunpack.c.l.b16 %v5013
        %v5078 = vunpack.c.l.b16 %v5014
        %v5079 = vunpack.c.l.b16 %v5015
        %v5080 = vunpack.c.l.b16 %v5016
        %v5081 = vunpack.c.l.b16 %v5017
        %v5082 = vunpack.c.l.b16 %v5018
        %v5083 = vunpack.c.l.b16 %v5019
        %v5084 = vunpack.c.l.b16 %v5020
        %v5085 = vunpack.c.l.b16 %v5021
        %v5086 = vunpack.c.l.b16 %v5022
        %v5087 = vunpack.c.l.b16 %v5023
        %v5088 = vunpack.c.l.b16 %v5024
        %v5089 = vunpack.c.l.b16 %v5025
        %v5090 = vpack.c.b16 %v5059, %v5058
        %v5091 = vpack.c.b16 %v5061, %v5060
        %v5092 = vpack.c.b16 %v5063, %v5062
        %v5093 = vpack.c.b16 %v5065, %v5064
        %v5094 = vpack.c.b16 %v5067, %v5066
        %v5095 = vpack.c.b16 %v5069, %v5068
        %v5096 = vpack.c.b16 %v5071, %v5070
        %v5097 = vpack.c.b16 %v5073, %v5072
        %v5098 = vpack.c.b16 %v5075, %v5074
        %v5099 = vpack.c.b16 %v5077, %v5076
        %v5100 = vpack.c.b16 %v5079, %v5078
        %v5101 = vpack.c.b16 %v5081, %v5080
        %v5102 = vpack.c.b16 %v5083, %v5082
        %v5103 = vpack.c.b16 %v5085, %v5084
        %v5104 = vpack.c.b16 %v5087, %v5086
        %v5105 = vpack.c.b16 %v5089, %v5088
        %5122 = vmatpush.bf16.msra.mxu0 %v5097
        %5123 = vmatpush.bf16.msra.mxu0 %v5096
        %5124 = vmatpush.bf16.msra.mxu0 %v5095
        %5125 = vmatpush.bf16.msra.mxu0 %v5094
        %5126 = vmatpush.bf16.msra.mxu0 %v5093
        %5127 = vmatpush.bf16.msra.mxu0 %v5092
        %5128 = vmatpush.bf16.msra.mxu0 %v5091
        %5129 = vmatpush.bf16.msra.mxu0 %v5090
        %5130 = vmatmul.bf16.gmra.mxu0 %v4517
        %v5131 = vpop.f32.mrf.mxu0
        %v5132 = vadd.f32 0.0, %v5131
        %v5133 = vpop.f32.mrf.mxu0
        %v5134 = vadd.f32 0.0, %v5133
        %5135 = vmatmul.bf16.gmra.mxu0 %v4519
        %v5136 = vpop.f32.mrf.mxu0
        %v5137 = vadd.f32 0.0, %v5136
        %v5138 = vpop.f32.mrf.mxu0
        %5139 = vdwg.mxu0
        %5140 = vmatpush.bf16.msra.mxu0 %v5105
        %5141 = vmatpush.bf16.msra.mxu0 %v5104
        %5142 = vmatpush.bf16.msra.mxu0 %v5103
        %5143 = vmatpush.bf16.msra.mxu0 %v5102
        %5144 = vmatpush.bf16.msra.mxu0 %v5101
        %5145 = vmatpush.bf16.msra.mxu0 %v5100
        %5146 = vmatpush.bf16.msra.mxu0 %v5099
        %5147 = vmatpush.bf16.msra.mxu0 %v5098
        %5148 = vmatmul.bf16.gmra.mxu0 %v4518
        %v5149 = vpop.f32.mrf.mxu0
        %v5150 = vadd.f32 %v5132, %v5149
        %v5151 = vpop.f32.mrf.mxu0
        %v5152 = vadd.f32 %v5134, %v5151
        %5153 = vmatmul.bf16.gmra.mxu0 %v4520
        %v5154 = vpop.f32.mrf.mxu0
        %v5155 = vadd.f32 %v5137, %v5154
        %v5156 = vpop.f32.mrf.mxu0
        %5157 = vdwg.mxu0
        %v5158 = vmax.f32 %v4990, %v5150
        %v5159 = vmax.f32 %v4991, %v5152
        %v5160 = vmax.f32 %v4992, %v5155
        %v5161 = vld [vmem:[%s2] sm:$0xff]
        %v5162 = vld [vmem:[%s2 + $0x8] sm:$0xff]
        %v5163 = vld [vmem:[%s2 + $0x10] sm:$0xf]
        %5165 = vset.pattern.permute.xlu0 0
        %5166 = vperm.xlu0 %5165, %v5161
        %v5167 = vpop.permute.xlu0 %5166
        %5170 = vset.pattern.permute.xlu0 0
        %5171 = vperm.xlu0 %5170, %v5162
        %v5172 = vpop.permute.xlu0 %5171
        %5175 = vset.pattern.permute.xlu0 0
        %5176 = vperm.xlu0 %5175, %v5163
        %v5177 = vpop.permute.xlu0 %5176
        %v5179 = vadd.f32 %v5158, %v5167
        %v5180 = vadd.f32 %v5159, %v5172
        %v5181 = vadd.f32 %v5160, %v5177
        %v5182 = vmax.f32 %v5179, 0.0
        %v5183 = vmax.f32 %v5180, 0.0
        %v5184 = vmax.f32 %v5181, 0.0
        %v5185 = vpack.c.bf16 %v5183, %v5182
        %v5186 = vpack.c.bf16 %v5184, %v5184
        %s5187 = smul.u32 %s23, 4
        %s5188 = smul.u32 %s5187, 7
        %s5189 = smul.addr %s5188, 4
        %s5190 = scalar_lea.vmem %s3, %s5189
        %v5191 = vld [vmem:[%s5190] sm:$0xf]
        %v5192 = vld [vmem:[%s5190 + $0x4] sm:$0xf]
        %v5193 = vld [vmem:[%s5190 + $0x8] sm:$0xf]
        %v5194 = vld [vmem:[%s5190 + $0xc] sm:$0xf]
        %v5195 = vld [vmem:[%s5190 + $0x10] sm:$0xf]
        %v5196 = vld [vmem:[%s5190 + $0x14] sm:$0xf]
        %v5197 = vld [vmem:[%s5190 + $0x18] sm:$0x1]
        %v5198 = vld [vmem:[#allocation2] sm:$0xff]
        %v5199 = vld [vmem:[#allocation2 + $0x8] sm:$0xff]
        %v5200 = vld [vmem:[#allocation2 + $0x10] sm:$0xff]
        %v5201 = vld [vmem:[#allocation2 + $0x18] sm:$0xff]
        %v5202 = vld [vmem:[#allocation2 + $0x20] sm:$0xff]
        %v5203 = vld [vmem:[#allocation2 + $0x28] sm:$0xff]
        %v5204 = vld [vmem:[#allocation2 + $0x30] sm:$0x3]
        %v5212 = vunpack.c.l.b16 %v5191
        %v5213 = vunpack.c.l.b16 %v5192
        %v5214 = vunpack.c.l.b16 %v5193
        %v5215 = vunpack.c.l.b16 %v5194
        %v5216 = vunpack.c.l.b16 %v5195
        %v5217 = vunpack.c.l.b16 %v5196
        %v5218 = vunpack.c.l.b16 %v5197
        %v5219 = vpack.c.b16 %v5213, %v5212
        %v5220 = vpack.c.b16 %v5215, %v5214
        %v5221 = vpack.c.b16 %v5217, %v5216
        %v5222 = vpack.c.b16 %v5218, %v5218
        %vm5223 = vcmask 162816
        %v5225 = vsel %vm5223, %v5219, 0
        %v5228 = vsel %vm5223, %v5220, 0
        %v5231 = vsel %vm5223, %v5221, 0
        %v5234 = vsel %vm5223, %v5222, 0
        %vm5236 = vcmask 1041408
        %v5238 = vsel %vm5236, %v5186, 0
        %5240 = vmatpush.bf16.msra.mxu0 0
        %5241 = vmatpush.bf16.msra.mxu0 0
        %5242 = vmatpush.bf16.msra.mxu0 0
        %5243 = vmatpush.bf16.msra.mxu0 0
        %5244 = vmatpush.bf16.msra.mxu0 0
        %5245 = vmatpush.bf16.msra.mxu0 0
        %5246 = vmatpush.bf16.msra.mxu0 %v5238
        %5247 = vmatpush.bf16.msra.mxu0 %v5185
        %5248 = vmatmul.bf16.gmra.mxu0 %v5225
        %v5249 = vpop.f32.mrf.mxu0
        %v5250 = vadd.f32 0.0, %v5249
        %v5251 = vpop.f32.mrf.mxu0
        %v5252 = vadd.f32 0.0, %v5251
        %5253 = vmatmul.bf16.gmra.mxu0 %v5228
        %v5254 = vpop.f32.mrf.mxu0
        %v5255 = vadd.f32 0.0, %v5254
        %v5256 = vpop.f32.mrf.mxu0
        %v5257 = vadd.f32 0.0, %v5256
        %5258 = vmatmul.bf16.gmra.mxu0 %v5231
        %v5259 = vpop.f32.mrf.mxu0
        %v5260 = vadd.f32 0.0, %v5259
        %v5261 = vpop.f32.mrf.mxu0
        %v5262 = vadd.f32 0.0, %v5261
        %5263 = vmatmul.bf16.gmra.mxu0 %v5234
        %v5264 = vpop.f32.mrf.mxu0
        %v5265 = vadd.f32 0.0, %v5264
        %v5266 = vpop.f32.mrf.mxu0
        %5267 = vdwg.mxu0
        %v5268 = vadd.f32 %v5198, %v5250
        %v5269 = vadd.f32 %v5199, %v5252
        %v5270 = vadd.f32 %v5200, %v5255
        %v5271 = vadd.f32 %v5201, %v5257
        %v5272 = vadd.f32 %v5202, %v5260
        %v5273 = vadd.f32 %v5203, %v5262
        %v5274 = vadd.f32 %v5204, %v5265
        %vm5275 = vcmask 523264
        %5276 = vst.msk [vmem:[#allocation2] sm:$0xff] %vm5275, %v5268
        %5277 = vst.msk [vmem:[#allocation2 + $0x8] sm:$0xff] %vm5275, %v5269
        %5278 = vst.msk [vmem:[#allocation2 + $0x10] sm:$0xff] %vm5275, %v5270
        %5279 = vst.msk [vmem:[#allocation2 + $0x18] sm:$0xff] %vm5275, %v5271
        %5280 = vst.msk [vmem:[#allocation2 + $0x20] sm:$0xff] %vm5275, %v5272
        %5281 = vst.msk [vmem:[#allocation2 + $0x28] sm:$0xff] %vm5275, %v5273
        %vm5282 = vcmask 517120
        %5283 = vst.msk [vmem:[#allocation2 + $0x30] sm:$0x3] %vm5282, %v5274
        %v5284 = vld [vmem:[%s1] sm:$0xff]
        %v5285 = vld [vmem:[%s1 + $0x8] sm:$0xff]
        %v5286 = vld [vmem:[%s1 + $0x10] sm:$0x33]
        %s5287 = scalar_lea.vmem %s4424, 512 [#allocation3]
        %v5288 = vld [vmem:[%s5287] sm:$0xf]
        %v5289 = vld [vmem:[%s5287 + $0x4] sm:$0xf]
        %v5290 = vld [vmem:[%s5287 + $0x8] sm:$0xf]
        %v5291 = vld [vmem:[%s5287 + $0xc] sm:$0xf]
        %v5292 = vld [vmem:[%s5287 + $0x10] sm:$0xf]
        %v5293 = vld [vmem:[%s5287 + $0x14] sm:$0xf]
        %v5294 = vld [vmem:[%s5287 + $0x18] sm:$0xf]
        %v5295 = vld [vmem:[%s5287 + $0x1c] sm:$0xf]
        %v5296 = vld [vmem:[%s5287 + $0x20] sm:$0xf]
        %v5297 = vld [vmem:[%s5287 + $0x24] sm:$0xf]
        %v5298 = vld [vmem:[%s5287 + $0x28] sm:$0xf]
        %v5299 = vld [vmem:[%s5287 + $0x2c] sm:$0xf]
        %v5300 = vld [vmem:[%s5287 + $0x30] sm:$0xf]
        %v5301 = vld [vmem:[%s5287 + $0x34] sm:$0xf]
        %v5302 = vld [vmem:[%s5287 + $0x38] sm:$0xf]
        %v5303 = vld [vmem:[%s5287 + $0x3c] sm:$0xf]
        %v5304 = vld [vmem:[%s5287 + $0x40] sm:$0xf]
        %v5305 = vld [vmem:[%s5287 + $0x44] sm:$0xf]
        %v5306 = vld [vmem:[%s5287 + $0x48] sm:$0xf]
        %v5307 = vld [vmem:[%s5287 + $0x4c] sm:$0xf]
        %v5308 = vld [vmem:[%s5287 + $0x50] sm:$0xf]
        %v5309 = vld [vmem:[%s5287 + $0x54] sm:$0xf]
        %v5310 = vld [vmem:[%s5287 + $0x58] sm:$0xf]
        %v5311 = vld [vmem:[%s5287 + $0x5c] sm:$0xf]
        %v5312 = vld [vmem:[%s5287 + $0x60] sm:$0xf]
        %v5313 = vld [vmem:[%s5287 + $0x64] sm:$0xf]
        %v5314 = vld [vmem:[%s5287 + $0x68] sm:$0xf]
        %v5315 = vld [vmem:[%s5287 + $0x6c] sm:$0xf]
        %v5316 = vld [vmem:[%s5287 + $0x70] sm:$0xf]
        %v5317 = vld [vmem:[%s5287 + $0x74] sm:$0xf]
        %v5318 = vld [vmem:[%s5287 + $0x78] sm:$0xf]
        %v5319 = vld [vmem:[%s5287 + $0x7c] sm:$0xf]
        %v5323 = vunpack.c.l.b16 %v5284
        %v5324 = vunpack.c.h.b16 %v5284
        %v5325 = vunpack.c.l.b16 %v5285
        %v5326 = vunpack.c.h.b16 %v5285
        %v5327 = vunpack.c.l.b16 %v5286
        %v5328 = vunpack.c.h.b16 %v5286
        %v5329 = vpack.c.b16 %v5325, %v5323
        %v5330 = vpack.c.b16 %v5326, %v5324
        %v5331 = vpack.c.b16 %v5327, %v5327
        %v5332 = vpack.c.b16 %v5328, %v5328
        %v5369 = vunpack.c.l.b16 %v5288
        %v5370 = vunpack.c.l.b16 %v5289
        %v5371 = vunpack.c.l.b16 %v5290
        %v5372 = vunpack.c.l.b16 %v5291
        %v5373 = vunpack.c.l.b16 %v5292
        %v5374 = vunpack.c.l.b16 %v5293
        %v5375 = vunpack.c.l.b16 %v5294
        %v5376 = vunpack.c.l.b16 %v5295
        %v5377 = vunpack.c.l.b16 %v5296
        %v5378 = vunpack.c.l.b16 %v5297
        %v5379 = vunpack.c.l.b16 %v5298
        %v5380 = vunpack.c.l.b16 %v5299
        %v5381 = vunpack.c.l.b16 %v5300
        %v5382 = vunpack.c.l.b16 %v5301
        %v5383 = vunpack.c.l.b16 %v5302
        %v5384 = vunpack.c.l.b16 %v5303
        %v5385 = vunpack.c.l.b16 %v5304
        %v5386 = vunpack.c.l.b16 %v5305
        %v5387 = vunpack.c.l.b16 %v5306
        %v5388 = vunpack.c.l.b16 %v5307
        %v5389 = vunpack.c.l.b16 %v5308
        %v5390 = vunpack.c.l.b16 %v5309
        %v5391 = vunpack.c.l.b16 %v5310
        %v5392 = vunpack.c.l.b16 %v5311
        %v5393 = vunpack.c.l.b16 %v5312
        %v5394 = vunpack.c.l.b16 %v5313
        %v5395 = vunpack.c.l.b16 %v5314
        %v5396 = vunpack.c.l.b16 %v5315
        %v5397 = vunpack.c.l.b16 %v5316
        %v5398 = vunpack.c.l.b16 %v5317
        %v5399 = vunpack.c.l.b16 %v5318
        %v5400 = vunpack.c.l.b16 %v5319
        %v5401 = vpack.c.b16 %v5370, %v5369
        %v5402 = vpack.c.b16 %v5372, %v5371
        %v5403 = vpack.c.b16 %v5374, %v5373
        %v5404 = vpack.c.b16 %v5376, %v5375
        %v5405 = vpack.c.b16 %v5378, %v5377
        %v5406 = vpack.c.b16 %v5380, %v5379
        %v5407 = vpack.c.b16 %v5382, %v5381
        %v5408 = vpack.c.b16 %v5384, %v5383
        %v5409 = vpack.c.b16 %v5386, %v5385
        %v5410 = vpack.c.b16 %v5388, %v5387
        %v5411 = vpack.c.b16 %v5390, %v5389
        %v5412 = vpack.c.b16 %v5392, %v5391
        %v5413 = vpack.c.b16 %v5394, %v5393
        %v5414 = vpack.c.b16 %v5396, %v5395
        %v5415 = vpack.c.b16 %v5398, %v5397
        %v5416 = vpack.c.b16 %v5400, %v5399
        %5433 = vmatpush.bf16.msra.mxu0 %v5408
        %5434 = vmatpush.bf16.msra.mxu0 %v5407
        %5435 = vmatpush.bf16.msra.mxu0 %v5406
        %5436 = vmatpush.bf16.msra.mxu0 %v5405
        %5437 = vmatpush.bf16.msra.mxu0 %v5404
        %5438 = vmatpush.bf16.msra.mxu0 %v5403
        %5439 = vmatpush.bf16.msra.mxu0 %v5402
        %5440 = vmatpush.bf16.msra.mxu0 %v5401
        %5441 = vmatmul.bf16.gmra.mxu0 %v5329
        %v5442 = vpop.f32.mrf.mxu0
        %v5443 = vadd.f32 0.0, %v5442
        %v5444 = vpop.f32.mrf.mxu0
        %v5445 = vadd.f32 0.0, %v5444
        %5446 = vmatmul.bf16.gmra.mxu0 %v5331
        %v5447 = vpop.f32.mrf.mxu0
        %v5448 = vadd.f32 0.0, %v5447
        %v5449 = vpop.f32.mrf.mxu0
        %5450 = vdwg.mxu0
        %5451 = vmatpush.bf16.msra.mxu0 %v5416
        %5452 = vmatpush.bf16.msra.mxu0 %v5415
        %5453 = vmatpush.bf16.msra.mxu0 %v5414
        %5454 = vmatpush.bf16.msra.mxu0 %v5413
        %5455 = vmatpush.bf16.msra.mxu0 %v5412
        %5456 = vmatpush.bf16.msra.mxu0 %v5411
        %5457 = vmatpush.bf16.msra.mxu0 %v5410
        %5458 = vmatpush.bf16.msra.mxu0 %v5409
        %5459 = vmatmul.bf16.gmra.mxu0 %v5330
        %v5460 = vpop.f32.mrf.mxu0
        %v5461 = vadd.f32 %v5443, %v5460
        %v5462 = vpop.f32.mrf.mxu0
        %v5463 = vadd.f32 %v5445, %v5462
        %5464 = vmatmul.bf16.gmra.mxu0 %v5332
        %v5465 = vpop.f32.mrf.mxu0
        %v5466 = vadd.f32 %v5448, %v5465
        %v5467 = vpop.f32.mrf.mxu0
        %5468 = vdwg.mxu0
        %s5469 = scalar_lea.vmem %s4424, 640 [#allocation3]
        %v5470 = vld [vmem:[%s5469] sm:$0xf]
        %v5471 = vld [vmem:[%s5469 + $0x4] sm:$0xf]
        %v5472 = vld [vmem:[%s5469 + $0x8] sm:$0xf]
        %v5473 = vld [vmem:[%s5469 + $0xc] sm:$0xf]
        %v5474 = vld [vmem:[%s5469 + $0x10] sm:$0xf]
        %v5475 = vld [vmem:[%s5469 + $0x14] sm:$0xf]
        %v5476 = vld [vmem:[%s5469 + $0x18] sm:$0xf]
        %v5477 = vld [vmem:[%s5469 + $0x1c] sm:$0xf]
        %v5478 = vld [vmem:[%s5469 + $0x20] sm:$0xf]
        %v5479 = vld [vmem:[%s5469 + $0x24] sm:$0xf]
        %v5480 = vld [vmem:[%s5469 + $0x28] sm:$0xf]
        %v5481 = vld [vmem:[%s5469 + $0x2c] sm:$0xf]
        %v5482 = vld [vmem:[%s5469 + $0x30] sm:$0xf]
        %v5483 = vld [vmem:[%s5469 + $0x34] sm:$0xf]
        %v5484 = vld [vmem:[%s5469 + $0x38] sm:$0xf]
        %v5485 = vld [vmem:[%s5469 + $0x3c] sm:$0xf]
        %v5486 = vld [vmem:[%s5469 + $0x40] sm:$0xf]
        %v5487 = vld [vmem:[%s5469 + $0x44] sm:$0xf]
        %v5488 = vld [vmem:[%s5469 + $0x48] sm:$0xf]
        %v5489 = vld [vmem:[%s5469 + $0x4c] sm:$0xf]
        %v5490 = vld [vmem:[%s5469 + $0x50] sm:$0xf]
        %v5491 = vld [vmem:[%s5469 + $0x54] sm:$0xf]
        %v5492 = vld [vmem:[%s5469 + $0x58] sm:$0xf]
        %v5493 = vld [vmem:[%s5469 + $0x5c] sm:$0xf]
        %v5494 = vld [vmem:[%s5469 + $0x60] sm:$0xf]
        %v5495 = vld [vmem:[%s5469 + $0x64] sm:$0xf]
        %v5496 = vld [vmem:[%s5469 + $0x68] sm:$0xf]
        %v5497 = vld [vmem:[%s5469 + $0x6c] sm:$0xf]
        %v5498 = vld [vmem:[%s5469 + $0x70] sm:$0xf]
        %v5499 = vld [vmem:[%s5469 + $0x74] sm:$0xf]
        %v5500 = vld [vmem:[%s5469 + $0x78] sm:$0xf]
        %v5501 = vld [vmem:[%s5469 + $0x7c] sm:$0xf]
        %v5534 = vunpack.c.l.b16 %v5470
        %v5535 = vunpack.c.l.b16 %v5471
        %v5536 = vunpack.c.l.b16 %v5472
        %v5537 = vunpack.c.l.b16 %v5473
        %v5538 = vunpack.c.l.b16 %v5474
        %v5539 = vunpack.c.l.b16 %v5475
        %v5540 = vunpack.c.l.b16 %v5476
        %v5541 = vunpack.c.l.b16 %v5477
        %v5542 = vunpack.c.l.b16 %v5478
        %v5543 = vunpack.c.l.b16 %v5479
        %v5544 = vunpack.c.l.b16 %v5480
        %v5545 = vunpack.c.l.b16 %v5481
        %v5546 = vunpack.c.l.b16 %v5482
        %v5547 = vunpack.c.l.b16 %v5483
        %v5548 = vunpack.c.l.b16 %v5484
        %v5549 = vunpack.c.l.b16 %v5485
        %v5550 = vunpack.c.l.b16 %v5486
        %v5551 = vunpack.c.l.b16 %v5487
        %v5552 = vunpack.c.l.b16 %v5488
        %v5553 = vunpack.c.l.b16 %v5489
        %v5554 = vunpack.c.l.b16 %v5490
        %v5555 = vunpack.c.l.b16 %v5491
        %v5556 = vunpack.c.l.b16 %v5492
        %v5557 = vunpack.c.l.b16 %v5493
        %v5558 = vunpack.c.l.b16 %v5494
        %v5559 = vunpack.c.l.b16 %v5495
        %v5560 = vunpack.c.l.b16 %v5496
        %v5561 = vunpack.c.l.b16 %v5497
        %v5562 = vunpack.c.l.b16 %v5498
        %v5563 = vunpack.c.l.b16 %v5499
        %v5564 = vunpack.c.l.b16 %v5500
        %v5565 = vunpack.c.l.b16 %v5501
        %v5566 = vpack.c.b16 %v5535, %v5534
        %v5567 = vpack.c.b16 %v5537, %v5536
        %v5568 = vpack.c.b16 %v5539, %v5538
        %v5569 = vpack.c.b16 %v5541, %v5540
        %v5570 = vpack.c.b16 %v5543, %v5542
        %v5571 = vpack.c.b16 %v5545, %v5544
        %v5572 = vpack.c.b16 %v5547, %v5546
        %v5573 = vpack.c.b16 %v5549, %v5548
        %v5574 = vpack.c.b16 %v5551, %v5550
        %v5575 = vpack.c.b16 %v5553, %v5552
        %v5576 = vpack.c.b16 %v5555, %v5554
        %v5577 = vpack.c.b16 %v5557, %v5556
        %v5578 = vpack.c.b16 %v5559, %v5558
        %v5579 = vpack.c.b16 %v5561, %v5560
        %v5580 = vpack.c.b16 %v5563, %v5562
        %v5581 = vpack.c.b16 %v5565, %v5564
        %5598 = vmatpush.bf16.msra.mxu0 %v5573
        %5599 = vmatpush.bf16.msra.mxu0 %v5572
        %5600 = vmatpush.bf16.msra.mxu0 %v5571
        %5601 = vmatpush.bf16.msra.mxu0 %v5570
        %5602 = vmatpush.bf16.msra.mxu0 %v5569
        %5603 = vmatpush.bf16.msra.mxu0 %v5568
        %5604 = vmatpush.bf16.msra.mxu0 %v5567
        %5605 = vmatpush.bf16.msra.mxu0 %v5566
        %5606 = vmatmul.bf16.gmra.mxu0 %v5329
        %v5607 = vpop.f32.mrf.mxu0
        %v5608 = vadd.f32 0.0, %v5607
        %v5609 = vpop.f32.mrf.mxu0
        %v5610 = vadd.f32 0.0, %v5609
        %5611 = vmatmul.bf16.gmra.mxu0 %v5331
        %v5612 = vpop.f32.mrf.mxu0
        %v5613 = vadd.f32 0.0, %v5612
        %v5614 = vpop.f32.mrf.mxu0
        %5615 = vdwg.mxu0
        %5616 = vmatpush.bf16.msra.mxu0 %v5581
        %5617 = vmatpush.bf16.msra.mxu0 %v5580
        %5618 = vmatpush.bf16.msra.mxu0 %v5579
        %5619 = vmatpush.bf16.msra.mxu0 %v5578
        %5620 = vmatpush.bf16.msra.mxu0 %v5577
        %5621 = vmatpush.bf16.msra.mxu0 %v5576
        %5622 = vmatpush.bf16.msra.mxu0 %v5575
        %5623 = vmatpush.bf16.msra.mxu0 %v5574
        %5624 = vmatmul.bf16.gmra.mxu0 %v5330
        %v5625 = vpop.f32.mrf.mxu0
        %v5626 = vadd.f32 %v5608, %v5625
        %v5627 = vpop.f32.mrf.mxu0
        %v5628 = vadd.f32 %v5610, %v5627
        %5629 = vmatmul.bf16.gmra.mxu0 %v5332
        %v5630 = vpop.f32.mrf.mxu0
        %v5631 = vadd.f32 %v5613, %v5630
        %v5632 = vpop.f32.mrf.mxu0
        %5633 = vdwg.mxu0
        %v5634 = vmax.f32 %v5461, %v5626
        %v5635 = vmax.f32 %v5463, %v5628
        %v5636 = vmax.f32 %v5466, %v5631
        %s5637 = scalar_lea.vmem %s4424, 768 [#allocation3]
        %v5638 = vld [vmem:[%s5637] sm:$0xf]
        %v5639 = vld [vmem:[%s5637 + $0x4] sm:$0xf]
        %v5640 = vld [vmem:[%s5637 + $0x8] sm:$0xf]
        %v5641 = vld [vmem:[%s5637 + $0xc] sm:$0xf]
        %v5642 = vld [vmem:[%s5637 + $0x10] sm:$0xf]
        %v5643 = vld [vmem:[%s5637 + $0x14] sm:$0xf]
        %v5644 = vld [vmem:[%s5637 + $0x18] sm:$0xf]
        %v5645 = vld [vmem:[%s5637 + $0x1c] sm:$0xf]
        %v5646 = vld [vmem:[%s5637 + $0x20] sm:$0xf]
        %v5647 = vld [vmem:[%s5637 + $0x24] sm:$0xf]
        %v5648 = vld [vmem:[%s5637 + $0x28] sm:$0xf]
        %v5649 = vld [vmem:[%s5637 + $0x2c] sm:$0xf]
        %v5650 = vld [vmem:[%s5637 + $0x30] sm:$0xf]
        %v5651 = vld [vmem:[%s5637 + $0x34] sm:$0xf]
        %v5652 = vld [vmem:[%s5637 + $0x38] sm:$0xf]
        %v5653 = vld [vmem:[%s5637 + $0x3c] sm:$0xf]
        %v5654 = vld [vmem:[%s5637 + $0x40] sm:$0xf]
        %v5655 = vld [vmem:[%s5637 + $0x44] sm:$0xf]
        %v5656 = vld [vmem:[%s5637 + $0x48] sm:$0xf]
        %v5657 = vld [vmem:[%s5637 + $0x4c] sm:$0xf]
        %v5658 = vld [vmem:[%s5637 + $0x50] sm:$0xf]
        %v5659 = vld [vmem:[%s5637 + $0x54] sm:$0xf]
        %v5660 = vld [vmem:[%s5637 + $0x58] sm:$0xf]
        %v5661 = vld [vmem:[%s5637 + $0x5c] sm:$0xf]
        %v5662 = vld [vmem:[%s5637 + $0x60] sm:$0xf]
        %v5663 = vld [vmem:[%s5637 + $0x64] sm:$0xf]
        %v5664 = vld [vmem:[%s5637 + $0x68] sm:$0xf]
        %v5665 = vld [vmem:[%s5637 + $0x6c] sm:$0xf]
        %v5666 = vld [vmem:[%s5637 + $0x70] sm:$0xf]
        %v5667 = vld [vmem:[%s5637 + $0x74] sm:$0xf]
        %v5668 = vld [vmem:[%s5637 + $0x78] sm:$0xf]
        %v5669 = vld [vmem:[%s5637 + $0x7c] sm:$0xf]
        %v5702 = vunpack.c.l.b16 %v5638
        %v5703 = vunpack.c.l.b16 %v5639
        %v5704 = vunpack.c.l.b16 %v5640
        %v5705 = vunpack.c.l.b16 %v5641
        %v5706 = vunpack.c.l.b16 %v5642
        %v5707 = vunpack.c.l.b16 %v5643
        %v5708 = vunpack.c.l.b16 %v5644
        %v5709 = vunpack.c.l.b16 %v5645
        %v5710 = vunpack.c.l.b16 %v5646
        %v5711 = vunpack.c.l.b16 %v5647
        %v5712 = vunpack.c.l.b16 %v5648
        %v5713 = vunpack.c.l.b16 %v5649
        %v5714 = vunpack.c.l.b16 %v5650
        %v5715 = vunpack.c.l.b16 %v5651
        %v5716 = vunpack.c.l.b16 %v5652
        %v5717 = vunpack.c.l.b16 %v5653
        %v5718 = vunpack.c.l.b16 %v5654
        %v5719 = vunpack.c.l.b16 %v5655
        %v5720 = vunpack.c.l.b16 %v5656
        %v5721 = vunpack.c.l.b16 %v5657
        %v5722 = vunpack.c.l.b16 %v5658
        %v5723 = vunpack.c.l.b16 %v5659
        %v5724 = vunpack.c.l.b16 %v5660
        %v5725 = vunpack.c.l.b16 %v5661
        %v5726 = vunpack.c.l.b16 %v5662
        %v5727 = vunpack.c.l.b16 %v5663
        %v5728 = vunpack.c.l.b16 %v5664
        %v5729 = vunpack.c.l.b16 %v5665
        %v5730 = vunpack.c.l.b16 %v5666
        %v5731 = vunpack.c.l.b16 %v5667
        %v5732 = vunpack.c.l.b16 %v5668
        %v5733 = vunpack.c.l.b16 %v5669
        %v5734 = vpack.c.b16 %v5703, %v5702
        %v5735 = vpack.c.b16 %v5705, %v5704
        %v5736 = vpack.c.b16 %v5707, %v5706
        %v5737 = vpack.c.b16 %v5709, %v5708
        %v5738 = vpack.c.b16 %v5711, %v5710
        %v5739 = vpack.c.b16 %v5713, %v5712
        %v5740 = vpack.c.b16 %v5715, %v5714
        %v5741 = vpack.c.b16 %v5717, %v5716
        %v5742 = vpack.c.b16 %v5719, %v5718
        %v5743 = vpack.c.b16 %v5721, %v5720
        %v5744 = vpack.c.b16 %v5723, %v5722
        %v5745 = vpack.c.b16 %v5725, %v5724
        %v5746 = vpack.c.b16 %v5727, %v5726
        %v5747 = vpack.c.b16 %v5729, %v5728
        %v5748 = vpack.c.b16 %v5731, %v5730
        %v5749 = vpack.c.b16 %v5733, %v5732
        %5766 = vmatpush.bf16.msra.mxu0 %v5741
        %5767 = vmatpush.bf16.msra.mxu0 %v5740
        %5768 = vmatpush.bf16.msra.mxu0 %v5739
        %5769 = vmatpush.bf16.msra.mxu0 %v5738
        %5770 = vmatpush.bf16.msra.mxu0 %v5737
        %5771 = vmatpush.bf16.msra.mxu0 %v5736
        %5772 = vmatpush.bf16.msra.mxu0 %v5735
        %5773 = vmatpush.bf16.msra.mxu0 %v5734
        %5774 = vmatmul.bf16.gmra.mxu0 %v5329
        %v5775 = vpop.f32.mrf.mxu0
        %v5776 = vadd.f32 0.0, %v5775
        %v5777 = vpop.f32.mrf.mxu0
        %v5778 = vadd.f32 0.0, %v5777
        %5779 = vmatmul.bf16.gmra.mxu0 %v5331
        %v5780 = vpop.f32.mrf.mxu0
        %v5781 = vadd.f32 0.0, %v5780
        %v5782 = vpop.f32.mrf.mxu0
        %5783 = vdwg.mxu0
        %5784 = vmatpush.bf16.msra.mxu0 %v5749
        %5785 = vmatpush.bf16.msra.mxu0 %v5748
        %5786 = vmatpush.bf16.msra.mxu0 %v5747
        %5787 = vmatpush.bf16.msra.mxu0 %v5746
        %5788 = vmatpush.bf16.msra.mxu0 %v5745
        %5789 = vmatpush.bf16.msra.mxu0 %v5744
        %5790 = vmatpush.bf16.msra.mxu0 %v5743
        %5791 = vmatpush.bf16.msra.mxu0 %v5742
        %5792 = vmatmul.bf16.gmra.mxu0 %v5330
        %v5793 = vpop.f32.mrf.mxu0
        %v5794 = vadd.f32 %v5776, %v5793
        %v5795 = vpop.f32.mrf.mxu0
        %v5796 = vadd.f32 %v5778, %v5795
        %5797 = vmatmul.bf16.gmra.mxu0 %v5332
        %v5798 = vpop.f32.mrf.mxu0
        %v5799 = vadd.f32 %v5781, %v5798
        %v5800 = vpop.f32.mrf.mxu0
        %5801 = vdwg.mxu0
        %v5802 = vmax.f32 %v5634, %v5794
        %v5803 = vmax.f32 %v5635, %v5796
        %v5804 = vmax.f32 %v5636, %v5799
        %s5805 = scalar_lea.vmem %s4424, 896 [#allocation3]
        %v5806 = vld [vmem:[%s5805] sm:$0xf]
        %v5807 = vld [vmem:[%s5805 + $0x4] sm:$0xf]
        %v5808 = vld [vmem:[%s5805 + $0x8] sm:$0xf]
        %v5809 = vld [vmem:[%s5805 + $0xc] sm:$0xf]
        %v5810 = vld [vmem:[%s5805 + $0x10] sm:$0xf]
        %v5811 = vld [vmem:[%s5805 + $0x14] sm:$0xf]
        %v5812 = vld [vmem:[%s5805 + $0x18] sm:$0xf]
        %v5813 = vld [vmem:[%s5805 + $0x1c] sm:$0xf]
        %v5814 = vld [vmem:[%s5805 + $0x20] sm:$0xf]
        %v5815 = vld [vmem:[%s5805 + $0x24] sm:$0xf]
        %v5816 = vld [vmem:[%s5805 + $0x28] sm:$0xf]
        %v5817 = vld [vmem:[%s5805 + $0x2c] sm:$0xf]
        %v5818 = vld [vmem:[%s5805 + $0x30] sm:$0xf]
        %v5819 = vld [vmem:[%s5805 + $0x34] sm:$0xf]
        %v5820 = vld [vmem:[%s5805 + $0x38] sm:$0xf]
        %v5821 = vld [vmem:[%s5805 + $0x3c] sm:$0xf]
        %v5822 = vld [vmem:[%s5805 + $0x40] sm:$0xf]
        %v5823 = vld [vmem:[%s5805 + $0x44] sm:$0xf]
        %v5824 = vld [vmem:[%s5805 + $0x48] sm:$0xf]
        %v5825 = vld [vmem:[%s5805 + $0x4c] sm:$0xf]
        %v5826 = vld [vmem:[%s5805 + $0x50] sm:$0xf]
        %v5827 = vld [vmem:[%s5805 + $0x54] sm:$0xf]
        %v5828 = vld [vmem:[%s5805 + $0x58] sm:$0xf]
        %v5829 = vld [vmem:[%s5805 + $0x5c] sm:$0xf]
        %v5830 = vld [vmem:[%s5805 + $0x60] sm:$0xf]
        %v5831 = vld [vmem:[%s5805 + $0x64] sm:$0xf]
        %v5832 = vld [vmem:[%s5805 + $0x68] sm:$0xf]
        %v5833 = vld [vmem:[%s5805 + $0x6c] sm:$0xf]
        %v5834 = vld [vmem:[%s5805 + $0x70] sm:$0xf]
        %v5835 = vld [vmem:[%s5805 + $0x74] sm:$0xf]
        %v5836 = vld [vmem:[%s5805 + $0x78] sm:$0xf]
        %v5837 = vld [vmem:[%s5805 + $0x7c] sm:$0xf]
        %v5870 = vunpack.c.l.b16 %v5806
        %v5871 = vunpack.c.l.b16 %v5807
        %v5872 = vunpack.c.l.b16 %v5808
        %v5873 = vunpack.c.l.b16 %v5809
        %v5874 = vunpack.c.l.b16 %v5810
        %v5875 = vunpack.c.l.b16 %v5811
        %v5876 = vunpack.c.l.b16 %v5812
        %v5877 = vunpack.c.l.b16 %v5813
        %v5878 = vunpack.c.l.b16 %v5814
        %v5879 = vunpack.c.l.b16 %v5815
        %v5880 = vunpack.c.l.b16 %v5816
        %v5881 = vunpack.c.l.b16 %v5817
        %v5882 = vunpack.c.l.b16 %v5818
        %v5883 = vunpack.c.l.b16 %v5819
        %v5884 = vunpack.c.l.b16 %v5820
        %v5885 = vunpack.c.l.b16 %v5821
        %v5886 = vunpack.c.l.b16 %v5822
        %v5887 = vunpack.c.l.b16 %v5823
        %v5888 = vunpack.c.l.b16 %v5824
        %v5889 = vunpack.c.l.b16 %v5825
        %v5890 = vunpack.c.l.b16 %v5826
        %v5891 = vunpack.c.l.b16 %v5827
        %v5892 = vunpack.c.l.b16 %v5828
        %v5893 = vunpack.c.l.b16 %v5829
        %v5894 = vunpack.c.l.b16 %v5830
        %v5895 = vunpack.c.l.b16 %v5831
        %v5896 = vunpack.c.l.b16 %v5832
        %v5897 = vunpack.c.l.b16 %v5833
        %v5898 = vunpack.c.l.b16 %v5834
        %v5899 = vunpack.c.l.b16 %v5835
        %v5900 = vunpack.c.l.b16 %v5836
        %v5901 = vunpack.c.l.b16 %v5837
        %v5902 = vpack.c.b16 %v5871, %v5870
        %v5903 = vpack.c.b16 %v5873, %v5872
        %v5904 = vpack.c.b16 %v5875, %v5874
        %v5905 = vpack.c.b16 %v5877, %v5876
        %v5906 = vpack.c.b16 %v5879, %v5878
        %v5907 = vpack.c.b16 %v5881, %v5880
        %v5908 = vpack.c.b16 %v5883, %v5882
        %v5909 = vpack.c.b16 %v5885, %v5884
        %v5910 = vpack.c.b16 %v5887, %v5886
        %v5911 = vpack.c.b16 %v5889, %v5888
        %v5912 = vpack.c.b16 %v5891, %v5890
        %v5913 = vpack.c.b16 %v5893, %v5892
        %v5914 = vpack.c.b16 %v5895, %v5894
        %v5915 = vpack.c.b16 %v5897, %v5896
        %v5916 = vpack.c.b16 %v5899, %v5898
        %v5917 = vpack.c.b16 %v5901, %v5900
        %5934 = vmatpush.bf16.msra.mxu0 %v5909
        %5935 = vmatpush.bf16.msra.mxu0 %v5908
        %5936 = vmatpush.bf16.msra.mxu0 %v5907
        %5937 = vmatpush.bf16.msra.mxu0 %v5906
        %5938 = vmatpush.bf16.msra.mxu0 %v5905
        %5939 = vmatpush.bf16.msra.mxu0 %v5904
        %5940 = vmatpush.bf16.msra.mxu0 %v5903
        %5941 = vmatpush.bf16.msra.mxu0 %v5902
        %5942 = vmatmul.bf16.gmra.mxu0 %v5329
        %v5943 = vpop.f32.mrf.mxu0
        %v5944 = vadd.f32 0.0, %v5943
        %v5945 = vpop.f32.mrf.mxu0
        %v5946 = vadd.f32 0.0, %v5945
        %5947 = vmatmul.bf16.gmra.mxu0 %v5331
        %v5948 = vpop.f32.mrf.mxu0
        %v5949 = vadd.f32 0.0, %v5948
        %v5950 = vpop.f32.mrf.mxu0
        %5951 = vdwg.mxu0
        %5952 = vmatpush.bf16.msra.mxu0 %v5917
        %5953 = vmatpush.bf16.msra.mxu0 %v5916
        %5954 = vmatpush.bf16.msra.mxu0 %v5915
        %5955 = vmatpush.bf16.msra.mxu0 %v5914
        %5956 = vmatpush.bf16.msra.mxu0 %v5913
        %5957 = vmatpush.bf16.msra.mxu0 %v5912
        %5958 = vmatpush.bf16.msra.mxu0 %v5911
        %5959 = vmatpush.bf16.msra.mxu0 %v5910
        %5960 = vmatmul.bf16.gmra.mxu0 %v5330
        %v5961 = vpop.f32.mrf.mxu0
        %v5962 = vadd.f32 %v5944, %v5961
        %v5963 = vpop.f32.mrf.mxu0
        %v5964 = vadd.f32 %v5946, %v5963
        %5965 = vmatmul.bf16.gmra.mxu0 %v5332
        %v5966 = vpop.f32.mrf.mxu0
        %v5967 = vadd.f32 %v5949, %v5966
        %v5968 = vpop.f32.mrf.mxu0
        %5969 = vdwg.mxu0
        %v5970 = vmax.f32 %v5802, %v5962
        %v5971 = vmax.f32 %v5803, %v5964
        %v5972 = vmax.f32 %v5804, %v5967
        %v5973 = vld [vmem:[%s2] sm:$0xff]
        %v5974 = vld [vmem:[%s2 + $0x8] sm:$0xff]
        %v5975 = vld [vmem:[%s2 + $0x10] sm:$0xf]
        %5977 = vset.pattern.permute.xlu0 0
        %5978 = vperm.xlu0 %5977, %v5973
        %v5979 = vpop.permute.xlu0 %5978
        %5982 = vset.pattern.permute.xlu0 0
        %5983 = vperm.xlu0 %5982, %v5974
        %v5984 = vpop.permute.xlu0 %5983
        %5987 = vset.pattern.permute.xlu0 0
        %5988 = vperm.xlu0 %5987, %v5975
        %v5989 = vpop.permute.xlu0 %5988
        %v5991 = vadd.f32 %v5970, %v5979
        %v5992 = vadd.f32 %v5971, %v5984
        %v5993 = vadd.f32 %v5972, %v5989
        %v5994 = vmax.f32 %v5991, 0.0
        %v5995 = vmax.f32 %v5992, 0.0
        %v5996 = vmax.f32 %v5993, 0.0
        %v5997 = vpack.c.bf16 %v5995, %v5994
        %v5998 = vpack.c.bf16 %v5996, %v5996
        %s5999 = sadd.s32 %s5187, 1
        %s6000 = smul.u32 %s5999, 7
        %s6001 = smul.addr %s6000, 4
        %s6002 = scalar_lea.vmem %s3, %s6001
        %v6003 = vld [vmem:[%s6002] sm:$0xf]
        %v6004 = vld [vmem:[%s6002 + $0x4] sm:$0xf]
        %v6005 = vld [vmem:[%s6002 + $0x8] sm:$0xf]
        %v6006 = vld [vmem:[%s6002 + $0xc] sm:$0xf]
        %v6007 = vld [vmem:[%s6002 + $0x10] sm:$0xf]
        %v6008 = vld [vmem:[%s6002 + $0x14] sm:$0xf]
        %v6009 = vld [vmem:[%s6002 + $0x18] sm:$0x1]
        %v6010 = vld [vmem:[#allocation2] sm:$0xff]
        %v6011 = vld [vmem:[#allocation2 + $0x8] sm:$0xff]
        %v6012 = vld [vmem:[#allocation2 + $0x10] sm:$0xff]
        %v6013 = vld [vmem:[#allocation2 + $0x18] sm:$0xff]
        %v6014 = vld [vmem:[#allocation2 + $0x20] sm:$0xff]
        %v6015 = vld [vmem:[#allocation2 + $0x28] sm:$0xff]
        %v6016 = vld [vmem:[#allocation2 + $0x30] sm:$0x3]
        %v6024 = vunpack.c.l.b16 %v6003
        %v6025 = vunpack.c.l.b16 %v6004
        %v6026 = vunpack.c.l.b16 %v6005
        %v6027 = vunpack.c.l.b16 %v6006
        %v6028 = vunpack.c.l.b16 %v6007
        %v6029 = vunpack.c.l.b16 %v6008
        %v6030 = vunpack.c.l.b16 %v6009
        %v6031 = vpack.c.b16 %v6025, %v6024
        %v6032 = vpack.c.b16 %v6027, %v6026
        %v6033 = vpack.c.b16 %v6029, %v6028
        %v6034 = vpack.c.b16 %v6030, %v6030
        %v6036 = vsel %vm5223, %v6031, 0
        %v6039 = vsel %vm5223, %v6032, 0
        %v6042 = vsel %vm5223, %v6033, 0
        %v6045 = vsel %vm5223, %v6034, 0
        %v6048 = vsel %vm5236, %v5998, 0
        %6050 = vmatpush.bf16.msra.mxu0 0
        %6051 = vmatpush.bf16.msra.mxu0 0
        %6052 = vmatpush.bf16.msra.mxu0 0
        %6053 = vmatpush.bf16.msra.mxu0 0
        %6054 = vmatpush.bf16.msra.mxu0 0
        %6055 = vmatpush.bf16.msra.mxu0 0
        %6056 = vmatpush.bf16.msra.mxu0 %v6048
        %6057 = vmatpush.bf16.msra.mxu0 %v5997
        %6058 = vmatmul.bf16.gmra.mxu0 %v6036
        %v6059 = vpop.f32.mrf.mxu0
        %v6060 = vadd.f32 0.0, %v6059
        %v6061 = vpop.f32.mrf.mxu0
        %v6062 = vadd.f32 0.0, %v6061
        %6063 = vmatmul.bf16.gmra.mxu0 %v6039
        %v6064 = vpop.f32.mrf.mxu0
        %v6065 = vadd.f32 0.0, %v6064
        %v6066 = vpop.f32.mrf.mxu0
        %v6067 = vadd.f32 0.0, %v6066
        %6068 = vmatmul.bf16.gmra.mxu0 %v6042
        %v6069 = vpop.f32.mrf.mxu0
        %v6070 = vadd.f32 0.0, %v6069
        %v6071 = vpop.f32.mrf.mxu0
        %v6072 = vadd.f32 0.0, %v6071
        %6073 = vmatmul.bf16.gmra.mxu0 %v6045
        %v6074 = vpop.f32.mrf.mxu0
        %v6075 = vadd.f32 0.0, %v6074
        %v6076 = vpop.f32.mrf.mxu0
        %6077 = vdwg.mxu0
        %v6078 = vadd.f32 %v6010, %v6060
        %v6079 = vadd.f32 %v6011, %v6062
        %v6080 = vadd.f32 %v6012, %v6065
        %v6081 = vadd.f32 %v6013, %v6067
        %v6082 = vadd.f32 %v6014, %v6070
        %v6083 = vadd.f32 %v6015, %v6072
        %v6084 = vadd.f32 %v6016, %v6075
        %6085 = vst.msk [vmem:[#allocation2] sm:$0xff] %vm5275, %v6078
        %6086 = vst.msk [vmem:[#allocation2 + $0x8] sm:$0xff] %vm5275, %v6079
        %6087 = vst.msk [vmem:[#allocation2 + $0x10] sm:$0xff] %vm5275, %v6080
        %6088 = vst.msk [vmem:[#allocation2 + $0x18] sm:$0xff] %vm5275, %v6081
        %6089 = vst.msk [vmem:[#allocation2 + $0x20] sm:$0xff] %vm5275, %v6082
        %6090 = vst.msk [vmem:[#allocation2 + $0x28] sm:$0xff] %vm5275, %v6083
        %6091 = vst.msk [vmem:[#allocation2 + $0x30] sm:$0x3] %vm5282, %v6084
        %v6092 = vld [vmem:[%s1] sm:$0xff]
        %v6093 = vld [vmem:[%s1 + $0x8] sm:$0xff]
        %v6094 = vld [vmem:[%s1 + $0x10] sm:$0x33]
        %s6095 = scalar_lea.vmem %s4424, 1024 [#allocation3]
        %v6096 = vld [vmem:[%s6095] sm:$0xf]
        %v6097 = vld [vmem:[%s6095 + $0x4] sm:$0xf]
        %v6098 = vld [vmem:[%s6095 + $0x8] sm:$0xf]
        %v6099 = vld [vmem:[%s6095 + $0xc] sm:$0xf]
        %v6100 = vld [vmem:[%s6095 + $0x10] sm:$0xf]
        %v6101 = vld [vmem:[%s6095 + $0x14] sm:$0xf]
        %v6102 = vld [vmem:[%s6095 + $0x18] sm:$0xf]
        %v6103 = vld [vmem:[%s6095 + $0x1c] sm:$0xf]
        %v6104 = vld [vmem:[%s6095 + $0x20] sm:$0xf]
        %v6105 = vld [vmem:[%s6095 + $0x24] sm:$0xf]
        %v6106 = vld [vmem:[%s6095 + $0x28] sm:$0xf]
        %v6107 = vld [vmem:[%s6095 + $0x2c] sm:$0xf]
        %v6108 = vld [vmem:[%s6095 + $0x30] sm:$0xf]
        %v6109 = vld [vmem:[%s6095 + $0x34] sm:$0xf]
        %v6110 = vld [vmem:[%s6095 + $0x38] sm:$0xf]
        %v6111 = vld [vmem:[%s6095 + $0x3c] sm:$0xf]
        %v6112 = vld [vmem:[%s6095 + $0x40] sm:$0xf]
        %v6113 = vld [vmem:[%s6095 + $0x44] sm:$0xf]
        %v6114 = vld [vmem:[%s6095 + $0x48] sm:$0xf]
        %v6115 = vld [vmem:[%s6095 + $0x4c] sm:$0xf]
        %v6116 = vld [vmem:[%s6095 + $0x50] sm:$0xf]
        %v6117 = vld [vmem:[%s6095 + $0x54] sm:$0xf]
        %v6118 = vld [vmem:[%s6095 + $0x58] sm:$0xf]
        %v6119 = vld [vmem:[%s6095 + $0x5c] sm:$0xf]
        %v6120 = vld [vmem:[%s6095 + $0x60] sm:$0xf]
        %v6121 = vld [vmem:[%s6095 + $0x64] sm:$0xf]
        %v6122 = vld [vmem:[%s6095 + $0x68] sm:$0xf]
        %v6123 = vld [vmem:[%s6095 + $0x6c] sm:$0xf]
        %v6124 = vld [vmem:[%s6095 + $0x70] sm:$0xf]
        %v6125 = vld [vmem:[%s6095 + $0x74] sm:$0xf]
        %v6126 = vld [vmem:[%s6095 + $0x78] sm:$0xf]
        %v6127 = vld [vmem:[%s6095 + $0x7c] sm:$0xf]
        %v6131 = vunpack.c.l.b16 %v6092
        %v6132 = vunpack.c.h.b16 %v6092
        %v6133 = vunpack.c.l.b16 %v6093
        %v6134 = vunpack.c.h.b16 %v6093
        %v6135 = vunpack.c.l.b16 %v6094
        %v6136 = vunpack.c.h.b16 %v6094
        %v6137 = vpack.c.b16 %v6133, %v6131
        %v6138 = vpack.c.b16 %v6134, %v6132
        %v6139 = vpack.c.b16 %v6135, %v6135
        %v6140 = vpack.c.b16 %v6136, %v6136
        %v6177 = vunpack.c.l.b16 %v6096
        %v6178 = vunpack.c.l.b16 %v6097
        %v6179 = vunpack.c.l.b16 %v6098
        %v6180 = vunpack.c.l.b16 %v6099
        %v6181 = vunpack.c.l.b16 %v6100
        %v6182 = vunpack.c.l.b16 %v6101
        %v6183 = vunpack.c.l.b16 %v6102
        %v6184 = vunpack.c.l.b16 %v6103
        %v6185 = vunpack.c.l.b16 %v6104
        %v6186 = vunpack.c.l.b16 %v6105
        %v6187 = vunpack.c.l.b16 %v6106
        %v6188 = vunpack.c.l.b16 %v6107
        %v6189 = vunpack.c.l.b16 %v6108
        %v6190 = vunpack.c.l.b16 %v6109
        %v6191 = vunpack.c.l.b16 %v6110
        %v6192 = vunpack.c.l.b16 %v6111
        %v6193 = vunpack.c.l.b16 %v6112
        %v6194 = vunpack.c.l.b16 %v6113
        %v6195 = vunpack.c.l.b16 %v6114
        %v6196 = vunpack.c.l.b16 %v6115
        %v6197 = vunpack.c.l.b16 %v6116
        %v6198 = vunpack.c.l.b16 %v6117
        %v6199 = vunpack.c.l.b16 %v6118
        %v6200 = vunpack.c.l.b16 %v6119
        %v6201 = vunpack.c.l.b16 %v6120
        %v6202 = vunpack.c.l.b16 %v6121
        %v6203 = vunpack.c.l.b16 %v6122
        %v6204 = vunpack.c.l.b16 %v6123
        %v6205 = vunpack.c.l.b16 %v6124
        %v6206 = vunpack.c.l.b16 %v6125
        %v6207 = vunpack.c.l.b16 %v6126
        %v6208 = vunpack.c.l.b16 %v6127
        %v6209 = vpack.c.b16 %v6178, %v6177
        %v6210 = vpack.c.b16 %v6180, %v6179
        %v6211 = vpack.c.b16 %v6182, %v6181
        %v6212 = vpack.c.b16 %v6184, %v6183
        %v6213 = vpack.c.b16 %v6186, %v6185
        %v6214 = vpack.c.b16 %v6188, %v6187
        %v6215 = vpack.c.b16 %v6190, %v6189
        %v6216 = vpack.c.b16 %v6192, %v6191
        %v6217 = vpack.c.b16 %v6194, %v6193
        %v6218 = vpack.c.b16 %v6196, %v6195
        %v6219 = vpack.c.b16 %v6198, %v6197
        %v6220 = vpack.c.b16 %v6200, %v6199
        %v6221 = vpack.c.b16 %v6202, %v6201
        %v6222 = vpack.c.b16 %v6204, %v6203
        %v6223 = vpack.c.b16 %v6206, %v6205
        %v6224 = vpack.c.b16 %v6208, %v6207
        %6241 = vmatpush.bf16.msra.mxu0 %v6216
        %6242 = vmatpush.bf16.msra.mxu0 %v6215
        %6243 = vmatpush.bf16.msra.mxu0 %v6214
        %6244 = vmatpush.bf16.msra.mxu0 %v6213
        %6245 = vmatpush.bf16.msra.mxu0 %v6212
        %6246 = vmatpush.bf16.msra.mxu0 %v6211
        %6247 = vmatpush.bf16.msra.mxu0 %v6210
        %6248 = vmatpush.bf16.msra.mxu0 %v6209
        %6249 = vmatmul.bf16.gmra.mxu0 %v6137
        %v6250 = vpop.f32.mrf.mxu0
        %v6251 = vadd.f32 0.0, %v6250
        %v6252 = vpop.f32.mrf.mxu0
        %v6253 = vadd.f32 0.0, %v6252
        %6254 = vmatmul.bf16.gmra.mxu0 %v6139
        %v6255 = vpop.f32.mrf.mxu0
        %v6256 = vadd.f32 0.0, %v6255
        %v6257 = vpop.f32.mrf.mxu0
        %6258 = vdwg.mxu0
        %6259 = vmatpush.bf16.msra.mxu0 %v6224
        %6260 = vmatpush.bf16.msra.mxu0 %v6223
        %6261 = vmatpush.bf16.msra.mxu0 %v6222
        %6262 = vmatpush.bf16.msra.mxu0 %v6221
        %6263 = vmatpush.bf16.msra.mxu0 %v6220
        %6264 = vmatpush.bf16.msra.mxu0 %v6219
        %6265 = vmatpush.bf16.msra.mxu0 %v6218
        %6266 = vmatpush.bf16.msra.mxu0 %v6217
        %6267 = vmatmul.bf16.gmra.mxu0 %v6138
        %v6268 = vpop.f32.mrf.mxu0
        %v6269 = vadd.f32 %v6251, %v6268
        %v6270 = vpop.f32.mrf.mxu0
        %v6271 = vadd.f32 %v6253, %v6270
        %6272 = vmatmul.bf16.gmra.mxu0 %v6140
        %v6273 = vpop.f32.mrf.mxu0
        %v6274 = vadd.f32 %v6256, %v6273
        %v6275 = vpop.f32.mrf.mxu0
        %6276 = vdwg.mxu0
        %s6277 = scalar_lea.vmem %s4424, 1152 [#allocation3]
        %v6278 = vld [vmem:[%s6277] sm:$0xf]
        %v6279 = vld [vmem:[%s6277 + $0x4] sm:$0xf]
        %v6280 = vld [vmem:[%s6277 + $0x8] sm:$0xf]
        %v6281 = vld [vmem:[%s6277 + $0xc] sm:$0xf]
        %v6282 = vld [vmem:[%s6277 + $0x10] sm:$0xf]
        %v6283 = vld [vmem:[%s6277 + $0x14] sm:$0xf]
        %v6284 = vld [vmem:[%s6277 + $0x18] sm:$0xf]
        %v6285 = vld [vmem:[%s6277 + $0x1c] sm:$0xf]
        %v6286 = vld [vmem:[%s6277 + $0x20] sm:$0xf]
        %v6287 = vld [vmem:[%s6277 + $0x24] sm:$0xf]
        %v6288 = vld [vmem:[%s6277 + $0x28] sm:$0xf]
        %v6289 = vld [vmem:[%s6277 + $0x2c] sm:$0xf]
        %v6290 = vld [vmem:[%s6277 + $0x30] sm:$0xf]
        %v6291 = vld [vmem:[%s6277 + $0x34] sm:$0xf]
        %v6292 = vld [vmem:[%s6277 + $0x38] sm:$0xf]
        %v6293 = vld [vmem:[%s6277 + $0x3c] sm:$0xf]
        %v6294 = vld [vmem:[%s6277 + $0x40] sm:$0xf]
        %v6295 = vld [vmem:[%s6277 + $0x44] sm:$0xf]
        %v6296 = vld [vmem:[%s6277 + $0x48] sm:$0xf]
        %v6297 = vld [vmem:[%s6277 + $0x4c] sm:$0xf]
        %v6298 = vld [vmem:[%s6277 + $0x50] sm:$0xf]
        %v6299 = vld [vmem:[%s6277 + $0x54] sm:$0xf]
        %v6300 = vld [vmem:[%s6277 + $0x58] sm:$0xf]
        %v6301 = vld [vmem:[%s6277 + $0x5c] sm:$0xf]
        %v6302 = vld [vmem:[%s6277 + $0x60] sm:$0xf]
        %v6303 = vld [vmem:[%s6277 + $0x64] sm:$0xf]
        %v6304 = vld [vmem:[%s6277 + $0x68] sm:$0xf]
        %v6305 = vld [vmem:[%s6277 + $0x6c] sm:$0xf]
        %v6306 = vld [vmem:[%s6277 + $0x70] sm:$0xf]
        %v6307 = vld [vmem:[%s6277 + $0x74] sm:$0xf]
        %v6308 = vld [vmem:[%s6277 + $0x78] sm:$0xf]
        %v6309 = vld [vmem:[%s6277 + $0x7c] sm:$0xf]
        %v6342 = vunpack.c.l.b16 %v6278
        %v6343 = vunpack.c.l.b16 %v6279
        %v6344 = vunpack.c.l.b16 %v6280
        %v6345 = vunpack.c.l.b16 %v6281
        %v6346 = vunpack.c.l.b16 %v6282
        %v6347 = vunpack.c.l.b16 %v6283
        %v6348 = vunpack.c.l.b16 %v6284
        %v6349 = vunpack.c.l.b16 %v6285
        %v6350 = vunpack.c.l.b16 %v6286
        %v6351 = vunpack.c.l.b16 %v6287
        %v6352 = vunpack.c.l.b16 %v6288
        %v6353 = vunpack.c.l.b16 %v6289
        %v6354 = vunpack.c.l.b16 %v6290
        %v6355 = vunpack.c.l.b16 %v6291
        %v6356 = vunpack.c.l.b16 %v6292
        %v6357 = vunpack.c.l.b16 %v6293
        %v6358 = vunpack.c.l.b16 %v6294
        %v6359 = vunpack.c.l.b16 %v6295
        %v6360 = vunpack.c.l.b16 %v6296
        %v6361 = vunpack.c.l.b16 %v6297
        %v6362 = vunpack.c.l.b16 %v6298
        %v6363 = vunpack.c.l.b16 %v6299
        %v6364 = vunpack.c.l.b16 %v6300
        %v6365 = vunpack.c.l.b16 %v6301
        %v6366 = vunpack.c.l.b16 %v6302
        %v6367 = vunpack.c.l.b16 %v6303
        %v6368 = vunpack.c.l.b16 %v6304
        %v6369 = vunpack.c.l.b16 %v6305
        %v6370 = vunpack.c.l.b16 %v6306
        %v6371 = vunpack.c.l.b16 %v6307
        %v6372 = vunpack.c.l.b16 %v6308
        %v6373 = vunpack.c.l.b16 %v6309
        %v6374 = vpack.c.b16 %v6343, %v6342
        %v6375 = vpack.c.b16 %v6345, %v6344
        %v6376 = vpack.c.b16 %v6347, %v6346
        %v6377 = vpack.c.b16 %v6349, %v6348
        %v6378 = vpack.c.b16 %v6351, %v6350
        %v6379 = vpack.c.b16 %v6353, %v6352
        %v6380 = vpack.c.b16 %v6355, %v6354
        %v6381 = vpack.c.b16 %v6357, %v6356
        %v6382 = vpack.c.b16 %v6359, %v6358
        %v6383 = vpack.c.b16 %v6361, %v6360
        %v6384 = vpack.c.b16 %v6363, %v6362
        %v6385 = vpack.c.b16 %v6365, %v6364
        %v6386 = vpack.c.b16 %v6367, %v6366
        %v6387 = vpack.c.b16 %v6369, %v6368
        %v6388 = vpack.c.b16 %v6371, %v6370
        %v6389 = vpack.c.b16 %v6373, %v6372
        %6406 = vmatpush.bf16.msra.mxu0 %v6381
        %6407 = vmatpush.bf16.msra.mxu0 %v6380
        %6408 = vmatpush.bf16.msra.mxu0 %v6379
        %6409 = vmatpush.bf16.msra.mxu0 %v6378
        %6410 = vmatpush.bf16.msra.mxu0 %v6377
        %6411 = vmatpush.bf16.msra.mxu0 %v6376
        %6412 = vmatpush.bf16.msra.mxu0 %v6375
        %6413 = vmatpush.bf16.msra.mxu0 %v6374
        %6414 = vmatmul.bf16.gmra.mxu0 %v6137
        %v6415 = vpop.f32.mrf.mxu0
        %v6416 = vadd.f32 0.0, %v6415
        %v6417 = vpop.f32.mrf.mxu0
        %v6418 = vadd.f32 0.0, %v6417
        %6419 = vmatmul.bf16.gmra.mxu0 %v6139
        %v6420 = vpop.f32.mrf.mxu0
        %v6421 = vadd.f32 0.0, %v6420
        %v6422 = vpop.f32.mrf.mxu0
        %6423 = vdwg.mxu0
        %6424 = vmatpush.bf16.msra.mxu0 %v6389
        %6425 = vmatpush.bf16.msra.mxu0 %v6388
        %6426 = vmatpush.bf16.msra.mxu0 %v6387
        %6427 = vmatpush.bf16.msra.mxu0 %v6386
        %6428 = vmatpush.bf16.msra.mxu0 %v6385
        %6429 = vmatpush.bf16.msra.mxu0 %v6384
        %6430 = vmatpush.bf16.msra.mxu0 %v6383
        %6431 = vmatpush.bf16.msra.mxu0 %v6382
        %6432 = vmatmul.bf16.gmra.mxu0 %v6138
        %v6433 = vpop.f32.mrf.mxu0
        %v6434 = vadd.f32 %v6416, %v6433
        %v6435 = vpop.f32.mrf.mxu0
        %v6436 = vadd.f32 %v6418, %v6435
        %6437 = vmatmul.bf16.gmra.mxu0 %v6140
        %v6438 = vpop.f32.mrf.mxu0
        %v6439 = vadd.f32 %v6421, %v6438
        %v6440 = vpop.f32.mrf.mxu0
        %6441 = vdwg.mxu0
        %v6442 = vmax.f32 %v6269, %v6434
        %v6443 = vmax.f32 %v6271, %v6436
        %v6444 = vmax.f32 %v6274, %v6439
        %s6445 = scalar_lea.vmem %s4424, 1280 [#allocation3]
        %v6446 = vld [vmem:[%s6445] sm:$0xf]
        %v6447 = vld [vmem:[%s6445 + $0x4] sm:$0xf]
        %v6448 = vld [vmem:[%s6445 + $0x8] sm:$0xf]
        %v6449 = vld [vmem:[%s6445 + $0xc] sm:$0xf]
        %v6450 = vld [vmem:[%s6445 + $0x10] sm:$0xf]
        %v6451 = vld [vmem:[%s6445 + $0x14] sm:$0xf]
        %v6452 = vld [vmem:[%s6445 + $0x18] sm:$0xf]
        %v6453 = vld [vmem:[%s6445 + $0x1c] sm:$0xf]
        %v6454 = vld [vmem:[%s6445 + $0x20] sm:$0xf]
        %v6455 = vld [vmem:[%s6445 + $0x24] sm:$0xf]
        %v6456 = vld [vmem:[%s6445 + $0x28] sm:$0xf]
        %v6457 = vld [vmem:[%s6445 + $0x2c] sm:$0xf]
        %v6458 = vld [vmem:[%s6445 + $0x30] sm:$0xf]
        %v6459 = vld [vmem:[%s6445 + $0x34] sm:$0xf]
        %v6460 = vld [vmem:[%s6445 + $0x38] sm:$0xf]
        %v6461 = vld [vmem:[%s6445 + $0x3c] sm:$0xf]
        %v6462 = vld [vmem:[%s6445 + $0x40] sm:$0xf]
        %v6463 = vld [vmem:[%s6445 + $0x44] sm:$0xf]
        %v6464 = vld [vmem:[%s6445 + $0x48] sm:$0xf]
        %v6465 = vld [vmem:[%s6445 + $0x4c] sm:$0xf]
        %v6466 = vld [vmem:[%s6445 + $0x50] sm:$0xf]
        %v6467 = vld [vmem:[%s6445 + $0x54] sm:$0xf]
        %v6468 = vld [vmem:[%s6445 + $0x58] sm:$0xf]
        %v6469 = vld [vmem:[%s6445 + $0x5c] sm:$0xf]
        %v6470 = vld [vmem:[%s6445 + $0x60] sm:$0xf]
        %v6471 = vld [vmem:[%s6445 + $0x64] sm:$0xf]
        %v6472 = vld [vmem:[%s6445 + $0x68] sm:$0xf]
        %v6473 = vld [vmem:[%s6445 + $0x6c] sm:$0xf]
        %v6474 = vld [vmem:[%s6445 + $0x70] sm:$0xf]
        %v6475 = vld [vmem:[%s6445 + $0x74] sm:$0xf]
        %v6476 = vld [vmem:[%s6445 + $0x78] sm:$0xf]
        %v6477 = vld [vmem:[%s6445 + $0x7c] sm:$0xf]
        %v6510 = vunpack.c.l.b16 %v6446
        %v6511 = vunpack.c.l.b16 %v6447
        %v6512 = vunpack.c.l.b16 %v6448
        %v6513 = vunpack.c.l.b16 %v6449
        %v6514 = vunpack.c.l.b16 %v6450
        %v6515 = vunpack.c.l.b16 %v6451
        %v6516 = vunpack.c.l.b16 %v6452
        %v6517 = vunpack.c.l.b16 %v6453
        %v6518 = vunpack.c.l.b16 %v6454
        %v6519 = vunpack.c.l.b16 %v6455
        %v6520 = vunpack.c.l.b16 %v6456
        %v6521 = vunpack.c.l.b16 %v6457
        %v6522 = vunpack.c.l.b16 %v6458
        %v6523 = vunpack.c.l.b16 %v6459
        %v6524 = vunpack.c.l.b16 %v6460
        %v6525 = vunpack.c.l.b16 %v6461
        %v6526 = vunpack.c.l.b16 %v6462
        %v6527 = vunpack.c.l.b16 %v6463
        %v6528 = vunpack.c.l.b16 %v6464
        %v6529 = vunpack.c.l.b16 %v6465
        %v6530 = vunpack.c.l.b16 %v6466
        %v6531 = vunpack.c.l.b16 %v6467
        %v6532 = vunpack.c.l.b16 %v6468
        %v6533 = vunpack.c.l.b16 %v6469
        %v6534 = vunpack.c.l.b16 %v6470
        %v6535 = vunpack.c.l.b16 %v6471
        %v6536 = vunpack.c.l.b16 %v6472
        %v6537 = vunpack.c.l.b16 %v6473
        %v6538 = vunpack.c.l.b16 %v6474
        %v6539 = vunpack.c.l.b16 %v6475
        %v6540 = vunpack.c.l.b16 %v6476
        %v6541 = vunpack.c.l.b16 %v6477
        %v6542 = vpack.c.b16 %v6511, %v6510
        %v6543 = vpack.c.b16 %v6513, %v6512
        %v6544 = vpack.c.b16 %v6515, %v6514
        %v6545 = vpack.c.b16 %v6517, %v6516
        %v6546 = vpack.c.b16 %v6519, %v6518
        %v6547 = vpack.c.b16 %v6521, %v6520
        %v6548 = vpack.c.b16 %v6523, %v6522
        %v6549 = vpack.c.b16 %v6525, %v6524
        %v6550 = vpack.c.b16 %v6527, %v6526
        %v6551 = vpack.c.b16 %v6529, %v6528
        %v6552 = vpack.c.b16 %v6531, %v6530
        %v6553 = vpack.c.b16 %v6533, %v6532
        %v6554 = vpack.c.b16 %v6535, %v6534
        %v6555 = vpack.c.b16 %v6537, %v6536
        %v6556 = vpack.c.b16 %v6539, %v6538
        %v6557 = vpack.c.b16 %v6541, %v6540
        %6574 = vmatpush.bf16.msra.mxu0 %v6549
        %6575 = vmatpush.bf16.msra.mxu0 %v6548
        %6576 = vmatpush.bf16.msra.mxu0 %v6547
        %6577 = vmatpush.bf16.msra.mxu0 %v6546
        %6578 = vmatpush.bf16.msra.mxu0 %v6545
        %6579 = vmatpush.bf16.msra.mxu0 %v6544
        %6580 = vmatpush.bf16.msra.mxu0 %v6543
        %6581 = vmatpush.bf16.msra.mxu0 %v6542
        %6582 = vmatmul.bf16.gmra.mxu0 %v6137
        %v6583 = vpop.f32.mrf.mxu0
        %v6584 = vadd.f32 0.0, %v6583
        %v6585 = vpop.f32.mrf.mxu0
        %v6586 = vadd.f32 0.0, %v6585
        %6587 = vmatmul.bf16.gmra.mxu0 %v6139
        %v6588 = vpop.f32.mrf.mxu0
        %v6589 = vadd.f32 0.0, %v6588
        %v6590 = vpop.f32.mrf.mxu0
        %6591 = vdwg.mxu0
        %6592 = vmatpush.bf16.msra.mxu0 %v6557
        %6593 = vmatpush.bf16.msra.mxu0 %v6556
        %6594 = vmatpush.bf16.msra.mxu0 %v6555
        %6595 = vmatpush.bf16.msra.mxu0 %v6554
        %6596 = vmatpush.bf16.msra.mxu0 %v6553
        %6597 = vmatpush.bf16.msra.mxu0 %v6552
        %6598 = vmatpush.bf16.msra.mxu0 %v6551
        %6599 = vmatpush.bf16.msra.mxu0 %v6550
        %6600 = vmatmul.bf16.gmra.mxu0 %v6138
        %v6601 = vpop.f32.mrf.mxu0
        %v6602 = vadd.f32 %v6584, %v6601
        %v6603 = vpop.f32.mrf.mxu0
        %v6604 = vadd.f32 %v6586, %v6603
        %6605 = vmatmul.bf16.gmra.mxu0 %v6140
        %v6606 = vpop.f32.mrf.mxu0
        %v6607 = vadd.f32 %v6589, %v6606
        %v6608 = vpop.f32.mrf.mxu0
        %6609 = vdwg.mxu0
        %v6610 = vmax.f32 %v6442, %v6602
        %v6611 = vmax.f32 %v6443, %v6604
        %v6612 = vmax.f32 %v6444, %v6607
        %s6613 = scalar_lea.vmem %s4424, 1408 [#allocation3]
        %v6614 = vld [vmem:[%s6613] sm:$0xf]
        %v6615 = vld [vmem:[%s6613 + $0x4] sm:$0xf]
        %v6616 = vld [vmem:[%s6613 + $0x8] sm:$0xf]
        %v6617 = vld [vmem:[%s6613 + $0xc] sm:$0xf]
        %v6618 = vld [vmem:[%s6613 + $0x10] sm:$0xf]
        %v6619 = vld [vmem:[%s6613 + $0x14] sm:$0xf]
        %v6620 = vld [vmem:[%s6613 + $0x18] sm:$0xf]
        %v6621 = vld [vmem:[%s6613 + $0x1c] sm:$0xf]
        %v6622 = vld [vmem:[%s6613 + $0x20] sm:$0xf]
        %v6623 = vld [vmem:[%s6613 + $0x24] sm:$0xf]
        %v6624 = vld [vmem:[%s6613 + $0x28] sm:$0xf]
        %v6625 = vld [vmem:[%s6613 + $0x2c] sm:$0xf]
        %v6626 = vld [vmem:[%s6613 + $0x30] sm:$0xf]
        %v6627 = vld [vmem:[%s6613 + $0x34] sm:$0xf]
        %v6628 = vld [vmem:[%s6613 + $0x38] sm:$0xf]
        %v6629 = vld [vmem:[%s6613 + $0x3c] sm:$0xf]
        %v6630 = vld [vmem:[%s6613 + $0x40] sm:$0xf]
        %v6631 = vld [vmem:[%s6613 + $0x44] sm:$0xf]
        %v6632 = vld [vmem:[%s6613 + $0x48] sm:$0xf]
        %v6633 = vld [vmem:[%s6613 + $0x4c] sm:$0xf]
        %v6634 = vld [vmem:[%s6613 + $0x50] sm:$0xf]
        %v6635 = vld [vmem:[%s6613 + $0x54] sm:$0xf]
        %v6636 = vld [vmem:[%s6613 + $0x58] sm:$0xf]
        %v6637 = vld [vmem:[%s6613 + $0x5c] sm:$0xf]
        %v6638 = vld [vmem:[%s6613 + $0x60] sm:$0xf]
        %v6639 = vld [vmem:[%s6613 + $0x64] sm:$0xf]
        %v6640 = vld [vmem:[%s6613 + $0x68] sm:$0xf]
        %v6641 = vld [vmem:[%s6613 + $0x6c] sm:$0xf]
        %v6642 = vld [vmem:[%s6613 + $0x70] sm:$0xf]
        %v6643 = vld [vmem:[%s6613 + $0x74] sm:$0xf]
        %v6644 = vld [vmem:[%s6613 + $0x78] sm:$0xf]
        %v6645 = vld [vmem:[%s6613 + $0x7c] sm:$0xf]
        %v6678 = vunpack.c.l.b16 %v6614
        %v6679 = vunpack.c.l.b16 %v6615
        %v6680 = vunpack.c.l.b16 %v6616
        %v6681 = vunpack.c.l.b16 %v6617
        %v6682 = vunpack.c.l.b16 %v6618
        %v6683 = vunpack.c.l.b16 %v6619
        %v6684 = vunpack.c.l.b16 %v6620
        %v6685 = vunpack.c.l.b16 %v6621
        %v6686 = vunpack.c.l.b16 %v6622
        %v6687 = vunpack.c.l.b16 %v6623
        %v6688 = vunpack.c.l.b16 %v6624
        %v6689 = vunpack.c.l.b16 %v6625
        %v6690 = vunpack.c.l.b16 %v6626
        %v6691 = vunpack.c.l.b16 %v6627
        %v6692 = vunpack.c.l.b16 %v6628
        %v6693 = vunpack.c.l.b16 %v6629
        %v6694 = vunpack.c.l.b16 %v6630
        %v6695 = vunpack.c.l.b16 %v6631
        %v6696 = vunpack.c.l.b16 %v6632
        %v6697 = vunpack.c.l.b16 %v6633
        %v6698 = vunpack.c.l.b16 %v6634
        %v6699 = vunpack.c.l.b16 %v6635
        %v6700 = vunpack.c.l.b16 %v6636
        %v6701 = vunpack.c.l.b16 %v6637
        %v6702 = vunpack.c.l.b16 %v6638
        %v6703 = vunpack.c.l.b16 %v6639
        %v6704 = vunpack.c.l.b16 %v6640
        %v6705 = vunpack.c.l.b16 %v6641
        %v6706 = vunpack.c.l.b16 %v6642
        %v6707 = vunpack.c.l.b16 %v6643
        %v6708 = vunpack.c.l.b16 %v6644
        %v6709 = vunpack.c.l.b16 %v6645
        %v6710 = vpack.c.b16 %v6679, %v6678
        %v6711 = vpack.c.b16 %v6681, %v6680
        %v6712 = vpack.c.b16 %v6683, %v6682
        %v6713 = vpack.c.b16 %v6685, %v6684
        %v6714 = vpack.c.b16 %v6687, %v6686
        %v6715 = vpack.c.b16 %v6689, %v6688
        %v6716 = vpack.c.b16 %v6691, %v6690
        %v6717 = vpack.c.b16 %v6693, %v6692
        %v6718 = vpack.c.b16 %v6695, %v6694
        %v6719 = vpack.c.b16 %v6697, %v6696
        %v6720 = vpack.c.b16 %v6699, %v6698
        %v6721 = vpack.c.b16 %v6701, %v6700
        %v6722 = vpack.c.b16 %v6703, %v6702
        %v6723 = vpack.c.b16 %v6705, %v6704
        %v6724 = vpack.c.b16 %v6707, %v6706
        %v6725 = vpack.c.b16 %v6709, %v6708
        %6742 = vmatpush.bf16.msra.mxu0 %v6717
        %6743 = vmatpush.bf16.msra.mxu0 %v6716
        %6744 = vmatpush.bf16.msra.mxu0 %v6715
        %6745 = vmatpush.bf16.msra.mxu0 %v6714
        %6746 = vmatpush.bf16.msra.mxu0 %v6713
        %6747 = vmatpush.bf16.msra.mxu0 %v6712
        %6748 = vmatpush.bf16.msra.mxu0 %v6711
        %6749 = vmatpush.bf16.msra.mxu0 %v6710
        %6750 = vmatmul.bf16.gmra.mxu0 %v6137
        %v6751 = vpop.f32.mrf.mxu0
        %v6752 = vadd.f32 0.0, %v6751
        %v6753 = vpop.f32.mrf.mxu0
        %v6754 = vadd.f32 0.0, %v6753
        %6755 = vmatmul.bf16.gmra.mxu0 %v6139
        %v6756 = vpop.f32.mrf.mxu0
        %v6757 = vadd.f32 0.0, %v6756
        %v6758 = vpop.f32.mrf.mxu0
        %6759 = vdwg.mxu0
        %6760 = vmatpush.bf16.msra.mxu0 %v6725
        %6761 = vmatpush.bf16.msra.mxu0 %v6724
        %6762 = vmatpush.bf16.msra.mxu0 %v6723
        %6763 = vmatpush.bf16.msra.mxu0 %v6722
        %6764 = vmatpush.bf16.msra.mxu0 %v6721
        %6765 = vmatpush.bf16.msra.mxu0 %v6720
        %6766 = vmatpush.bf16.msra.mxu0 %v6719
        %6767 = vmatpush.bf16.msra.mxu0 %v6718
        %6768 = vmatmul.bf16.gmra.mxu0 %v6138
        %v6769 = vpop.f32.mrf.mxu0
        %v6770 = vadd.f32 %v6752, %v6769
        %v6771 = vpop.f32.mrf.mxu0
        %v6772 = vadd.f32 %v6754, %v6771
        %6773 = vmatmul.bf16.gmra.mxu0 %v6140
        %v6774 = vpop.f32.mrf.mxu0
        %v6775 = vadd.f32 %v6757, %v6774
        %v6776 = vpop.f32.mrf.mxu0
        %6777 = vdwg.mxu0
        %v6778 = vmax.f32 %v6610, %v6770
        %v6779 = vmax.f32 %v6611, %v6772
        %v6780 = vmax.f32 %v6612, %v6775
        %v6781 = vld [vmem:[%s2] sm:$0xff]
        %v6782 = vld [vmem:[%s2 + $0x8] sm:$0xff]
        %v6783 = vld [vmem:[%s2 + $0x10] sm:$0xf]
        %6785 = vset.pattern.permute.xlu0 0
        %6786 = vperm.xlu0 %6785, %v6781
        %v6787 = vpop.permute.xlu0 %6786
        %6790 = vset.pattern.permute.xlu0 0
        %6791 = vperm.xlu0 %6790, %v6782
        %v6792 = vpop.permute.xlu0 %6791
        %6795 = vset.pattern.permute.xlu0 0
        %6796 = vperm.xlu0 %6795, %v6783
        %v6797 = vpop.permute.xlu0 %6796
        %v6799 = vadd.f32 %v6778, %v6787
        %v6800 = vadd.f32 %v6779, %v6792
        %v6801 = vadd.f32 %v6780, %v6797
        %v6802 = vmax.f32 %v6799, 0.0
        %v6803 = vmax.f32 %v6800, 0.0
        %v6804 = vmax.f32 %v6801, 0.0
        %v6805 = vpack.c.bf16 %v6803, %v6802
        %v6806 = vpack.c.bf16 %v6804, %v6804
        %s6807 = sadd.s32 %s5187, 2
        %s6808 = smul.u32 %s6807, 7
        %s6809 = smul.addr %s6808, 4
        %s6810 = scalar_lea.vmem %s3, %s6809
        %v6811 = vld [vmem:[%s6810] sm:$0xf]
        %v6812 = vld [vmem:[%s6810 + $0x4] sm:$0xf]
        %v6813 = vld [vmem:[%s6810 + $0x8] sm:$0xf]
        %v6814 = vld [vmem:[%s6810 + $0xc] sm:$0xf]
        %v6815 = vld [vmem:[%s6810 + $0x10] sm:$0xf]
        %v6816 = vld [vmem:[%s6810 + $0x14] sm:$0xf]
        %v6817 = vld [vmem:[%s6810 + $0x18] sm:$0x1]
        %v6818 = vld [vmem:[#allocation2] sm:$0xff]
        %v6819 = vld [vmem:[#allocation2 + $0x8] sm:$0xff]
        %v6820 = vld [vmem:[#allocation2 + $0x10] sm:$0xff]
        %v6821 = vld [vmem:[#allocation2 + $0x18] sm:$0xff]
        %v6822 = vld [vmem:[#allocation2 + $0x20] sm:$0xff]
        %v6823 = vld [vmem:[#allocation2 + $0x28] sm:$0xff]
        %v6824 = vld [vmem:[#allocation2 + $0x30] sm:$0x3]
        %v6832 = vunpack.c.l.b16 %v6811
        %v6833 = vunpack.c.l.b16 %v6812
        %v6834 = vunpack.c.l.b16 %v6813
        %v6835 = vunpack.c.l.b16 %v6814
        %v6836 = vunpack.c.l.b16 %v6815
        %v6837 = vunpack.c.l.b16 %v6816
        %v6838 = vunpack.c.l.b16 %v6817
        %v6839 = vpack.c.b16 %v6833, %v6832
        %v6840 = vpack.c.b16 %v6835, %v6834
        %v6841 = vpack.c.b16 %v6837, %v6836
        %v6842 = vpack.c.b16 %v6838, %v6838
        %v6844 = vsel %vm5223, %v6839, 0
        %v6847 = vsel %vm5223, %v6840, 0
        %v6850 = vsel %vm5223, %v6841, 0
        %v6853 = vsel %vm5223, %v6842, 0
        %v6856 = vsel %vm5236, %v6806, 0
        %6858 = vmatpush.bf16.msra.mxu0 0
        %6859 = vmatpush.bf16.msra.mxu0 0
        %6860 = vmatpush.bf16.msra.mxu0 0
        %6861 = vmatpush.bf16.msra.mxu0 0
        %6862 = vmatpush.bf16.msra.mxu0 0
        %6863 = vmatpush.bf16.msra.mxu0 0
        %6864 = vmatpush.bf16.msra.mxu0 %v6856
        %6865 = vmatpush.bf16.msra.mxu0 %v6805
        %6866 = vmatmul.bf16.gmra.mxu0 %v6844
        %v6867 = vpop.f32.mrf.mxu0
        %v6868 = vadd.f32 0.0, %v6867
        %v6869 = vpop.f32.mrf.mxu0
        %v6870 = vadd.f32 0.0, %v6869
        %6871 = vmatmul.bf16.gmra.mxu0 %v6847
        %v6872 = vpop.f32.mrf.mxu0
        %v6873 = vadd.f32 0.0, %v6872
        %v6874 = vpop.f32.mrf.mxu0
        %v6875 = vadd.f32 0.0, %v6874
        %6876 = vmatmul.bf16.gmra.mxu0 %v6850
        %v6877 = vpop.f32.mrf.mxu0
        %v6878 = vadd.f32 0.0, %v6877
        %v6879 = vpop.f32.mrf.mxu0
        %v6880 = vadd.f32 0.0, %v6879
        %6881 = vmatmul.bf16.gmra.mxu0 %v6853
        %v6882 = vpop.f32.mrf.mxu0
        %v6883 = vadd.f32 0.0, %v6882
        %v6884 = vpop.f32.mrf.mxu0
        %6885 = vdwg.mxu0
        %v6886 = vadd.f32 %v6818, %v6868
        %v6887 = vadd.f32 %v6819, %v6870
        %v6888 = vadd.f32 %v6820, %v6873
        %v6889 = vadd.f32 %v6821, %v6875
        %v6890 = vadd.f32 %v6822, %v6878
        %v6891 = vadd.f32 %v6823, %v6880
        %v6892 = vadd.f32 %v6824, %v6883
        %6893 = vst.msk [vmem:[#allocation2] sm:$0xff] %vm5275, %v6886
        %6894 = vst.msk [vmem:[#allocation2 + $0x8] sm:$0xff] %vm5275, %v6887
        %6895 = vst.msk [vmem:[#allocation2 + $0x10] sm:$0xff] %vm5275, %v6888
        %6896 = vst.msk [vmem:[#allocation2 + $0x18] sm:$0xff] %vm5275, %v6889
        %6897 = vst.msk [vmem:[#allocation2 + $0x20] sm:$0xff] %vm5275, %v6890
        %6898 = vst.msk [vmem:[#allocation2 + $0x28] sm:$0xff] %vm5275, %v6891
        %6899 = vst.msk [vmem:[#allocation2 + $0x30] sm:$0x3] %vm5282, %v6892
        %v6900 = vld [vmem:[%s1] sm:$0xff]
        %v6901 = vld [vmem:[%s1 + $0x8] sm:$0xff]
        %v6902 = vld [vmem:[%s1 + $0x10] sm:$0x33]
        %s6903 = scalar_lea.vmem %s4424, 1536 [#allocation3]
        %v6904 = vld [vmem:[%s6903] sm:$0xf]
        %v6905 = vld [vmem:[%s6903 + $0x4] sm:$0xf]
        %v6906 = vld [vmem:[%s6903 + $0x8] sm:$0xf]
        %v6907 = vld [vmem:[%s6903 + $0xc] sm:$0xf]
        %v6908 = vld [vmem:[%s6903 + $0x10] sm:$0xf]
        %v6909 = vld [vmem:[%s6903 + $0x14] sm:$0xf]
        %v6910 = vld [vmem:[%s6903 + $0x18] sm:$0xf]
        %v6911 = vld [vmem:[%s6903 + $0x1c] sm:$0xf]
        %v6912 = vld [vmem:[%s6903 + $0x20] sm:$0xf]
        %v6913 = vld [vmem:[%s6903 + $0x24] sm:$0xf]
        %v6914 = vld [vmem:[%s6903 + $0x28] sm:$0xf]
        %v6915 = vld [vmem:[%s6903 + $0x2c] sm:$0xf]
        %v6916 = vld [vmem:[%s6903 + $0x30] sm:$0xf]
        %v6917 = vld [vmem:[%s6903 + $0x34] sm:$0xf]
        %v6918 = vld [vmem:[%s6903 + $0x38] sm:$0xf]
        %v6919 = vld [vmem:[%s6903 + $0x3c] sm:$0xf]
        %v6920 = vld [vmem:[%s6903 + $0x40] sm:$0xf]
        %v6921 = vld [vmem:[%s6903 + $0x44] sm:$0xf]
        %v6922 = vld [vmem:[%s6903 + $0x48] sm:$0xf]
        %v6923 = vld [vmem:[%s6903 + $0x4c] sm:$0xf]
        %v6924 = vld [vmem:[%s6903 + $0x50] sm:$0xf]
        %v6925 = vld [vmem:[%s6903 + $0x54] sm:$0xf]
        %v6926 = vld [vmem:[%s6903 + $0x58] sm:$0xf]
        %v6927 = vld [vmem:[%s6903 + $0x5c] sm:$0xf]
        %v6928 = vld [vmem:[%s6903 + $0x60] sm:$0xf]
        %v6929 = vld [vmem:[%s6903 + $0x64] sm:$0xf]
        %v6930 = vld [vmem:[%s6903 + $0x68] sm:$0xf]
        %v6931 = vld [vmem:[%s6903 + $0x6c] sm:$0xf]
        %v6932 = vld [vmem:[%s6903 + $0x70] sm:$0xf]
        %v6933 = vld [vmem:[%s6903 + $0x74] sm:$0xf]
        %v6934 = vld [vmem:[%s6903 + $0x78] sm:$0xf]
        %v6935 = vld [vmem:[%s6903 + $0x7c] sm:$0xf]
        %v6939 = vunpack.c.l.b16 %v6900
        %v6940 = vunpack.c.h.b16 %v6900
        %v6941 = vunpack.c.l.b16 %v6901
        %v6942 = vunpack.c.h.b16 %v6901
        %v6943 = vunpack.c.l.b16 %v6902
        %v6944 = vunpack.c.h.b16 %v6902
        %v6945 = vpack.c.b16 %v6941, %v6939
        %v6946 = vpack.c.b16 %v6942, %v6940
        %v6947 = vpack.c.b16 %v6943, %v6943
        %v6948 = vpack.c.b16 %v6944, %v6944
        %v6985 = vunpack.c.l.b16 %v6904
        %v6986 = vunpack.c.l.b16 %v6905
        %v6987 = vunpack.c.l.b16 %v6906
        %v6988 = vunpack.c.l.b16 %v6907
        %v6989 = vunpack.c.l.b16 %v6908
        %v6990 = vunpack.c.l.b16 %v6909
        %v6991 = vunpack.c.l.b16 %v6910
        %v6992 = vunpack.c.l.b16 %v6911
        %v6993 = vunpack.c.l.b16 %v6912
        %v6994 = vunpack.c.l.b16 %v6913
        %v6995 = vunpack.c.l.b16 %v6914
        %v6996 = vunpack.c.l.b16 %v6915
        %v6997 = vunpack.c.l.b16 %v6916
        %v6998 = vunpack.c.l.b16 %v6917
        %v6999 = vunpack.c.l.b16 %v6918
        %v7000 = vunpack.c.l.b16 %v6919
        %v7001 = vunpack.c.l.b16 %v6920
        %v7002 = vunpack.c.l.b16 %v6921
        %v7003 = vunpack.c.l.b16 %v6922
        %v7004 = vunpack.c.l.b16 %v6923
        %v7005 = vunpack.c.l.b16 %v6924
        %v7006 = vunpack.c.l.b16 %v6925
        %v7007 = vunpack.c.l.b16 %v6926
        %v7008 = vunpack.c.l.b16 %v6927
        %v7009 = vunpack.c.l.b16 %v6928
        %v7010 = vunpack.c.l.b16 %v6929
        %v7011 = vunpack.c.l.b16 %v6930
        %v7012 = vunpack.c.l.b16 %v6931
        %v7013 = vunpack.c.l.b16 %v6932
        %v7014 = vunpack.c.l.b16 %v6933
        %v7015 = vunpack.c.l.b16 %v6934
        %v7016 = vunpack.c.l.b16 %v6935
        %v7017 = vpack.c.b16 %v6986, %v6985
        %v7018 = vpack.c.b16 %v6988, %v6987
        %v7019 = vpack.c.b16 %v6990, %v6989
        %v7020 = vpack.c.b16 %v6992, %v6991
        %v7021 = vpack.c.b16 %v6994, %v6993
        %v7022 = vpack.c.b16 %v6996, %v6995
        %v7023 = vpack.c.b16 %v6998, %v6997
        %v7024 = vpack.c.b16 %v7000, %v6999
        %v7025 = vpack.c.b16 %v7002, %v7001
        %v7026 = vpack.c.b16 %v7004, %v7003
        %v7027 = vpack.c.b16 %v7006, %v7005
        %v7028 = vpack.c.b16 %v7008, %v7007
        %v7029 = vpack.c.b16 %v7010, %v7009
        %v7030 = vpack.c.b16 %v7012, %v7011
        %v7031 = vpack.c.b16 %v7014, %v7013
        %v7032 = vpack.c.b16 %v7016, %v7015
        %7049 = vmatpush.bf16.msra.mxu0 %v7024
        %7050 = vmatpush.bf16.msra.mxu0 %v7023
        %7051 = vmatpush.bf16.msra.mxu0 %v7022
        %7052 = vmatpush.bf16.msra.mxu0 %v7021
        %7053 = vmatpush.bf16.msra.mxu0 %v7020
        %7054 = vmatpush.bf16.msra.mxu0 %v7019
        %7055 = vmatpush.bf16.msra.mxu0 %v7018
        %7056 = vmatpush.bf16.msra.mxu0 %v7017
        %7057 = vmatmul.bf16.gmra.mxu0 %v6945
        %v7058 = vpop.f32.mrf.mxu0
        %v7059 = vadd.f32 0.0, %v7058
        %v7060 = vpop.f32.mrf.mxu0
        %v7061 = vadd.f32 0.0, %v7060
        %7062 = vmatmul.bf16.gmra.mxu0 %v6947
        %v7063 = vpop.f32.mrf.mxu0
        %v7064 = vadd.f32 0.0, %v7063
        %v7065 = vpop.f32.mrf.mxu0
        %7066 = vdwg.mxu0
        %7067 = vmatpush.bf16.msra.mxu0 %v7032
        %7068 = vmatpush.bf16.msra.mxu0 %v7031
        %7069 = vmatpush.bf16.msra.mxu0 %v7030
        %7070 = vmatpush.bf16.msra.mxu0 %v7029
        %7071 = vmatpush.bf16.msra.mxu0 %v7028
        %7072 = vmatpush.bf16.msra.mxu0 %v7027
        %7073 = vmatpush.bf16.msra.mxu0 %v7026
        %7074 = vmatpush.bf16.msra.mxu0 %v7025
        %7075 = vmatmul.bf16.gmra.mxu0 %v6946
        %v7076 = vpop.f32.mrf.mxu0
        %v7077 = vadd.f32 %v7059, %v7076
        %v7078 = vpop.f32.mrf.mxu0
        %v7079 = vadd.f32 %v7061, %v7078
        %7080 = vmatmul.bf16.gmra.mxu0 %v6948
        %v7081 = vpop.f32.mrf.mxu0
        %v7082 = vadd.f32 %v7064, %v7081
        %v7083 = vpop.f32.mrf.mxu0
        %7084 = vdwg.mxu0
        %s7085 = scalar_lea.vmem %s4424, 1664 [#allocation3]
        %v7086 = vld [vmem:[%s7085] sm:$0xf]
        %v7087 = vld [vmem:[%s7085 + $0x4] sm:$0xf]
        %v7088 = vld [vmem:[%s7085 + $0x8] sm:$0xf]
        %v7089 = vld [vmem:[%s7085 + $0xc] sm:$0xf]
        %v7090 = vld [vmem:[%s7085 + $0x10] sm:$0xf]
        %v7091 = vld [vmem:[%s7085 + $0x14] sm:$0xf]
        %v7092 = vld [vmem:[%s7085 + $0x18] sm:$0xf]
        %v7093 = vld [vmem:[%s7085 + $0x1c] sm:$0xf]
        %v7094 = vld [vmem:[%s7085 + $0x20] sm:$0xf]
        %v7095 = vld [vmem:[%s7085 + $0x24] sm:$0xf]
        %v7096 = vld [vmem:[%s7085 + $0x28] sm:$0xf]
        %v7097 = vld [vmem:[%s7085 + $0x2c] sm:$0xf]
        %v7098 = vld [vmem:[%s7085 + $0x30] sm:$0xf]
        %v7099 = vld [vmem:[%s7085 + $0x34] sm:$0xf]
        %v7100 = vld [vmem:[%s7085 + $0x38] sm:$0xf]
        %v7101 = vld [vmem:[%s7085 + $0x3c] sm:$0xf]
        %v7102 = vld [vmem:[%s7085 + $0x40] sm:$0xf]
        %v7103 = vld [vmem:[%s7085 + $0x44] sm:$0xf]
        %v7104 = vld [vmem:[%s7085 + $0x48] sm:$0xf]
        %v7105 = vld [vmem:[%s7085 + $0x4c] sm:$0xf]
        %v7106 = vld [vmem:[%s7085 + $0x50] sm:$0xf]
        %v7107 = vld [vmem:[%s7085 + $0x54] sm:$0xf]
        %v7108 = vld [vmem:[%s7085 + $0x58] sm:$0xf]
        %v7109 = vld [vmem:[%s7085 + $0x5c] sm:$0xf]
        %v7110 = vld [vmem:[%s7085 + $0x60] sm:$0xf]
        %v7111 = vld [vmem:[%s7085 + $0x64] sm:$0xf]
        %v7112 = vld [vmem:[%s7085 + $0x68] sm:$0xf]
        %v7113 = vld [vmem:[%s7085 + $0x6c] sm:$0xf]
        %v7114 = vld [vmem:[%s7085 + $0x70] sm:$0xf]
        %v7115 = vld [vmem:[%s7085 + $0x74] sm:$0xf]
        %v7116 = vld [vmem:[%s7085 + $0x78] sm:$0xf]
        %v7117 = vld [vmem:[%s7085 + $0x7c] sm:$0xf]
        %v7150 = vunpack.c.l.b16 %v7086
        %v7151 = vunpack.c.l.b16 %v7087
        %v7152 = vunpack.c.l.b16 %v7088
        %v7153 = vunpack.c.l.b16 %v7089
        %v7154 = vunpack.c.l.b16 %v7090
        %v7155 = vunpack.c.l.b16 %v7091
        %v7156 = vunpack.c.l.b16 %v7092
        %v7157 = vunpack.c.l.b16 %v7093
        %v7158 = vunpack.c.l.b16 %v7094
        %v7159 = vunpack.c.l.b16 %v7095
        %v7160 = vunpack.c.l.b16 %v7096
        %v7161 = vunpack.c.l.b16 %v7097
        %v7162 = vunpack.c.l.b16 %v7098
        %v7163 = vunpack.c.l.b16 %v7099
        %v7164 = vunpack.c.l.b16 %v7100
        %v7165 = vunpack.c.l.b16 %v7101
        %v7166 = vunpack.c.l.b16 %v7102
        %v7167 = vunpack.c.l.b16 %v7103
        %v7168 = vunpack.c.l.b16 %v7104
        %v7169 = vunpack.c.l.b16 %v7105
        %v7170 = vunpack.c.l.b16 %v7106
        %v7171 = vunpack.c.l.b16 %v7107
        %v7172 = vunpack.c.l.b16 %v7108
        %v7173 = vunpack.c.l.b16 %v7109
        %v7174 = vunpack.c.l.b16 %v7110
        %v7175 = vunpack.c.l.b16 %v7111
        %v7176 = vunpack.c.l.b16 %v7112
        %v7177 = vunpack.c.l.b16 %v7113
        %v7178 = vunpack.c.l.b16 %v7114
        %v7179 = vunpack.c.l.b16 %v7115
        %v7180 = vunpack.c.l.b16 %v7116
        %v7181 = vunpack.c.l.b16 %v7117
        %v7182 = vpack.c.b16 %v7151, %v7150
        %v7183 = vpack.c.b16 %v7153, %v7152
        %v7184 = vpack.c.b16 %v7155, %v7154
        %v7185 = vpack.c.b16 %v7157, %v7156
        %v7186 = vpack.c.b16 %v7159, %v7158
        %v7187 = vpack.c.b16 %v7161, %v7160
        %v7188 = vpack.c.b16 %v7163, %v7162
        %v7189 = vpack.c.b16 %v7165, %v7164
        %v7190 = vpack.c.b16 %v7167, %v7166
        %v7191 = vpack.c.b16 %v7169, %v7168
        %v7192 = vpack.c.b16 %v7171, %v7170
        %v7193 = vpack.c.b16 %v7173, %v7172
        %v7194 = vpack.c.b16 %v7175, %v7174
        %v7195 = vpack.c.b16 %v7177, %v7176
        %v7196 = vpack.c.b16 %v7179, %v7178
        %v7197 = vpack.c.b16 %v7181, %v7180
        %7214 = vmatpush.bf16.msra.mxu0 %v7189
        %7215 = vmatpush.bf16.msra.mxu0 %v7188
        %7216 = vmatpush.bf16.msra.mxu0 %v7187
        %7217 = vmatpush.bf16.msra.mxu0 %v7186
        %7218 = vmatpush.bf16.msra.mxu0 %v7185
        %7219 = vmatpush.bf16.msra.mxu0 %v7184
        %7220 = vmatpush.bf16.msra.mxu0 %v7183
        %7221 = vmatpush.bf16.msra.mxu0 %v7182
        %7222 = vmatmul.bf16.gmra.mxu0 %v6945
        %v7223 = vpop.f32.mrf.mxu0
        %v7224 = vadd.f32 0.0, %v7223
        %v7225 = vpop.f32.mrf.mxu0
        %v7226 = vadd.f32 0.0, %v7225
        %7227 = vmatmul.bf16.gmra.mxu0 %v6947
        %v7228 = vpop.f32.mrf.mxu0
        %v7229 = vadd.f32 0.0, %v7228
        %v7230 = vpop.f32.mrf.mxu0
        %7231 = vdwg.mxu0
        %7232 = vmatpush.bf16.msra.mxu0 %v7197
        %7233 = vmatpush.bf16.msra.mxu0 %v7196
        %7234 = vmatpush.bf16.msra.mxu0 %v7195
        %7235 = vmatpush.bf16.msra.mxu0 %v7194
        %7236 = vmatpush.bf16.msra.mxu0 %v7193
        %7237 = vmatpush.bf16.msra.mxu0 %v7192
        %7238 = vmatpush.bf16.msra.mxu0 %v7191
        %7239 = vmatpush.bf16.msra.mxu0 %v7190
        %7240 = vmatmul.bf16.gmra.mxu0 %v6946
        %v7241 = vpop.f32.mrf.mxu0
        %v7242 = vadd.f32 %v7224, %v7241
        %v7243 = vpop.f32.mrf.mxu0
        %v7244 = vadd.f32 %v7226, %v7243
        %7245 = vmatmul.bf16.gmra.mxu0 %v6948
        %v7246 = vpop.f32.mrf.mxu0
        %v7247 = vadd.f32 %v7229, %v7246
        %v7248 = vpop.f32.mrf.mxu0
        %7249 = vdwg.mxu0
        %v7250 = vmax.f32 %v7077, %v7242
        %v7251 = vmax.f32 %v7079, %v7244
        %v7252 = vmax.f32 %v7082, %v7247
        %s7253 = scalar_lea.vmem %s4424, 1792 [#allocation3]
        %v7254 = vld [vmem:[%s7253] sm:$0xf]
        %v7255 = vld [vmem:[%s7253 + $0x4] sm:$0xf]
        %v7256 = vld [vmem:[%s7253 + $0x8] sm:$0xf]
        %v7257 = vld [vmem:[%s7253 + $0xc] sm:$0xf]
        %v7258 = vld [vmem:[%s7253 + $0x10] sm:$0xf]
        %v7259 = vld [vmem:[%s7253 + $0x14] sm:$0xf]
        %v7260 = vld [vmem:[%s7253 + $0x18] sm:$0xf]
        %v7261 = vld [vmem:[%s7253 + $0x1c] sm:$0xf]
        %v7262 = vld [vmem:[%s7253 + $0x20] sm:$0xf]
        %v7263 = vld [vmem:[%s7253 + $0x24] sm:$0xf]
        %v7264 = vld [vmem:[%s7253 + $0x28] sm:$0xf]
        %v7265 = vld [vmem:[%s7253 + $0x2c] sm:$0xf]
        %v7266 = vld [vmem:[%s7253 + $0x30] sm:$0xf]
        %v7267 = vld [vmem:[%s7253 + $0x34] sm:$0xf]
        %v7268 = vld [vmem:[%s7253 + $0x38] sm:$0xf]
        %v7269 = vld [vmem:[%s7253 + $0x3c] sm:$0xf]
        %v7270 = vld [vmem:[%s7253 + $0x40] sm:$0xf]
        %v7271 = vld [vmem:[%s7253 + $0x44] sm:$0xf]
        %v7272 = vld [vmem:[%s7253 + $0x48] sm:$0xf]
        %v7273 = vld [vmem:[%s7253 + $0x4c] sm:$0xf]
        %v7274 = vld [vmem:[%s7253 + $0x50] sm:$0xf]
        %v7275 = vld [vmem:[%s7253 + $0x54] sm:$0xf]
        %v7276 = vld [vmem:[%s7253 + $0x58] sm:$0xf]
        %v7277 = vld [vmem:[%s7253 + $0x5c] sm:$0xf]
        %v7278 = vld [vmem:[%s7253 + $0x60] sm:$0xf]
        %v7279 = vld [vmem:[%s7253 + $0x64] sm:$0xf]
        %v7280 = vld [vmem:[%s7253 + $0x68] sm:$0xf]
        %v7281 = vld [vmem:[%s7253 + $0x6c] sm:$0xf]
        %v7282 = vld [vmem:[%s7253 + $0x70] sm:$0xf]
        %v7283 = vld [vmem:[%s7253 + $0x74] sm:$0xf]
        %v7284 = vld [vmem:[%s7253 + $0x78] sm:$0xf]
        %v7285 = vld [vmem:[%s7253 + $0x7c] sm:$0xf]
        %v7318 = vunpack.c.l.b16 %v7254
        %v7319 = vunpack.c.l.b16 %v7255
        %v7320 = vunpack.c.l.b16 %v7256
        %v7321 = vunpack.c.l.b16 %v7257
        %v7322 = vunpack.c.l.b16 %v7258
        %v7323 = vunpack.c.l.b16 %v7259
        %v7324 = vunpack.c.l.b16 %v7260
        %v7325 = vunpack.c.l.b16 %v7261
        %v7326 = vunpack.c.l.b16 %v7262
        %v7327 = vunpack.c.l.b16 %v7263
        %v7328 = vunpack.c.l.b16 %v7264
        %v7329 = vunpack.c.l.b16 %v7265
        %v7330 = vunpack.c.l.b16 %v7266
        %v7331 = vunpack.c.l.b16 %v7267
        %v7332 = vunpack.c.l.b16 %v7268
        %v7333 = vunpack.c.l.b16 %v7269
        %v7334 = vunpack.c.l.b16 %v7270
        %v7335 = vunpack.c.l.b16 %v7271
        %v7336 = vunpack.c.l.b16 %v7272
        %v7337 = vunpack.c.l.b16 %v7273
        %v7338 = vunpack.c.l.b16 %v7274
        %v7339 = vunpack.c.l.b16 %v7275
        %v7340 = vunpack.c.l.b16 %v7276
        %v7341 = vunpack.c.l.b16 %v7277
        %v7342 = vunpack.c.l.b16 %v7278
        %v7343 = vunpack.c.l.b16 %v7279
        %v7344 = vunpack.c.l.b16 %v7280
        %v7345 = vunpack.c.l.b16 %v7281
        %v7346 = vunpack.c.l.b16 %v7282
        %v7347 = vunpack.c.l.b16 %v7283
        %v7348 = vunpack.c.l.b16 %v7284
        %v7349 = vunpack.c.l.b16 %v7285
        %v7350 = vpack.c.b16 %v7319, %v7318
        %v7351 = vpack.c.b16 %v7321, %v7320
        %v7352 = vpack.c.b16 %v7323, %v7322
        %v7353 = vpack.c.b16 %v7325, %v7324
        %v7354 = vpack.c.b16 %v7327, %v7326
        %v7355 = vpack.c.b16 %v7329, %v7328
        %v7356 = vpack.c.b16 %v7331, %v7330
        %v7357 = vpack.c.b16 %v7333, %v7332
        %v7358 = vpack.c.b16 %v7335, %v7334
        %v7359 = vpack.c.b16 %v7337, %v7336
        %v7360 = vpack.c.b16 %v7339, %v7338
        %v7361 = vpack.c.b16 %v7341, %v7340
        %v7362 = vpack.c.b16 %v7343, %v7342
        %v7363 = vpack.c.b16 %v7345, %v7344
        %v7364 = vpack.c.b16 %v7347, %v7346
        %v7365 = vpack.c.b16 %v7349, %v7348
        %7382 = vmatpush.bf16.msra.mxu0 %v7357
        %7383 = vmatpush.bf16.msra.mxu0 %v7356
        %7384 = vmatpush.bf16.msra.mxu0 %v7355
        %7385 = vmatpush.bf16.msra.mxu0 %v7354
        %7386 = vmatpush.bf16.msra.mxu0 %v7353
        %7387 = vmatpush.bf16.msra.mxu0 %v7352
        %7388 = vmatpush.bf16.msra.mxu0 %v7351
        %7389 = vmatpush.bf16.msra.mxu0 %v7350
        %7390 = vmatmul.bf16.gmra.mxu0 %v6945
        %v7391 = vpop.f32.mrf.mxu0
        %v7392 = vadd.f32 0.0, %v7391
        %v7393 = vpop.f32.mrf.mxu0
        %v7394 = vadd.f32 0.0, %v7393
        %7395 = vmatmul.bf16.gmra.mxu0 %v6947
        %v7396 = vpop.f32.mrf.mxu0
        %v7397 = vadd.f32 0.0, %v7396
        %v7398 = vpop.f32.mrf.mxu0
        %7399 = vdwg.mxu0
        %7400 = vmatpush.bf16.msra.mxu0 %v7365
        %7401 = vmatpush.bf16.msra.mxu0 %v7364
        %7402 = vmatpush.bf16.msra.mxu0 %v7363
        %7403 = vmatpush.bf16.msra.mxu0 %v7362
        %7404 = vmatpush.bf16.msra.mxu0 %v7361
        %7405 = vmatpush.bf16.msra.mxu0 %v7360
        %7406 = vmatpush.bf16.msra.mxu0 %v7359
        %7407 = vmatpush.bf16.msra.mxu0 %v7358
        %7408 = vmatmul.bf16.gmra.mxu0 %v6946
        %v7409 = vpop.f32.mrf.mxu0
        %v7410 = vadd.f32 %v7392, %v7409
        %v7411 = vpop.f32.mrf.mxu0
        %v7412 = vadd.f32 %v7394, %v7411
        %7413 = vmatmul.bf16.gmra.mxu0 %v6948
        %v7414 = vpop.f32.mrf.mxu0
        %v7415 = vadd.f32 %v7397, %v7414
        %v7416 = vpop.f32.mrf.mxu0
        %7417 = vdwg.mxu0
        %v7418 = vmax.f32 %v7250, %v7410
        %v7419 = vmax.f32 %v7251, %v7412
        %v7420 = vmax.f32 %v7252, %v7415
        %s7421 = scalar_lea.vmem %s4424, 1920 [#allocation3]
        %v7422 = vld [vmem:[%s7421] sm:$0xf]
        %v7423 = vld [vmem:[%s7421 + $0x4] sm:$0xf]
        %v7424 = vld [vmem:[%s7421 + $0x8] sm:$0xf]
        %v7425 = vld [vmem:[%s7421 + $0xc] sm:$0xf]
        %v7426 = vld [vmem:[%s7421 + $0x10] sm:$0xf]
        %v7427 = vld [vmem:[%s7421 + $0x14] sm:$0xf]
        %v7428 = vld [vmem:[%s7421 + $0x18] sm:$0xf]
        %v7429 = vld [vmem:[%s7421 + $0x1c] sm:$0xf]
        %v7430 = vld [vmem:[%s7421 + $0x20] sm:$0xf]
        %v7431 = vld [vmem:[%s7421 + $0x24] sm:$0xf]
        %v7432 = vld [vmem:[%s7421 + $0x28] sm:$0xf]
        %v7433 = vld [vmem:[%s7421 + $0x2c] sm:$0xf]
        %v7434 = vld [vmem:[%s7421 + $0x30] sm:$0xf]
        %v7435 = vld [vmem:[%s7421 + $0x34] sm:$0xf]
        %v7436 = vld [vmem:[%s7421 + $0x38] sm:$0xf]
        %v7437 = vld [vmem:[%s7421 + $0x3c] sm:$0xf]
        %v7438 = vld [vmem:[%s7421 + $0x40] sm:$0xf]
        %v7439 = vld [vmem:[%s7421 + $0x44] sm:$0xf]
        %v7440 = vld [vmem:[%s7421 + $0x48] sm:$0xf]
        %v7441 = vld [vmem:[%s7421 + $0x4c] sm:$0xf]
        %v7442 = vld [vmem:[%s7421 + $0x50] sm:$0xf]
        %v7443 = vld [vmem:[%s7421 + $0x54] sm:$0xf]
        %v7444 = vld [vmem:[%s7421 + $0x58] sm:$0xf]
        %v7445 = vld [vmem:[%s7421 + $0x5c] sm:$0xf]
        %v7446 = vld [vmem:[%s7421 + $0x60] sm:$0xf]
        %v7447 = vld [vmem:[%s7421 + $0x64] sm:$0xf]
        %v7448 = vld [vmem:[%s7421 + $0x68] sm:$0xf]
        %v7449 = vld [vmem:[%s7421 + $0x6c] sm:$0xf]
        %v7450 = vld [vmem:[%s7421 + $0x70] sm:$0xf]
        %v7451 = vld [vmem:[%s7421 + $0x74] sm:$0xf]
        %v7452 = vld [vmem:[%s7421 + $0x78] sm:$0xf]
        %v7453 = vld [vmem:[%s7421 + $0x7c] sm:$0xf]
        %v7486 = vunpack.c.l.b16 %v7422
        %v7487 = vunpack.c.l.b16 %v7423
        %v7488 = vunpack.c.l.b16 %v7424
        %v7489 = vunpack.c.l.b16 %v7425
        %v7490 = vunpack.c.l.b16 %v7426
        %v7491 = vunpack.c.l.b16 %v7427
        %v7492 = vunpack.c.l.b16 %v7428
        %v7493 = vunpack.c.l.b16 %v7429
        %v7494 = vunpack.c.l.b16 %v7430
        %v7495 = vunpack.c.l.b16 %v7431
        %v7496 = vunpack.c.l.b16 %v7432
        %v7497 = vunpack.c.l.b16 %v7433
        %v7498 = vunpack.c.l.b16 %v7434
        %v7499 = vunpack.c.l.b16 %v7435
        %v7500 = vunpack.c.l.b16 %v7436
        %v7501 = vunpack.c.l.b16 %v7437
        %v7502 = vunpack.c.l.b16 %v7438
        %v7503 = vunpack.c.l.b16 %v7439
        %v7504 = vunpack.c.l.b16 %v7440
        %v7505 = vunpack.c.l.b16 %v7441
        %v7506 = vunpack.c.l.b16 %v7442
        %v7507 = vunpack.c.l.b16 %v7443
        %v7508 = vunpack.c.l.b16 %v7444
        %v7509 = vunpack.c.l.b16 %v7445
        %v7510 = vunpack.c.l.b16 %v7446
        %v7511 = vunpack.c.l.b16 %v7447
        %v7512 = vunpack.c.l.b16 %v7448
        %v7513 = vunpack.c.l.b16 %v7449
        %v7514 = vunpack.c.l.b16 %v7450
        %v7515 = vunpack.c.l.b16 %v7451
        %v7516 = vunpack.c.l.b16 %v7452
        %v7517 = vunpack.c.l.b16 %v7453
        %v7518 = vpack.c.b16 %v7487, %v7486
        %v7519 = vpack.c.b16 %v7489, %v7488
        %v7520 = vpack.c.b16 %v7491, %v7490
        %v7521 = vpack.c.b16 %v7493, %v7492
        %v7522 = vpack.c.b16 %v7495, %v7494
        %v7523 = vpack.c.b16 %v7497, %v7496
        %v7524 = vpack.c.b16 %v7499, %v7498
        %v7525 = vpack.c.b16 %v7501, %v7500
        %v7526 = vpack.c.b16 %v7503, %v7502
        %v7527 = vpack.c.b16 %v7505, %v7504
        %v7528 = vpack.c.b16 %v7507, %v7506
        %v7529 = vpack.c.b16 %v7509, %v7508
        %v7530 = vpack.c.b16 %v7511, %v7510
        %v7531 = vpack.c.b16 %v7513, %v7512
        %v7532 = vpack.c.b16 %v7515, %v7514
        %v7533 = vpack.c.b16 %v7517, %v7516
        %7550 = vmatpush.bf16.msra.mxu0 %v7525
        %7551 = vmatpush.bf16.msra.mxu0 %v7524
        %7552 = vmatpush.bf16.msra.mxu0 %v7523
        %7553 = vmatpush.bf16.msra.mxu0 %v7522
        %7554 = vmatpush.bf16.msra.mxu0 %v7521
        %7555 = vmatpush.bf16.msra.mxu0 %v7520
        %7556 = vmatpush.bf16.msra.mxu0 %v7519
        %7557 = vmatpush.bf16.msra.mxu0 %v7518
        %7558 = vmatmul.bf16.gmra.mxu0 %v6945
        %v7559 = vpop.f32.mrf.mxu0
        %v7560 = vadd.f32 0.0, %v7559
        %v7561 = vpop.f32.mrf.mxu0
        %v7562 = vadd.f32 0.0, %v7561
        %7563 = vmatmul.bf16.gmra.mxu0 %v6947
        %v7564 = vpop.f32.mrf.mxu0
        %v7565 = vadd.f32 0.0, %v7564
        %v7566 = vpop.f32.mrf.mxu0
        %7567 = vdwg.mxu0
        %7568 = vmatpush.bf16.msra.mxu0 %v7533
        %7569 = vmatpush.bf16.msra.mxu0 %v7532
        %7570 = vmatpush.bf16.msra.mxu0 %v7531
        %7571 = vmatpush.bf16.msra.mxu0 %v7530
        %7572 = vmatpush.bf16.msra.mxu0 %v7529
        %7573 = vmatpush.bf16.msra.mxu0 %v7528
        %7574 = vmatpush.bf16.msra.mxu0 %v7527
        %7575 = vmatpush.bf16.msra.mxu0 %v7526
        %7576 = vmatmul.bf16.gmra.mxu0 %v6946
        %v7577 = vpop.f32.mrf.mxu0
        %v7578 = vadd.f32 %v7560, %v7577
        %v7579 = vpop.f32.mrf.mxu0
        %v7580 = vadd.f32 %v7562, %v7579
        %7581 = vmatmul.bf16.gmra.mxu0 %v6948
        %v7582 = vpop.f32.mrf.mxu0
        %v7583 = vadd.f32 %v7565, %v7582
        %v7584 = vpop.f32.mrf.mxu0
        %7585 = vdwg.mxu0
        %v7586 = vmax.f32 %v7418, %v7578
        %v7587 = vmax.f32 %v7419, %v7580
        %v7588 = vmax.f32 %v7420, %v7583
        %v7589 = vld [vmem:[%s2] sm:$0xff]
        %v7590 = vld [vmem:[%s2 + $0x8] sm:$0xff]
        %v7591 = vld [vmem:[%s2 + $0x10] sm:$0xf]
        %7593 = vset.pattern.permute.xlu0 0
        %7594 = vperm.xlu0 %7593, %v7589
        %v7595 = vpop.permute.xlu0 %7594
        %7598 = vset.pattern.permute.xlu0 0
        %7599 = vperm.xlu0 %7598, %v7590
        %v7600 = vpop.permute.xlu0 %7599
        %7603 = vset.pattern.permute.xlu0 0
        %7604 = vperm.xlu0 %7603, %v7591
        %v7605 = vpop.permute.xlu0 %7604
        %v7607 = vadd.f32 %v7586, %v7595
        %v7608 = vadd.f32 %v7587, %v7600
        %v7609 = vadd.f32 %v7588, %v7605
        %v7610 = vmax.f32 %v7607, 0.0
        %v7611 = vmax.f32 %v7608, 0.0
        %v7612 = vmax.f32 %v7609, 0.0
        %v7613 = vpack.c.bf16 %v7611, %v7610
        %v7614 = vpack.c.bf16 %v7612, %v7612
        %s7615 = sadd.s32 %s5187, 3
        %s7616 = smul.u32 %s7615, 7
        %s7617 = smul.addr %s7616, 4
        %s7618 = scalar_lea.vmem %s3, %s7617
        %v7619 = vld [vmem:[%s7618] sm:$0xf]
        %v7620 = vld [vmem:[%s7618 + $0x4] sm:$0xf]
        %v7621 = vld [vmem:[%s7618 + $0x8] sm:$0xf]
        %v7622 = vld [vmem:[%s7618 + $0xc] sm:$0xf]
        %v7623 = vld [vmem:[%s7618 + $0x10] sm:$0xf]
        %v7624 = vld [vmem:[%s7618 + $0x14] sm:$0xf]
        %v7625 = vld [vmem:[%s7618 + $0x18] sm:$0x1]
        %v7626 = vld [vmem:[#allocation2] sm:$0xff]
        %v7627 = vld [vmem:[#allocation2 + $0x8] sm:$0xff]
        %v7628 = vld [vmem:[#allocation2 + $0x10] sm:$0xff]
        %v7629 = vld [vmem:[#allocation2 + $0x18] sm:$0xff]
        %v7630 = vld [vmem:[#allocation2 + $0x20] sm:$0xff]
        %v7631 = vld [vmem:[#allocation2 + $0x28] sm:$0xff]
        %v7632 = vld [vmem:[#allocation2 + $0x30] sm:$0x3]
        %v7640 = vunpack.c.l.b16 %v7619
        %v7641 = vunpack.c.l.b16 %v7620
        %v7642 = vunpack.c.l.b16 %v7621
        %v7643 = vunpack.c.l.b16 %v7622
        %v7644 = vunpack.c.l.b16 %v7623
        %v7645 = vunpack.c.l.b16 %v7624
        %v7646 = vunpack.c.l.b16 %v7625
        %v7647 = vpack.c.b16 %v7641, %v7640
        %v7648 = vpack.c.b16 %v7643, %v7642
        %v7649 = vpack.c.b16 %v7645, %v7644
        %v7650 = vpack.c.b16 %v7646, %v7646
        %v7652 = vsel %vm5223, %v7647, 0
        %v7655 = vsel %vm5223, %v7648, 0
        %v7658 = vsel %vm5223, %v7649, 0
        %v7661 = vsel %vm5223, %v7650, 0
        %v7664 = vsel %vm5236, %v7614, 0
        %7666 = vmatpush.bf16.msra.mxu0 0
        %7667 = vmatpush.bf16.msra.mxu0 0
        %7668 = vmatpush.bf16.msra.mxu0 0
        %7669 = vmatpush.bf16.msra.mxu0 0
        %7670 = vmatpush.bf16.msra.mxu0 0
        %7671 = vmatpush.bf16.msra.mxu0 0
        %7672 = vmatpush.bf16.msra.mxu0 %v7664
        %7673 = vmatpush.bf16.msra.mxu0 %v7613
        %7674 = vmatmul.bf16.gmra.mxu0 %v7652
        %v7675 = vpop.f32.mrf.mxu0
        %v7676 = vadd.f32 0.0, %v7675
        %v7677 = vpop.f32.mrf.mxu0
        %v7678 = vadd.f32 0.0, %v7677
        %7679 = vmatmul.bf16.gmra.mxu0 %v7655
        %v7680 = vpop.f32.mrf.mxu0
        %v7681 = vadd.f32 0.0, %v7680
        %v7682 = vpop.f32.mrf.mxu0
        %v7683 = vadd.f32 0.0, %v7682
        %7684 = vmatmul.bf16.gmra.mxu0 %v7658
        %v7685 = vpop.f32.mrf.mxu0
        %v7686 = vadd.f32 0.0, %v7685
        %v7687 = vpop.f32.mrf.mxu0
        %v7688 = vadd.f32 0.0, %v7687
        %7689 = vmatmul.bf16.gmra.mxu0 %v7661
        %v7690 = vpop.f32.mrf.mxu0
        %v7691 = vadd.f32 0.0, %v7690
        %v7692 = vpop.f32.mrf.mxu0
        %7693 = vdwg.mxu0
        %v7694 = vadd.f32 %v7626, %v7676
        %v7695 = vadd.f32 %v7627, %v7678
        %v7696 = vadd.f32 %v7628, %v7681
        %v7697 = vadd.f32 %v7629, %v7683
        %v7698 = vadd.f32 %v7630, %v7686
        %v7699 = vadd.f32 %v7631, %v7688
        %v7700 = vadd.f32 %v7632, %v7691
        %7701 = vst.msk [vmem:[#allocation2] sm:$0xff] %vm5275, %v7694
        %7702 = vst.msk [vmem:[#allocation2 + $0x8] sm:$0xff] %vm5275, %v7695
        %7703 = vst.msk [vmem:[#allocation2 + $0x10] sm:$0xff] %vm5275, %v7696
        %7704 = vst.msk [vmem:[#allocation2 + $0x18] sm:$0xff] %vm5275, %v7697
        %7705 = vst.msk [vmem:[#allocation2 + $0x20] sm:$0xff] %vm5275, %v7698
        %7706 = vst.msk [vmem:[#allocation2 + $0x28] sm:$0xff] %vm5275, %v7699
        %7707 = vst.msk [vmem:[#allocation2 + $0x30] sm:$0x3] %vm5282, %v7700
        %p7708 = scmp.eq.s32.totalorder %s23, 3
        // Predicated region
        $region105: #{net_forward.3} parent=95 // pred_check
          %p7709 = pneg %p7708
        $region106: #{net_forward.3} parent=95 // pred_check_branch
          %7711 = sbr.rel (%p7709) target = $region108
        $region107: #{net_forward.3} parent=95 // pred_region
          %v7712 = vld [vmem:[#allocation2] sm:$0xff]
          %v7713 = vld [vmem:[#allocation2 + $0x8] sm:$0xff]
          %v7714 = vld [vmem:[#allocation2 + $0x10] sm:$0xff]
          %v7715 = vld [vmem:[#allocation2 + $0x18] sm:$0xff]
          %v7716 = vld [vmem:[#allocation2 + $0x20] sm:$0xff]
          %v7717 = vld [vmem:[#allocation2 + $0x28] sm:$0xff]
          %v7718 = vld [vmem:[#allocation2 + $0x30] sm:$0x3]
          %v7719 = vld [vmem:[%s4] sm:$0xff]
          %v7720 = vld [vmem:[%s4 + $0x8] sm:$0xff]
          %v7721 = vld [vmem:[%s4 + $0x10] sm:$0xff]
          %v7722 = vld [vmem:[%s4 + $0x18] sm:$0xff]
          %v7723 = vld [vmem:[%s4 + $0x20] sm:$0xff]
          %v7724 = vld [vmem:[%s4 + $0x28] sm:$0xff]
          %v7725 = vld [vmem:[%s4 + $0x30] sm:$0x3]
          %7727 = vset.pattern.permute.xlu0 0
          %7728 = vperm.xlu0 %7727, %v7719
          %v7729 = vpop.permute.xlu0 %7728
          %7732 = vset.pattern.permute.xlu0 0
          %7733 = vperm.xlu0 %7732, %v7720
          %v7734 = vpop.permute.xlu0 %7733
          %7737 = vset.pattern.permute.xlu0 0
          %7738 = vperm.xlu0 %7737, %v7721
          %v7739 = vpop.permute.xlu0 %7738
          %7742 = vset.pattern.permute.xlu0 0
          %7743 = vperm.xlu0 %7742, %v7722
          %v7744 = vpop.permute.xlu0 %7743
          %7747 = vset.pattern.permute.xlu0 0
          %7748 = vperm.xlu0 %7747, %v7723
          %v7749 = vpop.permute.xlu0 %7748
          %7752 = vset.pattern.permute.xlu0 0
          %7753 = vperm.xlu0 %7752, %v7724
          %v7754 = vpop.permute.xlu0 %7753
          %7757 = vset.pattern.permute.xlu0 0
          %7758 = vperm.xlu0 %7757, %v7725
          %v7759 = vpop.permute.xlu0 %7758
          %v7761 = vadd.f32 %v7712, %v7729
          %v7762 = vadd.f32 %v7713, %v7734
          %v7763 = vadd.f32 %v7714, %v7739
          %v7764 = vadd.f32 %v7715, %v7744
          %v7765 = vadd.f32 %v7716, %v7749
          %v7766 = vadd.f32 %v7717, %v7754
          %v7767 = vadd.f32 %v7718, %v7759
          %v7768 = vmax.f32 %v7761, 0.0
          %v7769 = vmax.f32 %v7762, 0.0
          %v7770 = vmax.f32 %v7763, 0.0
          %v7771 = vmax.f32 %v7764, 0.0
          %v7772 = vmax.f32 %v7765, 0.0
          %v7773 = vmax.f32 %v7766, 0.0
          %v7774 = vmax.f32 %v7767, 0.0
          %v7775 = vpack.c.bf16 %v7769, %v7768
          %v7776 = vpack.c.bf16 %v7771, %v7770
          %v7777 = vpack.c.bf16 %v7773, %v7772
          %v7778 = vpack.c.bf16 %v7774, %v7774
          %v7779 = vld [vmem:[%s5] sm:$0xf]
          %v7780 = vld [vmem:[%s5 + $0x4] sm:$0x1]
          %v7781 = vld [vmem:[%s6] sm:$0xff]
          %v7782 = vld [vmem:[%s6 + $0x8] sm:$0x3]
          %7784 = vset.pattern.permute.xlu0 0
          %7785 = vperm.xlu0 %7784, %v7781
          %v7786 = vpop.permute.xlu0 %7785
          %7789 = vset.pattern.permute.xlu0 0
          %7790 = vperm.xlu0 %7789, %v7782
          %v7791 = vpop.permute.xlu0 %7790
          %v7795 = vunpack.c.l.b16 %v7779
          %v7796 = vunpack.c.l.b16 %v7780
          %v7797 = vpack.c.b16 %v7796, %v7795
          %vm7798 = vcmask 408576
          %v7800 = vsel %vm7798, %v7797, 0
          %vm7802 = vcmask 1040384
          %v7804 = vsel %vm7802, %v7778, 0
          %7806 = vmatpush.bf16.msra.mxu0 0
          %7807 = vmatpush.bf16.msra.mxu0 0
          %7808 = vmatpush.bf16.msra.mxu0 0
          %7809 = vmatpush.bf16.msra.mxu0 0
          %7810 = vmatpush.bf16.msra.mxu0 %v7804
          %7811 = vmatpush.bf16.msra.mxu0 %v7777
          %7812 = vmatpush.bf16.msra.mxu0 %v7776
          %7813 = vmatpush.bf16.msra.mxu0 %v7775
          %7814 = vmatmul.bf16.gmra.mxu0 %v7800
          %v7815 = vpop.f32.mrf.mxu0
          %v7816 = vadd.f32 %v7786, %v7815
          %v7817 = vpop.f32.mrf.mxu0
          %v7818 = vadd.f32 %v7791, %v7817
          %7819 = vdwg.mxu0
          %7820 = vst.msk [vmem:[%s4458] sm:$0xff] %vm5275, %v7816
          %7821 = vst.msk [vmem:[%s4458 + $0x8] sm:$0x3] %vm5282, %v7818
        $region108: #{net_forward.3} parent=95 // pred_fallthru
          _
        %p7822 = scmp.lt.s32.totalorder %s22, 1
        %s7823 = scalar_select %p7822, %s22, 1
        %s7824 = smul.addr %s7823, 2
        %s7825 = smul.addr %s7824, 8
        %s7826 = scalar_lea.vmem %s7, %s7825
        // Predicated region
        $region109: #{net_forward.3} parent=95 // pred_check
          %p7827 = pneg %p202
        $region110: #{net_forward.3} parent=95 // pred_check_branch
          %7829 = sbr.rel (%p7827) target = $region112
        $region111: #{net_forward.3} parent=95 // pred_region
          _
        $region112: #{net_forward.3} parent=95 // pred_fallthru
          _
      $region96: #{net_forward.3} parent=5 // pred_fallthru
        _
      %p7830 = scmp.le.s32.totalorder 2, %s13
      // Predicated region
      $region113: #{net_forward.3} parent=5 // pred_check
        %p7831 = pneg %p7830
      $region114: #{net_forward.3} parent=5 // pred_check_branch
        %7833 = sbr.rel (%p7831) target = $region116
      $region115: #{net_forward.3} parent=5 // pred_region
        %s7834 = ssub.s32 %s13, 2
        // Predicated region
        $region117: #{net_forward.3} parent=115 // pred_check
          %p7835 = pneg %p208
        $region118: #{net_forward.3} parent=115 // pred_check_branch
          %7837 = sbr.rel (%p7835) target = $region120
        $region119: #{net_forward.3} parent=115 // pred_region
          %p7838 = scmp.lt.s32.totalorder %s24, 1
          %s7839 = scalar_select %p7838, %s24, 1
          %s7840 = smul.addr %s7839, 2
          %s7841 = smul.addr %s7840, 8
          %s7842 = scalar_lea.vmem %s7, %s7841
        $region120: #{net_forward.3} parent=115 // pred_fallthru
          _
      $region116: #{net_forward.3} parent=5 // pred_fallthru
        _
    $region6: #{net_forward.3} parent=1 // loop_footer
      %s17 = sadd.s32 1, %s13
    $region7: #{net_forward.3} parent=1 // loop_footer_branch
      %12 = sbr.rel target = $region3
    $region8: #{net_forward.3} parent=1 // loop_exit
      _

</llo_original>
